<compile_context>
chip_gen: v7x
topology: tpu7x:2x2x1
jax: 0.10.0
libtpu: 0.0.40
codegen_flags: <defaults>
</compile_context>

<pallas_src>
import functools
import math

import jax
import jax.numpy as jnp
import numpy as np
from jax import lax
from jax.experimental import pallas as pl
from jax.experimental.pallas import tpu as pltpu

_MM_DTYPE = jnp.bfloat16          # MXU operand dtype (accumulation is f32)
_PAIR_DTYPE = jnp.bfloat16        # storage dtype for B*N^2-scale tensors
_LN_EPS = 1e-5
_NODE_BLOCK_ROWS = 512            # row tile for node-sized pipelined linears
_PAIR_BLOCK_ROWS = 2048           # row tile for pair-sized pipelined linears


@functools.lru_cache(maxsize=1)
def _vmem_limit_bytes():
    """~3/4 of physical VMEM: ~48 MiB on v7x, ~96 MiB on v5e/v6e."""
    try:
        cap = int(getattr(pltpu.get_tpu_info(), "vmem_capacity_bytes", 0))
        if cap > 0:
            return min((cap * 3) // 4, 100 * 1024 * 1024)
    except Exception:
        pass
    return None


def _compiler_params(dimension_semantics, big=False):
    kwargs = dict(dimension_semantics=dimension_semantics)
    if big:
        lim = _vmem_limit_bytes()
        if lim is not None:
            kwargs["vmem_limit_bytes"] = lim
    return pltpu.CompilerParams(**kwargs)


_HAS_RECIP = hasattr(pl, "reciprocal")


def _approx_recip(x):
    if _HAS_RECIP:
        return pl.reciprocal(x, approx=True)
    return 1.0 / x


def _mm(a, b):
    """bf16 MXU matmul with f32 accumulation."""
    return jnp.dot(a.astype(_MM_DTYPE), b.astype(_MM_DTYPE),
                   preferred_element_type=jnp.float32)


def _pick_tile(n, target, multiple=8):
    """Largest multiple-of-`multiple` divisor of n that is <= target, else n."""
    if n <= target:
        return n
    best = None
    t = multiple
    while t <= target:
        if n % t == 0:
            best = t
        t += multiple
    return best if best is not None else n


# ----------------------------------------------------------------------------
# Fused, row-tiled linear (+ optional relu / mask / residual / layernorm)
# ----------------------------------------------------------------------------
def _fused_linear_kernel(*refs, relu_in, relu_out, has_add, mask_mode,
                         has_res, has_ln, ln_eps):
    o_ref = refs[-1]
    it = iter(refs[:-1])
    x = next(it)[...]
    if has_add:
        x = x + next(it)[...]
    if relu_in:
        x = jnp.maximum(x, 0.0)
    w = next(it)[...]
    b = next(it)[...]
    y = _mm(x, w) + b
    if relu_out:
        y = jnp.maximum(y, 0.0)
    m = next(it)[...] if mask_mode is not None else None
    if mask_mode == "pre":
        y = y * m
    if has_res:
        y = y + next(it)[...]
    if has_ln:
        g = next(it)[...]
        beta = next(it)[...]
        mu = jnp.mean(y, axis=-1, keepdims=True)
        yc = y - mu
        var = jnp.mean(yc * yc, axis=-1, keepdims=True)
        y = yc * lax.rsqrt(var + ln_eps) * g + beta
    if mask_mode == "post":
        y = y * m
    o_ref[...] = y.astype(o_ref.dtype)


def fused_linear(x, w, b, *, relu_in=False, relu_out=False, add_in=None,
                 row_mask=None, mask_mode=None, residual=None,
                 ln_gamma=None, ln_beta=None, ln_eps=_LN_EPS,
                 block_rows=_NODE_BLOCK_ROWS, out_dtype=jnp.float32):
    """y = [relu](x [+ add_in]) @ w + b with fused relu/mask/residual/LN epilogue.

    Row dimension is tiled (software-pipelined DMAs); weights/bias/LN params are
    grid-invariant.  No padding: a ragged last block is handled by Pallas
    (row-wise epilogues are safe; out-of-range writes are clipped).
    """
    in_dim = x.shape[-1]
    out_dim = w.shape[1]
    lead = x.shape[:-1]
    rows = int(np.prod(lead)) if lead else 1

    has_add = add_in is not None
    has_res = residual is not None
    has_ln = ln_gamma is not None
    if mask_mode is not None:
        assert row_mask is not None

    bm = rows if rows <= block_rows else block_rows
    nblk = pl.cdiv(rows, bm)

    def r2(t, d):
        return t.reshape(rows, d)

    inputs = [r2(x, in_dim)]
    specs = [pl.BlockSpec((bm, in_dim), lambda i: (i, 0))]
    if has_add:
        inputs.append(r2(add_in, in_dim))
        specs.append(pl.BlockSpec((bm, in_dim), lambda i: (i, 0)))
    inputs += [w, b.reshape(1, out_dim)]
    specs += [pl.BlockSpec((in_dim, out_dim), lambda i: (0, 0)),
              pl.BlockSpec((1, out_dim), lambda i: (0, 0))]
    if mask_mode is not None:
        inputs.append(r2(row_mask, 1))
        specs.append(pl.BlockSpec((bm, 1), lambda i: (i, 0)))
    if has_res:
        inputs.append(r2(residual, out_dim))
        specs.append(pl.BlockSpec((bm, out_dim), lambda i: (i, 0)))
    if has_ln:
        inputs += [ln_gamma.reshape(1, out_dim), ln_beta.reshape(1, out_dim)]
        specs += [pl.BlockSpec((1, out_dim), lambda i: (0, 0)),
                  pl.BlockSpec((1, out_dim), lambda i: (0, 0))]

    kern = functools.partial(
        _fused_linear_kernel, relu_in=relu_in, relu_out=relu_out,
        has_add=has_add, mask_mode=mask_mode, has_res=has_res, has_ln=has_ln,
        ln_eps=ln_eps)
    out = pl.pallas_call(
        kern,
        out_shape=jax.ShapeDtypeStruct((rows, out_dim), out_dtype),
        grid=(nblk,),
        in_specs=specs,
        out_specs=pl.BlockSpec((bm, out_dim), lambda i: (i, 0)),
        compiler_params=_compiler_params(("parallel",)),
    )(*inputs)
    return out.reshape(lead + (out_dim,))


# ----------------------------------------------------------------------------
# Fused node transition (3 linears + residual + LN + node mask)
# ----------------------------------------------------------------------------
def _node_transition_kernel(x_ref, w1, b1, w2, b2, w3, b3, g, beta, m_ref,
                            o_ref, *, ln_eps):
    x0 = x_ref[...]
    h = jnp.maximum(_mm(x0, w1[...]) + b1[...], 0.0)
    h = jnp.maximum(_mm(h, w2[...]) + b2[...], 0.0)
    y = _mm(h, w3[...]) + b3[...] + x0
    mu = jnp.mean(y, axis=-1, keepdims=True)
    yc = y - mu
    var = jnp.mean(yc * yc, axis=-1, keepdims=True)
    y = yc * lax.rsqrt(var + ln_eps) * g[...] + beta[...]
    o_ref[...] = (y * m_ref[...]).astype(o_ref.dtype)


def node_transition_pallas(p, s, row_mask, block_rows=_NODE_BLOCK_ROWS):
    lead = s.shape[:-1]
    c = s.shape[-1]
    rows = int(np.prod(lead))
    bm = rows if rows <= block_rows else block_rows
    nblk = pl.cdiv(rows, bm)

    kern = functools.partial(_node_transition_kernel, ln_eps=_LN_EPS)
    out = pl.pallas_call(
        kern,
        out_shape=jax.ShapeDtypeStruct((rows, c), jnp.float32),
        grid=(nblk,),
        in_specs=[
            pl.BlockSpec((bm, c), lambda i: (i, 0)),
            pl.BlockSpec((c, c), lambda i: (0, 0)),
            pl.BlockSpec((1, c), lambda i: (0, 0)),
            pl.BlockSpec((c, c), lambda i: (0, 0)),
            pl.BlockSpec((1, c), lambda i: (0, 0)),
            pl.BlockSpec((c, c), lambda i: (0, 0)),
            pl.BlockSpec((1, c), lambda i: (0, 0)),
            pl.BlockSpec((1, c), lambda i: (0, 0)),
            pl.BlockSpec((1, c), lambda i: (0, 0)),
            pl.BlockSpec((bm, 1), lambda i: (i, 0)),
        ],
        out_specs=pl.BlockSpec((bm, c), lambda i: (i, 0)),
        compiler_params=_compiler_params(("parallel",)),
    )(s.reshape(rows, c), p['l1_w'], p['l1_b'].reshape(1, c),
      p['l2_w'], p['l2_b'].reshape(1, c),
      p['l3_w'], p['l3_b'].reshape(1, c),
      p['ln_g'].reshape(1, c), p['ln_b'].reshape(1, c),
      row_mask.reshape(rows, 1))
    return out.reshape(lead + (c,))


# ----------------------------------------------------------------------------
# Fused AngleResnet (all layers of the torsion head in one call)
# ----------------------------------------------------------------------------
def _angle_resnet_kernel(*refs, n_blocks):
    o_ref = refs[-1]
    it = iter(refs[:-1])
    s = next(it)[...]
    s_init = next(it)[...]
    in_w = next(it)[...]
    in_b = next(it)[...]
    init_w = next(it)[...]
    init_b = next(it)[...]
    a = _mm(jnp.maximum(s, 0.0), in_w) + in_b
    a = a + _mm(jnp.maximum(s_init, 0.0), init_w) + init_b
    for _ in range(n_blocks):
        w1 = next(it)[...]
        b1 = next(it)[...]
        w2 = next(it)[...]
        b2 = next(it)[...]
        r = jnp.maximum(_mm(jnp.maximum(a, 0.0), w1) + b1, 0.0)
        r = _mm(r, w2) + b2
        a = a + r
    out_w = next(it)[...]
    out_b = next(it)[...]
    o_ref[...] = (_mm(jnp.maximum(a, 0.0), out_w) + out_b).astype(o_ref.dtype)


def angle_resnet_pallas(p, s, s_initial, no_angles, eps=1e-12,
                        block_rows=_NODE_BLOCK_ROWS):
    lead = s.shape[:-1]
    c_in = s.shape[-1]
    ch = p['in_w'].shape[1]
    out_dim = no_angles * 2
    rows = int(np.prod(lead))
    bm = rows if rows <= block_rows else block_rows
    nblk = pl.cdiv(rows, bm)

    inputs = [s.reshape(rows, c_in), s_initial.reshape(rows, c_in),
              p['in_w'], p['in_b'].reshape(1, ch),
              p['init_w'], p['init_b'].reshape(1, ch)]
    specs = [pl.BlockSpec((bm, c_in), lambda i: (i, 0)),
             pl.BlockSpec((bm, c_in), lambda i: (i, 0)),
             pl.BlockSpec((c_in, ch), lambda i: (0, 0)),
             pl.BlockSpec((1, ch), lambda i: (0, 0)),
             pl.BlockSpec((c_in, ch), lambda i: (0, 0)),
             pl.BlockSpec((1, ch), lambda i: (0, 0))]
    for blk in p['blocks']:
        inputs += [blk['l1_w'], blk['l1_b'].reshape(1, ch),
                   blk['l2_w'], blk['l2_b'].reshape(1, ch)]
        specs += [pl.BlockSpec((ch, ch), lambda i: (0, 0)),
                  pl.BlockSpec((1, ch), lambda i: (0, 0)),
                  pl.BlockSpec((ch, ch), lambda i: (0, 0)),
                  pl.BlockSpec((1, ch), lambda i: (0, 0))]
    inputs += [p['out_w'], p['out_b'].reshape(1, out_dim)]
    specs += [pl.BlockSpec((ch, out_dim), lambda i: (0, 0)),
              pl.BlockSpec((1, out_dim), lambda i: (0, 0))]

    kern = functools.partial(_angle_resnet_kernel, n_blocks=len(p['blocks']))
    a = pl.pallas_call(
        kern,
        out_shape=jax.ShapeDtypeStruct((rows, out_dim), jnp.float32),
        grid=(nblk,),
        in_specs=specs,
        out_specs=pl.BlockSpec((bm, out_dim), lambda i: (i, 0)),
        compiler_params=_compiler_params(("parallel",)),
    )(*inputs)
    a = a.reshape(lead + (no_angles, 2))
    denom = jnp.sqrt(jnp.maximum(jnp.sum(a * a, axis=-1, keepdims=True), eps))
    return a / denom


# ----------------------------------------------------------------------------
# Fused EdgeTransition: per-(batch, row-tile) kernel, node contributions hoisted
# ----------------------------------------------------------------------------
def _edge_transition_kernel(e_ref, c1i_ref, c1j_ref, cfi_ref, cfj_ref,
                            mi_ref, mj_ref, w1e_ref, b1_ref, w2_ref, b2_ref,
                            wf_ref, wfe_ref, bf_ref, g_ref, beta_ref,
                            o_ref, *, ln_eps):
    e3 = e_ref[0]                                       # [ti, N, c_z]
    ti, n, cz = e3.shape
    hidden = w2_ref.shape[0]
    e2 = e3.reshape(ti * n, cz)

    # trunk layer 1: x@W1 split as e@W1_e + (n_i@W1_i) + (n_j@W1_j) + b1
    h = _mm(e2, w1e_ref[...]).reshape(ti, n, hidden)
    h = h + c1i_ref[0][:, None, :] + c1j_ref[0][None, :, :] + b1_ref[...]
    h = jnp.maximum(h, 0.0)
    # trunk layer 2
    h = _mm(h.reshape(ti * n, hidden), w2_ref[...]) + b2_ref[...]
    h = jnp.maximum(h, 0.0)                             # [ti*N, hidden]
    # final layer on (trunk(x) + x), with x@Wf split by input slices
    y = _mm(h, wf_ref[...]) + _mm(e2, wfe_ref[...])     # [ti*N, c_z]
    y = y.reshape(ti, n, cz) + cfi_ref[0][:, None, :] + cfj_ref[0][None, :, :]
    y = y + bf_ref[...]

    mu = jnp.mean(y, axis=-1, keepdims=True)
    yc = y - mu
    var = jnp.mean(yc * yc, axis=-1, keepdims=True)
    y = yc * lax.rsqrt(var + ln_eps) * g_ref[...] + beta_ref[...]
    m = mi_ref[0][:, :, None] * mj_ref[0][:, :, None]   # [ti,1,1]*[1,N,1]
    o_ref[0] = (y * m).astype(o_ref.dtype)              # fused edge mask


def edge_transition_pallas(p, node_embed, edge_embed, node_mask):
    B, N, _ = node_embed.shape
    c_z = edge_embed.shape[-1]
    ne = fused_linear(node_embed, p['init_w'], p['init_b'])       # [B, N, be]
    be = ne.shape[-1]
    hidden = 2 * be + c_z

    w1 = p['t1_w']
    wf = p['fin_w']
    w1_e = w1[:c_z]
    wf_e = wf[:c_z]
    # Hoist the node-side (n_i / n_j) contributions of trunk layer 1 and of
    # the residual projection out of the per-row grid (one node-sized linear).
    wcat = jnp.concatenate([w1[c_z:c_z + be], w1[c_z + be:],
                            wf[c_z:c_z + be], wf[c_z + be:]], axis=1)
    contrib = fused_linear(ne, wcat, jnp.zeros((wcat.shape[1],), jnp.float32))
    c1_i = contrib[..., :hidden]
    c1_j = contrib[..., hidden:2 * hidden]
    cf_i = contrib[..., 2 * hidden:2 * hidden + c_z]
    cf_j = contrib[..., 2 * hidden + c_z:]

    ti = _pick_tile(N, 8, multiple=8)        # 8 query rows per grid step
    mask_i = node_mask.reshape(B, N, 1)
    mask_j = node_mask.reshape(B, 1, N)

    kern = functools.partial(_edge_transition_kernel, ln_eps=_LN_EPS)
    return pl.pallas_call(
        kern,
        out_shape=jax.ShapeDtypeStruct((B, N, N, c_z), _PAIR_DTYPE),
        grid=(B, N // ti),
        in_specs=[
            pl.BlockSpec((1, ti, N, c_z), lambda b, i: (b, i, 0, 0)),
            pl.BlockSpec((1, ti, hidden), lambda b, i: (b, i, 0)),
            pl.BlockSpec((1, N, hidden), lambda b, i: (b, 0, 0)),
            pl.BlockSpec((1, ti, c_z), lambda b, i: (b, i, 0)),
            pl.BlockSpec((1, N, c_z), lambda b, i: (b, 0, 0)),
            pl.BlockSpec((1, ti, 1), lambda b, i: (b, i, 0)),
            pl.BlockSpec((1, 1, N), lambda b, i: (b, 0, 0)),
            pl.BlockSpec((c_z, hidden), lambda b, i: (0, 0)),
            pl.BlockSpec((1, hidden), lambda b, i: (0, 0)),
            pl.BlockSpec((hidden, hidden), lambda b, i: (0, 0)),
            pl.BlockSpec((1, hidden), lambda b, i: (0, 0)),
            pl.BlockSpec((hidden, c_z), lambda b, i: (0, 0)),
            pl.BlockSpec((c_z, c_z), lambda b, i: (0, 0)),
            pl.BlockSpec((1, c_z), lambda b, i: (0, 0)),
            pl.BlockSpec((1, c_z), lambda b, i: (0, 0)),
            pl.BlockSpec((1, c_z), lambda b, i: (0, 0)),
        ],
        out_specs=pl.BlockSpec((1, ti, N, c_z), lambda b, i: (b, i, 0, 0)),
        compiler_params=_compiler_params(("parallel", "parallel"), big=True),
    )(edge_embed, c1_i, c1_j, cf_i, cf_j, mask_i, mask_j,
      w1_e, p['t1_b'].reshape(1, hidden),
      p['t2_w'], p['t2_b'].reshape(1, hidden),
      wf, wf_e, p['fin_b'].reshape(1, c_z),
      p['ln_g'].reshape(1, c_z), p['ln_b'].reshape(1, c_z))


# ----------------------------------------------------------------------------
# IPA attention core: grid over (batch, query tile), all heads per step
# ----------------------------------------------------------------------------
def _ipa_attn_kernel(qc_ref, kc_ref, vvp_ref, kn_ref, bb_ref, pz_ref,
                     mq_ref, mk_ref, ovp_ref, opair_ref, a_scr, *, inf):
    qc = qc_ref[0]                       # [H, tq, C+3Pq]  bf16
    kc = kc_ref[0]                       # [H, N,  C+3Pq]  bf16

    # q.k and the -2*qp.kp cross term in one batched MXU contraction.
    s = jnp.einsum('hqc,hkc->hqk', qc, kc,
                   preferred_element_type=jnp.float32)            # [H, tq, N]
    s = s + bb_ref[0].astype(jnp.float32)                         # pair bias
    s = s - kn_ref[0]                                             # -|kp|^2
    # in-kernel square mask bias from node masks (no HBM N^2 mask tensor)
    s = s + inf * (mq_ref[0] * mk_ref[0] - 1.0)

    s = s - jnp.max(s, axis=-1, keepdims=True)
    e = jnp.exp(s)
    a = e * _approx_recip(jnp.sum(e, axis=-1, keepdims=True))
    ab = a.astype(_MM_DTYPE)

    # o and o_pt from one a @ [v || vp] batched matmul
    ovp_ref[0] = jnp.einsum('hqk,hkc->hqc', ab, vvp_ref[0],
                            preferred_element_type=jnp.float32)

    # o_pair: per-query [H, N] @ [N, Cz4] matmuls (batch over queries, M = H);
    # attention weights head-transposed through a small VMEM scratch.
    H = ab.shape[0]
    for h in range(H):
        a_scr[:, h, :] = ab[h]
    opair_ref[0] = lax.dot_general(
        a_scr[...], pz_ref[0],
        dimension_numbers=(((2,), (1,)), ((0,), (0,))),
        preferred_element_type=jnp.float32)                       # [tq, H, Cz4]


def ipa_attention_pallas(qcat, kcat, vvp, kn, bias_b, pair_z, node_mask, *, inf):
    B, H, N, Ck = qcat.shape
    Cv = vvp.shape[-1]
    Cz4 = pair_z.shape[-1]
    tq = _pick_tile(N, 128, multiple=8)
    mq = node_mask.reshape(B, N, 1).astype(jnp.float32)
    mk = node_mask.reshape(B, 1, N).astype(jnp.float32)
    kern = functools.partial(_ipa_attn_kernel, inf=inf)
    return pl.pallas_call(
        kern,
        out_shape=(
            jax.ShapeDtypeStruct((B, H, N, Cv), jnp.float32),
            jax.ShapeDtypeStruct((B, N, H, Cz4), jnp.float32),
        ),
        grid=(B, N // tq),
        in_specs=[
            pl.BlockSpec((1, H, tq, Ck), lambda b, i: (b, 0, i, 0)),
            pl.BlockSpec((1, H, N, Ck), lambda b, i: (b, 0, 0, 0)),
            pl.BlockSpec((1, H, N, Cv), lambda b, i: (b, 0, 0, 0)),
            pl.BlockSpec((1, H, 1, N), lambda b, i: (b, 0, 0, 0)),
            pl.BlockSpec((1, H, tq, N), lambda b, i: (b, 0, i, 0)),
            pl.BlockSpec((1, tq, N, Cz4), lambda b, i: (b, i, 0, 0)),
            pl.BlockSpec((1, tq, 1), lambda b, i: (b, i, 0)),
            pl.BlockSpec((1, 1, N), lambda b, i: (b, 0, 0)),
        ],
        out_specs=(
            pl.BlockSpec((1, H, tq, Cv), lambda b, i: (b, 0, i, 0)),
            pl.BlockSpec((1, tq, H, Cz4), lambda b, i: (b, i, 0, 0)),
        ),
        scratch_shapes=[pltpu.VMEM((tq, H, N), _MM_DTYPE)],
        compiler_params=_compiler_params(("parallel", "parallel"), big=True),
    )(qcat, kcat, vvp, kn, bias_b, pair_z, mq, mk)


# ----------------------------------------------------------------------------
# Sequence-transformer self-attention (per batch/head grid point)
# ----------------------------------------------------------------------------
def _mha_kernel(q_ref, k_ref, v_ref, mb_ref, o_ref, *, scale):
    q = q_ref[0, 0]
    k = k_ref[0, 0]
    v = v_ref[0, 0]
    s = lax.dot_general(q.astype(_MM_DTYPE), k.astype(_MM_DTYPE),
                        (((1,), (1,)), ((), ())),
                        preferred_element_type=jnp.float32) * scale
    s = s + mb_ref[0]                                  # [1, N] key-padding bias
    s = s - jnp.max(s, axis=-1, keepdims=True)
    e = jnp.exp(s)
    a = e * _approx_recip(jnp.sum(e, axis=-1, keepdims=True))
    o_ref[0, 0] = jnp.dot(a.astype(_MM_DTYPE), v.astype(_MM_DTYPE),
                          preferred_element_type=jnp.float32)


def mha_pallas(q, k, v, key_bias, scale):
    B, H, N, D = q.shape
    return pl.pallas_call(
        functools.partial(_mha_kernel, scale=scale),
        out_shape=jax.ShapeDtypeStruct((B, H, N, D), jnp.float32),
        grid=(B, H),
        in_specs=[
            pl.BlockSpec((1, 1, N, D), lambda b, h: (b, h, 0, 0)),
            pl.BlockSpec((1, 1, N, D), lambda b, h: (b, h, 0, 0)),
            pl.BlockSpec((1, 1, N, D), lambda b, h: (b, h, 0, 0)),
            pl.BlockSpec((1, 1, N), lambda b, h: (b, 0, 0)),
        ],
        out_specs=pl.BlockSpec((1, 1, N, D), lambda b, h: (b, h, 0, 0)),
        compiler_params=_compiler_params(("parallel", "parallel")),
    )(q, k, v, key_bias)


# ----------------------------------------------------------------------------
# Rigid (quaternion + translation) helpers — small per-residue algebra (glue)
# ----------------------------------------------------------------------------
def quat_to_rot(q):
    a, b, c, d = q[..., 0], q[..., 1], q[..., 2], q[..., 3]
    r00 = a * a + b * b - c * c - d * d
    r01 = 2 * (b * c - a * d)
    r02 = 2 * (b * d + a * c)
    r10 = 2 * (b * c + a * d)
    r11 = a * a - b * b + c * c - d * d
    r12 = 2 * (c * d - a * b)
    r20 = 2 * (b * d - a * c)
    r21 = 2 * (c * d + a * b)
    r22 = a * a - b * b - c * c + d * d
    return jnp.stack([
        jnp.stack([r00, r01, r02], axis=-1),
        jnp.stack([r10, r11, r12], axis=-1),
        jnp.stack([r20, r21, r22], axis=-1),
    ], axis=-2)


def quat_mul_vec(q, v):
    a, b, c, d = q[..., 0], q[..., 1], q[..., 2], q[..., 3]
    x, y, z = v[..., 0], v[..., 1], v[..., 2]
    return jnp.stack([
        -b * x - c * y - d * z,
        a * x + c * z - d * y,
        a * y - b * z + d * x,
        a * z + b * y - c * x,
    ], axis=-1)


def compose_q_update(quat, trans, update):
    q_vec, t_vec = update[..., :3], update[..., 3:]
    new_quat = quat + quat_mul_vec(quat, q_vec)
    new_quat = new_quat / jnp.linalg.norm(new_quat, axis=-1, keepdims=True)
    R = quat_to_rot(quat)
    new_trans = trans + jnp.einsum('...ij,...j->...i', R, t_vec)
    return new_quat, new_trans


def rigid_apply_pts(R, t, pts):            # R [B,N,3,3], t [B,N,3], pts [B,N,P,3]
    return jnp.einsum('bnij,bnpj->bnpi', R, pts) + t[:, :, None, :]


def rigid_invert_apply_pts(R, t, pts):     # pts [B,N,H,P,3]
    return jnp.einsum('bnji,bnhpj->bnhpi', R, pts - t[:, :, None, None, :])


# ----------------------------------------------------------------------------
# Sub-module forwards (composed from Pallas kernels)
# ----------------------------------------------------------------------------
def ipa_forward(p, s, z, R, t, mask, cfg):
    """Returns o_feats; the output projection is fused into the caller."""
    B, N, _ = s.shape
    H, C = cfg['no_heads'], cfg['c_hidden']
    Pq, Pv = cfg['no_qk_points'], cfg['no_v_points']
    inf = 1e5

    # Fused node projections (q | kv | q_pts | kv_pts): one lane-dense linear.
    node_w = jnp.concatenate([p['q_w'], p['kv_w'], p['qp_w'], p['kvp_w']],
                             axis=1)
    node_b = jnp.concatenate([p['q_b'], p['kv_b'], p['qp_b'], p['kvp_b']],
                             axis=0)
    proj = fused_linear(s, node_w, node_b)
    o0 = H * C
    o1 = o0 + 2 * H * C
    o2 = o1 + H * Pq * 3
    q = proj[..., :o0].reshape(B, N, H, C)
    kv = proj[..., o0:o1].reshape(B, N, H, 2 * C)
    k, v = kv[..., :C], kv[..., C:]

    q_pts = jnp.stack(jnp.split(proj[..., o1:o2], 3, axis=-1), axis=-1)
    q_pts = rigid_apply_pts(R, t, q_pts).reshape(B, N, H, Pq, 3)
    kv_pts = jnp.stack(jnp.split(proj[..., o2:], 3, axis=-1), axis=-1)
    kv_pts = rigid_apply_pts(R, t, kv_pts).reshape(B, N, H, Pq + Pv, 3)
    k_pts, v_pts = kv_pts[..., :Pq, :], kv_pts[..., Pq:, :]

    # Pair projections (attention bias heads | down_z): one bf16 fused linear
    # over B*N^2 rows; the sqrt(1/3) bias scale is folded into the weights.
    b_scale = math.sqrt(1.0 / 3)
    pair_w = jnp.concatenate([p['b_w'] * b_scale, p['dz_w']], axis=1)
    pair_b = jnp.concatenate([p['b_b'] * b_scale, p['dz_b']], axis=0)
    zproj = fused_linear(z, pair_w, pair_b, block_rows=_PAIR_BLOCK_ROWS,
                         out_dtype=_PAIR_DTYPE)                  # [B,N,N,H+Cz4]
    bias_b = jnp.transpose(zproj[..., :H], (0, 3, 1, 2))         # [B,H,N,N] bf16
    pair_z = zproj[..., H:]                                      # [B,N,N,Cz4] bf16
    Cz4 = pair_z.shape[-1]

    head_w = jax.nn.softplus(p['head_weights'].astype(jnp.float32))
    pt_coeff = math.sqrt(1.0 / (3 * (Pq * 9.0 / 2)))
    pt_scale = jnp.sqrt(0.5 * head_w * pt_coeff)                 # [H]

    q_h = jnp.transpose(q, (0, 2, 1, 3))
    k_h = jnp.transpose(k, (0, 2, 1, 3))
    v_h = jnp.transpose(v, (0, 2, 1, 3))
    qp_h = jnp.transpose(q_pts, (0, 2, 1, 3, 4)).reshape(B, H, N, Pq * 3)
    kp_h = jnp.transpose(k_pts, (0, 2, 1, 3, 4)).reshape(B, H, N, Pq * 3)
    vp_h = jnp.transpose(v_pts, (0, 2, 1, 3, 4)).reshape(B, H, N, Pv * 3)
    qp_h = qp_h * pt_scale[None, :, None, None]
    kp_h = kp_h * pt_scale[None, :, None, None]

    # Fused score operands: q.k and the -2*qp.kp cross term share one MXU dot.
    # The row-constant |qp|^2 is dropped (softmax shift-invariant); |kp|^2 is
    # passed as a small [B, H, 1, N] tensor.
    sq = (1.0 / (3 * C)) ** 0.25            # sqrt(qk_scale)
    rt2 = math.sqrt(2.0)
    qcat = jnp.concatenate([q_h * sq, qp_h * rt2], axis=-1).astype(_MM_DTYPE)
    kcat = jnp.concatenate([k_h * sq, kp_h * rt2], axis=-1).astype(_MM_DTYPE)
    kn = jnp.sum(kp_h * kp_h, axis=-1)[:, :, None, :]            # [B,H,1,N]
    vvp = jnp.concatenate([v_h, vp_h], axis=-1).astype(_MM_DTYPE)

    ovp, o_pair = ipa_attention_pallas(qcat, kcat, vvp, kn, bias_b, pair_z,
                                       mask, inf=inf)

    o = jnp.transpose(ovp[..., :C], (0, 2, 1, 3)).reshape(B, N, H * C)
    o_pt = jnp.transpose(ovp[..., C:].reshape(B, H, N, Pv, 3), (0, 2, 1, 3, 4))
    o_pt = rigid_invert_apply_pts(R, t, o_pt)                    # [B,N,H,Pv,3]
    o_pt_norm = jnp.sqrt(jnp.sum(o_pt * o_pt, axis=-1) + 1e-8).reshape(
        B, N, H * Pv)
    o_pt = o_pt.reshape(B, N, H * Pv, 3)
    o_pair = o_pair.reshape(B, N, H * Cz4)

    o_feats = jnp.concatenate(
        [o, o_pt[..., 0], o_pt[..., 1], o_pt[..., 2], o_pt_norm, o_pair],
        axis=-1)
    return o_feats


def transformer_layer(lp, x, key_bias, nhead):
    B, N, D = x.shape
    hd = D // nhead
    qkv = fused_linear(x, lp['in_w'], lp['in_b'])
    q, k, v = qkv[..., :D], qkv[..., D:2 * D], qkv[..., 2 * D:]

    def to_heads(t):
        return jnp.transpose(t.reshape(B, N, nhead, hd), (0, 2, 1, 3))

    o = mha_pallas(to_heads(q), to_heads(k), to_heads(v), key_bias,
                   scale=1.0 / math.sqrt(hd))
    o = jnp.transpose(o, (0, 2, 1, 3)).reshape(B, N, D)
    # out_proj + residual + LayerNorm fused
    x = fused_linear(o, lp['out_w'], lp['out_b'], residual=x,
                     ln_gamma=lp['ln1_g'], ln_beta=lp['ln1_b'])
    ff = fused_linear(x, lp['ff1_w'], lp['ff1_b'], relu_out=True)
    # ff2 + residual + LayerNorm fused
    return fused_linear(ff, lp['ff2_w'], lp['ff2_b'], residual=x,
                        ln_gamma=lp['ln2_g'], ln_beta=lp['ln2_b'])


# ----------------------------------------------------------------------------
# StructureModule forward
# ----------------------------------------------------------------------------
def structure_module_forward(params, rigids_t, node_feat, edge_feat,
                             node_mask, padding_mask, cfg):
    B, N, _ = node_feat.shape
    node_feat = node_feat * node_mask[..., None]
    # NOTE: the reference pre-multiplies edge_feat by the B*N^2 pair mask here.
    # That full HBM pass is folded into the consumers instead: masked key
    # columns are killed by the in-kernel softmax mask bias (exp underflows to
    # exactly 0), masked query rows are node-masked downstream, and the fused
    # EdgeTransition applies the pair mask to its output.

    quat = rigids_t[..., :4]
    trans = rigids_t[..., 4:] * cfg['coordinate_scaling']

    init_node_feat = node_feat
    row_mask = node_mask[..., None]
    # key-padding bias for the seq transformer (True = keep); shape [B, 1, N]
    key_bias = jnp.where(padding_mask, 0.0, -1e9).astype(jnp.float32)[:, None, :]

    for b in range(cfg['num_ipa_blocks']):
        bp = params['blocks'][b]
        R = quat_to_rot(quat)
        o_feats = ipa_forward(bp['ipa'], node_feat, edge_feat, R, trans,
                              node_mask, cfg)
        # IPA output linear + node-mask + residual + LayerNorm fused
        node_feat = fused_linear(
            o_feats, bp['ipa']['out_w'], bp['ipa']['out_b'],
            row_mask=row_mask, mask_mode='pre', residual=node_feat,
            ln_gamma=bp['ipa_ln_g'], ln_beta=bp['ipa_ln_b'])

        skip = fused_linear(init_node_feat, bp['skip_w'], bp['skip_b'])
        seq_out = jnp.concatenate([node_feat, skip], axis=-1)
        for lp in bp['tfmr_layers']:
            seq_out = transformer_layer(lp, seq_out, key_bias,
                                        cfg['seq_tfmr_num_heads'])
        # post-transformer linear + residual fused
        node_feat = fused_linear(seq_out, bp['post_w'], bp['post_b'],
                                 residual=node_feat)
        # node transition (3 linears + residual + LN) + node-mask fused
        node_feat = node_transition_pallas(bp['transition'], node_feat,
                                           row_mask)
        rigid_update = fused_linear(node_feat, bp['bb_w'], bp['bb_b'])  # [B,N,6]
        quat, trans = compose_q_update(quat, trans, rigid_update)
        if b < cfg['num_ipa_blocks'] - 1:
            edge_feat = edge_transition_pallas(bp['edge'], node_feat,
                                               edge_feat, node_mask)

    pred_torsions = angle_resnet_pallas(params['torsion'], node_feat,
                                        init_node_feat, cfg['no_angles'])
    pred_rigids_0 = jnp.concatenate(
        [quat, trans / cfg['coordinate_scaling']], axis=-1)
    return {'pred_rigids_0': pred_rigids_0, 'pred_torsions': pred_torsions}


# ----------------------------------------------------------------------------
# Deterministic parameter initialization (shapes per the module's __init__)
# Matmul weights are stored in bf16 (kernels compute bf16xbf16->f32 anyway);
# biases / LayerNorm params stay f32.
# ----------------------------------------------------------------------------
class _KeyGen:
    def __init__(self, key):
        self.key = key

    def __call__(self):
        self.key, sub = jax.random.split(self.key)
        return sub


def _lin(kg, i, o):
    w = (jax.random.normal(kg(), (i, o), jnp.float32) /
         math.sqrt(i)).astype(_MM_DTYPE)
    b = jnp.zeros((o,), jnp.float32)
    return w, b


def init_params(cfg, key):
    kg = _KeyGen(key)
    c_s, c_z = cfg['c_s'], cfg['c_z']
    C, H = cfg['c_hidden'], cfg['no_heads']
    Pq, Pv = cfg['no_qk_points'], cfg['no_v_points']
    c_skip = cfg['c_skip']
    d_model = c_s + c_skip
    concat_out = c_z // 4 + C + Pv * 4

    blocks = []
    for bi in range(cfg['num_ipa_blocks']):
        ipa = {}
        ipa['q_w'], ipa['q_b'] = _lin(kg, c_s, H * C)
        ipa['kv_w'], ipa['kv_b'] = _lin(kg, c_s, 2 * H * C)
        ipa['qp_w'], ipa['qp_b'] = _lin(kg, c_s, H * Pq * 3)
        ipa['kvp_w'], ipa['kvp_b'] = _lin(kg, c_s, H * (Pq + Pv) * 3)
        ipa['b_w'], ipa['b_b'] = _lin(kg, c_z, H)
        ipa['dz_w'], ipa['dz_b'] = _lin(kg, c_z, c_z // 4)
        ipa['head_weights'] = jnp.full((H,), 0.541324854612918, jnp.float32)
        ipa['out_w'], ipa['out_b'] = _lin(kg, H * concat_out, c_s)
        blk = {'ipa': ipa,
               'ipa_ln_g': jnp.ones((c_s,), jnp.float32),
               'ipa_ln_b': jnp.zeros((c_s,), jnp.float32)}
        blk['skip_w'], blk['skip_b'] = _lin(kg, c_s, c_skip)
        layers = []
        for _ in range(cfg['seq_tfmr_num_layers']):
            lp = {}
            lp['in_w'], lp['in_b'] = _lin(kg, d_model, 3 * d_model)
            lp['out_w'], lp['out_b'] = _lin(kg, d_model, d_model)
            lp['ff1_w'], lp['ff1_b'] = _lin(kg, d_model, d_model)
            lp['ff2_w'], lp['ff2_b'] = _lin(kg, d_model, d_model)
            lp['ln1_g'] = jnp.ones((d_model,), jnp.float32)
            lp['ln1_b'] = jnp.zeros((d_model,), jnp.float32)
            lp['ln2_g'] = jnp.ones((d_model,), jnp.float32)
            lp['ln2_b'] = jnp.zeros((d_model,), jnp.float32)
            layers.append(lp)
        blk['tfmr_layers'] = layers
        blk['post_w'], blk['post_b'] = _lin(kg, d_model, c_s)
        tr = {}
        tr['l1_w'], tr['l1_b'] = _lin(kg, c_s, c_s)
        tr['l2_w'], tr['l2_b'] = _lin(kg, c_s, c_s)
        tr['l3_w'], tr['l3_b'] = _lin(kg, c_s, c_s)
        tr['ln_g'] = jnp.ones((c_s,), jnp.float32)
        tr['ln_b'] = jnp.zeros((c_s,), jnp.float32)
        blk['transition'] = tr
        blk['bb_w'], blk['bb_b'] = _lin(kg, c_s, 6)
        if bi < cfg['num_ipa_blocks'] - 1:
            bias_embed = c_s // 2
            hidden = bias_embed * 2 + c_z
            e = {}
            e['init_w'], e['init_b'] = _lin(kg, c_s, bias_embed)
            e['t1_w'], e['t1_b'] = _lin(kg, hidden, hidden)
            e['t2_w'], e['t2_b'] = _lin(kg, hidden, hidden)
            e['fin_w'], e['fin_b'] = _lin(kg, hidden, c_z)
            e['ln_g'] = jnp.ones((c_z,), jnp.float32)
            e['ln_b'] = jnp.zeros((c_z,), jnp.float32)
            blk['edge'] = e
        blocks.append(blk)

    ch = 128  # AngleResnet hidden dim (module default)
    tor = {}
    tor['in_w'], tor['in_b'] = _lin(kg, c_s, ch)
    tor['init_w'], tor['init_b'] = _lin(kg, c_s, ch)
    tor_blocks = []
    for _ in range(2):
        tb = {}
        tb['l1_w'], tb['l1_b'] = _lin(kg, ch, ch)
        tb['l2_w'], tb['l2_b'] = _lin(kg, ch, ch)
        tor_blocks.append(tb)
    tor['blocks'] = tor_blocks
    tor['out_w'], tor['out_b'] = _lin(kg, ch, cfg['no_angles'] * 2)
    return {'blocks': blocks, 'torsion': tor}


# ----------------------------------------------------------------------------
if __name__ == "__main__":
    cfg = dict(num_ipa_blocks=2, c_s=32, c_z=16, c_hidden=16, c_skip=8,
               no_heads=4, no_qk_points=4, no_v_points=8,
               seq_tfmr_num_heads=4, seq_tfmr_num_layers=1,
               coordinate_scaling=0.1, no_angles=7)
    B, N = 2, 8

    key = jax.random.PRNGKey(0)
    k_params, k_quat, k_trans, k_node, k_edge = jax.random.split(key, 5)
    params = init_params(cfg, k_params)

    quat = jax.random.normal(k_quat, (B, N, 4), jnp.float32)
    quat = quat / jnp.linalg.norm(quat, axis=-1, keepdims=True)
    trans = jax.random.normal(k_trans, (B, N, 3), jnp.float32)
    rigids_t = jnp.concatenate([quat, trans], axis=-1)          # [B, N, 7]
    node_feat = jax.random.normal(k_node, (B, N, cfg['c_s']), jnp.float32)
    edge_feat = jax.random.normal(k_edge, (B, N, N, cfg['c_z']), jnp.float32)
    node_mask = jnp.ones((B, N), jnp.float32).at[1, -1].set(0.0)
    padding_mask = node_mask.astype(bool)

    fwd = jax.jit(functools.partial(structure_module_forward, cfg=cfg))
    out = fwd(params, rigids_t, node_feat, edge_feat, node_mask, padding_mask)
    jax.block_until_ready(out)

    assert out['pred_rigids_0'].shape == (B, N, 7)
    assert out['pred_torsions'].shape == (B, N, cfg['no_angles'], 2)
    assert bool(jnp.all(jnp.isfinite(out['pred_rigids_0'])))
    assert bool(jnp.all(jnp.isfinite(out['pred_torsions'])))
    print("KERNEL_OK")
</pallas_src>

<mosaic_0001>
module attributes {stable_mosaic.version = 11 : i64} {
  func.func @_fused_linear_kernel(%arg0: i32, %arg1: memref<16x32xf32, #tpu.memory_space<vmem>>, %arg2: memref<32x8xbf16, #tpu.memory_space<vmem>>, %arg3: memref<1x8xf32, #tpu.memory_space<vmem>>, %arg4: memref<16x8xf32, #tpu.memory_space<vmem>>) attributes {dimension_semantics = [#tpu.dimension_semantics<parallel>], iteration_bounds = array<i64: 1>, scalar_prefetch = 0 : i64, scratch_operands = 0 : i64, tpu.core_type = #tpu.core_type<tc>, window_params = [{transform_indices = @transform_0, window_bounds = array<i64: 16, 32>}, {pipeline_mode = #tpu.pipeline_mode<synchronous>, transform_indices = @transform_1, window_bounds = array<i64: 32, 8>}, {pipeline_mode = #tpu.pipeline_mode<synchronous>, transform_indices = @transform_2, window_bounds = array<i64: 1, 8>}, {transform_indices = @transform_3, window_bounds = array<i64: 16, 8>}]} {
    %c0 = arith.constant 0 : index
    %c0_0 = arith.constant 0 : index
    %0 = vector.load %arg1[%c0, %c0_0] : memref<16x32xf32, #tpu.memory_space<vmem>>, vector<16x32xf32>
    %c0_1 = arith.constant 0 : index
    %c0_2 = arith.constant 0 : index
    %1 = vector.load %arg2[%c0_1, %c0_2] : memref<32x8xbf16, #tpu.memory_space<vmem>>, vector<32x8xbf16>
    %c0_3 = arith.constant 0 : index
    %c0_4 = arith.constant 0 : index
    %2 = vector.load %arg3[%c0_3, %c0_4] : memref<1x8xf32, #tpu.memory_space<vmem>>, vector<1x8xf32>
    %3 = arith.truncf %0 : vector<16x32xf32> to vector<16x32xbf16>
    %cst = arith.constant dense<0.000000e+00> : vector<16x8xf32>
    %4 = tpu.matmul %3, %1, %cst {dimension_numbers = #tpu.dot_dimension_numbers<[1], [0], [0], [1], [0, 0, 1, 1], [], []>} : vector<16x32xbf16>, vector<32x8xbf16>, vector<16x8xf32> -> vector<16x8xf32>
    %5 = vector.broadcast %2 : vector<1x8xf32> to vector<16x8xf32>
    %6 = arith.addf %4, %5 : vector<16x8xf32>
    %c0_5 = arith.constant 0 : index
    %c0_6 = arith.constant 0 : index
    %7 = vector.load %arg4[%c0_5, %c0_6] : memref<16x8xf32, #tpu.memory_space<vmem>>, vector<16x8xf32>
    tpu.vector_store %arg4[%c0_5, %c0_6], %6 {strides = array<i32>} : memref<16x8xf32, #tpu.memory_space<vmem>>, vector<16x8xf32>,
    return
  }
  func.func @transform_0(%arg0: i32) -> (i32, i32) {
    %c0_i32 = arith.constant 0 : i32
    %c0_i32_0 = arith.constant 0 : i32
    return %arg0, %c0_i32 : i32, i32
  }
  func.func @transform_1(%arg0: i32) -> (i32, i32) {
    %c0_i32 = arith.constant 0 : i32
    %c0_i32_0 = arith.constant 0 : i32
    %c0_i32_1 = arith.constant 0 : i32
    return %c0_i32, %c0_i32_0 : i32, i32
  }
  func.func @transform_2(%arg0: i32) -> (i32, i32) {
    %c0_i32 = arith.constant 0 : i32
    %c0_i32_0 = arith.constant 0 : i32
    %c0_i32_1 = arith.constant 0 : i32
    return %c0_i32, %c0_i32_0 : i32, i32
  }
  func.func @transform_3(%arg0: i32) -> (i32, i32) {
    %c0_i32 = arith.constant 0 : i32
    %c0_i32_0 = arith.constant 0 : i32
    return %arg0, %c0_i32 : i32, i32
  }
}

module attributes {stable_mosaic.version = 11 : i64} {
  func.func @_fused_linear_kernel(%arg0: i32, %arg1: memref<16x32xf32, #tpu.memory_space<vmem>>, %arg2: memref<32x384xbf16, #tpu.memory_space<vmem>>, %arg3: memref<1x384xf32, #tpu.memory_space<vmem>>, %arg4: memref<16x384xf32, #tpu.memory_space<vmem>>) attributes {dimension_semantics = [#tpu.dimension_semantics<parallel>], iteration_bounds = array<i64: 1>, scalar_prefetch = 0 : i64, scratch_operands = 0 : i64, tpu.core_type = #tpu.core_type<tc>, window_params = [{transform_indices = @transform_0, window_bounds = array<i64: 16, 32>}, {pipeline_mode = #tpu.pipeline_mode<synchronous>, transform_indices = @transform_1, window_bounds = array<i64: 32, 384>}, {pipeline_mode = #tpu.pipeline_mode<synchronous>, transform_indices = @transform_2, window_bounds = array<i64: 1, 384>}, {transform_indices = @transform_3, window_bounds = array<i64: 16, 384>}]} {
    %c0 = arith.constant 0 : index
    %c0_0 = arith.constant 0 : index
    %0 = vector.load %arg1[%c0, %c0_0] : memref<16x32xf32, #tpu.memory_space<vmem>>, vector<16x32xf32>
    %c0_1 = arith.constant 0 : index
    %c0_2 = arith.constant 0 : index
    %1 = vector.load %arg2[%c0_1, %c0_2] : memref<32x384xbf16, #tpu.memory_space<vmem>>, vector<32x384xbf16>
    %c0_3 = arith.constant 0 : index
    %c0_4 = arith.constant 0 : index
    %2 = vector.load %arg3[%c0_3, %c0_4] : memref<1x384xf32, #tpu.memory_space<vmem>>, vector<1x384xf32>
    %3 = arith.truncf %0 : vector<16x32xf32> to vector<16x32xbf16>
    %cst = arith.constant dense<0.000000e+00> : vector<16x384xf32>
    %4 = tpu.matmul %3, %1, %cst {dimension_numbers = #tpu.dot_dimension_numbers<[1], [0], [0], [1], [0, 0, 1, 1], [], []>} : vector<16x32xbf16>, vector<32x384xbf16>, vector<16x384xf32> -> vector<16x384xf32>
    %5 = vector.broadcast %2 : vector<1x384xf32> to vector<16x384xf32>
    %6 = arith.addf %4, %5 : vector<16x384xf32>
    %c0_5 = arith.constant 0 : index
    %c0_6 = arith.constant 0 : index
    %7 = vector.load %arg4[%c0_5, %c0_6] : memref<16x384xf32, #tpu.memory_space<vmem>>, vector<16x384xf32>
    tpu.vector_store %arg4[%c0_5, %c0_6], %6 {strides = array<i32>} : memref<16x384xf32, #tpu.memory_space<vmem>>, vector<16x384xf32>,
    return
  }
  func.func @transform_0(%arg0: i32) -> (i32, i32) {
    %c0_i32 = arith.constant 0 : i32
    %c0_i32_0 = arith.constant 0 : i32
    return %arg0, %c0_i32 : i32, i32
  }
  func.func @transform_1(%arg0: i32) -> (i32, i32) {
    %c0_i32 = arith.constant 0 : i32
    %c0_i32_0 = arith.constant 0 : i32
    %c0_i32_1 = arith.constant 0 : i32
    return %c0_i32, %c0_i32_0 : i32, i32
  }
  func.func @transform_2(%arg0: i32) -> (i32, i32) {
    %c0_i32 = arith.constant 0 : i32
    %c0_i32_0 = arith.constant 0 : i32
    %c0_i32_1 = arith.constant 0 : i32
    return %c0_i32, %c0_i32_0 : i32, i32
  }
  func.func @transform_3(%arg0: i32) -> (i32, i32) {
    %c0_i32 = arith.constant 0 : i32
    %c0_i32_0 = arith.constant 0 : i32
    return %arg0, %c0_i32 : i32, i32
  }
}

module attributes {stable_mosaic.version = 11 : i64} {
  func.func @_fused_linear_kernel(%arg0: i32, %arg1: memref<128x16xf32, #tpu.memory_space<vmem>>, %arg2: memref<16x8xbf16, #tpu.memory_space<vmem>>, %arg3: memref<1x8xf32, #tpu.memory_space<vmem>>, %arg4: memref<128x8xbf16, #tpu.memory_space<vmem>>) attributes {dimension_semantics = [#tpu.dimension_semantics<parallel>], iteration_bounds = array<i64: 1>, scalar_prefetch = 0 : i64, scratch_operands = 0 : i64, tpu.core_type = #tpu.core_type<tc>, window_params = [{transform_indices = @transform_0, window_bounds = array<i64: 128, 16>}, {pipeline_mode = #tpu.pipeline_mode<synchronous>, transform_indices = @transform_1, window_bounds = array<i64: 16, 8>}, {pipeline_mode = #tpu.pipeline_mode<synchronous>, transform_indices = @transform_2, window_bounds = array<i64: 1, 8>}, {transform_indices = @transform_3, window_bounds = array<i64: 128, 8>}]} {
    %c0 = arith.constant 0 : index
    %c0_0 = arith.constant 0 : index
    %0 = vector.load %arg1[%c0, %c0_0] : memref<128x16xf32, #tpu.memory_space<vmem>>, vector<128x16xf32>
    %c0_1 = arith.constant 0 : index
    %c0_2 = arith.constant 0 : index
    %1 = vector.load %arg2[%c0_1, %c0_2] : memref<16x8xbf16, #tpu.memory_space<vmem>>, vector<16x8xbf16>
    %c0_3 = arith.constant 0 : index
    %c0_4 = arith.constant 0 : index
    %2 = vector.load %arg3[%c0_3, %c0_4] : memref<1x8xf32, #tpu.memory_space<vmem>>, vector<1x8xf32>
    %3 = arith.truncf %0 : vector<128x16xf32> to vector<128x16xbf16>
    %cst = arith.constant dense<0.000000e+00> : vector<128x8xf32>
    %4 = tpu.matmul %3, %1, %cst {dimension_numbers = #tpu.dot_dimension_numbers<[1], [0], [0], [1], [0, 0, 1, 1], [], []>} : vector<128x16xbf16>, vector<16x8xbf16>, vector<128x8xf32> -> vector<128x8xf32>
    %5 = vector.broadcast %2 : vector<1x8xf32> to vector<128x8xf32>
    %6 = arith.addf %4, %5 : vector<128x8xf32>
    %7 = arith.truncf %6 : vector<128x8xf32> to vector<128x8xbf16>
    %c0_5 = arith.constant 0 : index
    %c0_6 = arith.constant 0 : index
    %8 = vector.load %arg4[%c0_5, %c0_6] : memref<128x8xbf16, #tpu.memory_space<vmem>>, vector<128x8xbf16>
    tpu.vector_store %arg4[%c0_5, %c0_6], %7 {strides = array<i32>} : memref<128x8xbf16, #tpu.memory_space<vmem>>, vector<128x8xbf16>,
    return
  }
  func.func @transform_0(%arg0: i32) -> (i32, i32) {
    %c0_i32 = arith.constant 0 : i32
    %c0_i32_0 = arith.constant 0 : i32
    return %arg0, %c0_i32 : i32, i32
  }
  func.func @transform_1(%arg0: i32) -> (i32, i32) {
    %c0_i32 = arith.constant 0 : i32
    %c0_i32_0 = arith.constant 0 : i32
    %c0_i32_1 = arith.constant 0 : i32
    return %c0_i32, %c0_i32_0 : i32, i32
  }
  func.func @transform_2(%arg0: i32) -> (i32, i32) {
    %c0_i32 = arith.constant 0 : i32
    %c0_i32_0 = arith.constant 0 : i32
    %c0_i32_1 = arith.constant 0 : i32
    return %c0_i32, %c0_i32_0 : i32, i32
  }
  func.func @transform_3(%arg0: i32) -> (i32, i32) {
    %c0_i32 = arith.constant 0 : i32
    %c0_i32_0 = arith.constant 0 : i32
    return %arg0, %c0_i32 : i32, i32
  }
}

module attributes {stable_mosaic.version = 11 : i64} {
  func.func @_ipa_attn_kernel(%arg0: i32, %arg1: i32, %arg2: memref<1x4x8x28xbf16, #tpu.memory_space<vmem>>, %arg3: memref<1x4x8x28xbf16, #tpu.memory_space<vmem>>, %arg4: memref<1x4x8x40xbf16, #tpu.memory_space<vmem>>, %arg5: memref<1x4x1x8xf32, #tpu.memory_space<vmem>>, %arg6: memref<1x4x8x8xbf16, #tpu.memory_space<vmem>>, %arg7: memref<1x8x8x4xbf16, #tpu.memory_space<vmem>>, %arg8: memref<1x8x1xf32, #tpu.memory_space<vmem>>, %arg9: memref<1x1x8xf32, #tpu.memory_space<vmem>>, %arg10: memref<1x4x8x40xf32, #tpu.memory_space<vmem>>, %arg11: memref<1x8x4x4xf32, #tpu.memory_space<vmem>>, %arg12: memref<8x4x8xbf16, #tpu.memory_space<vmem>>) attributes {dimension_semantics = [#tpu.dimension_semantics<parallel>, #tpu.dimension_semantics<parallel>], iteration_bounds = array<i64: 2, 1>, scalar_prefetch = 0 : i64, scratch_operands = 1 : i64, tpu.core_type = #tpu.core_type<tc>, window_params = [{transform_indices = @transform_0, window_bounds = array<i64: 1, 4, 8, 28>}, {transform_indices = @transform_1, window_bounds = array<i64: 1, 4, 8, 28>}, {transform_indices = @transform_2, window_bounds = array<i64: 1, 4, 8, 40>}, {transform_indices = @transform_3, window_bounds = array<i64: 1, 4, 1, 8>}, {transform_indices = @transform_4, window_bounds = array<i64: 1, 4, 8, 8>}, {transform_indices = @transform_5, window_bounds = array<i64: 1, 8, 8, 4>}, {transform_indices = @transform_6, window_bounds = array<i64: 1, 8, 1>}, {transform_indices = @transform_7, window_bounds = array<i64: 1, 1, 8>}, {transform_indices = @transform_8, window_bounds = array<i64: 1, 4, 8, 40>}, {transform_indices = @transform_9, window_bounds = array<i64: 1, 8, 4, 4>}]} {
    %c0 = arith.constant 0 : index
    %c0_0 = arith.constant 0 : index
    %c0_1 = arith.constant 0 : index
    %c0_2 = arith.constant 0 : index
    %0 = vector.load %arg2[%c0, %c0_0, %c0_1, %c0_2] : memref<1x4x8x28xbf16, #tpu.memory_space<vmem>>, vector<1x4x8x28xbf16>
    %1 = vector.shape_cast %0 : vector<1x4x8x28xbf16> to vector<4x8x28xbf16>
    %c0_3 = arith.constant 0 : index
    %c0_4 = arith.constant 0 : index
    %c0_5 = arith.constant 0 : index
    %c0_6 = arith.constant 0 : index
    %2 = vector.load %arg3[%c0_3, %c0_4, %c0_5, %c0_6] : memref<1x4x8x28xbf16, #tpu.memory_space<vmem>>, vector<1x4x8x28xbf16>
    %3 = vector.shape_cast %2 : vector<1x4x8x28xbf16> to vector<4x8x28xbf16>
    "tpu.trace_start"() <{level = 10 : i32, message = "hqc,hkc->hqk"}> : () -> ()
    %cst = arith.constant dense<0.000000e+00> : vector<4x8x8xf32>
    %4 = tpu.matmul %1, %3, %cst {dimension_numbers = #tpu.dot_dimension_numbers<[2], [2], [1], [1], [0, 0, 0, 1, 1, 1], [0], [0]>} : vector<4x8x28xbf16>, vector<4x8x28xbf16>, vector<4x8x8xf32> -> vector<4x8x8xf32>
    "tpu.trace_stop"() : () -> ()
    %c0_7 = arith.constant 0 : index
    %c0_8 = arith.constant 0 : index
    %c0_9 = arith.constant 0 : index
    %c0_10 = arith.constant 0 : index
    %5 = vector.load %arg6[%c0_7, %c0_8, %c0_9, %c0_10] : memref<1x4x8x8xbf16, #tpu.memory_space<vmem>>, vector<1x4x8x8xbf16>
    %6 = vector.shape_cast %5 : vector<1x4x8x8xbf16> to vector<4x8x8xbf16>
    %7 = arith.extf %6 : vector<4x8x8xbf16> to vector<4x8x8xf32>
    %8 = arith.addf %4, %7 : vector<4x8x8xf32>
    %c0_11 = arith.constant 0 : index
    %c0_12 = arith.constant 0 : index
    %c0_13 = arith.constant 0 : index
    %c0_14 = arith.constant 0 : index
    %9 = vector.load %arg5[%c0_11, %c0_12, %c0_13, %c0_14] : memref<1x4x1x8xf32, #tpu.memory_space<vmem>>, vector<1x4x1x8xf32>
    %10 = vector.shape_cast %9 : vector<1x4x1x8xf32> to vector<4x1x8xf32>
    %11 = vector.broadcast %10 : vector<4x1x8xf32> to vector<4x8x8xf32>
    %12 = arith.subf %8, %11 : vector<4x8x8xf32>
    %c0_15 = arith.constant 0 : index
    %c0_16 = arith.constant 0 : index
    %c0_17 = arith.constant 0 : index
    %13 = vector.load %arg8[%c0_15, %c0_16, %c0_17] : memref<1x8x1xf32, #tpu.memory_space<vmem>>, vector<1x8x1xf32>
    %14 = vector.shape_cast %13 : vector<1x8x1xf32> to vector<8x1xf32>
    %c0_18 = arith.constant 0 : index
    %c0_19 = arith.constant 0 : index
    %c0_20 = arith.constant 0 : index
    %15 = vector.load %arg9[%c0_18, %c0_19, %c0_20] : memref<1x1x8xf32, #tpu.memory_space<vmem>>, vector<1x1x8xf32>
    %16 = vector.shape_cast %15 : vector<1x1x8xf32> to vector<1x8xf32>
    %17 = vector.broadcast %14 : vector<8x1xf32> to vector<8x8xf32>
    %18 = vector.broadcast %16 : vector<1x8xf32> to vector<8x8xf32>
    %19 = arith.mulf %17, %18 : vector<8x8xf32>
    %cst_21 = arith.constant 1.000000e+00 : f32
    %20 = vector.broadcast %cst_21 : f32 to vector<8x8xf32>
    %21 = arith.subf %19, %20 : vector<8x8xf32>
    %cst_22 = arith.constant 1.000000e+05 : f32
    %22 = vector.broadcast %cst_22 : f32 to vector<8x8xf32>
    %23 = arith.mulf %22, %21 : vector<8x8xf32>
    %24 = vector.shape_cast %23 : vector<8x8xf32> to vector<1x8x8xf32>
    %25 = vector.broadcast %24 : vector<1x8x8xf32> to vector<4x8x8xf32>
    %26 = arith.addf %12, %25 : vector<4x8x8xf32>
    %cst_23 = arith.constant dense<0xFF800000> : vector<4x8xf32>
    %27 = vector.multi_reduction <maximumf>, %26, %cst_23 [2] : vector<4x8x8xf32> to vector<4x8xf32>
    %28 = vector.shape_cast %27 : vector<4x8xf32> to vector<4x8x1xf32>
    %29 = vector.broadcast %28 : vector<4x8x1xf32> to vector<4x8x8xf32>
    %30 = arith.subf %26, %29 : vector<4x8x8xf32>
    %31 = math.exp %30 : vector<4x8x8xf32>
    %cst_24 = arith.constant dense<0.000000e+00> : vector<4x8xf32>
    %32 = vector.multi_reduction <add>, %31, %cst_24 [2] : vector<4x8x8xf32> to vector<4x8xf32>
    %33 = vector.shape_cast %32 : vector<4x8xf32> to vector<4x8x1xf32>
    %34 = tpu.reciprocal %33 {approx = true} : vector<4x8x1xf32> -> vector<4x8x1xf32>
    %35 = vector.broadcast %34 : vector<4x8x1xf32> to vector<4x8x8xf32>
    %36 = arith.mulf %31, %35 : vector<4x8x8xf32>
    %37 = arith.truncf %36 : vector<4x8x8xf32> to vector<4x8x8xbf16>
    %c0_25 = arith.constant 0 : index
    %c0_26 = arith.constant 0 : index
    %c0_27 = arith.constant 0 : index
    %c0_28 = arith.constant 0 : index
    %38 = vector.load %arg4[%c0_25, %c0_26, %c0_27, %c0_28] : memref<1x4x8x40xbf16, #tpu.memory_space<vmem>>, vector<1x4x8x40xbf16>
    %39 = vector.shape_cast %38 : vector<1x4x8x40xbf16> to vector<4x8x40xbf16>
    "tpu.trace_start"() <{level = 10 : i32, message = "hqk,hkc->hqc"}> : () -> ()
    %cst_29 = arith.constant dense<0.000000e+00> : vector<4x8x40xf32>
    %40 = tpu.matmul %37, %39, %cst_29 {dimension_numbers = #tpu.dot_dimension_numbers<[2], [1], [1], [2], [0, 0, 0, 1, 1, 2], [0], [0]>} : vector<4x8x8xbf16>, vector<4x8x40xbf16>, vector<4x8x40xf32> -> vector<4x8x40xf32>
    "tpu.trace_stop"() : () -> ()
    %c0_30 = arith.constant 0 : index
    %c0_31 = arith.constant 0 : index
    %c0_32 = arith.constant 0 : index
    %c0_33 = arith.constant 0 : index
    %41 = vector.load %arg10[%c0_30, %c0_31, %c0_32, %c0_33] : memref<1x4x8x40xf32, #tpu.memory_space<vmem>>, vector<1x4x8x40xf32>
    %42 = vector.shape_cast %41 : vector<1x4x8x40xf32> to vector<4x8x40xf32>
    %43 = vector.shape_cast %40 : vector<4x8x40xf32> to vector<1x4x8x40xf32>
    tpu.vector_store %arg10[%c0_30, %c0_31, %c0_32, %c0_33], %43 {strides = array<i32>} : memref<1x4x8x40xf32, #tpu.memory_space<vmem>>, vector<1x4x8x40xf32>,
    %44 = vector.extract_strided_slice %37 {offsets = [0, 0, 0], sizes = [1, 8, 8], strides = [1, 1, 1]} : vector<4x8x8xbf16> to vector<1x8x8xbf16>
    %45 = vector.shape_cast %44 : vector<1x8x8xbf16> to vector<8x8xbf16>
    %c0_34 = arith.constant 0 : index
    %c0_35 = arith.constant 0 : index
    %c0_36 = arith.constant 0 : index
    %46 = vector.load %arg12[%c0_34, %c0_35, %c0_36] : memref<8x4x8xbf16, #tpu.memory_space<vmem>>, vector<8x1x8xbf16>
    %47 = vector.shape_cast %46 : vector<8x1x8xbf16> to vector<8x8xbf16>
    %48 = vector.shape_cast %45 : vector<8x8xbf16> to vector<8x1x8xbf16>
    tpu.vector_store %arg12[%c0_34, %c0_35, %c0_36], %48 {strides = array<i32>} : memref<8x4x8xbf16, #tpu.memory_space<vmem>>, vector<8x1x8xbf16>,
    %49 = vector.extract_strided_slice %37 {offsets = [1, 0, 0], sizes = [1, 8, 8], strides = [1, 1, 1]} : vector<4x8x8xbf16> to vector<1x8x8xbf16>
    %50 = vector.shape_cast %49 : vector<1x8x8xbf16> to vector<8x8xbf16>
    %c0_37 = arith.constant 0 : index
    %c1 = arith.constant 1 : index
    %c0_38 = arith.constant 0 : index
    %51 = vector.load %arg12[%c0_37, %c1, %c0_38] : memref<8x4x8xbf16, #tpu.memory_space<vmem>>, vector<8x1x8xbf16>
    %52 = vector.shape_cast %51 : vector<8x1x8xbf16> to vector<8x8xbf16>
    %53 = vector.shape_cast %50 : vector<8x8xbf16> to vector<8x1x8xbf16>
    tpu.vector_store %arg12[%c0_37, %c1, %c0_38], %53 {strides = array<i32>} : memref<8x4x8xbf16, #tpu.memory_space<vmem>>, vector<8x1x8xbf16>,
    %54 = vector.extract_strided_slice %37 {offsets = [2, 0, 0], sizes = [1, 8, 8], strides = [1, 1, 1]} : vector<4x8x8xbf16> to vector<1x8x8xbf16>
    %55 = vector.shape_cast %54 : vector<1x8x8xbf16> to vector<8x8xbf16>
    %c0_39 = arith.constant 0 : index
    %c2 = arith.constant 2 : index
    %c0_40 = arith.constant 0 : index
    %56 = vector.load %arg12[%c0_39, %c2, %c0_40] : memref<8x4x8xbf16, #tpu.memory_space<vmem>>, vector<8x1x8xbf16>
    %57 = vector.shape_cast %56 : vector<8x1x8xbf16> to vector<8x8xbf16>
    %58 = vector.shape_cast %55 : vector<8x8xbf16> to vector<8x1x8xbf16>
    tpu.vector_store %arg12[%c0_39, %c2, %c0_40], %58 {strides = array<i32>} : memref<8x4x8xbf16, #tpu.memory_space<vmem>>, vector<8x1x8xbf16>,
    %59 = vector.extract_strided_slice %37 {offsets = [3, 0, 0], sizes = [1, 8, 8], strides = [1, 1, 1]} : vector<4x8x8xbf16> to vector<1x8x8xbf16>
    %60 = vector.shape_cast %59 : vector<1x8x8xbf16> to vector<8x8xbf16>
    %c0_41 = arith.constant 0 : index
    %c3 = arith.constant 3 : index
    %c0_42 = arith.constant 0 : index
    %61 = vector.load %arg12[%c0_41, %c3, %c0_42] : memref<8x4x8xbf16, #tpu.memory_space<vmem>>, vector<8x1x8xbf16>
    %62 = vector.shape_cast %61 : vector<8x1x8xbf16> to vector<8x8xbf16>
    %63 = vector.shape_cast %60 : vector<8x8xbf16> to vector<8x1x8xbf16>
    tpu.vector_store %arg12[%c0_41, %c3, %c0_42], %63 {strides = array<i32>} : memref<8x4x8xbf16, #tpu.memory_space<vmem>>, vector<8x1x8xbf16>,
    %c0_43 = arith.constant 0 : index
    %c0_44 = arith.constant 0 : index
    %c0_45 = arith.constant 0 : index
    %64 = vector.load %arg12[%c0_43, %c0_44, %c0_45] : memref<8x4x8xbf16, #tpu.memory_space<vmem>>, vector<8x4x8xbf16>
    %c0_46 = arith.constant 0 : index
    %c0_47 = arith.constant 0 : index
    %c0_48 = arith.constant 0 : index
    %c0_49 = arith.constant 0 : index
    %65 = vector.load %arg7[%c0_46, %c0_47, %c0_48, %c0_49] : memref<1x8x8x4xbf16, #tpu.memory_space<vmem>>, vector<1x8x8x4xbf16>
    %66 = vector.shape_cast %65 : vector<1x8x8x4xbf16> to vector<8x8x4xbf16>
    %cst_50 = arith.constant dense<0.000000e+00> : vector<8x4x4xf32>
    %67 = tpu.matmul %64, %66, %cst_50 {dimension_numbers = #tpu.dot_dimension_numbers<[2], [1], [1], [2], [0, 0, 0, 1, 1, 2], [0], [0]>} : vector<8x4x8xbf16>, vector<8x8x4xbf16>, vector<8x4x4xf32> -> vector<8x4x4xf32>
    %c0_51 = arith.constant 0 : index
    %c0_52 = arith.constant 0 : index
    %c0_53 = arith.constant 0 : index
    %c0_54 = arith.constant 0 : index
    %68 = vector.load %arg11[%c0_51, %c0_52, %c0_53, %c0_54] : memref<1x8x4x4xf32, #tpu.memory_space<vmem>>, vector<1x8x4x4xf32>
    %69 = vector.shape_cast %68 : vector<1x8x4x4xf32> to vector<8x4x4xf32>
    %70 = vector.shape_cast %67 : vector<8x4x4xf32> to vector<1x8x4x4xf32>
    tpu.vector_store %arg11[%c0_51, %c0_52, %c0_53, %c0_54], %70 {strides = array<i32>} : memref<1x8x4x4xf32, #tpu.memory_space<vmem>>, vector<1x8x4x4xf32>,
    return
  }
  func.func @transform_0(%arg0: i32, %arg1: i32) -> (i32, i32, i32, i32) {
    %c0_i32 = arith.constant 0 : i32
    %c0_i32_0 = arith.constant 0 : i32
    %c0_i32_1 = arith.constant 0 : i32
    return %arg0, %c0_i32, %arg1, %c0_i32_0 : i32, i32, i32, i32
  }
  func.func @transform_1(%arg0: i32, %arg1: i32) -> (i32, i32, i32, i32) {
    %c0_i32 = arith.constant 0 : i32
    %c0_i32_0 = arith.constant 0 : i32
    %c0_i32_1 = arith.constant 0 : i32
    %c0_i32_2 = arith.constant 0 : i32
    return %arg0, %c0_i32, %c0_i32_0, %c0_i32_1 : i32, i32, i32, i32
  }
  func.func @transform_2(%arg0: i32, %arg1: i32) -> (i32, i32, i32, i32) {
    %c0_i32 = arith.constant 0 : i32
    %c0_i32_0 = arith.constant 0 : i32
    %c0_i32_1 = arith.constant 0 : i32
    %c0_i32_2 = arith.constant 0 : i32
    return %arg0, %c0_i32, %c0_i32_0, %c0_i32_1 : i32, i32, i32, i32
  }
  func.func @transform_3(%arg0: i32, %arg1: i32) -> (i32, i32, i32, i32) {
    %c0_i32 = arith.constant 0 : i32
    %c0_i32_0 = arith.constant 0 : i32
    %c0_i32_1 = arith.constant 0 : i32
    %c0_i32_2 = arith.constant 0 : i32
    return %arg0, %c0_i32, %c0_i32_0, %c0_i32_1 : i32, i32, i32, i32
  }
  func.func @transform_4(%arg0: i32, %arg1: i32) -> (i32, i32, i32, i32) {
    %c0_i32 = arith.constant 0 : i32
    %c0_i32_0 = arith.constant 0 : i32
    %c0_i32_1 = arith.constant 0 : i32
    return %arg0, %c0_i32, %arg1, %c0_i32_0 : i32, i32, i32, i32
  }
  func.func @transform_5(%arg0: i32, %arg1: i32) -> (i32, i32, i32, i32) {
    %c0_i32 = arith.constant 0 : i32
    %c0_i32_0 = arith.constant 0 : i32
    %c0_i32_1 = arith.constant 0 : i32
    return %arg0, %arg1, %c0_i32, %c0_i32_0 : i32, i32, i32, i32
  }
  func.func @transform_6(%arg0: i32, %arg1: i32) -> (i32, i32, i32) {
    %c0_i32 = arith.constant 0 : i32
    %c0_i32_0 = arith.constant 0 : i32
    return %arg0, %arg1, %c0_i32 : i32, i32, i32
  }
  func.func @transform_7(%arg0: i32, %arg1: i32) -> (i32, i32, i32) {
    %c0_i32 = arith.constant 0 : i32
    %c0_i32_0 = arith.constant 0 : i32
    %c0_i32_1 = arith.constant 0 : i32
    return %arg0, %c0_i32, %c0_i32_0 : i32, i32, i32
  }
  func.func @transform_8(%arg0: i32, %arg1: i32) -> (i32, i32, i32, i32) {
    %c0_i32 = arith.constant 0 : i32
    %c0_i32_0 = arith.constant 0 : i32
    %c0_i32_1 = arith.constant 0 : i32
    return %arg0, %c0_i32, %arg1, %c0_i32_0 : i32, i32, i32, i32
  }
  func.func @transform_9(%arg0: i32, %arg1: i32) -> (i32, i32, i32, i32) {
    %c0_i32 = arith.constant 0 : i32
    %c0_i32_0 = arith.constant 0 : i32
    %c0_i32_1 = arith.constant 0 : i32
    return %arg0, %arg1, %c0_i32, %c0_i32_0 : i32, i32, i32, i32
  }
}

module attributes {stable_mosaic.version = 11 : i64} {
  func.func @_fused_linear_kernel(%arg0: i32, %arg1: memref<16x208xf32, #tpu.memory_space<vmem>>, %arg2: memref<208x32xbf16, #tpu.memory_space<vmem>>, %arg3: memref<1x32xf32, #tpu.memory_space<vmem>>, %arg4: memref<16x1xf32, #tpu.memory_space<vmem>>, %arg5: memref<16x32xf32, #tpu.memory_space<vmem>>, %arg6: memref<1x32xf32, #tpu.memory_space<vmem>>, %arg7: memref<1x32xf32, #tpu.memory_space<vmem>>, %arg8: memref<16x32xf32, #tpu.memory_space<vmem>>) attributes {dimension_semantics = [#tpu.dimension_semantics<parallel>], iteration_bounds = array<i64: 1>, scalar_prefetch = 0 : i64, scratch_operands = 0 : i64, tpu.core_type = #tpu.core_type<tc>, window_params = [{transform_indices = @transform_0, window_bounds = array<i64: 16, 208>}, {pipeline_mode = #tpu.pipeline_mode<synchronous>, transform_indices = @transform_1, window_bounds = array<i64: 208, 32>}, {pipeline_mode = #tpu.pipeline_mode<synchronous>, transform_indices = @transform_2, window_bounds = array<i64: 1, 32>}, {transform_indices = @transform_3, window_bounds = array<i64: 16, 1>}, {transform_indices = @transform_4, window_bounds = array<i64: 16, 32>}, {pipeline_mode = #tpu.pipeline_mode<synchronous>, transform_indices = @transform_5, window_bounds = array<i64: 1, 32>}, {pipeline_mode = #tpu.pipeline_mode<synchronous>, transform_indices = @transform_6, window_bounds = array<i64: 1, 32>}, {transform_indices = @transform_7, window_bounds = array<i64: 16, 32>}]} {
    %c0 = arith.constant 0 : index
    %c0_0 = arith.constant 0 : index
    %0 = vector.load %arg1[%c0, %c0_0] : memref<16x208xf32, #tpu.memory_space<vmem>>, vector<16x208xf32>
    %c0_1 = arith.constant 0 : index
    %c0_2 = arith.constant 0 : index
    %1 = vector.load %arg2[%c0_1, %c0_2] : memref<208x32xbf16, #tpu.memory_space<vmem>>, vector<208x32xbf16>
    %c0_3 = arith.constant 0 : index
    %c0_4 = arith.constant 0 : index
    %2 = vector.load %arg3[%c0_3, %c0_4] : memref<1x32xf32, #tpu.memory_space<vmem>>, vector<1x32xf32>
    %3 = arith.truncf %0 : vector<16x208xf32> to vector<16x208xbf16>
    %cst = arith.constant dense<0.000000e+00> : vector<16x32xf32>
    %4 = tpu.matmul %3, %1, %cst {dimension_numbers = #tpu.dot_dimension_numbers<[1], [0], [0], [1], [0, 0, 1, 1], [], []>} : vector<16x208xbf16>, vector<208x32xbf16>, vector<16x32xf32> -> vector<16x32xf32>
    %5 = vector.broadcast %2 : vector<1x32xf32> to vector<16x32xf32>
    %6 = arith.addf %4, %5 : vector<16x32xf32>
    %c0_5 = arith.constant 0 : index
    %c0_6 = arith.constant 0 : index
    %7 = vector.load %arg4[%c0_5, %c0_6] : memref<16x1xf32, #tpu.memory_space<vmem>>, vector<16x1xf32>
    %8 = vector.broadcast %7 : vector<16x1xf32> to vector<16x32xf32>
    %9 = arith.mulf %6, %8 : vector<16x32xf32>
    %c0_7 = arith.constant 0 : index
    %c0_8 = arith.constant 0 : index
    %10 = vector.load %arg5[%c0_7, %c0_8] : memref<16x32xf32, #tpu.memory_space<vmem>>, vector<16x32xf32>
    %11 = arith.addf %9, %10 : vector<16x32xf32>
    %c0_9 = arith.constant 0 : index
    %c0_10 = arith.constant 0 : index
    %12 = vector.load %arg6[%c0_9, %c0_10] : memref<1x32xf32, #tpu.memory_space<vmem>>, vector<1x32xf32>
    %c0_11 = arith.constant 0 : index
    %c0_12 = arith.constant 0 : index
    %13 = vector.load %arg7[%c0_11, %c0_12] : memref<1x32xf32, #tpu.memory_space<vmem>>, vector<1x32xf32>
    %cst_13 = arith.constant dense<0.000000e+00> : vector<16xf32>
    %14 = vector.multi_reduction <add>, %11, %cst_13 [1] : vector<16x32xf32> to vector<16xf32>
    %15 = vector.shape_cast %14 : vector<16xf32> to vector<16x1xf32>
    %cst_14 = arith.constant 3.200000e+01 : f32
    %16 = vector.broadcast %cst_14 : f32 to vector<16x1xf32>
    %17 = arith.divf %15, %16 : vector<16x1xf32>
    %18 = vector.broadcast %17 : vector<16x1xf32> to vector<16x32xf32>
    %19 = arith.subf %11, %18 : vector<16x32xf32>
    %20 = arith.mulf %19, %19 : vector<16x32xf32>
    %cst_15 = arith.constant dense<0.000000e+00> : vector<16xf32>
    %21 = vector.multi_reduction <add>, %20, %cst_15 [1] : vector<16x32xf32> to vector<16xf32>
    %22 = vector.shape_cast %21 : vector<16xf32> to vector<16x1xf32>
    %cst_16 = arith.constant 3.200000e+01 : f32
    %23 = vector.broadcast %cst_16 : f32 to vector<16x1xf32>
    %24 = arith.divf %22, %23 : vector<16x1xf32>
    %cst_17 = arith.constant 9.99999974E-6 : f32
    %25 = vector.broadcast %cst_17 : f32 to vector<16x1xf32>
    %26 = arith.addf %24, %25 : vector<16x1xf32>
    %27 = math.rsqrt %26 : vector<16x1xf32>
    %28 = vector.broadcast %27 : vector<16x1xf32> to vector<16x32xf32>
    %29 = arith.mulf %19, %28 : vector<16x32xf32>
    %30 = vector.broadcast %12 : vector<1x32xf32> to vector<16x32xf32>
    %31 = arith.mulf %29, %30 : vector<16x32xf32>
    %32 = vector.broadcast %13 : vector<1x32xf32> to vector<16x32xf32>
    %33 = arith.addf %31, %32 : vector<16x32xf32>
    %c0_18 = arith.constant 0 : index
    %c0_19 = arith.constant 0 : index
    %34 = vector.load %arg8[%c0_18, %c0_19] : memref<16x32xf32, #tpu.memory_space<vmem>>, vector<16x32xf32>
    tpu.vector_store %arg8[%c0_18, %c0_19], %33 {strides = array<i32>} : memref<16x32xf32, #tpu.memory_space<vmem>>, vector<16x32xf32>,
    return
  }
  func.func @transform_0(%arg0: i32) -> (i32, i32) {
    %c0_i32 = arith.constant 0 : i32
    %c0_i32_0 = arith.constant 0 : i32
    return %arg0, %c0_i32 : i32, i32
  }
  func.func @transform_1(%arg0: i32) -> (i32, i32) {
    %c0_i32 = arith.constant 0 : i32
    %c0_i32_0 = arith.constant 0 : i32
    %c0_i32_1 = arith.constant 0 : i32
    return %c0_i32, %c0_i32_0 : i32, i32
  }
  func.func @transform_2(%arg0: i32) -> (i32, i32) {
    %c0_i32 = arith.constant 0 : i32
    %c0_i32_0 = arith.constant 0 : i32
    %c0_i32_1 = arith.constant 0 : i32
    return %c0_i32, %c0_i32_0 : i32, i32
  }
  func.func @transform_3(%arg0: i32) -> (i32, i32) {
    %c0_i32 = arith.constant 0 : i32
    %c0_i32_0 = arith.constant 0 : i32
    return %arg0, %c0_i32 : i32, i32
  }
  func.func @transform_4(%arg0: i32) -> (i32, i32) {
    %c0_i32 = arith.constant 0 : i32
    %c0_i32_0 = arith.constant 0 : i32
    return %arg0, %c0_i32 : i32, i32
  }
  func.func @transform_5(%arg0: i32) -> (i32, i32) {
    %c0_i32 = arith.constant 0 : i32
    %c0_i32_0 = arith.constant 0 : i32
    %c0_i32_1 = arith.constant 0 : i32
    return %c0_i32, %c0_i32_0 : i32, i32
  }
  func.func @transform_6(%arg0: i32) -> (i32, i32) {
    %c0_i32 = arith.constant 0 : i32
    %c0_i32_0 = arith.constant 0 : i32
    %c0_i32_1 = arith.constant 0 : i32
    return %c0_i32, %c0_i32_0 : i32, i32
  }
  func.func @transform_7(%arg0: i32) -> (i32, i32) {
    %c0_i32 = arith.constant 0 : i32
    %c0_i32_0 = arith.constant 0 : i32
    return %arg0, %c0_i32 : i32, i32
  }
}

module attributes {stable_mosaic.version = 11 : i64} {
  func.func @_fused_linear_kernel(%arg0: i32, %arg1: memref<16x40xf32, #tpu.memory_space<vmem>>, %arg2: memref<40x120xbf16, #tpu.memory_space<vmem>>, %arg3: memref<1x120xf32, #tpu.memory_space<vmem>>, %arg4: memref<16x120xf32, #tpu.memory_space<vmem>>) attributes {dimension_semantics = [#tpu.dimension_semantics<parallel>], iteration_bounds = array<i64: 1>, scalar_prefetch = 0 : i64, scratch_operands = 0 : i64, tpu.core_type = #tpu.core_type<tc>, window_params = [{transform_indices = @transform_0, window_bounds = array<i64: 16, 40>}, {pipeline_mode = #tpu.pipeline_mode<synchronous>, transform_indices = @transform_1, window_bounds = array<i64: 40, 120>}, {pipeline_mode = #tpu.pipeline_mode<synchronous>, transform_indices = @transform_2, window_bounds = array<i64: 1, 120>}, {transform_indices = @transform_3, window_bounds = array<i64: 16, 120>}]} {
    %c0 = arith.constant 0 : index
    %c0_0 = arith.constant 0 : index
    %0 = vector.load %arg1[%c0, %c0_0] : memref<16x40xf32, #tpu.memory_space<vmem>>, vector<16x40xf32>
    %c0_1 = arith.constant 0 : index
    %c0_2 = arith.constant 0 : index
    %1 = vector.load %arg2[%c0_1, %c0_2] : memref<40x120xbf16, #tpu.memory_space<vmem>>, vector<40x120xbf16>
    %c0_3 = arith.constant 0 : index
    %c0_4 = arith.constant 0 : index
    %2 = vector.load %arg3[%c0_3, %c0_4] : memref<1x120xf32, #tpu.memory_space<vmem>>, vector<1x120xf32>
    %3 = arith.truncf %0 : vector<16x40xf32> to vector<16x40xbf16>
    %cst = arith.constant dense<0.000000e+00> : vector<16x120xf32>
    %4 = tpu.matmul %3, %1, %cst {dimension_numbers = #tpu.dot_dimension_numbers<[1], [0], [0], [1], [0, 0, 1, 1], [], []>} : vector<16x40xbf16>, vector<40x120xbf16>, vector<16x120xf32> -> vector<16x120xf32>
    %5 = vector.broadcast %2 : vector<1x120xf32> to vector<16x120xf32>
    %6 = arith.addf %4, %5 : vector<16x120xf32>
    %c0_5 = arith.constant 0 : index
    %c0_6 = arith.constant 0 : index
    %7 = vector.load %arg4[%c0_5, %c0_6] : memref<16x120xf32, #tpu.memory_space<vmem>>, vector<16x120xf32>
    tpu.vector_store %arg4[%c0_5, %c0_6], %6 {strides = array<i32>} : memref<16x120xf32, #tpu.memory_space<vmem>>, vector<16x120xf32>,
    return
  }
  func.func @transform_0(%arg0: i32) -> (i32, i32) {
    %c0_i32 = arith.constant 0 : i32
    %c0_i32_0 = arith.constant 0 : i32
    return %arg0, %c0_i32 : i32, i32
  }
  func.func @transform_1(%arg0: i32) -> (i32, i32) {
    %c0_i32 = arith.constant 0 : i32
    %c0_i32_0 = arith.constant 0 : i32
    %c0_i32_1 = arith.constant 0 : i32
    return %c0_i32, %c0_i32_0 : i32, i32
  }
  func.func @transform_2(%arg0: i32) -> (i32, i32) {
    %c0_i32 = arith.constant 0 : i32
    %c0_i32_0 = arith.constant 0 : i32
    %c0_i32_1 = arith.constant 0 : i32
    return %c0_i32, %c0_i32_0 : i32, i32
  }
  func.func @transform_3(%arg0: i32) -> (i32, i32) {
    %c0_i32 = arith.constant 0 : i32
    %c0_i32_0 = arith.constant 0 : i32
    return %arg0, %c0_i32 : i32, i32
  }
}

module attributes {stable_mosaic.version = 11 : i64} {
  func.func @_mha_kernel(%arg0: i32, %arg1: i32, %arg2: memref<1x1x8x10xf32, #tpu.memory_space<vmem>>, %arg3: memref<1x1x8x10xf32, #tpu.memory_space<vmem>>, %arg4: memref<1x1x8x10xf32, #tpu.memory_space<vmem>>, %arg5: memref<1x1x8xf32, #tpu.memory_space<vmem>>, %arg6: memref<1x1x8x10xf32, #tpu.memory_space<vmem>>) attributes {dimension_semantics = [#tpu.dimension_semantics<parallel>, #tpu.dimension_semantics<parallel>], iteration_bounds = array<i64: 2, 4>, scalar_prefetch = 0 : i64, scratch_operands = 0 : i64, tpu.core_type = #tpu.core_type<tc>, window_params = [{transform_indices = @transform_0, window_bounds = array<i64: 1, 1, 8, 10>}, {transform_indices = @transform_1, window_bounds = array<i64: 1, 1, 8, 10>}, {transform_indices = @transform_2, window_bounds = array<i64: 1, 1, 8, 10>}, {transform_indices = @transform_3, window_bounds = array<i64: 1, 1, 8>}, {transform_indices = @transform_4, window_bounds = array<i64: 1, 1, 8, 10>}]} {
    %c0 = arith.constant 0 : index
    %c0_0 = arith.constant 0 : index
    %c0_1 = arith.constant 0 : index
    %c0_2 = arith.constant 0 : index
    %0 = vector.load %arg2[%c0, %c0_0, %c0_1, %c0_2] : memref<1x1x8x10xf32, #tpu.memory_space<vmem>>, vector<1x1x8x10xf32>
    %1 = vector.shape_cast %0 : vector<1x1x8x10xf32> to vector<8x10xf32>
    %c0_3 = arith.constant 0 : index
    %c0_4 = arith.constant 0 : index
    %c0_5 = arith.constant 0 : index
    %c0_6 = arith.constant 0 : index
    %2 = vector.load %arg3[%c0_3, %c0_4, %c0_5, %c0_6] : memref<1x1x8x10xf32, #tpu.memory_space<vmem>>, vector<1x1x8x10xf32>
    %3 = vector.shape_cast %2 : vector<1x1x8x10xf32> to vector<8x10xf32>
    %c0_7 = arith.constant 0 : index
    %c0_8 = arith.constant 0 : index
    %c0_9 = arith.constant 0 : index
    %c0_10 = arith.constant 0 : index
    %4 = vector.load %arg4[%c0_7, %c0_8, %c0_9, %c0_10] : memref<1x1x8x10xf32, #tpu.memory_space<vmem>>, vector<1x1x8x10xf32>
    %5 = vector.shape_cast %4 : vector<1x1x8x10xf32> to vector<8x10xf32>
    %6 = arith.truncf %1 : vector<8x10xf32> to vector<8x10xbf16>
    %7 = arith.truncf %3 : vector<8x10xf32> to vector<8x10xbf16>
    %cst = arith.constant dense<0.000000e+00> : vector<8x8xf32>
    %8 = tpu.matmul %6, %7, %cst {dimension_numbers = #tpu.dot_dimension_numbers<[1], [1], [0], [0], [0, 0, 1, 0], [], []>} : vector<8x10xbf16>, vector<8x10xbf16>, vector<8x8xf32> -> vector<8x8xf32>
    %cst_11 = arith.constant 0.316227764 : f32
    %9 = vector.broadcast %cst_11 : f32 to vector<8x8xf32>
    %10 = arith.mulf %8, %9 : vector<8x8xf32>
    %c0_12 = arith.constant 0 : index
    %c0_13 = arith.constant 0 : index
    %c0_14 = arith.constant 0 : index
    %11 = vector.load %arg5[%c0_12, %c0_13, %c0_14] : memref<1x1x8xf32, #tpu.memory_space<vmem>>, vector<1x1x8xf32>
    %12 = vector.shape_cast %11 : vector<1x1x8xf32> to vector<1x8xf32>
    %13 = vector.broadcast %12 : vector<1x8xf32> to vector<8x8xf32>
    %14 = arith.addf %10, %13 : vector<8x8xf32>
    %cst_15 = arith.constant dense<0xFF800000> : vector<8xf32>
    %15 = vector.multi_reduction <maximumf>, %14, %cst_15 [1] : vector<8x8xf32> to vector<8xf32>
    %16 = vector.shape_cast %15 : vector<8xf32> to vector<8x1xf32>
    %17 = vector.broadcast %16 : vector<8x1xf32> to vector<8x8xf32>
    %18 = arith.subf %14, %17 : vector<8x8xf32>
    %19 = math.exp %18 : vector<8x8xf32>
    %cst_16 = arith.constant dense<0.000000e+00> : vector<8xf32>
    %20 = vector.multi_reduction <add>, %19, %cst_16 [1] : vector<8x8xf32> to vector<8xf32>
    %21 = vector.shape_cast %20 : vector<8xf32> to vector<8x1xf32>
    %22 = tpu.reciprocal %21 {approx = true} : vector<8x1xf32> -> vector<8x1xf32>
    %23 = vector.broadcast %22 : vector<8x1xf32> to vector<8x8xf32>
    %24 = arith.mulf %19, %23 : vector<8x8xf32>
    %25 = arith.truncf %24 : vector<8x8xf32> to vector<8x8xbf16>
    %26 = arith.truncf %5 : vector<8x10xf32> to vector<8x10xbf16>
    %cst_17 = arith.constant dense<0.000000e+00> : vector<8x10xf32>
    %27 = tpu.matmul %25, %26, %cst_17 {dimension_numbers = #tpu.dot_dimension_numbers<[1], [0], [0], [1], [0, 0, 1, 1], [], []>} : vector<8x8xbf16>, vector<8x10xbf16>, vector<8x10xf32> -> vector<8x10xf32>
    %c0_18 = arith.constant 0 : index
    %c0_19 = arith.constant 0 : index
    %c0_20 = arith.constant 0 : index
    %c0_21 = arith.constant 0 : index
    %28 = vector.load %arg6[%c0_18, %c0_19, %c0_20, %c0_21] : memref<1x1x8x10xf32, #tpu.memory_space<vmem>>, vector<1x1x8x10xf32>
    %29 = vector.shape_cast %28 : vector<1x1x8x10xf32> to vector<8x10xf32>
    %30 = vector.shape_cast %27 : vector<8x10xf32> to vector<1x1x8x10xf32>
    tpu.vector_store %arg6[%c0_18, %c0_19, %c0_20, %c0_21], %30 {strides = array<i32>} : memref<1x1x8x10xf32, #tpu.memory_space<vmem>>, vector<1x1x8x10xf32>,
    return
  }
  func.func @transform_0(%arg0: i32, %arg1: i32) -> (i32, i32, i32, i32) {
    %c0_i32 = arith.constant 0 : i32
    %c0_i32_0 = arith.constant 0 : i32
    %c0_i32_1 = arith.constant 0 : i32
    return %arg0, %arg1, %c0_i32, %c0_i32_0 : i32, i32, i32, i32
  }
  func.func @transform_1(%arg0: i32, %arg1: i32) -> (i32, i32, i32, i32) {
    %c0_i32 = arith.constant 0 : i32
    %c0_i32_0 = arith.constant 0 : i32
    %c0_i32_1 = arith.constant 0 : i32
    return %arg0, %arg1, %c0_i32, %c0_i32_0 : i32, i32, i32, i32
  }
  func.func @transform_2(%arg0: i32, %arg1: i32) -> (i32, i32, i32, i32) {
    %c0_i32 = arith.constant 0 : i32
    %c0_i32_0 = arith.constant 0 : i32
    %c0_i32_1 = arith.constant 0 : i32
    return %arg0, %arg1, %c0_i32, %c0_i32_0 : i32, i32, i32, i32
  }
  func.func @transform_3(%arg0: i32, %arg1: i32) -> (i32, i32, i32) {
    %c0_i32 = arith.constant 0 : i32
    %c0_i32_0 = arith.constant 0 : i32
    %c0_i32_1 = arith.constant 0 : i32
    return %arg0, %c0_i32, %c0_i32_0 : i32, i32, i32
  }
  func.func @transform_4(%arg0: i32, %arg1: i32) -> (i32, i32, i32, i32) {
    %c0_i32 = arith.constant 0 : i32
    %c0_i32_0 = arith.constant 0 : i32
    %c0_i32_1 = arith.constant 0 : i32
    return %arg0, %arg1, %c0_i32, %c0_i32_0 : i32, i32, i32, i32
  }
}

module attributes {stable_mosaic.version = 11 : i64} {
  func.func @_fused_linear_kernel(%arg0: i32, %arg1: memref<16x40xf32, #tpu.memory_space<vmem>>, %arg2: memref<40x40xbf16, #tpu.memory_space<vmem>>, %arg3: memref<1x40xf32, #tpu.memory_space<vmem>>, %arg4: memref<16x40xf32, #tpu.memory_space<vmem>>) attributes {dimension_semantics = [#tpu.dimension_semantics<parallel>], iteration_bounds = array<i64: 1>, scalar_prefetch = 0 : i64, scratch_operands = 0 : i64, tpu.core_type = #tpu.core_type<tc>, window_params = [{transform_indices = @transform_0, window_bounds = array<i64: 16, 40>}, {pipeline_mode = #tpu.pipeline_mode<synchronous>, transform_indices = @transform_1, window_bounds = array<i64: 40, 40>}, {pipeline_mode = #tpu.pipeline_mode<synchronous>, transform_indices = @transform_2, window_bounds = array<i64: 1, 40>}, {transform_indices = @transform_3, window_bounds = array<i64: 16, 40>}]} {
    %c0 = arith.constant 0 : index
    %c0_0 = arith.constant 0 : index
    %0 = vector.load %arg1[%c0, %c0_0] : memref<16x40xf32, #tpu.memory_space<vmem>>, vector<16x40xf32>
    %c0_1 = arith.constant 0 : index
    %c0_2 = arith.constant 0 : index
    %1 = vector.load %arg2[%c0_1, %c0_2] : memref<40x40xbf16, #tpu.memory_space<vmem>>, vector<40x40xbf16>
    %c0_3 = arith.constant 0 : index
    %c0_4 = arith.constant 0 : index
    %2 = vector.load %arg3[%c0_3, %c0_4] : memref<1x40xf32, #tpu.memory_space<vmem>>, vector<1x40xf32>
    %3 = arith.truncf %0 : vector<16x40xf32> to vector<16x40xbf16>
    %cst = arith.constant dense<0.000000e+00> : vector<16x40xf32>
    %4 = tpu.matmul %3, %1, %cst {dimension_numbers = #tpu.dot_dimension_numbers<[1], [0], [0], [1], [0, 0, 1, 1], [], []>} : vector<16x40xbf16>, vector<40x40xbf16>, vector<16x40xf32> -> vector<16x40xf32>
    %5 = vector.broadcast %2 : vector<1x40xf32> to vector<16x40xf32>
    %6 = arith.addf %4, %5 : vector<16x40xf32>
    %cst_5 = arith.constant 0.000000e+00 : f32
    %7 = vector.broadcast %cst_5 : f32 to vector<16x40xf32>
    %8 = arith.maximumf %6, %7 : vector<16x40xf32>
    %c0_6 = arith.constant 0 : index
    %c0_7 = arith.constant 0 : index
    %9 = vector.load %arg4[%c0_6, %c0_7] : memref<16x40xf32, #tpu.memory_space<vmem>>, vector<16x40xf32>
    tpu.vector_store %arg4[%c0_6, %c0_7], %8 {strides = array<i32>} : memref<16x40xf32, #tpu.memory_space<vmem>>, vector<16x40xf32>,
    return
  }
  func.func @transform_0(%arg0: i32) -> (i32, i32) {
    %c0_i32 = arith.constant 0 : i32
    %c0_i32_0 = arith.constant 0 : i32
    return %arg0, %c0_i32 : i32, i32
  }
  func.func @transform_1(%arg0: i32) -> (i32, i32) {
    %c0_i32 = arith.constant 0 : i32
    %c0_i32_0 = arith.constant 0 : i32
    %c0_i32_1 = arith.constant 0 : i32
    return %c0_i32, %c0_i32_0 : i32, i32
  }
  func.func @transform_2(%arg0: i32) -> (i32, i32) {
    %c0_i32 = arith.constant 0 : i32
    %c0_i32_0 = arith.constant 0 : i32
    %c0_i32_1 = arith.constant 0 : i32
    return %c0_i32, %c0_i32_0 : i32, i32
  }
  func.func @transform_3(%arg0: i32) -> (i32, i32) {
    %c0_i32 = arith.constant 0 : i32
    %c0_i32_0 = arith.constant 0 : i32
    return %arg0, %c0_i32 : i32, i32
  }
}

module attributes {stable_mosaic.version = 11 : i64} {
  func.func @_fused_linear_kernel(%arg0: i32, %arg1: memref<16x40xf32, #tpu.memory_space<vmem>>, %arg2: memref<40x40xbf16, #tpu.memory_space<vmem>>, %arg3: memref<1x40xf32, #tpu.memory_space<vmem>>, %arg4: memref<16x40xf32, #tpu.memory_space<vmem>>, %arg5: memref<1x40xf32, #tpu.memory_space<vmem>>, %arg6: memref<1x40xf32, #tpu.memory_space<vmem>>, %arg7: memref<16x40xf32, #tpu.memory_space<vmem>>) attributes {dimension_semantics = [#tpu.dimension_semantics<parallel>], iteration_bounds = array<i64: 1>, scalar_prefetch = 0 : i64, scratch_operands = 0 : i64, tpu.core_type = #tpu.core_type<tc>, window_params = [{transform_indices = @transform_0, window_bounds = array<i64: 16, 40>}, {pipeline_mode = #tpu.pipeline_mode<synchronous>, transform_indices = @transform_1, window_bounds = array<i64: 40, 40>}, {pipeline_mode = #tpu.pipeline_mode<synchronous>, transform_indices = @transform_2, window_bounds = array<i64: 1, 40>}, {transform_indices = @transform_3, window_bounds = array<i64: 16, 40>}, {pipeline_mode = #tpu.pipeline_mode<synchronous>, transform_indices = @transform_4, window_bounds = array<i64: 1, 40>}, {pipeline_mode = #tpu.pipeline_mode<synchronous>, transform_indices = @transform_5, window_bounds = array<i64: 1, 40>}, {transform_indices = @transform_6, window_bounds = array<i64: 16, 40>}]} {
    %c0 = arith.constant 0 : index
    %c0_0 = arith.constant 0 : index
    %0 = vector.load %arg1[%c0, %c0_0] : memref<16x40xf32, #tpu.memory_space<vmem>>, vector<16x40xf32>
    %c0_1 = arith.constant 0 : index
    %c0_2 = arith.constant 0 : index
    %1 = vector.load %arg2[%c0_1, %c0_2] : memref<40x40xbf16, #tpu.memory_space<vmem>>, vector<40x40xbf16>
    %c0_3 = arith.constant 0 : index
    %c0_4 = arith.constant 0 : index
    %2 = vector.load %arg3[%c0_3, %c0_4] : memref<1x40xf32, #tpu.memory_space<vmem>>, vector<1x40xf32>
    %3 = arith.truncf %0 : vector<16x40xf32> to vector<16x40xbf16>
    %cst = arith.constant dense<0.000000e+00> : vector<16x40xf32>
    %4 = tpu.matmul %3, %1, %cst {dimension_numbers = #tpu.dot_dimension_numbers<[1], [0], [0], [1], [0, 0, 1, 1], [], []>} : vector<16x40xbf16>, vector<40x40xbf16>, vector<16x40xf32> -> vector<16x40xf32>
    %5 = vector.broadcast %2 : vector<1x40xf32> to vector<16x40xf32>
    %6 = arith.addf %4, %5 : vector<16x40xf32>
    %c0_5 = arith.constant 0 : index
    %c0_6 = arith.constant 0 : index
    %7 = vector.load %arg4[%c0_5, %c0_6] : memref<16x40xf32, #tpu.memory_space<vmem>>, vector<16x40xf32>
    %8 = arith.addf %6, %7 : vector<16x40xf32>
    %c0_7 = arith.constant 0 : index
    %c0_8 = arith.constant 0 : index
    %9 = vector.load %arg5[%c0_7, %c0_8] : memref<1x40xf32, #tpu.memory_space<vmem>>, vector<1x40xf32>
    %c0_9 = arith.constant 0 : index
    %c0_10 = arith.constant 0 : index
    %10 = vector.load %arg6[%c0_9, %c0_10] : memref<1x40xf32, #tpu.memory_space<vmem>>, vector<1x40xf32>
    %cst_11 = arith.constant dense<0.000000e+00> : vector<16xf32>
    %11 = vector.multi_reduction <add>, %8, %cst_11 [1] : vector<16x40xf32> to vector<16xf32>
    %12 = vector.shape_cast %11 : vector<16xf32> to vector<16x1xf32>
    %cst_12 = arith.constant 4.000000e+01 : f32
    %13 = vector.broadcast %cst_12 : f32 to vector<16x1xf32>
    %14 = arith.divf %12, %13 : vector<16x1xf32>
    %15 = vector.broadcast %14 : vector<16x1xf32> to vector<16x40xf32>
    %16 = arith.subf %8, %15 : vector<16x40xf32>
    %17 = arith.mulf %16, %16 : vector<16x40xf32>
    %cst_13 = arith.constant dense<0.000000e+00> : vector<16xf32>
    %18 = vector.multi_reduction <add>, %17, %cst_13 [1] : vector<16x40xf32> to vector<16xf32>
    %19 = vector.shape_cast %18 : vector<16xf32> to vector<16x1xf32>
    %cst_14 = arith.constant 4.000000e+01 : f32
    %20 = vector.broadcast %cst_14 : f32 to vector<16x1xf32>
    %21 = arith.divf %19, %20 : vector<16x1xf32>
    %cst_15 = arith.constant 9.99999974E-6 : f32
    %22 = vector.broadcast %cst_15 : f32 to vector<16x1xf32>
    %23 = arith.addf %21, %22 : vector<16x1xf32>
    %24 = math.rsqrt %23 : vector<16x1xf32>
    %25 = vector.broadcast %24 : vector<16x1xf32> to vector<16x40xf32>
    %26 = arith.mulf %16, %25 : vector<16x40xf32>
    %27 = vector.broadcast %9 : vector<1x40xf32> to vector<16x40xf32>
    %28 = arith.mulf %26, %27 : vector<16x40xf32>
    %29 = vector.broadcast %10 : vector<1x40xf32> to vector<16x40xf32>
    %30 = arith.addf %28, %29 : vector<16x40xf32>
    %c0_16 = arith.constant 0 : index
    %c0_17 = arith.constant 0 : index
    %31 = vector.load %arg7[%c0_16, %c0_17] : memref<16x40xf32, #tpu.memory_space<vmem>>, vector<16x40xf32>
    tpu.vector_store %arg7[%c0_16, %c0_17], %30 {strides = array<i32>} : memref<16x40xf32, #tpu.memory_space<vmem>>, vector<16x40xf32>,
    return
  }
  func.func @transform_0(%arg0: i32) -> (i32, i32) {
    %c0_i32 = arith.constant 0 : i32
    %c0_i32_0 = arith.constant 0 : i32
    return %arg0, %c0_i32 : i32, i32
  }
  func.func @transform_1(%arg0: i32) -> (i32, i32) {
    %c0_i32 = arith.constant 0 : i32
    %c0_i32_0 = arith.constant 0 : i32
    %c0_i32_1 = arith.constant 0 : i32
    return %c0_i32, %c0_i32_0 : i32, i32
  }
  func.func @transform_2(%arg0: i32) -> (i32, i32) {
    %c0_i32 = arith.constant 0 : i32
    %c0_i32_0 = arith.constant 0 : i32
    %c0_i32_1 = arith.constant 0 : i32
    return %c0_i32, %c0_i32_0 : i32, i32
  }
  func.func @transform_3(%arg0: i32) -> (i32, i32) {
    %c0_i32 = arith.constant 0 : i32
    %c0_i32_0 = arith.constant 0 : i32
    return %arg0, %c0_i32 : i32, i32
  }
  func.func @transform_4(%arg0: i32) -> (i32, i32) {
    %c0_i32 = arith.constant 0 : i32
    %c0_i32_0 = arith.constant 0 : i32
    %c0_i32_1 = arith.constant 0 : i32
    return %c0_i32, %c0_i32_0 : i32, i32
  }
  func.func @transform_5(%arg0: i32) -> (i32, i32) {
    %c0_i32 = arith.constant 0 : i32
    %c0_i32_0 = arith.constant 0 : i32
    %c0_i32_1 = arith.constant 0 : i32
    return %c0_i32, %c0_i32_0 : i32, i32
  }
  func.func @transform_6(%arg0: i32) -> (i32, i32) {
    %c0_i32 = arith.constant 0 : i32
    %c0_i32_0 = arith.constant 0 : i32
    return %arg0, %c0_i32 : i32, i32
  }
}

module attributes {stable_mosaic.version = 11 : i64} {
  func.func @_fused_linear_kernel(%arg0: i32, %arg1: memref<16x40xf32, #tpu.memory_space<vmem>>, %arg2: memref<40x32xbf16, #tpu.memory_space<vmem>>, %arg3: memref<1x32xf32, #tpu.memory_space<vmem>>, %arg4: memref<16x32xf32, #tpu.memory_space<vmem>>, %arg5: memref<16x32xf32, #tpu.memory_space<vmem>>) attributes {dimension_semantics = [#tpu.dimension_semantics<parallel>], iteration_bounds = array<i64: 1>, scalar_prefetch = 0 : i64, scratch_operands = 0 : i64, tpu.core_type = #tpu.core_type<tc>, window_params = [{transform_indices = @transform_0, window_bounds = array<i64: 16, 40>}, {pipeline_mode = #tpu.pipeline_mode<synchronous>, transform_indices = @transform_1, window_bounds = array<i64: 40, 32>}, {pipeline_mode = #tpu.pipeline_mode<synchronous>, transform_indices = @transform_2, window_bounds = array<i64: 1, 32>}, {transform_indices = @transform_3, window_bounds = array<i64: 16, 32>}, {transform_indices = @transform_4, window_bounds = array<i64: 16, 32>}]} {
    %c0 = arith.constant 0 : index
    %c0_0 = arith.constant 0 : index
    %0 = vector.load %arg1[%c0, %c0_0] : memref<16x40xf32, #tpu.memory_space<vmem>>, vector<16x40xf32>
    %c0_1 = arith.constant 0 : index
    %c0_2 = arith.constant 0 : index
    %1 = vector.load %arg2[%c0_1, %c0_2] : memref<40x32xbf16, #tpu.memory_space<vmem>>, vector<40x32xbf16>
    %c0_3 = arith.constant 0 : index
    %c0_4 = arith.constant 0 : index
    %2 = vector.load %arg3[%c0_3, %c0_4] : memref<1x32xf32, #tpu.memory_space<vmem>>, vector<1x32xf32>
    %3 = arith.truncf %0 : vector<16x40xf32> to vector<16x40xbf16>
    %cst = arith.constant dense<0.000000e+00> : vector<16x32xf32>
    %4 = tpu.matmul %3, %1, %cst {dimension_numbers = #tpu.dot_dimension_numbers<[1], [0], [0], [1], [0, 0, 1, 1], [], []>} : vector<16x40xbf16>, vector<40x32xbf16>, vector<16x32xf32> -> vector<16x32xf32>
    %5 = vector.broadcast %2 : vector<1x32xf32> to vector<16x32xf32>
    %6 = arith.addf %4, %5 : vector<16x32xf32>
    %c0_5 = arith.constant 0 : index
    %c0_6 = arith.constant 0 : index
    %7 = vector.load %arg4[%c0_5, %c0_6] : memref<16x32xf32, #tpu.memory_space<vmem>>, vector<16x32xf32>
    %8 = arith.addf %6, %7 : vector<16x32xf32>
    %c0_7 = arith.constant 0 : index
    %c0_8 = arith.constant 0 : index
    %9 = vector.load %arg5[%c0_7, %c0_8] : memref<16x32xf32, #tpu.memory_space<vmem>>, vector<16x32xf32>
    tpu.vector_store %arg5[%c0_7, %c0_8], %8 {strides = array<i32>} : memref<16x32xf32, #tpu.memory_space<vmem>>, vector<16x32xf32>,
    return
  }
  func.func @transform_0(%arg0: i32) -> (i32, i32) {
    %c0_i32 = arith.constant 0 : i32
    %c0_i32_0 = arith.constant 0 : i32
    return %arg0, %c0_i32 : i32, i32
  }
  func.func @transform_1(%arg0: i32) -> (i32, i32) {
    %c0_i32 = arith.constant 0 : i32
    %c0_i32_0 = arith.constant 0 : i32
    %c0_i32_1 = arith.constant 0 : i32
    return %c0_i32, %c0_i32_0 : i32, i32
  }
  func.func @transform_2(%arg0: i32) -> (i32, i32) {
    %c0_i32 = arith.constant 0 : i32
    %c0_i32_0 = arith.constant 0 : i32
    %c0_i32_1 = arith.constant 0 : i32
    return %c0_i32, %c0_i32_0 : i32, i32
  }
  func.func @transform_3(%arg0: i32) -> (i32, i32) {
    %c0_i32 = arith.constant 0 : i32
    %c0_i32_0 = arith.constant 0 : i32
    return %arg0, %c0_i32 : i32, i32
  }
  func.func @transform_4(%arg0: i32) -> (i32, i32) {
    %c0_i32 = arith.constant 0 : i32
    %c0_i32_0 = arith.constant 0 : i32
    return %arg0, %c0_i32 : i32, i32
  }
}

module attributes {stable_mosaic.version = 11 : i64} {
  func.func @_node_transition_kernel(%arg0: i32, %arg1: memref<16x32xf32, #tpu.memory_space<vmem>>, %arg2: memref<32x32xbf16, #tpu.memory_space<vmem>>, %arg3: memref<1x32xf32, #tpu.memory_space<vmem>>, %arg4: memref<32x32xbf16, #tpu.memory_space<vmem>>, %arg5: memref<1x32xf32, #tpu.memory_space<vmem>>, %arg6: memref<32x32xbf16, #tpu.memory_space<vmem>>, %arg7: memref<1x32xf32, #tpu.memory_space<vmem>>, %arg8: memref<1x32xf32, #tpu.memory_space<vmem>>, %arg9: memref<1x32xf32, #tpu.memory_space<vmem>>, %arg10: memref<16x1xf32, #tpu.memory_space<vmem>>, %arg11: memref<16x32xf32, #tpu.memory_space<vmem>>) attributes {dimension_semantics = [#tpu.dimension_semantics<parallel>], iteration_bounds = array<i64: 1>, scalar_prefetch = 0 : i64, scratch_operands = 0 : i64, tpu.core_type = #tpu.core_type<tc>, window_params = [{transform_indices = @transform_0, window_bounds = array<i64: 16, 32>}, {pipeline_mode = #tpu.pipeline_mode<synchronous>, transform_indices = @transform_1, window_bounds = array<i64: 32, 32>}, {pipeline_mode = #tpu.pipeline_mode<synchronous>, transform_indices = @transform_2, window_bounds = array<i64: 1, 32>}, {pipeline_mode = #tpu.pipeline_mode<synchronous>, transform_indices = @transform_3, window_bounds = array<i64: 32, 32>}, {pipeline_mode = #tpu.pipeline_mode<synchronous>, transform_indices = @transform_4, window_bounds = array<i64: 1, 32>}, {pipeline_mode = #tpu.pipeline_mode<synchronous>, transform_indices = @transform_5, window_bounds = array<i64: 32, 32>}, {pipeline_mode = #tpu.pipeline_mode<synchronous>, transform_indices = @transform_6, window_bounds = array<i64: 1, 32>}, {pipeline_mode = #tpu.pipeline_mode<synchronous>, transform_indices = @transform_7, window_bounds = array<i64: 1, 32>}, {pipeline_mode = #tpu.pipeline_mode<synchronous>, transform_indices = @transform_8, window_bounds = array<i64: 1, 32>}, {transform_indices = @transform_9, window_bounds = array<i64: 16, 1>}, {transform_indices = @transform_10, window_bounds = array<i64: 16, 32>}]} {
    %c0 = arith.constant 0 : index
    %c0_0 = arith.constant 0 : index
    %0 = vector.load %arg1[%c0, %c0_0] : memref<16x32xf32, #tpu.memory_space<vmem>>, vector<16x32xf32>
    %c0_1 = arith.constant 0 : index
    %c0_2 = arith.constant 0 : index
    %1 = vector.load %arg2[%c0_1, %c0_2] : memref<32x32xbf16, #tpu.memory_space<vmem>>, vector<32x32xbf16>
    %2 = arith.truncf %0 : vector<16x32xf32> to vector<16x32xbf16>
    %cst = arith.constant dense<0.000000e+00> : vector<16x32xf32>
    %3 = tpu.matmul %2, %1, %cst {dimension_numbers = #tpu.dot_dimension_numbers<[1], [0], [0], [1], [0, 0, 1, 1], [], []>} : vector<16x32xbf16>, vector<32x32xbf16>, vector<16x32xf32> -> vector<16x32xf32>
    %c0_3 = arith.constant 0 : index
    %c0_4 = arith.constant 0 : index
    %4 = vector.load %arg3[%c0_3, %c0_4] : memref<1x32xf32, #tpu.memory_space<vmem>>, vector<1x32xf32>
    %5 = vector.broadcast %4 : vector<1x32xf32> to vector<16x32xf32>
    %6 = arith.addf %3, %5 : vector<16x32xf32>
    %cst_5 = arith.constant 0.000000e+00 : f32
    %7 = vector.broadcast %cst_5 : f32 to vector<16x32xf32>
    %8 = arith.maximumf %6, %7 : vector<16x32xf32>
    %c0_6 = arith.constant 0 : index
    %c0_7 = arith.constant 0 : index
    %9 = vector.load %arg4[%c0_6, %c0_7] : memref<32x32xbf16, #tpu.memory_space<vmem>>, vector<32x32xbf16>
    %10 = arith.truncf %8 : vector<16x32xf32> to vector<16x32xbf16>
    %cst_8 = arith.constant dense<0.000000e+00> : vector<16x32xf32>
    %11 = tpu.matmul %10, %9, %cst_8 {dimension_numbers = #tpu.dot_dimension_numbers<[1], [0], [0], [1], [0, 0, 1, 1], [], []>} : vector<16x32xbf16>, vector<32x32xbf16>, vector<16x32xf32> -> vector<16x32xf32>
    %c0_9 = arith.constant 0 : index
    %c0_10 = arith.constant 0 : index
    %12 = vector.load %arg5[%c0_9, %c0_10] : memref<1x32xf32, #tpu.memory_space<vmem>>, vector<1x32xf32>
    %13 = vector.broadcast %12 : vector<1x32xf32> to vector<16x32xf32>
    %14 = arith.addf %11, %13 : vector<16x32xf32>
    %cst_11 = arith.constant 0.000000e+00 : f32
    %15 = vector.broadcast %cst_11 : f32 to vector<16x32xf32>
    %16 = arith.maximumf %14, %15 : vector<16x32xf32>
    %c0_12 = arith.constant 0 : index
    %c0_13 = arith.constant 0 : index
    %17 = vector.load %arg6[%c0_12, %c0_13] : memref<32x32xbf16, #tpu.memory_space<vmem>>, vector<32x32xbf16>
    %18 = arith.truncf %16 : vector<16x32xf32> to vector<16x32xbf16>
    %cst_14 = arith.constant dense<0.000000e+00> : vector<16x32xf32>
    %19 = tpu.matmul %18, %17, %cst_14 {dimension_numbers = #tpu.dot_dimension_numbers<[1], [0], [0], [1], [0, 0, 1, 1], [], []>} : vector<16x32xbf16>, vector<32x32xbf16>, vector<16x32xf32> -> vector<16x32xf32>
    %c0_15 = arith.constant 0 : index
    %c0_16 = arith.constant 0 : index
    %20 = vector.load %arg7[%c0_15, %c0_16] : memref<1x32xf32, #tpu.memory_space<vmem>>, vector<1x32xf32>
    %21 = vector.broadcast %20 : vector<1x32xf32> to vector<16x32xf32>
    %22 = arith.addf %19, %21 : vector<16x32xf32>
    %23 = arith.addf %22, %0 : vector<16x32xf32>
    %cst_17 = arith.constant dense<0.000000e+00> : vector<16xf32>
    %24 = vector.multi_reduction <add>, %23, %cst_17 [1] : vector<16x32xf32> to vector<16xf32>
    %25 = vector.shape_cast %24 : vector<16xf32> to vector<16x1xf32>
    %cst_18 = arith.constant 3.200000e+01 : f32
    %26 = vector.broadcast %cst_18 : f32 to vector<16x1xf32>
    %27 = arith.divf %25, %26 : vector<16x1xf32>
    %28 = vector.broadcast %27 : vector<16x1xf32> to vector<16x32xf32>
    %29 = arith.subf %23, %28 : vector<16x32xf32>
    %30 = arith.mulf %29, %29 : vector<16x32xf32>
    %cst_19 = arith.constant dense<0.000000e+00> : vector<16xf32>
    %31 = vector.multi_reduction <add>, %30, %cst_19 [1] : vector<16x32xf32> to vector<16xf32>
    %32 = vector.shape_cast %31 : vector<16xf32> to vector<16x1xf32>
    %cst_20 = arith.constant 3.200000e+01 : f32
    %33 = vector.broadcast %cst_20 : f32 to vector<16x1xf32>
    %34 = arith.divf %32, %33 : vector<16x1xf32>
    %cst_21 = arith.constant 9.99999974E-6 : f32
    %35 = vector.broadcast %cst_21 : f32 to vector<16x1xf32>
    %36 = arith.addf %34, %35 : vector<16x1xf32>
    %37 = math.rsqrt %36 : vector<16x1xf32>
    %38 = vector.broadcast %37 : vector<16x1xf32> to vector<16x32xf32>
    %39 = arith.mulf %29, %38 : vector<16x32xf32>
    %c0_22 = arith.constant 0 : index
    %c0_23 = arith.constant 0 : index
    %40 = vector.load %arg8[%c0_22, %c0_23] : memref<1x32xf32, #tpu.memory_space<vmem>>, vector<1x32xf32>
    %41 = vector.broadcast %40 : vector<1x32xf32> to vector<16x32xf32>
    %42 = arith.mulf %39, %41 : vector<16x32xf32>
    %c0_24 = arith.constant 0 : index
    %c0_25 = arith.constant 0 : index
    %43 = vector.load %arg9[%c0_24, %c0_25] : memref<1x32xf32, #tpu.memory_space<vmem>>, vector<1x32xf32>
    %44 = vector.broadcast %43 : vector<1x32xf32> to vector<16x32xf32>
    %45 = arith.addf %42, %44 : vector<16x32xf32>
    %c0_26 = arith.constant 0 : index
    %c0_27 = arith.constant 0 : index
    %46 = vector.load %arg10[%c0_26, %c0_27] : memref<16x1xf32, #tpu.memory_space<vmem>>, vector<16x1xf32>
    %47 = vector.broadcast %46 : vector<16x1xf32> to vector<16x32xf32>
    %48 = arith.mulf %45, %47 : vector<16x32xf32>
    %c0_28 = arith.constant 0 : index
    %c0_29 = arith.constant 0 : index
    %49 = vector.load %arg11[%c0_28, %c0_29] : memref<16x32xf32, #tpu.memory_space<vmem>>, vector<16x32xf32>
    tpu.vector_store %arg11[%c0_28, %c0_29], %48 {strides = array<i32>} : memref<16x32xf32, #tpu.memory_space<vmem>>, vector<16x32xf32>,
    return
  }
  func.func @transform_0(%arg0: i32) -> (i32, i32) {
    %c0_i32 = arith.constant 0 : i32
    %c0_i32_0 = arith.constant 0 : i32
    return %arg0, %c0_i32 : i32, i32
  }
  func.func @transform_1(%arg0: i32) -> (i32, i32) {
    %c0_i32 = arith.constant 0 : i32
    %c0_i32_0 = arith.constant 0 : i32
    %c0_i32_1 = arith.constant 0 : i32
    return %c0_i32, %c0_i32_0 : i32, i32
  }
  func.func @transform_2(%arg0: i32) -> (i32, i32) {
    %c0_i32 = arith.constant 0 : i32
    %c0_i32_0 = arith.constant 0 : i32
    %c0_i32_1 = arith.constant 0 : i32
    return %c0_i32, %c0_i32_0 : i32, i32
  }
  func.func @transform_3(%arg0: i32) -> (i32, i32) {
    %c0_i32 = arith.constant 0 : i32
    %c0_i32_0 = arith.constant 0 : i32
    %c0_i32_1 = arith.constant 0 : i32
    return %c0_i32, %c0_i32_0 : i32, i32
  }
  func.func @transform_4(%arg0: i32) -> (i32, i32) {
    %c0_i32 = arith.constant 0 : i32
    %c0_i32_0 = arith.constant 0 : i32
    %c0_i32_1 = arith.constant 0 : i32
    return %c0_i32, %c0_i32_0 : i32, i32
  }
  func.func @transform_5(%arg0: i32) -> (i32, i32) {
    %c0_i32 = arith.constant 0 : i32
    %c0_i32_0 = arith.constant 0 : i32
    %c0_i32_1 = arith.constant 0 : i32
    return %c0_i32, %c0_i32_0 : i32, i32
  }
  func.func @transform_6(%arg0: i32) -> (i32, i32) {
    %c0_i32 = arith.constant 0 : i32
    %c0_i32_0 = arith.constant 0 : i32
    %c0_i32_1 = arith.constant 0 : i32
    return %c0_i32, %c0_i32_0 : i32, i32
  }
  func.func @transform_7(%arg0: i32) -> (i32, i32) {
    %c0_i32 = arith.constant 0 : i32
    %c0_i32_0 = arith.constant 0 : i32
    %c0_i32_1 = arith.constant 0 : i32
    return %c0_i32, %c0_i32_0 : i32, i32
  }
  func.func @transform_8(%arg0: i32) -> (i32, i32) {
    %c0_i32 = arith.constant 0 : i32
    %c0_i32_0 = arith.constant 0 : i32
    %c0_i32_1 = arith.constant 0 : i32
    return %c0_i32, %c0_i32_0 : i32, i32
  }
  func.func @transform_9(%arg0: i32) -> (i32, i32) {
    %c0_i32 = arith.constant 0 : i32
    %c0_i32_0 = arith.constant 0 : i32
    return %arg0, %c0_i32 : i32, i32
  }
  func.func @transform_10(%arg0: i32) -> (i32, i32) {
    %c0_i32 = arith.constant 0 : i32
    %c0_i32_0 = arith.constant 0 : i32
    return %arg0, %c0_i32 : i32, i32
  }
}

module attributes {stable_mosaic.version = 11 : i64} {
  func.func @_fused_linear_kernel(%arg0: i32, %arg1: memref<16x32xf32, #tpu.memory_space<vmem>>, %arg2: memref<32x6xbf16, #tpu.memory_space<vmem>>, %arg3: memref<1x6xf32, #tpu.memory_space<vmem>>, %arg4: memref<16x6xf32, #tpu.memory_space<vmem>>) attributes {dimension_semantics = [#tpu.dimension_semantics<parallel>], iteration_bounds = array<i64: 1>, scalar_prefetch = 0 : i64, scratch_operands = 0 : i64, tpu.core_type = #tpu.core_type<tc>, window_params = [{transform_indices = @transform_0, window_bounds = array<i64: 16, 32>}, {pipeline_mode = #tpu.pipeline_mode<synchronous>, transform_indices = @transform_1, window_bounds = array<i64: 32, 6>}, {pipeline_mode = #tpu.pipeline_mode<synchronous>, transform_indices = @transform_2, window_bounds = array<i64: 1, 6>}, {transform_indices = @transform_3, window_bounds = array<i64: 16, 6>}]} {
    %c0 = arith.constant 0 : index
    %c0_0 = arith.constant 0 : index
    %0 = vector.load %arg1[%c0, %c0_0] : memref<16x32xf32, #tpu.memory_space<vmem>>, vector<16x32xf32>
    %c0_1 = arith.constant 0 : index
    %c0_2 = arith.constant 0 : index
    %1 = vector.load %arg2[%c0_1, %c0_2] : memref<32x6xbf16, #tpu.memory_space<vmem>>, vector<32x6xbf16>
    %c0_3 = arith.constant 0 : index
    %c0_4 = arith.constant 0 : index
    %2 = vector.load %arg3[%c0_3, %c0_4] : memref<1x6xf32, #tpu.memory_space<vmem>>, vector<1x6xf32>
    %3 = arith.truncf %0 : vector<16x32xf32> to vector<16x32xbf16>
    %cst = arith.constant dense<0.000000e+00> : vector<16x6xf32>
    %4 = tpu.matmul %3, %1, %cst {dimension_numbers = #tpu.dot_dimension_numbers<[1], [0], [0], [1], [0, 0, 1, 1], [], []>} : vector<16x32xbf16>, vector<32x6xbf16>, vector<16x6xf32> -> vector<16x6xf32>
    %5 = vector.broadcast %2 : vector<1x6xf32> to vector<16x6xf32>
    %6 = arith.addf %4, %5 : vector<16x6xf32>
    %c0_5 = arith.constant 0 : index
    %c0_6 = arith.constant 0 : index
    %7 = vector.load %arg4[%c0_5, %c0_6] : memref<16x6xf32, #tpu.memory_space<vmem>>, vector<16x6xf32>
    tpu.vector_store %arg4[%c0_5, %c0_6], %6 {strides = array<i32>} : memref<16x6xf32, #tpu.memory_space<vmem>>, vector<16x6xf32>,
    return
  }
  func.func @transform_0(%arg0: i32) -> (i32, i32) {
    %c0_i32 = arith.constant 0 : i32
    %c0_i32_0 = arith.constant 0 : i32
    return %arg0, %c0_i32 : i32, i32
  }
  func.func @transform_1(%arg0: i32) -> (i32, i32) {
    %c0_i32 = arith.constant 0 : i32
    %c0_i32_0 = arith.constant 0 : i32
    %c0_i32_1 = arith.constant 0 : i32
    return %c0_i32, %c0_i32_0 : i32, i32
  }
  func.func @transform_2(%arg0: i32) -> (i32, i32) {
    %c0_i32 = arith.constant 0 : i32
    %c0_i32_0 = arith.constant 0 : i32
    %c0_i32_1 = arith.constant 0 : i32
    return %c0_i32, %c0_i32_0 : i32, i32
  }
  func.func @transform_3(%arg0: i32) -> (i32, i32) {
    %c0_i32 = arith.constant 0 : i32
    %c0_i32_0 = arith.constant 0 : i32
    return %arg0, %c0_i32 : i32, i32
  }
}

module attributes {stable_mosaic.version = 11 : i64} {
  func.func @_fused_linear_kernel(%arg0: i32, %arg1: memref<16x32xf32, #tpu.memory_space<vmem>>, %arg2: memref<32x16xbf16, #tpu.memory_space<vmem>>, %arg3: memref<1x16xf32, #tpu.memory_space<vmem>>, %arg4: memref<16x16xf32, #tpu.memory_space<vmem>>) attributes {dimension_semantics = [#tpu.dimension_semantics<parallel>], iteration_bounds = array<i64: 1>, scalar_prefetch = 0 : i64, scratch_operands = 0 : i64, tpu.core_type = #tpu.core_type<tc>, window_params = [{transform_indices = @transform_0, window_bounds = array<i64: 16, 32>}, {pipeline_mode = #tpu.pipeline_mode<synchronous>, transform_indices = @transform_1, window_bounds = array<i64: 32, 16>}, {pipeline_mode = #tpu.pipeline_mode<synchronous>, transform_indices = @transform_2, window_bounds = array<i64: 1, 16>}, {transform_indices = @transform_3, window_bounds = array<i64: 16, 16>}]} {
    %c0 = arith.constant 0 : index
    %c0_0 = arith.constant 0 : index
    %0 = vector.load %arg1[%c0, %c0_0] : memref<16x32xf32, #tpu.memory_space<vmem>>, vector<16x32xf32>
    %c0_1 = arith.constant 0 : index
    %c0_2 = arith.constant 0 : index
    %1 = vector.load %arg2[%c0_1, %c0_2] : memref<32x16xbf16, #tpu.memory_space<vmem>>, vector<32x16xbf16>
    %c0_3 = arith.constant 0 : index
    %c0_4 = arith.constant 0 : index
    %2 = vector.load %arg3[%c0_3, %c0_4] : memref<1x16xf32, #tpu.memory_space<vmem>>, vector<1x16xf32>
    %3 = arith.truncf %0 : vector<16x32xf32> to vector<16x32xbf16>
    %cst = arith.constant dense<0.000000e+00> : vector<16x16xf32>
    %4 = tpu.matmul %3, %1, %cst {dimension_numbers = #tpu.dot_dimension_numbers<[1], [0], [0], [1], [0, 0, 1, 1], [], []>} : vector<16x32xbf16>, vector<32x16xbf16>, vector<16x16xf32> -> vector<16x16xf32>
    %5 = vector.broadcast %2 : vector<1x16xf32> to vector<16x16xf32>
    %6 = arith.addf %4, %5 : vector<16x16xf32>
    %c0_5 = arith.constant 0 : index
    %c0_6 = arith.constant 0 : index
    %7 = vector.load %arg4[%c0_5, %c0_6] : memref<16x16xf32, #tpu.memory_space<vmem>>, vector<16x16xf32>
    tpu.vector_store %arg4[%c0_5, %c0_6], %6 {strides = array<i32>} : memref<16x16xf32, #tpu.memory_space<vmem>>, vector<16x16xf32>,
    return
  }
  func.func @transform_0(%arg0: i32) -> (i32, i32) {
    %c0_i32 = arith.constant 0 : i32
    %c0_i32_0 = arith.constant 0 : i32
    return %arg0, %c0_i32 : i32, i32
  }
  func.func @transform_1(%arg0: i32) -> (i32, i32) {
    %c0_i32 = arith.constant 0 : i32
    %c0_i32_0 = arith.constant 0 : i32
    %c0_i32_1 = arith.constant 0 : i32
    return %c0_i32, %c0_i32_0 : i32, i32
  }
  func.func @transform_2(%arg0: i32) -> (i32, i32) {
    %c0_i32 = arith.constant 0 : i32
    %c0_i32_0 = arith.constant 0 : i32
    %c0_i32_1 = arith.constant 0 : i32
    return %c0_i32, %c0_i32_0 : i32, i32
  }
  func.func @transform_3(%arg0: i32) -> (i32, i32) {
    %c0_i32 = arith.constant 0 : i32
    %c0_i32_0 = arith.constant 0 : i32
    return %arg0, %c0_i32 : i32, i32
  }
}

module attributes {stable_mosaic.version = 11 : i64} {
  func.func @_fused_linear_kernel(%arg0: i32, %arg1: memref<16x16xf32, #tpu.memory_space<vmem>>, %arg2: memref<16x128xbf16, #tpu.memory_space<vmem>>, %arg3: memref<1x128xf32, #tpu.memory_space<vmem>>, %arg4: memref<16x128xf32, #tpu.memory_space<vmem>>) attributes {dimension_semantics = [#tpu.dimension_semantics<parallel>], iteration_bounds = array<i64: 1>, scalar_prefetch = 0 : i64, scratch_operands = 0 : i64, tpu.core_type = #tpu.core_type<tc>, window_params = [{transform_indices = @transform_0, window_bounds = array<i64: 16, 16>}, {pipeline_mode = #tpu.pipeline_mode<synchronous>, transform_indices = @transform_1, window_bounds = array<i64: 16, 128>}, {pipeline_mode = #tpu.pipeline_mode<synchronous>, transform_indices = @transform_2, window_bounds = array<i64: 1, 128>}, {transform_indices = @transform_3, window_bounds = array<i64: 16, 128>}]} {
    %c0 = arith.constant 0 : index
    %c0_0 = arith.constant 0 : index
    %0 = vector.load %arg1[%c0, %c0_0] : memref<16x16xf32, #tpu.memory_space<vmem>>, vector<16x16xf32>
    %c0_1 = arith.constant 0 : index
    %c0_2 = arith.constant 0 : index
    %1 = vector.load %arg2[%c0_1, %c0_2] : memref<16x128xbf16, #tpu.memory_space<vmem>>, vector<16x128xbf16>
    %c0_3 = arith.constant 0 : index
    %c0_4 = arith.constant 0 : index
    %2 = vector.load %arg3[%c0_3, %c0_4] : memref<1x128xf32, #tpu.memory_space<vmem>>, vector<1x128xf32>
    %3 = arith.truncf %0 : vector<16x16xf32> to vector<16x16xbf16>
    %cst = arith.constant dense<0.000000e+00> : vector<16x128xf32>
    %4 = tpu.matmul %3, %1, %cst {dimension_numbers = #tpu.dot_dimension_numbers<[1], [0], [0], [1], [0, 0, 1, 1], [], []>} : vector<16x16xbf16>, vector<16x128xbf16>, vector<16x128xf32> -> vector<16x128xf32>
    %5 = vector.broadcast %2 : vector<1x128xf32> to vector<16x128xf32>
    %6 = arith.addf %4, %5 : vector<16x128xf32>
    %c0_5 = arith.constant 0 : index
    %c0_6 = arith.constant 0 : index
    %7 = vector.load %arg4[%c0_5, %c0_6] : memref<16x128xf32, #tpu.memory_space<vmem>>, vector<16x128xf32>
    tpu.vector_store %arg4[%c0_5, %c0_6], %6 {strides = array<i32>} : memref<16x128xf32, #tpu.memory_space<vmem>>, vector<16x128xf32>,
    return
  }
  func.func @transform_0(%arg0: i32) -> (i32, i32) {
    %c0_i32 = arith.constant 0 : i32
    %c0_i32_0 = arith.constant 0 : i32
    return %arg0, %c0_i32 : i32, i32
  }
  func.func @transform_1(%arg0: i32) -> (i32, i32) {
    %c0_i32 = arith.constant 0 : i32
    %c0_i32_0 = arith.constant 0 : i32
    %c0_i32_1 = arith.constant 0 : i32
    return %c0_i32, %c0_i32_0 : i32, i32
  }
  func.func @transform_2(%arg0: i32) -> (i32, i32) {
    %c0_i32 = arith.constant 0 : i32
    %c0_i32_0 = arith.constant 0 : i32
    %c0_i32_1 = arith.constant 0 : i32
    return %c0_i32, %c0_i32_0 : i32, i32
  }
  func.func @transform_3(%arg0: i32) -> (i32, i32) {
    %c0_i32 = arith.constant 0 : i32
    %c0_i32_0 = arith.constant 0 : i32
    return %arg0, %c0_i32 : i32, i32
  }
}

module attributes {stable_mosaic.version = 11 : i64} {
  func.func @_fused_linear_kernel(%arg0: i32, %arg1: memref<128x16xbf16, #tpu.memory_space<vmem>>, %arg2: memref<16x8xbf16, #tpu.memory_space<vmem>>, %arg3: memref<1x8xf32, #tpu.memory_space<vmem>>, %arg4: memref<128x8xbf16, #tpu.memory_space<vmem>>) attributes {dimension_semantics = [#tpu.dimension_semantics<parallel>], iteration_bounds = array<i64: 1>, scalar_prefetch = 0 : i64, scratch_operands = 0 : i64, tpu.core_type = #tpu.core_type<tc>, window_params = [{transform_indices = @transform_0, window_bounds = array<i64: 128, 16>}, {pipeline_mode = #tpu.pipeline_mode<synchronous>, transform_indices = @transform_1, window_bounds = array<i64: 16, 8>}, {pipeline_mode = #tpu.pipeline_mode<synchronous>, transform_indices = @transform_2, window_bounds = array<i64: 1, 8>}, {transform_indices = @transform_3, window_bounds = array<i64: 128, 8>}]} {
    %c0 = arith.constant 0 : index
    %c0_0 = arith.constant 0 : index
    %0 = vector.load %arg1[%c0, %c0_0] : memref<128x16xbf16, #tpu.memory_space<vmem>>, vector<128x16xbf16>
    %c0_1 = arith.constant 0 : index
    %c0_2 = arith.constant 0 : index
    %1 = vector.load %arg2[%c0_1, %c0_2] : memref<16x8xbf16, #tpu.memory_space<vmem>>, vector<16x8xbf16>
    %c0_3 = arith.constant 0 : index
    %c0_4 = arith.constant 0 : index
    %2 = vector.load %arg3[%c0_3, %c0_4] : memref<1x8xf32, #tpu.memory_space<vmem>>, vector<1x8xf32>
    %cst = arith.constant dense<0.000000e+00> : vector<128x8xf32>
    %3 = tpu.matmul %0, %1, %cst {dimension_numbers = #tpu.dot_dimension_numbers<[1], [0], [0], [1], [0, 0, 1, 1], [], []>} : vector<128x16xbf16>, vector<16x8xbf16>, vector<128x8xf32> -> vector<128x8xf32>
    %4 = vector.broadcast %2 : vector<1x8xf32> to vector<128x8xf32>
    %5 = arith.addf %3, %4 : vector<128x8xf32>
    %6 = arith.truncf %5 : vector<128x8xf32> to vector<128x8xbf16>
    %c0_5 = arith.constant 0 : index
    %c0_6 = arith.constant 0 : index
    %7 = vector.load %arg4[%c0_5, %c0_6] : memref<128x8xbf16, #tpu.memory_space<vmem>>, vector<128x8xbf16>
    tpu.vector_store %arg4[%c0_5, %c0_6], %6 {strides = array<i32>} : memref<128x8xbf16, #tpu.memory_space<vmem>>, vector<128x8xbf16>,
    return
  }
  func.func @transform_0(%arg0: i32) -> (i32, i32) {
    %c0_i32 = arith.constant 0 : i32
    %c0_i32_0 = arith.constant 0 : i32
    return %arg0, %c0_i32 : i32, i32
  }
  func.func @transform_1(%arg0: i32) -> (i32, i32) {
    %c0_i32 = arith.constant 0 : i32
    %c0_i32_0 = arith.constant 0 : i32
    %c0_i32_1 = arith.constant 0 : i32
    return %c0_i32, %c0_i32_0 : i32, i32
  }
  func.func @transform_2(%arg0: i32) -> (i32, i32) {
    %c0_i32 = arith.constant 0 : i32
    %c0_i32_0 = arith.constant 0 : i32
    %c0_i32_1 = arith.constant 0 : i32
    return %c0_i32, %c0_i32_0 : i32, i32
  }
  func.func @transform_3(%arg0: i32) -> (i32, i32) {
    %c0_i32 = arith.constant 0 : i32
    %c0_i32_0 = arith.constant 0 : i32
    return %arg0, %c0_i32 : i32, i32
  }
}

module attributes {stable_mosaic.version = 11 : i64} {
  func.func @_edge_transition_kernel(%arg0: i32, %arg1: i32, %arg2: memref<1x8x8x16xf32, #tpu.memory_space<vmem>>, %arg3: memref<1x8x48xf32, #tpu.memory_space<vmem>>, %arg4: memref<1x8x48xf32, #tpu.memory_space<vmem>>, %arg5: memref<1x8x16xf32, #tpu.memory_space<vmem>>, %arg6: memref<1x8x16xf32, #tpu.memory_space<vmem>>, %arg7: memref<1x8x1xf32, #tpu.memory_space<vmem>>, %arg8: memref<1x1x8xf32, #tpu.memory_space<vmem>>, %arg9: memref<16x48xbf16, #tpu.memory_space<vmem>>, %arg10: memref<1x48xf32, #tpu.memory_space<vmem>>, %arg11: memref<48x48xbf16, #tpu.memory_space<vmem>>, %arg12: memref<1x48xf32, #tpu.memory_space<vmem>>, %arg13: memref<48x16xbf16, #tpu.memory_space<vmem>>, %arg14: memref<16x16xbf16, #tpu.memory_space<vmem>>, %arg15: memref<1x16xf32, #tpu.memory_space<vmem>>, %arg16: memref<1x16xf32, #tpu.memory_space<vmem>>, %arg17: memref<1x16xf32, #tpu.memory_space<vmem>>, %arg18: memref<1x8x8x16xbf16, #tpu.memory_space<vmem>>) attributes {dimension_semantics = [#tpu.dimension_semantics<parallel>, #tpu.dimension_semantics<parallel>], iteration_bounds = array<i64: 2, 1>, scalar_prefetch = 0 : i64, scratch_operands = 0 : i64, tpu.core_type = #tpu.core_type<tc>, window_params = [{transform_indices = @transform_0, window_bounds = array<i64: 1, 8, 8, 16>}, {transform_indices = @transform_1, window_bounds = array<i64: 1, 8, 48>}, {transform_indices = @transform_2, window_bounds = array<i64: 1, 8, 48>}, {transform_indices = @transform_3, window_bounds = array<i64: 1, 8, 16>}, {transform_indices = @transform_4, window_bounds = array<i64: 1, 8, 16>}, {transform_indices = @transform_5, window_bounds = array<i64: 1, 8, 1>}, {transform_indices = @transform_6, window_bounds = array<i64: 1, 1, 8>}, {pipeline_mode = #tpu.pipeline_mode<synchronous>, transform_indices = @transform_7, window_bounds = array<i64: 16, 48>}, {pipeline_mode = #tpu.pipeline_mode<synchronous>, transform_indices = @transform_8, window_bounds = array<i64: 1, 48>}, {pipeline_mode = #tpu.pipeline_mode<synchronous>, transform_indices = @transform_9, window_bounds = array<i64: 48, 48>}, {pipeline_mode = #tpu.pipeline_mode<synchronous>, transform_indices = @transform_10, window_bounds = array<i64: 1, 48>}, {pipeline_mode = #tpu.pipeline_mode<synchronous>, transform_indices = @transform_11, window_bounds = array<i64: 48, 16>}, {pipeline_mode = #tpu.pipeline_mode<synchronous>, transform_indices = @transform_12, window_bounds = array<i64: 16, 16>}, {pipeline_mode = #tpu.pipeline_mode<synchronous>, transform_indices = @transform_13, window_bounds = array<i64: 1, 16>}, {pipeline_mode = #tpu.pipeline_mode<synchronous>, transform_indices = @transform_14, window_bounds = array<i64: 1, 16>}, {pipeline_mode = #tpu.pipeline_mode<synchronous>, transform_indices = @transform_15, window_bounds = array<i64: 1, 16>}, {transform_indices = @transform_16, window_bounds = array<i64: 1, 8, 8, 16>}]} {
    %c0 = arith.constant 0 : index
    %c0_0 = arith.constant 0 : index
    %c0_1 = arith.constant 0 : index
    %c0_2 = arith.constant 0 : index
    %0 = vector.load %arg2[%c0, %c0_0, %c0_1, %c0_2] : memref<1x8x8x16xf32, #tpu.memory_space<vmem>>, vector<1x8x8x16xf32>
    %1 = vector.shape_cast %0 : vector<1x8x8x16xf32> to vector<8x8x16xf32>
    %2 = vector.shape_cast %1 : vector<8x8x16xf32> to vector<64x16xf32>
    %c0_3 = arith.constant 0 : index
    %c0_4 = arith.constant 0 : index
    %3 = vector.load %arg9[%c0_3, %c0_4] : memref<16x48xbf16, #tpu.memory_space<vmem>>, vector<16x48xbf16>
    %4 = arith.truncf %2 : vector<64x16xf32> to vector<64x16xbf16>
    %cst = arith.constant dense<0.000000e+00> : vector<64x48xf32>
    %5 = tpu.matmul %4, %3, %cst {dimension_numbers = #tpu.dot_dimension_numbers<[1], [0], [0], [1], [0, 0, 1, 1], [], []>} : vector<64x16xbf16>, vector<16x48xbf16>, vector<64x48xf32> -> vector<64x48xf32>
    %6 = vector.shape_cast %5 : vector<64x48xf32> to vector<8x8x48xf32>
    %c0_5 = arith.constant 0 : index
    %c0_6 = arith.constant 0 : index
    %c0_7 = arith.constant 0 : index
    %7 = vector.load %arg3[%c0_5, %c0_6, %c0_7] : memref<1x8x48xf32, #tpu.memory_space<vmem>>, vector<1x8x48xf32>
    %8 = vector.shape_cast %7 : vector<1x8x48xf32> to vector<8x48xf32>
    %9 = vector.shape_cast %8 : vector<8x48xf32> to vector<8x1x48xf32>
    %10 = vector.broadcast %9 : vector<8x1x48xf32> to vector<8x8x48xf32>
    %11 = arith.addf %6, %10 : vector<8x8x48xf32>
    %c0_8 = arith.constant 0 : index
    %c0_9 = arith.constant 0 : index
    %c0_10 = arith.constant 0 : index
    %12 = vector.load %arg4[%c0_8, %c0_9, %c0_10] : memref<1x8x48xf32, #tpu.memory_space<vmem>>, vector<1x8x48xf32>
    %13 = vector.shape_cast %12 : vector<1x8x48xf32> to vector<8x48xf32>
    %14 = vector.shape_cast %13 : vector<8x48xf32> to vector<1x8x48xf32>
    %15 = vector.broadcast %14 : vector<1x8x48xf32> to vector<8x8x48xf32>
    %16 = arith.addf %11, %15 : vector<8x8x48xf32>
    %c0_11 = arith.constant 0 : index
    %c0_12 = arith.constant 0 : index
    %17 = vector.load %arg10[%c0_11, %c0_12] : memref<1x48xf32, #tpu.memory_space<vmem>>, vector<1x48xf32>
    %18 = vector.shape_cast %17 : vector<1x48xf32> to vector<1x1x48xf32>
    %19 = vector.broadcast %18 : vector<1x1x48xf32> to vector<8x8x48xf32>
    %20 = arith.addf %16, %19 : vector<8x8x48xf32>
    %cst_13 = arith.constant 0.000000e+00 : f32
    %21 = vector.broadcast %cst_13 : f32 to vector<8x8x48xf32>
    %22 = arith.maximumf %20, %21 : vector<8x8x48xf32>
    %23 = vector.shape_cast %22 : vector<8x8x48xf32> to vector<64x48xf32>
    %c0_14 = arith.constant 0 : index
    %c0_15 = arith.constant 0 : index
    %24 = vector.load %arg11[%c0_14, %c0_15] : memref<48x48xbf16, #tpu.memory_space<vmem>>, vector<48x48xbf16>
    %25 = arith.truncf %23 : vector<64x48xf32> to vector<64x48xbf16>
    %cst_16 = arith.constant dense<0.000000e+00> : vector<64x48xf32>
    %26 = tpu.matmul %25, %24, %cst_16 {dimension_numbers = #tpu.dot_dimension_numbers<[1], [0], [0], [1], [0, 0, 1, 1], [], []>} : vector<64x48xbf16>, vector<48x48xbf16>, vector<64x48xf32> -> vector<64x48xf32>
    %c0_17 = arith.constant 0 : index
    %c0_18 = arith.constant 0 : index
    %27 = vector.load %arg12[%c0_17, %c0_18] : memref<1x48xf32, #tpu.memory_space<vmem>>, vector<1x48xf32>
    %28 = vector.broadcast %27 : vector<1x48xf32> to vector<64x48xf32>
    %29 = arith.addf %26, %28 : vector<64x48xf32>
    %cst_19 = arith.constant 0.000000e+00 : f32
    %30 = vector.broadcast %cst_19 : f32 to vector<64x48xf32>
    %31 = arith.maximumf %29, %30 : vector<64x48xf32>
    %c0_20 = arith.constant 0 : index
    %c0_21 = arith.constant 0 : index
    %32 = vector.load %arg13[%c0_20, %c0_21] : memref<48x16xbf16, #tpu.memory_space<vmem>>, vector<48x16xbf16>
    %33 = arith.truncf %31 : vector<64x48xf32> to vector<64x48xbf16>
    %cst_22 = arith.constant dense<0.000000e+00> : vector<64x16xf32>
    %34 = tpu.matmul %33, %32, %cst_22 {dimension_numbers = #tpu.dot_dimension_numbers<[1], [0], [0], [1], [0, 0, 1, 1], [], []>} : vector<64x48xbf16>, vector<48x16xbf16>, vector<64x16xf32> -> vector<64x16xf32>
    %c0_23 = arith.constant 0 : index
    %c0_24 = arith.constant 0 : index
    %35 = vector.load %arg14[%c0_23, %c0_24] : memref<16x16xbf16, #tpu.memory_space<vmem>>, vector<16x16xbf16>
    %36 = arith.truncf %2 : vector<64x16xf32> to vector<64x16xbf16>
    %cst_25 = arith.constant dense<0.000000e+00> : vector<64x16xf32>
    %37 = tpu.matmul %36, %35, %cst_25 {dimension_numbers = #tpu.dot_dimension_numbers<[1], [0], [0], [1], [0, 0, 1, 1], [], []>} : vector<64x16xbf16>, vector<16x16xbf16>, vector<64x16xf32> -> vector<64x16xf32>
    %38 = arith.addf %34, %37 : vector<64x16xf32>
    %39 = vector.shape_cast %38 : vector<64x16xf32> to vector<8x8x16xf32>
    %c0_26 = arith.constant 0 : index
    %c0_27 = arith.constant 0 : index
    %c0_28 = arith.constant 0 : index
    %40 = vector.load %arg5[%c0_26, %c0_27, %c0_28] : memref<1x8x16xf32, #tpu.memory_space<vmem>>, vector<1x8x16xf32>
    %41 = vector.shape_cast %40 : vector<1x8x16xf32> to vector<8x16xf32>
    %42 = vector.shape_cast %41 : vector<8x16xf32> to vector<8x1x16xf32>
    %43 = vector.broadcast %42 : vector<8x1x16xf32> to vector<8x8x16xf32>
    %44 = arith.addf %39, %43 : vector<8x8x16xf32>
    %c0_29 = arith.constant 0 : index
    %c0_30 = arith.constant 0 : index
    %c0_31 = arith.constant 0 : index
    %45 = vector.load %arg6[%c0_29, %c0_30, %c0_31] : memref<1x8x16xf32, #tpu.memory_space<vmem>>, vector<1x8x16xf32>
    %46 = vector.shape_cast %45 : vector<1x8x16xf32> to vector<8x16xf32>
    %47 = vector.shape_cast %46 : vector<8x16xf32> to vector<1x8x16xf32>
    %48 = vector.broadcast %47 : vector<1x8x16xf32> to vector<8x8x16xf32>
    %49 = arith.addf %44, %48 : vector<8x8x16xf32>
    %c0_32 = arith.constant 0 : index
    %c0_33 = arith.constant 0 : index
    %50 = vector.load %arg15[%c0_32, %c0_33] : memref<1x16xf32, #tpu.memory_space<vmem>>, vector<1x16xf32>
    %51 = vector.shape_cast %50 : vector<1x16xf32> to vector<1x1x16xf32>
    %52 = vector.broadcast %51 : vector<1x1x16xf32> to vector<8x8x16xf32>
    %53 = arith.addf %49, %52 : vector<8x8x16xf32>
    %cst_34 = arith.constant dense<0.000000e+00> : vector<8x8xf32>
    %54 = vector.multi_reduction <add>, %53, %cst_34 [2] : vector<8x8x16xf32> to vector<8x8xf32>
    %55 = vector.shape_cast %54 : vector<8x8xf32> to vector<8x8x1xf32>
    %cst_35 = arith.constant 1.600000e+01 : f32
    %56 = vector.broadcast %cst_35 : f32 to vector<8x8x1xf32>
    %57 = arith.divf %55, %56 : vector<8x8x1xf32>
    %58 = vector.broadcast %57 : vector<8x8x1xf32> to vector<8x8x16xf32>
    %59 = arith.subf %53, %58 : vector<8x8x16xf32>
    %60 = arith.mulf %59, %59 : vector<8x8x16xf32>
    %cst_36 = arith.constant dense<0.000000e+00> : vector<8x8xf32>
    %61 = vector.multi_reduction <add>, %60, %cst_36 [2] : vector<8x8x16xf32> to vector<8x8xf32>
    %62 = vector.shape_cast %61 : vector<8x8xf32> to vector<8x8x1xf32>
    %cst_37 = arith.constant 1.600000e+01 : f32
    %63 = vector.broadcast %cst_37 : f32 to vector<8x8x1xf32>
    %64 = arith.divf %62, %63 : vector<8x8x1xf32>
    %cst_38 = arith.constant 9.99999974E-6 : f32
    %65 = vector.broadcast %cst_38 : f32 to vector<8x8x1xf32>
    %66 = arith.addf %64, %65 : vector<8x8x1xf32>
    %67 = math.rsqrt %66 : vector<8x8x1xf32>
    %68 = vector.broadcast %67 : vector<8x8x1xf32> to vector<8x8x16xf32>
    %69 = arith.mulf %59, %68 : vector<8x8x16xf32>
    %c0_39 = arith.constant 0 : index
    %c0_40 = arith.constant 0 : index
    %70 = vector.load %arg16[%c0_39, %c0_40] : memref<1x16xf32, #tpu.memory_space<vmem>>, vector<1x16xf32>
    %71 = vector.shape_cast %70 : vector<1x16xf32> to vector<1x1x16xf32>
    %72 = vector.broadcast %71 : vector<1x1x16xf32> to vector<8x8x16xf32>
    %73 = arith.mulf %69, %72 : vector<8x8x16xf32>
    %c0_41 = arith.constant 0 : index
    %c0_42 = arith.constant 0 : index
    %74 = vector.load %arg17[%c0_41, %c0_42] : memref<1x16xf32, #tpu.memory_space<vmem>>, vector<1x16xf32>
    %75 = vector.shape_cast %74 : vector<1x16xf32> to vector<1x1x16xf32>
    %76 = vector.broadcast %75 : vector<1x1x16xf32> to vector<8x8x16xf32>
    %77 = arith.addf %73, %76 : vector<8x8x16xf32>
    %c0_43 = arith.constant 0 : index
    %c0_44 = arith.constant 0 : index
    %c0_45 = arith.constant 0 : index
    %78 = vector.load %arg7[%c0_43, %c0_44, %c0_45] : memref<1x8x1xf32, #tpu.memory_space<vmem>>, vector<1x8x1xf32>
    %79 = vector.shape_cast %78 : vector<1x8x1xf32> to vector<8x1xf32>
    %80 = vector.shape_cast %79 : vector<8x1xf32> to vector<8x1x1xf32>
    %c0_46 = arith.constant 0 : index
    %c0_47 = arith.constant 0 : index
    %c0_48 = arith.constant 0 : index
    %81 = vector.load %arg8[%c0_46, %c0_47, %c0_48] : memref<1x1x8xf32, #tpu.memory_space<vmem>>, vector<1x1x8xf32>
    %82 = vector.shape_cast %81 : vector<1x1x8xf32> to vector<1x8xf32>
    %83 = vector.shape_cast %82 : vector<1x8xf32> to vector<1x8x1xf32>
    %84 = vector.broadcast %80 : vector<8x1x1xf32> to vector<8x8x1xf32>
    %85 = vector.broadcast %83 : vector<1x8x1xf32> to vector<8x8x1xf32>
    %86 = arith.mulf %84, %85 : vector<8x8x1xf32>
    %87 = vector.broadcast %86 : vector<8x8x1xf32> to vector<8x8x16xf32>
    %88 = arith.mulf %77, %87 : vector<8x8x16xf32>
    %89 = arith.truncf %88 : vector<8x8x16xf32> to vector<8x8x16xbf16>
    %c0_49 = arith.constant 0 : index
    %c0_50 = arith.constant 0 : index
    %c0_51 = arith.constant 0 : index
    %c0_52 = arith.constant 0 : index
    %90 = vector.load %arg18[%c0_49, %c0_50, %c0_51, %c0_52] : memref<1x8x8x16xbf16, #tpu.memory_space<vmem>>, vector<1x8x8x16xbf16>
    %91 = vector.shape_cast %90 : vector<1x8x8x16xbf16> to vector<8x8x16xbf16>
    %92 = vector.shape_cast %89 : vector<8x8x16xbf16> to vector<1x8x8x16xbf16>
    tpu.vector_store %arg18[%c0_49, %c0_50, %c0_51, %c0_52], %92 {strides = array<i32>} : memref<1x8x8x16xbf16, #tpu.memory_space<vmem>>, vector<1x8x8x16xbf16>,
    return
  }
  func.func @transform_0(%arg0: i32, %arg1: i32) -> (i32, i32, i32, i32) {
    %c0_i32 = arith.constant 0 : i32
    %c0_i32_0 = arith.constant 0 : i32
    %c0_i32_1 = arith.constant 0 : i32
    return %arg0, %arg1, %c0_i32, %c0_i32_0 : i32, i32, i32, i32
  }
  func.func @transform_1(%arg0: i32, %arg1: i32) -> (i32, i32, i32) {
    %c0_i32 = arith.constant 0 : i32
    %c0_i32_0 = arith.constant 0 : i32
    return %arg0, %arg1, %c0_i32 : i32, i32, i32
  }
  func.func @transform_2(%arg0: i32, %arg1: i32) -> (i32, i32, i32) {
    %c0_i32 = arith.constant 0 : i32
    %c0_i32_0 = arith.constant 0 : i32
    %c0_i32_1 = arith.constant 0 : i32
    return %arg0, %c0_i32, %c0_i32_0 : i32, i32, i32
  }
  func.func @transform_3(%arg0: i32, %arg1: i32) -> (i32, i32, i32) {
    %c0_i32 = arith.constant 0 : i32
    %c0_i32_0 = arith.constant 0 : i32
    return %arg0, %arg1, %c0_i32 : i32, i32, i32
  }
  func.func @transform_4(%arg0: i32, %arg1: i32) -> (i32, i32, i32) {
    %c0_i32 = arith.constant 0 : i32
    %c0_i32_0 = arith.constant 0 : i32
    %c0_i32_1 = arith.constant 0 : i32
    return %arg0, %c0_i32, %c0_i32_0 : i32, i32, i32
  }
  func.func @transform_5(%arg0: i32, %arg1: i32) -> (i32, i32, i32) {
    %c0_i32 = arith.constant 0 : i32
    %c0_i32_0 = arith.constant 0 : i32
    return %arg0, %arg1, %c0_i32 : i32, i32, i32
  }
  func.func @transform_6(%arg0: i32, %arg1: i32) -> (i32, i32, i32) {
    %c0_i32 = arith.constant 0 : i32
    %c0_i32_0 = arith.constant 0 : i32
    %c0_i32_1 = arith.constant 0 : i32
    return %arg0, %c0_i32, %c0_i32_0 : i32, i32, i32
  }
  func.func @transform_7(%arg0: i32, %arg1: i32) -> (i32, i32) {
    %c0_i32 = arith.constant 0 : i32
    %c0_i32_0 = arith.constant 0 : i32
    %c0_i32_1 = arith.constant 0 : i32
    return %c0_i32, %c0_i32_0 : i32, i32
  }
  func.func @transform_8(%arg0: i32, %arg1: i32) -> (i32, i32) {
    %c0_i32 = arith.constant 0 : i32
    %c0_i32_0 = arith.constant 0 : i32
    %c0_i32_1 = arith.constant 0 : i32
    return %c0_i32, %c0_i32_0 : i32, i32
  }
  func.func @transform_9(%arg0: i32, %arg1: i32) -> (i32, i32) {
    %c0_i32 = arith.constant 0 : i32
    %c0_i32_0 = arith.constant 0 : i32
    %c0_i32_1 = arith.constant 0 : i32
    return %c0_i32, %c0_i32_0 : i32, i32
  }
  func.func @transform_10(%arg0: i32, %arg1: i32) -> (i32, i32) {
    %c0_i32 = arith.constant 0 : i32
    %c0_i32_0 = arith.constant 0 : i32
    %c0_i32_1 = arith.constant 0 : i32
    return %c0_i32, %c0_i32_0 : i32, i32
  }
  func.func @transform_11(%arg0: i32, %arg1: i32) -> (i32, i32) {
    %c0_i32 = arith.constant 0 : i32
    %c0_i32_0 = arith.constant 0 : i32
    %c0_i32_1 = arith.constant 0 : i32
    return %c0_i32, %c0_i32_0 : i32, i32
  }
  func.func @transform_12(%arg0: i32, %arg1: i32) -> (i32, i32) {
    %c0_i32 = arith.constant 0 : i32
    %c0_i32_0 = arith.constant 0 : i32
    %c0_i32_1 = arith.constant 0 : i32
    return %c0_i32, %c0_i32_0 : i32, i32
  }
  func.func @transform_13(%arg0: i32, %arg1: i32) -> (i32, i32) {
    %c0_i32 = arith.constant 0 : i32
    %c0_i32_0 = arith.constant 0 : i32
    %c0_i32_1 = arith.constant 0 : i32
    return %c0_i32, %c0_i32_0 : i32, i32
  }
  func.func @transform_14(%arg0: i32, %arg1: i32) -> (i32, i32) {
    %c0_i32 = arith.constant 0 : i32
    %c0_i32_0 = arith.constant 0 : i32
    %c0_i32_1 = arith.constant 0 : i32
    return %c0_i32, %c0_i32_0 : i32, i32
  }
  func.func @transform_15(%arg0: i32, %arg1: i32) -> (i32, i32) {
    %c0_i32 = arith.constant 0 : i32
    %c0_i32_0 = arith.constant 0 : i32
    %c0_i32_1 = arith.constant 0 : i32
    return %c0_i32, %c0_i32_0 : i32, i32
  }
  func.func @transform_16(%arg0: i32, %arg1: i32) -> (i32, i32, i32, i32) {
    %c0_i32 = arith.constant 0 : i32
    %c0_i32_0 = arith.constant 0 : i32
    %c0_i32_1 = arith.constant 0 : i32
    return %arg0, %arg1, %c0_i32, %c0_i32_0 : i32, i32, i32, i32
  }
}

module attributes {stable_mosaic.version = 11 : i64} {
  func.func @_angle_resnet_kernel(%arg0: i32, %arg1: memref<16x32xf32, #tpu.memory_space<vmem>>, %arg2: memref<16x32xf32, #tpu.memory_space<vmem>>, %arg3: memref<32x128xbf16, #tpu.memory_space<vmem>>, %arg4: memref<1x128xf32, #tpu.memory_space<vmem>>, %arg5: memref<32x128xbf16, #tpu.memory_space<vmem>>, %arg6: memref<1x128xf32, #tpu.memory_space<vmem>>, %arg7: memref<128x128xbf16, #tpu.memory_space<vmem>>, %arg8: memref<1x128xf32, #tpu.memory_space<vmem>>, %arg9: memref<128x128xbf16, #tpu.memory_space<vmem>>, %arg10: memref<1x128xf32, #tpu.memory_space<vmem>>, %arg11: memref<128x128xbf16, #tpu.memory_space<vmem>>, %arg12: memref<1x128xf32, #tpu.memory_space<vmem>>, %arg13: memref<128x128xbf16, #tpu.memory_space<vmem>>, %arg14: memref<1x128xf32, #tpu.memory_space<vmem>>, %arg15: memref<128x14xbf16, #tpu.memory_space<vmem>>, %arg16: memref<1x14xf32, #tpu.memory_space<vmem>>, %arg17: memref<16x14xf32, #tpu.memory_space<vmem>>) attributes {dimension_semantics = [#tpu.dimension_semantics<parallel>], iteration_bounds = array<i64: 1>, scalar_prefetch = 0 : i64, scratch_operands = 0 : i64, tpu.core_type = #tpu.core_type<tc>, window_params = [{transform_indices = @transform_0, window_bounds = array<i64: 16, 32>}, {transform_indices = @transform_1, window_bounds = array<i64: 16, 32>}, {pipeline_mode = #tpu.pipeline_mode<synchronous>, transform_indices = @transform_2, window_bounds = array<i64: 32, 128>}, {pipeline_mode = #tpu.pipeline_mode<synchronous>, transform_indices = @transform_3, window_bounds = array<i64: 1, 128>}, {pipeline_mode = #tpu.pipeline_mode<synchronous>, transform_indices = @transform_4, window_bounds = array<i64: 32, 128>}, {pipeline_mode = #tpu.pipeline_mode<synchronous>, transform_indices = @transform_5, window_bounds = array<i64: 1, 128>}, {pipeline_mode = #tpu.pipeline_mode<synchronous>, transform_indices = @transform_6, window_bounds = array<i64: 128, 128>}, {pipeline_mode = #tpu.pipeline_mode<synchronous>, transform_indices = @transform_7, window_bounds = array<i64: 1, 128>}, {pipeline_mode = #tpu.pipeline_mode<synchronous>, transform_indices = @transform_8, window_bounds = array<i64: 128, 128>}, {pipeline_mode = #tpu.pipeline_mode<synchronous>, transform_indices = @transform_9, window_bounds = array<i64: 1, 128>}, {pipeline_mode = #tpu.pipeline_mode<synchronous>, transform_indices = @transform_10, window_bounds = array<i64: 128, 128>}, {pipeline_mode = #tpu.pipeline_mode<synchronous>, transform_indices = @transform_11, window_bounds = array<i64: 1, 128>}, {pipeline_mode = #tpu.pipeline_mode<synchronous>, transform_indices = @transform_12, window_bounds = array<i64: 128, 128>}, {pipeline_mode = #tpu.pipeline_mode<synchronous>, transform_indices = @transform_13, window_bounds = array<i64: 1, 128>}, {pipeline_mode = #tpu.pipeline_mode<synchronous>, transform_indices = @transform_14, window_bounds = array<i64: 128, 14>}, {pipeline_mode = #tpu.pipeline_mode<synchronous>, transform_indices = @transform_15, window_bounds = array<i64: 1, 14>}, {transform_indices = @transform_16, window_bounds = array<i64: 16, 14>}]} {
    %c0 = arith.constant 0 : index
    %c0_0 = arith.constant 0 : index
    %0 = vector.load %arg1[%c0, %c0_0] : memref<16x32xf32, #tpu.memory_space<vmem>>, vector<16x32xf32>
    %c0_1 = arith.constant 0 : index
    %c0_2 = arith.constant 0 : index
    %1 = vector.load %arg2[%c0_1, %c0_2] : memref<16x32xf32, #tpu.memory_space<vmem>>, vector<16x32xf32>
    %c0_3 = arith.constant 0 : index
    %c0_4 = arith.constant 0 : index
    %2 = vector.load %arg3[%c0_3, %c0_4] : memref<32x128xbf16, #tpu.memory_space<vmem>>, vector<32x128xbf16>
    %c0_5 = arith.constant 0 : index
    %c0_6 = arith.constant 0 : index
    %3 = vector.load %arg4[%c0_5, %c0_6] : memref<1x128xf32, #tpu.memory_space<vmem>>, vector<1x128xf32>
    %c0_7 = arith.constant 0 : index
    %c0_8 = arith.constant 0 : index
    %4 = vector.load %arg5[%c0_7, %c0_8] : memref<32x128xbf16, #tpu.memory_space<vmem>>, vector<32x128xbf16>
    %c0_9 = arith.constant 0 : index
    %c0_10 = arith.constant 0 : index
    %5 = vector.load %arg6[%c0_9, %c0_10] : memref<1x128xf32, #tpu.memory_space<vmem>>, vector<1x128xf32>
    %cst = arith.constant 0.000000e+00 : f32
    %6 = vector.broadcast %cst : f32 to vector<16x32xf32>
    %7 = arith.maximumf %0, %6 : vector<16x32xf32>
    %8 = arith.truncf %7 : vector<16x32xf32> to vector<16x32xbf16>
    %cst_11 = arith.constant dense<0.000000e+00> : vector<16x128xf32>
    %9 = tpu.matmul %8, %2, %cst_11 {dimension_numbers = #tpu.dot_dimension_numbers<[1], [0], [0], [1], [0, 0, 1, 1], [], []>} : vector<16x32xbf16>, vector<32x128xbf16>, vector<16x128xf32> -> vector<16x128xf32>
    %10 = vector.broadcast %3 : vector<1x128xf32> to vector<16x128xf32>
    %11 = arith.addf %9, %10 : vector<16x128xf32>
    %cst_12 = arith.constant 0.000000e+00 : f32
    %12 = vector.broadcast %cst_12 : f32 to vector<16x32xf32>
    %13 = arith.maximumf %1, %12 : vector<16x32xf32>
    %14 = arith.truncf %13 : vector<16x32xf32> to vector<16x32xbf16>
    %cst_13 = arith.constant dense<0.000000e+00> : vector<16x128xf32>
    %15 = tpu.matmul %14, %4, %cst_13 {dimension_numbers = #tpu.dot_dimension_numbers<[1], [0], [0], [1], [0, 0, 1, 1], [], []>} : vector<16x32xbf16>, vector<32x128xbf16>, vector<16x128xf32> -> vector<16x128xf32>
    %16 = arith.addf %11, %15 : vector<16x128xf32>
    %17 = vector.broadcast %5 : vector<1x128xf32> to vector<16x128xf32>
    %18 = arith.addf %16, %17 : vector<16x128xf32>
    %c0_14 = arith.constant 0 : index
    %c0_15 = arith.constant 0 : index
    %19 = vector.load %arg7[%c0_14, %c0_15] : memref<128x128xbf16, #tpu.memory_space<vmem>>, vector<128x128xbf16>
    %c0_16 = arith.constant 0 : index
    %c0_17 = arith.constant 0 : index
    %20 = vector.load %arg8[%c0_16, %c0_17] : memref<1x128xf32, #tpu.memory_space<vmem>>, vector<1x128xf32>
    %c0_18 = arith.constant 0 : index
    %c0_19 = arith.constant 0 : index
    %21 = vector.load %arg9[%c0_18, %c0_19] : memref<128x128xbf16, #tpu.memory_space<vmem>>, vector<128x128xbf16>
    %c0_20 = arith.constant 0 : index
    %c0_21 = arith.constant 0 : index
    %22 = vector.load %arg10[%c0_20, %c0_21] : memref<1x128xf32, #tpu.memory_space<vmem>>, vector<1x128xf32>
    %cst_22 = arith.constant 0.000000e+00 : f32
    %23 = vector.broadcast %cst_22 : f32 to vector<16x128xf32>
    %24 = arith.maximumf %18, %23 : vector<16x128xf32>
    %25 = arith.truncf %24 : vector<16x128xf32> to vector<16x128xbf16>
    %cst_23 = arith.constant dense<0.000000e+00> : vector<16x128xf32>
    %26 = tpu.matmul %25, %19, %cst_23 {dimension_numbers = #tpu.dot_dimension_numbers<[1], [0], [0], [1], [0, 0, 1, 1], [], []>} : vector<16x128xbf16>, vector<128x128xbf16>, vector<16x128xf32> -> vector<16x128xf32>
    %27 = vector.broadcast %20 : vector<1x128xf32> to vector<16x128xf32>
    %28 = arith.addf %26, %27 : vector<16x128xf32>
    %cst_24 = arith.constant 0.000000e+00 : f32
    %29 = vector.broadcast %cst_24 : f32 to vector<16x128xf32>
    %30 = arith.maximumf %28, %29 : vector<16x128xf32>
    %31 = arith.truncf %30 : vector<16x128xf32> to vector<16x128xbf16>
    %cst_25 = arith.constant dense<0.000000e+00> : vector<16x128xf32>
    %32 = tpu.matmul %31, %21, %cst_25 {dimension_numbers = #tpu.dot_dimension_numbers<[1], [0], [0], [1], [0, 0, 1, 1], [], []>} : vector<16x128xbf16>, vector<128x128xbf16>, vector<16x128xf32> -> vector<16x128xf32>
    %33 = vector.broadcast %22 : vector<1x128xf32> to vector<16x128xf32>
    %34 = arith.addf %32, %33 : vector<16x128xf32>
    %35 = arith.addf %18, %34 : vector<16x128xf32>
    %c0_26 = arith.constant 0 : index
    %c0_27 = arith.constant 0 : index
    %36 = vector.load %arg11[%c0_26, %c0_27] : memref<128x128xbf16, #tpu.memory_space<vmem>>, vector<128x128xbf16>
    %c0_28 = arith.constant 0 : index
    %c0_29 = arith.constant 0 : index
    %37 = vector.load %arg12[%c0_28, %c0_29] : memref<1x128xf32, #tpu.memory_space<vmem>>, vector<1x128xf32>
    %c0_30 = arith.constant 0 : index
    %c0_31 = arith.constant 0 : index
    %38 = vector.load %arg13[%c0_30, %c0_31] : memref<128x128xbf16, #tpu.memory_space<vmem>>, vector<128x128xbf16>
    %c0_32 = arith.constant 0 : index
    %c0_33 = arith.constant 0 : index
    %39 = vector.load %arg14[%c0_32, %c0_33] : memref<1x128xf32, #tpu.memory_space<vmem>>, vector<1x128xf32>
    %cst_34 = arith.constant 0.000000e+00 : f32
    %40 = vector.broadcast %cst_34 : f32 to vector<16x128xf32>
    %41 = arith.maximumf %35, %40 : vector<16x128xf32>
    %42 = arith.truncf %41 : vector<16x128xf32> to vector<16x128xbf16>
    %cst_35 = arith.constant dense<0.000000e+00> : vector<16x128xf32>
    %43 = tpu.matmul %42, %36, %cst_35 {dimension_numbers = #tpu.dot_dimension_numbers<[1], [0], [0], [1], [0, 0, 1, 1], [], []>} : vector<16x128xbf16>, vector<128x128xbf16>, vector<16x128xf32> -> vector<16x128xf32>
    %44 = vector.broadcast %37 : vector<1x128xf32> to vector<16x128xf32>
    %45 = arith.addf %43, %44 : vector<16x128xf32>
    %cst_36 = arith.constant 0.000000e+00 : f32
    %46 = vector.broadcast %cst_36 : f32 to vector<16x128xf32>
    %47 = arith.maximumf %45, %46 : vector<16x128xf32>
    %48 = arith.truncf %47 : vector<16x128xf32> to vector<16x128xbf16>
    %cst_37 = arith.constant dense<0.000000e+00> : vector<16x128xf32>
    %49 = tpu.matmul %48, %38, %cst_37 {dimension_numbers = #tpu.dot_dimension_numbers<[1], [0], [0], [1], [0, 0, 1, 1], [], []>} : vector<16x128xbf16>, vector<128x128xbf16>, vector<16x128xf32> -> vector<16x128xf32>
    %50 = vector.broadcast %39 : vector<1x128xf32> to vector<16x128xf32>
    %51 = arith.addf %49, %50 : vector<16x128xf32>
    %52 = arith.addf %35, %51 : vector<16x128xf32>
    %c0_38 = arith.constant 0 : index
    %c0_39 = arith.constant 0 : index
    %53 = vector.load %arg15[%c0_38, %c0_39] : memref<128x14xbf16, #tpu.memory_space<vmem>>, vector<128x14xbf16>
    %c0_40 = arith.constant 0 : index
    %c0_41 = arith.constant 0 : index
    %54 = vector.load %arg16[%c0_40, %c0_41] : memref<1x14xf32, #tpu.memory_space<vmem>>, vector<1x14xf32>
    %cst_42 = arith.constant 0.000000e+00 : f32
    %55 = vector.broadcast %cst_42 : f32 to vector<16x128xf32>
    %56 = arith.maximumf %52, %55 : vector<16x128xf32>
    %57 = arith.truncf %56 : vector<16x128xf32> to vector<16x128xbf16>
    %cst_43 = arith.constant dense<0.000000e+00> : vector<16x14xf32>
    %58 = tpu.matmul %57, %53, %cst_43 {dimension_numbers = #tpu.dot_dimension_numbers<[1], [0], [0], [1], [0, 0, 1, 1], [], []>} : vector<16x128xbf16>, vector<128x14xbf16>, vector<16x14xf32> -> vector<16x14xf32>
    %59 = vector.broadcast %54 : vector<1x14xf32> to vector<16x14xf32>
    %60 = arith.addf %58, %59 : vector<16x14xf32>
    %c0_44 = arith.constant 0 : index
    %c0_45 = arith.constant 0 : index
    %61 = vector.load %arg17[%c0_44, %c0_45] : memref<16x14xf32, #tpu.memory_space<vmem>>, vector<16x14xf32>
    tpu.vector_store %arg17[%c0_44, %c0_45], %60 {strides = array<i32>} : memref<16x14xf32, #tpu.memory_space<vmem>>, vector<16x14xf32>,
    return
  }
  func.func @transform_0(%arg0: i32) -> (i32, i32) {
    %c0_i32 = arith.constant 0 : i32
    %c0_i32_0 = arith.constant 0 : i32
    return %arg0, %c0_i32 : i32, i32
  }
  func.func @transform_1(%arg0: i32) -> (i32, i32) {
    %c0_i32 = arith.constant 0 : i32
    %c0_i32_0 = arith.constant 0 : i32
    return %arg0, %c0_i32 : i32, i32
  }
  func.func @transform_2(%arg0: i32) -> (i32, i32) {
    %c0_i32 = arith.constant 0 : i32
    %c0_i32_0 = arith.constant 0 : i32
    %c0_i32_1 = arith.constant 0 : i32
    return %c0_i32, %c0_i32_0 : i32, i32
  }
  func.func @transform_3(%arg0: i32) -> (i32, i32) {
    %c0_i32 = arith.constant 0 : i32
    %c0_i32_0 = arith.constant 0 : i32
    %c0_i32_1 = arith.constant 0 : i32
    return %c0_i32, %c0_i32_0 : i32, i32
  }
  func.func @transform_4(%arg0: i32) -> (i32, i32) {
    %c0_i32 = arith.constant 0 : i32
    %c0_i32_0 = arith.constant 0 : i32
    %c0_i32_1 = arith.constant 0 : i32
    return %c0_i32, %c0_i32_0 : i32, i32
  }
  func.func @transform_5(%arg0: i32) -> (i32, i32) {
    %c0_i32 = arith.constant 0 : i32
    %c0_i32_0 = arith.constant 0 : i32
    %c0_i32_1 = arith.constant 0 : i32
    return %c0_i32, %c0_i32_0 : i32, i32
  }
  func.func @transform_6(%arg0: i32) -> (i32, i32) {
    %c0_i32 = arith.constant 0 : i32
    %c0_i32_0 = arith.constant 0 : i32
    %c0_i32_1 = arith.constant 0 : i32
    return %c0_i32, %c0_i32_0 : i32, i32
  }
  func.func @transform_7(%arg0: i32) -> (i32, i32) {
    %c0_i32 = arith.constant 0 : i32
    %c0_i32_0 = arith.constant 0 : i32
    %c0_i32_1 = arith.constant 0 : i32
    return %c0_i32, %c0_i32_0 : i32, i32
  }
  func.func @transform_8(%arg0: i32) -> (i32, i32) {
    %c0_i32 = arith.constant 0 : i32
    %c0_i32_0 = arith.constant 0 : i32
    %c0_i32_1 = arith.constant 0 : i32
    return %c0_i32, %c0_i32_0 : i32, i32
  }
  func.func @transform_9(%arg0: i32) -> (i32, i32) {
    %c0_i32 = arith.constant 0 : i32
    %c0_i32_0 = arith.constant 0 : i32
    %c0_i32_1 = arith.constant 0 : i32
    return %c0_i32, %c0_i32_0 : i32, i32
  }
  func.func @transform_10(%arg0: i32) -> (i32, i32) {
    %c0_i32 = arith.constant 0 : i32
    %c0_i32_0 = arith.constant 0 : i32
    %c0_i32_1 = arith.constant 0 : i32
    return %c0_i32, %c0_i32_0 : i32, i32
  }
  func.func @transform_11(%arg0: i32) -> (i32, i32) {
    %c0_i32 = arith.constant 0 : i32
    %c0_i32_0 = arith.constant 0 : i32
    %c0_i32_1 = arith.constant 0 : i32
    return %c0_i32, %c0_i32_0 : i32, i32
  }
  func.func @transform_12(%arg0: i32) -> (i32, i32) {
    %c0_i32 = arith.constant 0 : i32
    %c0_i32_0 = arith.constant 0 : i32
    %c0_i32_1 = arith.constant 0 : i32
    return %c0_i32, %c0_i32_0 : i32, i32
  }
  func.func @transform_13(%arg0: i32) -> (i32, i32) {
    %c0_i32 = arith.constant 0 : i32
    %c0_i32_0 = arith.constant 0 : i32
    %c0_i32_1 = arith.constant 0 : i32
    return %c0_i32, %c0_i32_0 : i32, i32
  }
  func.func @transform_14(%arg0: i32) -> (i32, i32) {
    %c0_i32 = arith.constant 0 : i32
    %c0_i32_0 = arith.constant 0 : i32
    %c0_i32_1 = arith.constant 0 : i32
    return %c0_i32, %c0_i32_0 : i32, i32
  }
  func.func @transform_15(%arg0: i32) -> (i32, i32) {
    %c0_i32 = arith.constant 0 : i32
    %c0_i32_0 = arith.constant 0 : i32
    %c0_i32_1 = arith.constant 0 : i32
    return %c0_i32, %c0_i32_0 : i32, i32
  }
  func.func @transform_16(%arg0: i32) -> (i32, i32) {
    %c0_i32 = arith.constant 0 : i32
    %c0_i32_0 = arith.constant 0 : i32
    return %arg0, %c0_i32 : i32, i32
  }
}

</mosaic_0001>

<llo_original>
// kernel: structure_module_forward.34
$region0: #{structure_module_forward.34}
  #allocation0 [shape = 'u32[]', space=smem, size = 0x4, offset = 0x4, fixed_abs, tag = 'smem constant byte address 0x4 - core index']
  #allocation1 [shape = 'u32[144,128]{1,0:T(1,128)}', space=vmem, size = 0x12000, scoped, tag = 'internal scratch']
  %s0 = inlined_call_operand.vmem [shape: f32[16,32], index: 0, kind: input, shape index: {}]
  %s1 = inlined_call_operand.vmem [shape: bf16[32,8], index: 1, kind: input, shape index: {}]
  %s2 = inlined_call_operand.vmem [shape: f32[1,8], index: 2, kind: input, shape index: {}]
  %s3 = inlined_call_operand.vmem [shape: f32[16,8], index: 3, kind: output, shape index: {}]
  %s4 = sld [smem:[#allocation0]]
  $region22: #{structure_module_forward.34} parent=0
    _
  %s6 = ssub.s32 1, %s4
  %s7 = scalar_select 0, %s6, %s4
  // Predicated region
  $region2: #{structure_module_forward.34} parent=0 // pred_check
    _
  $region3: #{structure_module_forward.34} parent=0 // pred_check_branch
    %9 = sbr.rel (0) target = $region5
  $region4: #{structure_module_forward.34} parent=0 // pred_region
    _
  $region5: #{structure_module_forward.34} parent=0 // pred_fallthru
    _
  // Predicated region
  $region6: #{structure_module_forward.34} parent=0 // pred_check
    _
  $region7: #{structure_module_forward.34} parent=0 // pred_check_branch
    %11 = sbr.rel (0) target = $region9
  $region8: #{structure_module_forward.34} parent=0 // pred_region
    _
  $region9: #{structure_module_forward.34} parent=0 // pred_fallthru
    _
  // Predicated region
  $region10: #{structure_module_forward.34} parent=0 // pred_check
    _
  $region11: #{structure_module_forward.34} parent=0 // pred_check_branch
    %13 = sbr.rel (0) target = $region13
  $region12: #{structure_module_forward.34} parent=0 // pred_region
    _
  $region13: #{structure_module_forward.34} parent=0 // pred_fallthru
    _
  %v15 = vld [vmem:[%s0] sm:$0xff]
  %v16 = vld [vmem:[%s0 + $0x8] sm:$0xff]
  %v17 = vld [vmem:[%s1] sm:$0xf]
  %v18 = vld [vmem:[%s1 + $0x4] sm:$0xf]
  %v19 = vld [vmem:[%s1 + $0x8] sm:$0xf]
  %v20 = vld [vmem:[%s1 + $0xc] sm:$0xf]
  %v21 = vld [vmem:[%s2] sm:$0x1]
  %v22 = vpack.c.bf16 %v16, %v15
  %v24 = vlaneseq
  %v25 = vshrl.u32 %v24, 7
  %v26 = vsub.s32 0, %v25
  %v27 = vrot.slane %v21, %v26
  %v33 = vunpack.c.l.b16 %v17
  %v34 = vunpack.c.l.b16 %v18
  %v35 = vunpack.c.l.b16 %v19
  %v36 = vunpack.c.l.b16 %v20
  %v37 = vpack.c.b16 %v34, %v33
  %v38 = vpack.c.b16 %v36, %v35
  %vm41 = vcmask 261120
  %v43 = vsel %vm41, %v22, 0
  %45 = vmatprep.subr.bf16.mxu0 0
  %46 = vmatpush1.bf16.msra.mxu0 %v37
  %47 = vmatprep.subr.bf16.mxu0 0
  %48 = vmatpush1.bf16.msra.mxu0 %v38
  %49 = vmatprep.subr.bf16.mxu0 0
  %50 = vmatpush1.bf16.msra.mxu0 0
  %51 = vmatprep.subr.bf16.mxu0 0
  %52 = vmatpush1.bf16.msra.mxu0 0
  %53 = vmatprep.subr.bf16.mxu0 0
  %54 = vmatpush1.bf16.msra.mxu0 0
  %55 = vmatprep.subr.bf16.mxu0 0
  %56 = vmatpush1.bf16.msra.mxu0 0
  %57 = vmatprep.subr.bf16.mxu0 0
  %58 = vmatpush1.bf16.msra.mxu0 0
  %59 = vmatprep.subr.bf16.mxu0 0
  %60 = vmatpush1.bf16.msra.mxu0 0
  %61 = vmatprep.subr.bf16.mxu0 0
  %62 = vmatpush1.bf16.msra.mxu0 0
  %63 = vmatprep.subr.bf16.mxu0 0
  %64 = vmatpush1.bf16.msra.mxu0 0
  %65 = vmatprep.subr.bf16.mxu0 0
  %66 = vmatpush1.bf16.msra.mxu0 0
  %67 = vmatprep.subr.bf16.mxu0 0
  %68 = vmatpush1.bf16.msra.mxu0 0
  %69 = vmatprep.subr.bf16.mxu0 0
  %70 = vmatpush1.bf16.msra.mxu0 0
  %71 = vmatprep.subr.bf16.mxu0 0
  %72 = vmatpush1.bf16.msra.mxu0 0
  %73 = vmatprep.subr.bf16.mxu0 0
  %74 = vmatpush1.bf16.msra.mxu0 0
  %75 = vmatprep.subr.bf16.mxu0 0
  %76 = vmatpush1.bf16.msra.mxu0 0
  %77 = vmatprep.mubr.bf16.mxu0 0
  %78 = vmatmul.mubr.bf16.gmra.mrb[0].mxu0 %v43
  %v79 = vpop.f32.mrb[0].mxu0
  %v80 = vadd.f32 %v27, %v79
  %v81 = vpop.f32.mrb[0].mxu0
  %v82 = vpop.f32.mrb[0].mxu0
  %v83 = vadd.f32 %v27, %v82
  %v84 = vpop.f32.mrb[0].mxu0
  %85 = vdwg.mxu0
  %vm86 = vcmask 64512
  %87 = vst.msk [vmem:[%s3] sm:$0xff] %vm86, %v80
  %88 = vst.msk [vmem:[%s3 + $0x8] sm:$0xff] %vm86, %v83
  // Predicated region
  $region14: #{structure_module_forward.34} parent=0 // pred_check
    _
  $region15: #{structure_module_forward.34} parent=0 // pred_check_branch
    %90 = sbr.rel (0) target = $region17
  $region16: #{structure_module_forward.34} parent=0 // pred_region
    _
  $region17: #{structure_module_forward.34} parent=0 // pred_fallthru
    _
  // Predicated region
  $region18: #{structure_module_forward.34} parent=0 // pred_check
    _
  $region19: #{structure_module_forward.34} parent=0 // pred_check_branch
    %92 = sbr.rel (0) target = $region21
  $region20: #{structure_module_forward.34} parent=0 // pred_region
    _
  $region21: #{structure_module_forward.34} parent=0 // pred_fallthru
    _

// kernel: structure_module_forward.30
$region0: #{structure_module_forward.30}
  #allocation0 [shape = 'u32[]', space=smem, size = 0x4, offset = 0x4, fixed_abs, tag = 'smem constant byte address 0x4 - core index']
  #allocation1 [shape = 'u32[144,128]{1,0:T(1,128)}', space=vmem, size = 0x12000, scoped, tag = 'internal scratch']
  %s0 = inlined_call_operand.vmem [shape: f32[16,32], index: 0, kind: input, shape index: {}]
  %s1 = inlined_call_operand.vmem [shape: bf16[32,384], index: 1, kind: input, shape index: {}]
  %s2 = inlined_call_operand.vmem [shape: f32[1,384], index: 2, kind: input, shape index: {}]
  %s3 = inlined_call_operand.vmem [shape: f32[16,384], index: 3, kind: output, shape index: {}]
  %s4 = sld [smem:[#allocation0]]
  $region22: #{structure_module_forward.30} parent=0
    _
  %s6 = ssub.s32 1, %s4
  %s7 = scalar_select 0, %s6, %s4
  // Predicated region
  $region2: #{structure_module_forward.30} parent=0 // pred_check
    _
  $region3: #{structure_module_forward.30} parent=0 // pred_check_branch
    %9 = sbr.rel (0) target = $region5
  $region4: #{structure_module_forward.30} parent=0 // pred_region
    _
  $region5: #{structure_module_forward.30} parent=0 // pred_fallthru
    _
  // Predicated region
  $region6: #{structure_module_forward.30} parent=0 // pred_check
    _
  $region7: #{structure_module_forward.30} parent=0 // pred_check_branch
    %11 = sbr.rel (0) target = $region9
  $region8: #{structure_module_forward.30} parent=0 // pred_region
    _
  $region9: #{structure_module_forward.30} parent=0 // pred_fallthru
    _
  // Predicated region
  $region10: #{structure_module_forward.30} parent=0 // pred_check
    _
  $region11: #{structure_module_forward.30} parent=0 // pred_check_branch
    %13 = sbr.rel (0) target = $region13
  $region12: #{structure_module_forward.30} parent=0 // pred_region
    _
  $region13: #{structure_module_forward.30} parent=0 // pred_fallthru
    _
  %v15 = vld [vmem:[%s0] sm:$0xff]
  %v16 = vld [vmem:[%s0 + $0x8] sm:$0xff]
  %v17 = vld [vmem:[%s1] sm:$0xff]
  %v18 = vld [vmem:[%s1 + $0x8] sm:$0xf]
  %v19 = vld [vmem:[%s1 + $0xc] sm:$0xff]
  %v20 = vld [vmem:[%s1 + $0x14] sm:$0xf]
  %v21 = vld [vmem:[%s1 + $0x18] sm:$0xff]
  %v22 = vld [vmem:[%s1 + $0x20] sm:$0xf]
  %v23 = vld [vmem:[%s1 + $0x24] sm:$0xff]
  %v24 = vld [vmem:[%s1 + $0x2c] sm:$0xf]
  %v25 = vld [vmem:[%s2] sm:$0x7]
  %v26 = vpack.c.bf16 %v16, %v15
  %v28 = vlaneseq
  %v29 = vshrl.u32 %v28, 7
  %v30 = vsub.s32 0, %v29
  %v31 = vrot.slane %v25, %v30
  %v32 = vlaneseq
  %v33 = vshrl.u32 %v32, 7
  %v34 = vsub.s32 1, %v33
  %v35 = vrot.slane %v25, %v34
  %v36 = vlaneseq
  %v37 = vshrl.u32 %v36, 7
  %v38 = vsub.s32 2, %v37
  %v39 = vrot.slane %v25, %v38
  %v51 = vunpack.c.l.b16 %v17
  %v52 = vunpack.c.h.b16 %v17
  %v53 = vunpack.c.l.b16 %v18
  %v54 = vunpack.c.l.b16 %v19
  %v55 = vunpack.c.h.b16 %v19
  %v56 = vunpack.c.l.b16 %v20
  %v57 = vunpack.c.l.b16 %v21
  %v58 = vunpack.c.h.b16 %v21
  %v59 = vunpack.c.l.b16 %v22
  %v60 = vunpack.c.l.b16 %v23
  %v61 = vunpack.c.h.b16 %v23
  %v62 = vunpack.c.l.b16 %v24
  %v63 = vpack.c.b16 %v54, %v51
  %v64 = vpack.c.b16 %v55, %v52
  %v65 = vpack.c.b16 %v56, %v53
  %v66 = vpack.c.b16 %v60, %v57
  %v67 = vpack.c.b16 %v61, %v58
  %v68 = vpack.c.b16 %v62, %v59
  %vm75 = vcmask 261120
  %v77 = vsel %vm75, %v26, 0
  %79 = vmatprep.subr.bf16.mxu0 %v64
  %80 = vmatpush1.bf16.msra.mxu0 %v63
  %81 = vmatprep.subr.bf16.mxu0 %v67
  %82 = vmatpush1.bf16.msra.mxu0 %v66
  %83 = vmatprep.subr.bf16.mxu0 0
  %84 = vmatpush1.bf16.msra.mxu0 0
  %85 = vmatprep.subr.bf16.mxu0 0
  %86 = vmatpush1.bf16.msra.mxu0 0
  %87 = vmatprep.subr.bf16.mxu0 0
  %88 = vmatpush1.bf16.msra.mxu0 0
  %89 = vmatprep.subr.bf16.mxu0 0
  %90 = vmatpush1.bf16.msra.mxu0 0
  %91 = vmatprep.subr.bf16.mxu0 0
  %92 = vmatpush1.bf16.msra.mxu0 0
  %93 = vmatprep.subr.bf16.mxu0 0
  %94 = vmatpush1.bf16.msra.mxu0 0
  %95 = vmatprep.subr.bf16.mxu0 0
  %96 = vmatpush1.bf16.msra.mxu0 0
  %97 = vmatprep.subr.bf16.mxu0 0
  %98 = vmatpush1.bf16.msra.mxu0 0
  %99 = vmatprep.subr.bf16.mxu0 0
  %100 = vmatpush1.bf16.msra.mxu0 0
  %101 = vmatprep.subr.bf16.mxu0 0
  %102 = vmatpush1.bf16.msra.mxu0 0
  %103 = vmatprep.subr.bf16.mxu0 0
  %104 = vmatpush1.bf16.msra.mxu0 0
  %105 = vmatprep.subr.bf16.mxu0 0
  %106 = vmatpush1.bf16.msra.mxu0 0
  %107 = vmatprep.subr.bf16.mxu0 0
  %108 = vmatpush1.bf16.msra.mxu0 0
  %109 = vmatprep.subr.bf16.mxu0 0
  %110 = vmatpush1.bf16.msra.mxu0 0
  %111 = vmatprep.mubr.bf16.mxu0 0
  %112 = vmatmul.mubr.bf16.gmra.mrb[0].mxu0 %v77
  %v113 = vpop.f32.mrb[0].mxu0
  %v114 = vadd.f32 %v31, %v113
  %v115 = vpop.f32.mrb[0].mxu0
  %v116 = vadd.f32 %v35, %v115
  %v117 = vpop.f32.mrb[0].mxu0
  %v118 = vadd.f32 %v31, %v117
  %v119 = vpop.f32.mrb[0].mxu0
  %v120 = vadd.f32 %v35, %v119
  %121 = vdwg.mxu0
  %122 = vmatprep.subr.bf16.mxu0 0
  %123 = vmatpush1.bf16.msra.mxu0 %v65
  %124 = vmatprep.subr.bf16.mxu0 0
  %125 = vmatpush1.bf16.msra.mxu0 %v68
  %126 = vmatprep.subr.bf16.mxu0 0
  %127 = vmatpush1.bf16.msra.mxu0 0
  %128 = vmatprep.subr.bf16.mxu0 0
  %129 = vmatpush1.bf16.msra.mxu0 0
  %130 = vmatprep.subr.bf16.mxu0 0
  %131 = vmatpush1.bf16.msra.mxu0 0
  %132 = vmatprep.subr.bf16.mxu0 0
  %133 = vmatpush1.bf16.msra.mxu0 0
  %134 = vmatprep.subr.bf16.mxu0 0
  %135 = vmatpush1.bf16.msra.mxu0 0
  %136 = vmatprep.subr.bf16.mxu0 0
  %137 = vmatpush1.bf16.msra.mxu0 0
  %138 = vmatprep.subr.bf16.mxu0 0
  %139 = vmatpush1.bf16.msra.mxu0 0
  %140 = vmatprep.subr.bf16.mxu0 0
  %141 = vmatpush1.bf16.msra.mxu0 0
  %142 = vmatprep.subr.bf16.mxu0 0
  %143 = vmatpush1.bf16.msra.mxu0 0
  %144 = vmatprep.subr.bf16.mxu0 0
  %145 = vmatpush1.bf16.msra.mxu0 0
  %146 = vmatprep.subr.bf16.mxu0 0
  %147 = vmatpush1.bf16.msra.mxu0 0
  %148 = vmatprep.subr.bf16.mxu0 0
  %149 = vmatpush1.bf16.msra.mxu0 0
  %150 = vmatprep.subr.bf16.mxu0 0
  %151 = vmatpush1.bf16.msra.mxu0 0
  %152 = vmatprep.subr.bf16.mxu0 0
  %153 = vmatpush1.bf16.msra.mxu0 0
  %154 = vmatprep.mubr.bf16.mxu0 0
  %155 = vmatmul.mubr.bf16.gmra.mrb[0].mxu0 %v77
  %v156 = vpop.f32.mrb[0].mxu0
  %v157 = vadd.f32 %v39, %v156
  %v158 = vpop.f32.mrb[0].mxu0
  %v159 = vpop.f32.mrb[0].mxu0
  %v160 = vadd.f32 %v39, %v159
  %v161 = vpop.f32.mrb[0].mxu0
  %162 = vdwg.mxu0
  %163 = vst [vmem:[%s3] sm:$0xff] %v114
  %164 = vst [vmem:[%s3 + $0x8] sm:$0xff] %v116
  %165 = vst [vmem:[%s3 + $0x10] sm:$0xff] %v157
  %166 = vst [vmem:[%s3 + $0x18] sm:$0xff] %v118
  %167 = vst [vmem:[%s3 + $0x20] sm:$0xff] %v120
  %168 = vst [vmem:[%s3 + $0x28] sm:$0xff] %v160
  // Predicated region
  $region14: #{structure_module_forward.30} parent=0 // pred_check
    _
  $region15: #{structure_module_forward.30} parent=0 // pred_check_branch
    %170 = sbr.rel (0) target = $region17
  $region16: #{structure_module_forward.30} parent=0 // pred_region
    _
  $region17: #{structure_module_forward.30} parent=0 // pred_fallthru
    _
  // Predicated region
  $region18: #{structure_module_forward.30} parent=0 // pred_check
    _
  $region19: #{structure_module_forward.30} parent=0 // pred_check_branch
    %172 = sbr.rel (0) target = $region21
  $region20: #{structure_module_forward.30} parent=0 // pred_region
    _
  $region21: #{structure_module_forward.30} parent=0 // pred_fallthru
    _

// kernel: structure_module_forward.31
$region0: #{structure_module_forward.31}
  #allocation0 [shape = 'u32[]', space=smem, size = 0x4, offset = 0x4, fixed_abs, tag = 'smem constant byte address 0x4 - core index']
  #allocation1 [shape = 'u32[144,128]{1,0:T(1,128)}', space=vmem, size = 0x12000, scoped, tag = 'internal scratch']
  %s0 = inlined_call_operand.vmem [shape: f32[128,16], index: 0, kind: input, shape index: {}]
  %s1 = inlined_call_operand.vmem [shape: bf16[16,8], index: 1, kind: input, shape index: {}]
  %s2 = inlined_call_operand.vmem [shape: f32[1,8], index: 2, kind: input, shape index: {}]
  %s3 = inlined_call_operand.vmem [shape: bf16[128,8], index: 3, kind: output, shape index: {}]
  %s4 = sld [smem:[#allocation0]]
  $region22: #{structure_module_forward.31} parent=0
    _
  %s6 = ssub.s32 1, %s4
  %s7 = scalar_select 0, %s6, %s4
  // Predicated region
  $region2: #{structure_module_forward.31} parent=0 // pred_check
    _
  $region3: #{structure_module_forward.31} parent=0 // pred_check_branch
    %9 = sbr.rel (0) target = $region5
  $region4: #{structure_module_forward.31} parent=0 // pred_region
    _
  $region5: #{structure_module_forward.31} parent=0 // pred_fallthru
    _
  // Predicated region
  $region6: #{structure_module_forward.31} parent=0 // pred_check
    _
  $region7: #{structure_module_forward.31} parent=0 // pred_check_branch
    %11 = sbr.rel (0) target = $region9
  $region8: #{structure_module_forward.31} parent=0 // pred_region
    _
  $region9: #{structure_module_forward.31} parent=0 // pred_fallthru
    _
  // Predicated region
  $region10: #{structure_module_forward.31} parent=0 // pred_check
    _
  $region11: #{structure_module_forward.31} parent=0 // pred_check_branch
    %13 = sbr.rel (0) target = $region13
  $region12: #{structure_module_forward.31} parent=0 // pred_region
    _
  $region13: #{structure_module_forward.31} parent=0 // pred_fallthru
    _
  %v15 = vld [vmem:[%s0] sm:$0xff]
  %v16 = vld [vmem:[%s0 + $0x8] sm:$0xff]
  %v17 = vld [vmem:[%s0 + $0x10] sm:$0xff]
  %v18 = vld [vmem:[%s0 + $0x18] sm:$0xff]
  %v19 = vld [vmem:[%s0 + $0x20] sm:$0xff]
  %v20 = vld [vmem:[%s0 + $0x28] sm:$0xff]
  %v21 = vld [vmem:[%s0 + $0x30] sm:$0xff]
  %v22 = vld [vmem:[%s0 + $0x38] sm:$0xff]
  %v23 = vld [vmem:[%s0 + $0x40] sm:$0xff]
  %v24 = vld [vmem:[%s0 + $0x48] sm:$0xff]
  %v25 = vld [vmem:[%s0 + $0x50] sm:$0xff]
  %v26 = vld [vmem:[%s0 + $0x58] sm:$0xff]
  %v27 = vld [vmem:[%s0 + $0x60] sm:$0xff]
  %v28 = vld [vmem:[%s0 + $0x68] sm:$0xff]
  %v29 = vld [vmem:[%s0 + $0x70] sm:$0xff]
  %v30 = vld [vmem:[%s0 + $0x78] sm:$0xff]
  %v31 = vld [vmem:[%s1] sm:$0xf]
  %v32 = vld [vmem:[%s1 + $0x4] sm:$0xf]
  %v33 = vld [vmem:[%s2] sm:$0x1]
  %v34 = vpack.c.bf16 %v16, %v15
  %v35 = vpack.c.bf16 %v18, %v17
  %v36 = vpack.c.bf16 %v20, %v19
  %v37 = vpack.c.bf16 %v22, %v21
  %v38 = vpack.c.bf16 %v24, %v23
  %v39 = vpack.c.bf16 %v26, %v25
  %v40 = vpack.c.bf16 %v28, %v27
  %v41 = vpack.c.bf16 %v30, %v29
  %v43 = vlaneseq
  %v44 = vshrl.u32 %v43, 7
  %v45 = vsub.s32 0, %v44
  %v46 = vrot.slane %v33, %v45
  %v50 = vunpack.c.l.b16 %v31
  %v51 = vunpack.c.l.b16 %v32
  %v52 = vpack.c.b16 %v51, %v50
  %vm54 = vcmask 130048
  %v56 = vsel %vm54, %v34, 0
  %v59 = vsel %vm54, %v35, 0
  %v62 = vsel %vm54, %v36, 0
  %v65 = vsel %vm54, %v37, 0
  %v68 = vsel %vm54, %v38, 0
  %v71 = vsel %vm54, %v39, 0
  %v74 = vsel %vm54, %v40, 0
  %v77 = vsel %vm54, %v41, 0
  %79 = vmatprep.subr.bf16.mxu0 0
  %80 = vmatpush1.bf16.msra.mxu0 %v52
  %81 = vmatprep.subr.bf16.mxu0 0
  %82 = vmatpush1.bf16.msra.mxu0 0
  %83 = vmatprep.subr.bf16.mxu0 0
  %84 = vmatpush1.bf16.msra.mxu0 0
  %85 = vmatprep.subr.bf16.mxu0 0
  %86 = vmatpush1.bf16.msra.mxu0 0
  %87 = vmatprep.subr.bf16.mxu0 0
  %88 = vmatpush1.bf16.msra.mxu0 0
  %89 = vmatprep.subr.bf16.mxu0 0
  %90 = vmatpush1.bf16.msra.mxu0 0
  %91 = vmatprep.subr.bf16.mxu0 0
  %92 = vmatpush1.bf16.msra.mxu0 0
  %93 = vmatprep.subr.bf16.mxu0 0
  %94 = vmatpush1.bf16.msra.mxu0 0
  %95 = vmatprep.subr.bf16.mxu0 0
  %96 = vmatpush1.bf16.msra.mxu0 0
  %97 = vmatprep.subr.bf16.mxu0 0
  %98 = vmatpush1.bf16.msra.mxu0 0
  %99 = vmatprep.subr.bf16.mxu0 0
  %100 = vmatpush1.bf16.msra.mxu0 0
  %101 = vmatprep.subr.bf16.mxu0 0
  %102 = vmatpush1.bf16.msra.mxu0 0
  %103 = vmatprep.subr.bf16.mxu0 0
  %104 = vmatpush1.bf16.msra.mxu0 0
  %105 = vmatprep.subr.bf16.mxu0 0
  %106 = vmatpush1.bf16.msra.mxu0 0
  %107 = vmatprep.subr.bf16.mxu0 0
  %108 = vmatpush1.bf16.msra.mxu0 0
  %109 = vmatprep.subr.bf16.mxu0 0
  %110 = vmatpush1.bf16.msra.mxu0 0
  %111 = vmatprep.mubr.bf16.mxu0 0
  %112 = vmatmul.mubr.bf16.gmra.mrb[0].mxu0 %v56
  %v113 = vpop.f32.mrb[0].mxu0
  %v114 = vadd.f32 %v46, %v113
  %v115 = vpop.f32.mrb[0].mxu0
  %v116 = vpop.f32.mrb[0].mxu0
  %v117 = vadd.f32 %v46, %v116
  %v118 = vpop.f32.mrb[0].mxu0
  %119 = vmatprep.mubr.bf16.mxu0 0
  %120 = vmatmul.mubr.bf16.gmra.mrb[0].mxu0 %v59
  %v121 = vpop.f32.mrb[0].mxu0
  %v122 = vadd.f32 %v46, %v121
  %v123 = vpop.f32.mrb[0].mxu0
  %v124 = vpop.f32.mrb[0].mxu0
  %v125 = vadd.f32 %v46, %v124
  %v126 = vpop.f32.mrb[0].mxu0
  %127 = vmatprep.mubr.bf16.mxu0 0
  %128 = vmatmul.mubr.bf16.gmra.mrb[0].mxu0 %v62
  %v129 = vpop.f32.mrb[0].mxu0
  %v130 = vadd.f32 %v46, %v129
  %v131 = vpop.f32.mrb[0].mxu0
  %v132 = vpop.f32.mrb[0].mxu0
  %v133 = vadd.f32 %v46, %v132
  %v134 = vpop.f32.mrb[0].mxu0
  %135 = vmatprep.mubr.bf16.mxu0 0
  %136 = vmatmul.mubr.bf16.gmra.mrb[0].mxu0 %v65
  %v137 = vpop.f32.mrb[0].mxu0
  %v138 = vadd.f32 %v46, %v137
  %v139 = vpop.f32.mrb[0].mxu0
  %v140 = vpop.f32.mrb[0].mxu0
  %v141 = vadd.f32 %v46, %v140
  %v142 = vpop.f32.mrb[0].mxu0
  %143 = vmatprep.mubr.bf16.mxu0 0
  %144 = vmatmul.mubr.bf16.gmra.mrb[0].mxu0 %v68
  %v145 = vpop.f32.mrb[0].mxu0
  %v146 = vadd.f32 %v46, %v145
  %v147 = vpop.f32.mrb[0].mxu0
  %v148 = vpop.f32.mrb[0].mxu0
  %v149 = vadd.f32 %v46, %v148
  %v150 = vpop.f32.mrb[0].mxu0
  %151 = vmatprep.mubr.bf16.mxu0 0
  %152 = vmatmul.mubr.bf16.gmra.mrb[0].mxu0 %v71
  %v153 = vpop.f32.mrb[0].mxu0
  %v154 = vadd.f32 %v46, %v153
  %v155 = vpop.f32.mrb[0].mxu0
  %v156 = vpop.f32.mrb[0].mxu0
  %v157 = vadd.f32 %v46, %v156
  %v158 = vpop.f32.mrb[0].mxu0
  %159 = vmatprep.mubr.bf16.mxu0 0
  %160 = vmatmul.mubr.bf16.gmra.mrb[0].mxu0 %v74
  %v161 = vpop.f32.mrb[0].mxu0
  %v162 = vadd.f32 %v46, %v161
  %v163 = vpop.f32.mrb[0].mxu0
  %v164 = vpop.f32.mrb[0].mxu0
  %v165 = vadd.f32 %v46, %v164
  %v166 = vpop.f32.mrb[0].mxu0
  %167 = vmatprep.mubr.bf16.mxu0 0
  %168 = vmatmul.mubr.bf16.gmra.mrb[0].mxu0 %v77
  %v169 = vpop.f32.mrb[0].mxu0
  %v170 = vadd.f32 %v46, %v169
  %v171 = vpop.f32.mrb[0].mxu0
  %v172 = vpop.f32.mrb[0].mxu0
  %v173 = vadd.f32 %v46, %v172
  %v174 = vpop.f32.mrb[0].mxu0
  %175 = vdwg.mxu0
  %v176 = vpack.c.bf16 %v117, %v114
  %v177 = vpack.c.bf16 %v125, %v122
  %v178 = vpack.c.bf16 %v133, %v130
  %v179 = vpack.c.bf16 %v141, %v138
  %v180 = vpack.c.bf16 %v149, %v146
  %v181 = vpack.c.bf16 %v157, %v154
  %v182 = vpack.c.bf16 %v165, %v162
  %v183 = vpack.c.bf16 %v173, %v170
  %v192 = vunpack.c.l.b16 %v176
  %v193 = vunpack.c.h.b16 %v176
  %v194 = vunpack.c.l.b16 %v177
  %v195 = vunpack.c.h.b16 %v177
  %v196 = vunpack.c.l.b16 %v178
  %v197 = vunpack.c.h.b16 %v178
  %v198 = vunpack.c.l.b16 %v179
  %v199 = vunpack.c.h.b16 %v179
  %v200 = vunpack.c.l.b16 %v180
  %v201 = vunpack.c.h.b16 %v180
  %v202 = vunpack.c.l.b16 %v181
  %v203 = vunpack.c.h.b16 %v181
  %v204 = vunpack.c.l.b16 %v182
  %v205 = vunpack.c.h.b16 %v182
  %v206 = vunpack.c.l.b16 %v183
  %v207 = vunpack.c.h.b16 %v183
  %v208 = vpack.c.b16 %v192, %v192
  %v209 = vpack.c.b16 %v193, %v193
  %v210 = vpack.c.b16 %v194, %v194
  %v211 = vpack.c.b16 %v195, %v195
  %v212 = vpack.c.b16 %v196, %v196
  %v213 = vpack.c.b16 %v197, %v197
  %v214 = vpack.c.b16 %v198, %v198
  %v215 = vpack.c.b16 %v199, %v199
  %v216 = vpack.c.b16 %v200, %v200
  %v217 = vpack.c.b16 %v201, %v201
  %v218 = vpack.c.b16 %v202, %v202
  %v219 = vpack.c.b16 %v203, %v203
  %v220 = vpack.c.b16 %v204, %v204
  %v221 = vpack.c.b16 %v205, %v205
  %v222 = vpack.c.b16 %v206, %v206
  %v223 = vpack.c.b16 %v207, %v207
  %vm240 = vcmask 60416
  %241 = vst.msk [vmem:[%s3] sm:$0xf] %vm240, %v208
  %242 = vst.msk [vmem:[%s3 + $0x4] sm:$0xf] %vm240, %v209
  %243 = vst.msk [vmem:[%s3 + $0x8] sm:$0xf] %vm240, %v210
  %244 = vst.msk [vmem:[%s3 + $0xc] sm:$0xf] %vm240, %v211
  %245 = vst.msk [vmem:[%s3 + $0x10] sm:$0xf] %vm240, %v212
  %246 = vst.msk [vmem:[%s3 + $0x14] sm:$0xf] %vm240, %v213
  %247 = vst.msk [vmem:[%s3 + $0x18] sm:$0xf] %vm240, %v214
  %248 = vst.msk [vmem:[%s3 + $0x1c] sm:$0xf] %vm240, %v215
  %249 = vst.msk [vmem:[%s3 + $0x20] sm:$0xf] %vm240, %v216
  %250 = vst.msk [vmem:[%s3 + $0x24] sm:$0xf] %vm240, %v217
  %251 = vst.msk [vmem:[%s3 + $0x28] sm:$0xf] %vm240, %v218
  %252 = vst.msk [vmem:[%s3 + $0x2c] sm:$0xf] %vm240, %v219
  %253 = vst.msk [vmem:[%s3 + $0x30] sm:$0xf] %vm240, %v220
  %254 = vst.msk [vmem:[%s3 + $0x34] sm:$0xf] %vm240, %v221
  %255 = vst.msk [vmem:[%s3 + $0x38] sm:$0xf] %vm240, %v222
  %256 = vst.msk [vmem:[%s3 + $0x3c] sm:$0xf] %vm240, %v223
  // Predicated region
  $region14: #{structure_module_forward.31} parent=0 // pred_check
    _
  $region15: #{structure_module_forward.31} parent=0 // pred_check_branch
    %258 = sbr.rel (0) target = $region17
  $region16: #{structure_module_forward.31} parent=0 // pred_region
    _
  $region17: #{structure_module_forward.31} parent=0 // pred_fallthru
    _
  // Predicated region
  $region18: #{structure_module_forward.31} parent=0 // pred_check
    _
  $region19: #{structure_module_forward.31} parent=0 // pred_check_branch
    %260 = sbr.rel (0) target = $region21
  $region20: #{structure_module_forward.31} parent=0 // pred_region
    _
  $region21: #{structure_module_forward.31} parent=0 // pred_fallthru
    _

// kernel: structure_module_forward.32
$region0: #{structure_module_forward.32}
  #allocation0 [shape = 'u32[]', space=smem, size = 0x4, offset = 0x4, fixed_abs, tag = 'smem constant byte address 0x4 - core index']
  #allocation1 [shape = 'u32[144,128]{1,0:T(1,128)}', space=vmem, size = 0x12000, scoped, tag = 'internal scratch']
  #allocation2 [shape = 'bf16[8,4,8]{2,1,0:T(4,128)(2,1)}', space=vmem, size = 0x2000, scoped, tag = 'scratch operand']
  %s0 = inlined_call_operand.vmem [shape: bf16[2,4,8,28], index: 0, kind: input, shape index: {}]
  %s1 = inlined_call_operand.vmem [shape: bf16[2,4,8,28], index: 1, kind: input, shape index: {}]
  %s2 = inlined_call_operand.vmem [shape: bf16[2,4,8,40], index: 2, kind: input, shape index: {}]
  %s3 = inlined_call_operand.vmem [shape: f32[2,4,1,8], index: 3, kind: input, shape index: {}]
  %s4 = inlined_call_operand.vmem [shape: bf16[2,4,8,8], index: 4, kind: input, shape index: {}]
  %s5 = inlined_call_operand.vmem [shape: bf16[2,8,8,4], index: 5, kind: input, shape index: {}]
  %s6 = inlined_call_operand.vmem [shape: f32[2,8,1], index: 6, kind: input, shape index: {}]
  %s7 = inlined_call_operand.vmem [shape: f32[2,1,8], index: 7, kind: input, shape index: {}]
  %s8 = inlined_call_operand.vmem [shape: f32[2,4,8,40], index: 8, kind: output, shape index: {0}]
  %s9 = inlined_call_operand.vmem [shape: f32[2,8,4,4], index: 9, kind: output, shape index: {1}]
  %10 = xla_tuple %s8, %s9
  %s11 = sld [smem:[#allocation0]]
  $region73: #{structure_module_forward.32} parent=0
    _
  %s13 = ssub.s32 1, %s11
  %s14 = scalar_select 0, %s13, %s11
  loop: start=0, step=1, limit=4
  $region2: #{structure_module_forward.32} parent=0 // loop_pre_header
    _
  $region3: #{structure_module_forward.32} parent=0 // loop_header
    %s16 = sphi 0, %s20
    %p17 = scmp.ge.s32.totalorder %s16, 4
    %s23 = sphi 0, %s35
    %s24 = sphi 0, %s31
    %s25 = sphi 0, %s23
    %s26 = sphi 0, %s24
    %s27 = sphi 0, %s25
    %s28 = sphi 0, %s26
    %s40 = sphi 0, %s42
    %s43 = sphi 0, %s40
    %s44 = sphi 0, %s43
    %s60 = sphi 0, %s44
    %s66 = sphi 0, %s68
    %s69 = sphi 0, %s66
    %s70 = sphi 0, %s69
    %s86 = sphi 0, %s70
    %s92 = sphi 0, %s94
    %s95 = sphi 0, %s92
    %s96 = sphi 0, %s95
    %s112 = sphi 0, %s96
    %s118 = sphi 0, %s120
    %s121 = sphi 0, %s118
    %s122 = sphi 0, %s121
    %s138 = sphi 0, %s122
    %s146 = sphi 0, %s148
    %s149 = sphi 0, %s146
    %s150 = sphi 0, %s149
    %s166 = sphi 0, %s150
    %s174 = sphi 0, %s176
    %s177 = sphi 0, %s174
    %s178 = sphi 0, %s177
    %s194 = sphi 0, %s178
    %s202 = sphi 0, %s204
    %s205 = sphi 0, %s202
    %s206 = sphi 0, %s205
    %s222 = sphi 0, %s206
    %s228 = sphi 0, %s230
    %s231 = sphi 0, %s228
    %s232 = sphi 0, %s231
    %s248 = sphi 0, %s232
    %s256 = sphi 0, %s258
    %s259 = sphi 0, %s256
    %s260 = sphi 0, %s259
    %s276 = sphi 0, %s260
    %s284 = sphi 0, %s286
    %s287 = sphi 0, %s284
    %s288 = sphi 0, %s287
    %s304 = sphi 0, %s288
  $region4: #{structure_module_forward.32} parent=0 // loop_header_branch
    %19 = sbr.rel (%p17) target = $region8
  $region5: #{structure_module_forward.32} parent=0 // loop_body
    %s21 = ssub.s32 %s16, 1
    %s22 = ssub.s32 %s16, 2
    %s29 = sadd.s32 1, %s24
    %p30 = scmp.ge.s32.totalorder %s29, 1
    %s31 = scalar_select %p30, 0, %s29
    %s32 = sadd.s32 1, %s23
    %s33 = scalar_select %p30, %s32, %s23
    %p34 = scmp.ge.s32.totalorder %s33, 2
    %s35 = scalar_select %p34, 0, %s33
    %s36 = ssub.s32 %s23, %s35
    %s37 = ssub.s32 %s24, %s31
    %s38 = sor.u32 %s36, %s37
    %p39 = scmp.eq.s32.totalorder %s38, 0
    %s41 = sadd.s32 %s40, 1
    %s42 = scalar_select %p39, %s40, %s41
    %p45 = pneg %p39
    %p46 = scmp.eq.s32.totalorder %s16, 1
    %p47 = por %p45, %p46
    %p48 = scmp.ne.s32.totalorder %s40, %s43
    %p49 = scmp.eq.s32.totalorder %s16, 0
    %p50 = por %p48, %p49
    %p51 = scmp.ne.s32.totalorder %s40, %s43
    %p52 = scmp.eq.s32.totalorder %s21, 1
    %p53 = por %p51, %p52
    %p54 = scmp.ne.s32.totalorder %s43, %s44
    %p55 = scmp.eq.s32.totalorder %s21, 0
    %p56 = por %p54, %p55
    %p57 = scmp.ne.s32.totalorder %s43, %s44
    %p58 = scmp.eq.s32.totalorder %s22, 1
    %p59 = por %p57, %p58
    %p61 = scmp.ne.s32.totalorder %s44, %s60
    %p62 = scmp.eq.s32.totalorder %s22, 0
    %p63 = por %p61, %p62
    %s64 = ssub.s32 %s23, %s35
    %p65 = scmp.eq.s32.totalorder %s64, 0
    %s67 = sadd.s32 %s66, 1
    %s68 = scalar_select %p65, %s66, %s67
    %p71 = pneg %p65
    %p72 = scmp.eq.s32.totalorder %s16, 1
    %p73 = por %p71, %p72
    %p74 = scmp.ne.s32.totalorder %s66, %s69
    %p75 = scmp.eq.s32.totalorder %s16, 0
    %p76 = por %p74, %p75
    %p77 = scmp.ne.s32.totalorder %s66, %s69
    %p78 = scmp.eq.s32.totalorder %s21, 1
    %p79 = por %p77, %p78
    %p80 = scmp.ne.s32.totalorder %s69, %s70
    %p81 = scmp.eq.s32.totalorder %s21, 0
    %p82 = por %p80, %p81
    %p83 = scmp.ne.s32.totalorder %s69, %s70
    %p84 = scmp.eq.s32.totalorder %s22, 1
    %p85 = por %p83, %p84
    %p87 = scmp.ne.s32.totalorder %s70, %s86
    %p88 = scmp.eq.s32.totalorder %s22, 0
    %p89 = por %p87, %p88
    %s90 = ssub.s32 %s23, %s35
    %p91 = scmp.eq.s32.totalorder %s90, 0
    %s93 = sadd.s32 %s92, 1
    %s94 = scalar_select %p91, %s92, %s93
    %p97 = pneg %p91
    %p98 = scmp.eq.s32.totalorder %s16, 1
    %p99 = por %p97, %p98
    %p100 = scmp.ne.s32.totalorder %s92, %s95
    %p101 = scmp.eq.s32.totalorder %s16, 0
    %p102 = por %p100, %p101
    %p103 = scmp.ne.s32.totalorder %s92, %s95
    %p104 = scmp.eq.s32.totalorder %s21, 1
    %p105 = por %p103, %p104
    %p106 = scmp.ne.s32.totalorder %s95, %s96
    %p107 = scmp.eq.s32.totalorder %s21, 0
    %p108 = por %p106, %p107
    %p109 = scmp.ne.s32.totalorder %s95, %s96
    %p110 = scmp.eq.s32.totalorder %s22, 1
    %p111 = por %p109, %p110
    %p113 = scmp.ne.s32.totalorder %s96, %s112
    %p114 = scmp.eq.s32.totalorder %s22, 0
    %p115 = por %p113, %p114
    %s116 = ssub.s32 %s23, %s35
    %p117 = scmp.eq.s32.totalorder %s116, 0
    %s119 = sadd.s32 %s118, 1
    %s120 = scalar_select %p117, %s118, %s119
    %p123 = pneg %p117
    %p124 = scmp.eq.s32.totalorder %s16, 1
    %p125 = por %p123, %p124
    %p126 = scmp.ne.s32.totalorder %s118, %s121
    %p127 = scmp.eq.s32.totalorder %s16, 0
    %p128 = por %p126, %p127
    %p129 = scmp.ne.s32.totalorder %s118, %s121
    %p130 = scmp.eq.s32.totalorder %s21, 1
    %p131 = por %p129, %p130
    %p132 = scmp.ne.s32.totalorder %s121, %s122
    %p133 = scmp.eq.s32.totalorder %s21, 0
    %p134 = por %p132, %p133
    %p135 = scmp.ne.s32.totalorder %s121, %s122
    %p136 = scmp.eq.s32.totalorder %s22, 1
    %p137 = por %p135, %p136
    %p139 = scmp.ne.s32.totalorder %s122, %s138
    %p140 = scmp.eq.s32.totalorder %s22, 0
    %p141 = por %p139, %p140
    %s142 = ssub.s32 %s23, %s35
    %s143 = ssub.s32 %s24, %s31
    %s144 = sor.u32 %s142, %s143
    %p145 = scmp.eq.s32.totalorder %s144, 0
    %s147 = sadd.s32 %s146, 1
    %s148 = scalar_select %p145, %s146, %s147
    %p151 = pneg %p145
    %p152 = scmp.eq.s32.totalorder %s16, 1
    %p153 = por %p151, %p152
    %p154 = scmp.ne.s32.totalorder %s146, %s149
    %p155 = scmp.eq.s32.totalorder %s16, 0
    %p156 = por %p154, %p155
    %p157 = scmp.ne.s32.totalorder %s146, %s149
    %p158 = scmp.eq.s32.totalorder %s21, 1
    %p159 = por %p157, %p158
    %p160 = scmp.ne.s32.totalorder %s149, %s150
    %p161 = scmp.eq.s32.totalorder %s21, 0
    %p162 = por %p160, %p161
    %p163 = scmp.ne.s32.totalorder %s149, %s150
    %p164 = scmp.eq.s32.totalorder %s22, 1
    %p165 = por %p163, %p164
    %p167 = scmp.ne.s32.totalorder %s150, %s166
    %p168 = scmp.eq.s32.totalorder %s22, 0
    %p169 = por %p167, %p168
    %s170 = ssub.s32 %s23, %s35
    %s171 = ssub.s32 %s24, %s31
    %s172 = sor.u32 %s170, %s171
    %p173 = scmp.eq.s32.totalorder %s172, 0
    %s175 = sadd.s32 %s174, 1
    %s176 = scalar_select %p173, %s174, %s175
    %p179 = pneg %p173
    %p180 = scmp.eq.s32.totalorder %s16, 1
    %p181 = por %p179, %p180
    %p182 = scmp.ne.s32.totalorder %s174, %s177
    %p183 = scmp.eq.s32.totalorder %s16, 0
    %p184 = por %p182, %p183
    %p185 = scmp.ne.s32.totalorder %s174, %s177
    %p186 = scmp.eq.s32.totalorder %s21, 1
    %p187 = por %p185, %p186
    %p188 = scmp.ne.s32.totalorder %s177, %s178
    %p189 = scmp.eq.s32.totalorder %s21, 0
    %p190 = por %p188, %p189
    %p191 = scmp.ne.s32.totalorder %s177, %s178
    %p192 = scmp.eq.s32.totalorder %s22, 1
    %p193 = por %p191, %p192
    %p195 = scmp.ne.s32.totalorder %s178, %s194
    %p196 = scmp.eq.s32.totalorder %s22, 0
    %p197 = por %p195, %p196
    %s198 = ssub.s32 %s23, %s35
    %s199 = ssub.s32 %s24, %s31
    %s200 = sor.u32 %s198, %s199
    %p201 = scmp.eq.s32.totalorder %s200, 0
    %s203 = sadd.s32 %s202, 1
    %s204 = scalar_select %p201, %s202, %s203
    %p207 = pneg %p201
    %p208 = scmp.eq.s32.totalorder %s16, 1
    %p209 = por %p207, %p208
    %p210 = scmp.ne.s32.totalorder %s202, %s205
    %p211 = scmp.eq.s32.totalorder %s16, 0
    %p212 = por %p210, %p211
    %p213 = scmp.ne.s32.totalorder %s202, %s205
    %p214 = scmp.eq.s32.totalorder %s21, 1
    %p215 = por %p213, %p214
    %p216 = scmp.ne.s32.totalorder %s205, %s206
    %p217 = scmp.eq.s32.totalorder %s21, 0
    %p218 = por %p216, %p217
    %p219 = scmp.ne.s32.totalorder %s205, %s206
    %p220 = scmp.eq.s32.totalorder %s22, 1
    %p221 = por %p219, %p220
    %p223 = scmp.ne.s32.totalorder %s206, %s222
    %p224 = scmp.eq.s32.totalorder %s22, 0
    %p225 = por %p223, %p224
    %s226 = ssub.s32 %s23, %s35
    %p227 = scmp.eq.s32.totalorder %s226, 0
    %s229 = sadd.s32 %s228, 1
    %s230 = scalar_select %p227, %s228, %s229
    %p233 = pneg %p227
    %p234 = scmp.eq.s32.totalorder %s16, 1
    %p235 = por %p233, %p234
    %p236 = scmp.ne.s32.totalorder %s228, %s231
    %p237 = scmp.eq.s32.totalorder %s16, 0
    %p238 = por %p236, %p237
    %p239 = scmp.ne.s32.totalorder %s228, %s231
    %p240 = scmp.eq.s32.totalorder %s21, 1
    %p241 = por %p239, %p240
    %p242 = scmp.ne.s32.totalorder %s231, %s232
    %p243 = scmp.eq.s32.totalorder %s21, 0
    %p244 = por %p242, %p243
    %p245 = scmp.ne.s32.totalorder %s231, %s232
    %p246 = scmp.eq.s32.totalorder %s22, 1
    %p247 = por %p245, %p246
    %p249 = scmp.ne.s32.totalorder %s232, %s248
    %p250 = scmp.eq.s32.totalorder %s22, 0
    %p251 = por %p249, %p250
    %s252 = ssub.s32 %s23, %s35
    %s253 = ssub.s32 %s24, %s31
    %s254 = sor.u32 %s252, %s253
    %p255 = scmp.eq.s32.totalorder %s254, 0
    %s257 = sadd.s32 %s256, 1
    %s258 = scalar_select %p255, %s256, %s257
    %p261 = pneg %p255
    %p262 = scmp.eq.s32.totalorder %s16, 1
    %p263 = por %p261, %p262
    %p264 = scmp.ne.s32.totalorder %s256, %s259
    %p265 = scmp.eq.s32.totalorder %s16, 0
    %p266 = por %p264, %p265
    %p267 = scmp.ne.s32.totalorder %s256, %s259
    %p268 = scmp.eq.s32.totalorder %s21, 1
    %p269 = por %p267, %p268
    %p270 = scmp.ne.s32.totalorder %s259, %s260
    %p271 = scmp.eq.s32.totalorder %s21, 0
    %p272 = por %p270, %p271
    %p273 = scmp.ne.s32.totalorder %s259, %s260
    %p274 = scmp.eq.s32.totalorder %s22, 1
    %p275 = por %p273, %p274
    %p277 = scmp.ne.s32.totalorder %s260, %s276
    %p278 = scmp.eq.s32.totalorder %s22, 0
    %p279 = por %p277, %p278
    %s280 = ssub.s32 %s23, %s35
    %s281 = ssub.s32 %s24, %s31
    %s282 = sor.u32 %s280, %s281
    %p283 = scmp.eq.s32.totalorder %s282, 0
    %s285 = sadd.s32 %s284, 1
    %s286 = scalar_select %p283, %s284, %s285
    %p289 = pneg %p283
    %p290 = scmp.eq.s32.totalorder %s16, 1
    %p291 = por %p289, %p290
    %p292 = scmp.ne.s32.totalorder %s284, %s287
    %p293 = scmp.eq.s32.totalorder %s16, 0
    %p294 = por %p292, %p293
    %p295 = scmp.ne.s32.totalorder %s284, %s287
    %p296 = scmp.eq.s32.totalorder %s21, 1
    %p297 = por %p295, %p296
    %p298 = scmp.ne.s32.totalorder %s287, %s288
    %p299 = scmp.eq.s32.totalorder %s21, 0
    %p300 = por %p298, %p299
    %p301 = scmp.ne.s32.totalorder %s287, %s288
    %p302 = scmp.eq.s32.totalorder %s22, 1
    %p303 = por %p301, %p302
    %p305 = scmp.ne.s32.totalorder %s288, %s304
    %p306 = scmp.eq.s32.totalorder %s22, 0
    %p307 = por %p305, %p306
    %p308 = scmp.le.s32.totalorder 1, %s16
    %p309 = scmp.lt.s32.totalorder %s16, 3
    %p310 = pnand %p308, %p309
    %p311 = pneg %p310
    // Predicated region
    $region9: #{structure_module_forward.32} parent=5 // pred_check
      _
    $region10: #{structure_module_forward.32} parent=5 // pred_check_branch
      %313 = sbr.rel (%p310) target = $region12
    $region11: #{structure_module_forward.32} parent=5 // pred_region
      %s314 = ssub.s32 %s16, 1
    $region12: #{structure_module_forward.32} parent=5 // pred_fallthru
      _
    %p315 = scmp.lt.s32.totalorder %s16, 2
    // Predicated region
    $region13: #{structure_module_forward.32} parent=5 // pred_check
      %p316 = pneg %p315
    $region14: #{structure_module_forward.32} parent=5 // pred_check_branch
      %318 = sbr.rel (%p316) target = $region16
    $region15: #{structure_module_forward.32} parent=5 // pred_region
      // Predicated region
      $region17: #{structure_module_forward.32} parent=15 // pred_check
        %p319 = pneg %p50
      $region18: #{structure_module_forward.32} parent=15 // pred_check_branch
        %321 = sbr.rel (%p319) target = $region20
      $region19: #{structure_module_forward.32} parent=15 // pred_region
        %p322 = scmp.lt.s32.totalorder %s23, 1
        %s323 = scalar_select %p322, %s23, 1
        %p324 = scmp.lt.s32.totalorder %s24, 0
        %s325 = scalar_select %p324, %s24, 0
        %s326 = smul.addr %s323, 4
        %s327 = sadd.s32 %s325, %s326
        %s328 = smul.addr %s327, 4
        %s329 = scalar_lea.vmem %s0, %s328
      $region20: #{structure_module_forward.32} parent=15 // pred_fallthru
        _
      // Predicated region
      $region21: #{structure_module_forward.32} parent=15 // pred_check
        %p330 = pneg %p76
      $region22: #{structure_module_forward.32} parent=15 // pred_check_branch
        %332 = sbr.rel (%p330) target = $region24
      $region23: #{structure_module_forward.32} parent=15 // pred_region
        %p333 = scmp.lt.s32.totalorder %s23, 1
        %s334 = scalar_select %p333, %s23, 1
        %s335 = smul.addr %s334, 4
        %s336 = smul.addr %s335, 4
        %s337 = scalar_lea.vmem %s1, %s336
      $region24: #{structure_module_forward.32} parent=15 // pred_fallthru
        _
      // Predicated region
      $region25: #{structure_module_forward.32} parent=15 // pred_check
        %p338 = pneg %p102
      $region26: #{structure_module_forward.32} parent=15 // pred_check_branch
        %340 = sbr.rel (%p338) target = $region28
      $region27: #{structure_module_forward.32} parent=15 // pred_region
        %p341 = scmp.lt.s32.totalorder %s23, 1
        %s342 = scalar_select %p341, %s23, 1
        %s343 = smul.addr %s342, 4
        %s344 = smul.addr %s343, 4
        %s345 = scalar_lea.vmem %s2, %s344
      $region28: #{structure_module_forward.32} parent=15 // pred_fallthru
        _
      // Predicated region
      $region29: #{structure_module_forward.32} parent=15 // pred_check
        %p346 = pneg %p128
      $region30: #{structure_module_forward.32} parent=15 // pred_check_branch
        %348 = sbr.rel (%p346) target = $region32
      $region31: #{structure_module_forward.32} parent=15 // pred_region
        %p349 = scmp.lt.s32.totalorder %s23, 1
        %s350 = scalar_select %p349, %s23, 1
        %s351 = smul.addr %s350, 4
        %s352 = scalar_lea.vmem %s3, %s351
      $region32: #{structure_module_forward.32} parent=15 // pred_fallthru
        _
      // Predicated region
      $region33: #{structure_module_forward.32} parent=15 // pred_check
        %p353 = pneg %p156
      $region34: #{structure_module_forward.32} parent=15 // pred_check_branch
        %355 = sbr.rel (%p353) target = $region36
      $region35: #{structure_module_forward.32} parent=15 // pred_region
        %p356 = scmp.lt.s32.totalorder %s23, 1
        %s357 = scalar_select %p356, %s23, 1
        %p358 = scmp.lt.s32.totalorder %s24, 0
        %s359 = scalar_select %p358, %s24, 0
        %s360 = smul.addr %s357, 4
        %s361 = sadd.s32 %s359, %s360
        %s362 = smul.addr %s361, 4
        %s363 = scalar_lea.vmem %s4, %s362
      $region36: #{structure_module_forward.32} parent=15 // pred_fallthru
        _
      // Predicated region
      $region37: #{structure_module_forward.32} parent=15 // pred_check
        %p364 = pneg %p184
      $region38: #{structure_module_forward.32} parent=15 // pred_check_branch
        %366 = sbr.rel (%p364) target = $region40
      $region39: #{structure_module_forward.32} parent=15 // pred_region
        %s367 = smul.u32 8, %s24
        %p368 = scmp.lt.s32.totalorder %s23, 1
        %s369 = scalar_select %p368, %s23, 1
        %p370 = scmp.lt.s32.totalorder %s367, 7
        %s371 = scalar_select %p370, %s367, 7
        %s372 = smul.addr %s369, 8
        %s373 = sadd.s32 %s371, %s372
        %s374 = smul.addr %s373, 4
        %s375 = scalar_lea.vmem %s5, %s374
        %s376 = smul.u32 8, %s24
      $region40: #{structure_module_forward.32} parent=15 // pred_fallthru
        _
      // Predicated region
      $region41: #{structure_module_forward.32} parent=15 // pred_check
        %p377 = pneg %p212
      $region42: #{structure_module_forward.32} parent=15 // pred_check_branch
        %379 = sbr.rel (%p377) target = $region44
      $region43: #{structure_module_forward.32} parent=15 // pred_region
        %p380 = scmp.lt.s32.totalorder %s23, 1
        %s381 = scalar_select %p380, %s23, 1
        %p382 = scmp.lt.s32.totalorder %s24, 0
        %s383 = scalar_select %p382, %s24, 0
        %s384 = sadd.s32 %s383, %s381
        %s385 = smul.addr %s384, 8
        %s386 = scalar_lea.vmem %s6, %s385
      $region44: #{structure_module_forward.32} parent=15 // pred_fallthru
        _
      // Predicated region
      $region45: #{structure_module_forward.32} parent=15 // pred_check
        %p387 = pneg %p238
      $region46: #{structure_module_forward.32} parent=15 // pred_check_branch
        %389 = sbr.rel (%p387) target = $region48
      $region47: #{structure_module_forward.32} parent=15 // pred_region
        %p390 = scmp.lt.s32.totalorder %s23, 1
        %s391 = scalar_select %p390, %s23, 1
        %s392 = scalar_lea.vmem %s7, %s391
      $region48: #{structure_module_forward.32} parent=15 // pred_fallthru
        _
    $region16: #{structure_module_forward.32} parent=5 // pred_fallthru
      _
    %p393 = scmp.le.s32.totalorder 1, %s16
    %p394 = scmp.lt.s32.totalorder %s16, 3
    %p395 = pnand %p393, %p394
    %p396 = pneg %p395
    // Predicated region
    $region49: #{structure_module_forward.32} parent=5 // pred_check
      _
    $region50: #{structure_module_forward.32} parent=5 // pred_check_branch
      %398 = sbr.rel (%p395) target = $region52
    $region51: #{structure_module_forward.32} parent=5 // pred_region
      %s399 = ssub.s32 %s16, 1
      %p400 = scmp.lt.s32.totalorder %s25, 1
      %s401 = scalar_select %p400, %s25, 1
      %p402 = scmp.lt.s32.totalorder %s26, 0
      %s403 = scalar_select %p402, %s26, 0
      %s404 = smul.addr %s401, 4
      %s405 = sadd.s32 %s403, %s404
      %s406 = smul.addr %s405, 4
      %s407 = scalar_lea.vmem %s0, %s406
      %p408 = pneg %p56
      %p409 = pneg %p53
      %p410 = scmp.lt.s32.totalorder %s25, 1
      %s411 = scalar_select %p410, %s25, 1
      %s412 = smul.addr %s411, 4
      %s413 = smul.addr %s412, 4
      %s414 = scalar_lea.vmem %s1, %s413
      %p415 = pneg %p82
      %p416 = pneg %p79
      %p417 = scmp.lt.s32.totalorder %s25, 1
      %s418 = scalar_select %p417, %s25, 1
      %s419 = smul.addr %s418, 4
      %s420 = smul.addr %s419, 4
      %s421 = scalar_lea.vmem %s2, %s420
      %p422 = pneg %p108
      %p423 = pneg %p105
      %p424 = scmp.lt.s32.totalorder %s25, 1
      %s425 = scalar_select %p424, %s25, 1
      %s426 = smul.addr %s425, 4
      %s427 = scalar_lea.vmem %s3, %s426
      %p428 = pneg %p134
      %p429 = pneg %p131
      %p430 = scmp.lt.s32.totalorder %s25, 1
      %s431 = scalar_select %p430, %s25, 1
      %p432 = scmp.lt.s32.totalorder %s26, 0
      %s433 = scalar_select %p432, %s26, 0
      %s434 = smul.addr %s431, 4
      %s435 = sadd.s32 %s433, %s434
      %s436 = smul.addr %s435, 4
      %s437 = scalar_lea.vmem %s4, %s436
      %p438 = pneg %p162
      %p439 = pneg %p159
      %s440 = smul.u32 8, %s26
      %p441 = scmp.lt.s32.totalorder %s25, 1
      %s442 = scalar_select %p441, %s25, 1
      %p443 = scmp.lt.s32.totalorder %s440, 7
      %s444 = scalar_select %p443, %s440, 7
      %s445 = smul.addr %s442, 8
      %s446 = sadd.s32 %s444, %s445
      %s447 = smul.addr %s446, 4
      %s448 = scalar_lea.vmem %s5, %s447
      %p449 = pneg %p190
      %p450 = pneg %p187
      %p451 = scmp.lt.s32.totalorder %s25, 1
      %s452 = scalar_select %p451, %s25, 1
      %p453 = scmp.lt.s32.totalorder %s26, 0
      %s454 = scalar_select %p453, %s26, 0
      %s455 = sadd.s32 %s454, %s452
      %s456 = smul.addr %s455, 8
      %s457 = scalar_lea.vmem %s6, %s456
      %p458 = pneg %p218
      %p459 = pneg %p215
      %p460 = scmp.lt.s32.totalorder %s25, 1
      %s461 = scalar_select %p460, %s25, 1
      %s462 = scalar_lea.vmem %s7, %s461
      %p463 = pneg %p244
      %p464 = pneg %p241
      %p465 = pneg %p272
      %p466 = pneg %p269
      %p467 = scmp.lt.s32.totalorder %s25, 1
      %s468 = scalar_select %p467, %s25, 1
      %p469 = scmp.lt.s32.totalorder %s26, 0
      %s470 = scalar_select %p469, %s26, 0
      %s471 = smul.addr %s468, 4
      %s472 = sadd.s32 %s470, %s471
      %s473 = smul.addr %s472, 8
      %s474 = scalar_lea.vmem %s8, %s473
      %p475 = pneg %p300
      %p476 = pneg %p297
      %s477 = smul.u32 8, %s26
      %p478 = scmp.lt.s32.totalorder %s25, 1
      %s479 = scalar_select %p478, %s25, 1
      %p480 = scmp.lt.s32.totalorder %s477, 7
      %s481 = scalar_select %p480, %s477, 7
      %s482 = smul.addr %s479, 8
      %s483 = sadd.s32 %s481, %s482
      %s484 = smul.addr %s483, 4
      %s485 = scalar_lea.vmem %s9, %s484
      %p486 = scmp.lt.s32.totalorder %s25, 1
      %s487 = scalar_select %p486, %s25, 1
      %p488 = scmp.lt.s32.totalorder %s26, 0
      %s489 = scalar_select %p488, %s26, 0
      %s490 = smul.addr %s487, 4
      %s491 = sadd.s32 %s489, %s490
      %s492 = smul.addr %s491, 4
      %s493 = scalar_lea.vmem %s0, %s492
      %p494 = scmp.lt.s32.totalorder %s25, 1
      %s495 = scalar_select %p494, %s25, 1
      %s496 = smul.addr %s495, 4
      %s497 = smul.addr %s496, 4
      %s498 = scalar_lea.vmem %s1, %s497
      %p499 = scmp.lt.s32.totalorder %s25, 1
      %s500 = scalar_select %p499, %s25, 1
      %s501 = smul.addr %s500, 4
      %s502 = smul.addr %s501, 4
      %s503 = scalar_lea.vmem %s2, %s502
      %p504 = scmp.lt.s32.totalorder %s25, 1
      %s505 = scalar_select %p504, %s25, 1
      %s506 = smul.addr %s505, 4
      %s507 = scalar_lea.vmem %s3, %s506
      %p508 = scmp.lt.s32.totalorder %s25, 1
      %s509 = scalar_select %p508, %s25, 1
      %p510 = scmp.lt.s32.totalorder %s26, 0
      %s511 = scalar_select %p510, %s26, 0
      %s512 = smul.addr %s509, 4
      %s513 = sadd.s32 %s511, %s512
      %s514 = smul.addr %s513, 4
      %s515 = scalar_lea.vmem %s4, %s514
      %s516 = smul.u32 8, %s26
      %p517 = scmp.lt.s32.totalorder %s25, 1
      %s518 = scalar_select %p517, %s25, 1
      %p519 = scmp.lt.s32.totalorder %s516, 7
      %s520 = scalar_select %p519, %s516, 7
      %s521 = smul.addr %s518, 8
      %s522 = sadd.s32 %s520, %s521
      %s523 = smul.addr %s522, 4
      %s524 = scalar_lea.vmem %s5, %s523
      %s525 = smul.u32 8, %s26
      %p526 = scmp.lt.s32.totalorder %s25, 1
      %s527 = scalar_select %p526, %s25, 1
      %p528 = scmp.lt.s32.totalorder %s26, 0
      %s529 = scalar_select %p528, %s26, 0
      %s530 = sadd.s32 %s529, %s527
      %s531 = smul.addr %s530, 8
      %s532 = scalar_lea.vmem %s6, %s531
      %p533 = scmp.lt.s32.totalorder %s25, 1
      %s534 = scalar_select %p533, %s25, 1
      %s535 = scalar_lea.vmem %s7, %s534
      %p536 = scmp.lt.s32.totalorder %s25, 1
      %s537 = scalar_select %p536, %s25, 1
      %p538 = scmp.lt.s32.totalorder %s26, 0
      %s539 = scalar_select %p538, %s26, 0
      %s540 = smul.addr %s537, 4
      %s541 = sadd.s32 %s539, %s540
      %s542 = smul.addr %s541, 8
      %s543 = scalar_lea.vmem %s8, %s542
      %s544 = smul.u32 8, %s26
      %p545 = scmp.lt.s32.totalorder %s25, 1
      %s546 = scalar_select %p545, %s25, 1
      %p547 = scmp.lt.s32.totalorder %s544, 7
      %s548 = scalar_select %p547, %s544, 7
      %s549 = smul.addr %s546, 8
      %s550 = sadd.s32 %s548, %s549
      %s551 = smul.addr %s550, 4
      %s552 = scalar_lea.vmem %s9, %s551
      %s553 = smul.u32 8, %s26
      %v555 = vld [vmem:[%s493] sm:$0xf]
      %v556 = vld [vmem:[%s493 + $0x4] sm:$0xf]
      %v557 = vld [vmem:[%s493 + $0x8] sm:$0xf]
      %v558 = vld [vmem:[%s493 + $0xc] sm:$0xf]
      %v559 = vld [vmem:[%s498] sm:$0xf]
      %v560 = vld [vmem:[%s498 + $0x4] sm:$0xf]
      %v561 = vld [vmem:[%s498 + $0x8] sm:$0xf]
      %v562 = vld [vmem:[%s498 + $0xc] sm:$0xf]
      %v563 = vld [vmem:[%s515] sm:$0xf]
      %v564 = vld [vmem:[%s515 + $0x4] sm:$0xf]
      %v565 = vld [vmem:[%s515 + $0x8] sm:$0xf]
      %v566 = vld [vmem:[%s515 + $0xc] sm:$0xf]
      %v567 = vunpack.c.l.bf16 %v563
      %v568 = vunpack.c.l.bf16 %v564
      %v569 = vunpack.c.l.bf16 %v565
      %v570 = vunpack.c.l.bf16 %v566
      %vm571 = vcmask 228352
      %v573 = vsel %vm571, %v555, 0
      %v576 = vsel %vm571, %v559, 0
      %578 = vmatprep.subr.bf16.mxu0 0
      %579 = vmatpush1.bf16.xpose.msra.mxu0 %v576
      %580 = vmatprep.subr.bf16.mxu0 0
      %581 = vmatpush1.bf16.xpose.msra.mxu0 0
      %582 = vmatprep.subr.bf16.mxu0 0
      %583 = vmatpush1.bf16.xpose.msra.mxu0 0
      %584 = vmatprep.subr.bf16.mxu0 0
      %585 = vmatpush1.bf16.xpose.msra.mxu0 0
      %586 = vmatprep.subr.bf16.mxu0 0
      %587 = vmatpush1.bf16.xpose.msra.mxu0 0
      %588 = vmatprep.subr.bf16.mxu0 0
      %589 = vmatpush1.bf16.xpose.msra.mxu0 0
      %590 = vmatprep.subr.bf16.mxu0 0
      %591 = vmatpush1.bf16.xpose.msra.mxu0 0
      %592 = vmatprep.subr.bf16.mxu0 0
      %593 = vmatpush1.bf16.xpose.msra.mxu0 0
      %594 = vmatprep.subr.bf16.mxu0 0
      %595 = vmatpush1.bf16.xpose.msra.mxu0 0
      %596 = vmatprep.subr.bf16.mxu0 0
      %597 = vmatpush1.bf16.xpose.msra.mxu0 0
      %598 = vmatprep.subr.bf16.mxu0 0
      %599 = vmatpush1.bf16.xpose.msra.mxu0 0
      %600 = vmatprep.subr.bf16.mxu0 0
      %601 = vmatpush1.bf16.xpose.msra.mxu0 0
      %602 = vmatprep.subr.bf16.mxu0 0
      %603 = vmatpush1.bf16.xpose.msra.mxu0 0
      %604 = vmatprep.subr.bf16.mxu0 0
      %605 = vmatpush1.bf16.xpose.msra.mxu0 0
      %606 = vmatprep.subr.bf16.mxu0 0
      %607 = vmatpush1.bf16.xpose.msra.mxu0 0
      %608 = vmatprep.subr.bf16.mxu0 0
      %609 = vmatpush1.bf16.xpose.msra.mxu0 0
      %610 = vmatprep.mubr.bf16.mxu0 0
      %611 = vmatmul.mubr.bf16.gmra.mrb[0].mxu0 %v573
      %v612 = vpop.f32.mrb[0].mxu0
      %v613 = vadd.f32 %v567, %v612
      %v614 = vpop.f32.mrb[0].mxu0
      %v615 = vpop.f32.mrb[0].mxu0
      %v616 = vpop.f32.mrb[0].mxu0
      %617 = vdwg.mxu0
      %v619 = vsel %vm571, %v556, 0
      %v622 = vsel %vm571, %v560, 0
      %624 = vmatprep.subr.bf16.mxu0 0
      %625 = vmatpush1.bf16.xpose.msra.mxu0 %v622
      %626 = vmatprep.subr.bf16.mxu0 0
      %627 = vmatpush1.bf16.xpose.msra.mxu0 0
      %628 = vmatprep.subr.bf16.mxu0 0
      %629 = vmatpush1.bf16.xpose.msra.mxu0 0
      %630 = vmatprep.subr.bf16.mxu0 0
      %631 = vmatpush1.bf16.xpose.msra.mxu0 0
      %632 = vmatprep.subr.bf16.mxu0 0
      %633 = vmatpush1.bf16.xpose.msra.mxu0 0
      %634 = vmatprep.subr.bf16.mxu0 0
      %635 = vmatpush1.bf16.xpose.msra.mxu0 0
      %636 = vmatprep.subr.bf16.mxu0 0
      %637 = vmatpush1.bf16.xpose.msra.mxu0 0
      %638 = vmatprep.subr.bf16.mxu0 0
      %639 = vmatpush1.bf16.xpose.msra.mxu0 0
      %640 = vmatprep.subr.bf16.mxu0 0
      %641 = vmatpush1.bf16.xpose.msra.mxu0 0
      %642 = vmatprep.subr.bf16.mxu0 0
      %643 = vmatpush1.bf16.xpose.msra.mxu0 0
      %644 = vmatprep.subr.bf16.mxu0 0
      %645 = vmatpush1.bf16.xpose.msra.mxu0 0
      %646 = vmatprep.subr.bf16.mxu0 0
      %647 = vmatpush1.bf16.xpose.msra.mxu0 0
      %648 = vmatprep.subr.bf16.mxu0 0
      %649 = vmatpush1.bf16.xpose.msra.mxu0 0
      %650 = vmatprep.subr.bf16.mxu0 0
      %651 = vmatpush1.bf16.xpose.msra.mxu0 0
      %652 = vmatprep.subr.bf16.mxu0 0
      %653 = vmatpush1.bf16.xpose.msra.mxu0 0
      %654 = vmatprep.subr.bf16.mxu0 0
      %655 = vmatpush1.bf16.xpose.msra.mxu0 0
      %656 = vmatprep.mubr.bf16.mxu0 0
      %657 = vmatmul.mubr.bf16.gmra.mrb[0].mxu0 %v619
      %v658 = vpop.f32.mrb[0].mxu0
      %v659 = vadd.f32 %v568, %v658
      %v660 = vpop.f32.mrb[0].mxu0
      %v661 = vpop.f32.mrb[0].mxu0
      %v662 = vpop.f32.mrb[0].mxu0
      %663 = vdwg.mxu0
      %v665 = vsel %vm571, %v557, 0
      %v668 = vsel %vm571, %v561, 0
      %670 = vmatprep.subr.bf16.mxu0 0
      %671 = vmatpush1.bf16.xpose.msra.mxu0 %v668
      %672 = vmatprep.subr.bf16.mxu0 0
      %673 = vmatpush1.bf16.xpose.msra.mxu0 0
      %674 = vmatprep.subr.bf16.mxu0 0
      %675 = vmatpush1.bf16.xpose.msra.mxu0 0
      %676 = vmatprep.subr.bf16.mxu0 0
      %677 = vmatpush1.bf16.xpose.msra.mxu0 0
      %678 = vmatprep.subr.bf16.mxu0 0
      %679 = vmatpush1.bf16.xpose.msra.mxu0 0
      %680 = vmatprep.subr.bf16.mxu0 0
      %681 = vmatpush1.bf16.xpose.msra.mxu0 0
      %682 = vmatprep.subr.bf16.mxu0 0
      %683 = vmatpush1.bf16.xpose.msra.mxu0 0
      %684 = vmatprep.subr.bf16.mxu0 0
      %685 = vmatpush1.bf16.xpose.msra.mxu0 0
      %686 = vmatprep.subr.bf16.mxu0 0
      %687 = vmatpush1.bf16.xpose.msra.mxu0 0
      %688 = vmatprep.subr.bf16.mxu0 0
      %689 = vmatpush1.bf16.xpose.msra.mxu0 0
      %690 = vmatprep.subr.bf16.mxu0 0
      %691 = vmatpush1.bf16.xpose.msra.mxu0 0
      %692 = vmatprep.subr.bf16.mxu0 0
      %693 = vmatpush1.bf16.xpose.msra.mxu0 0
      %694 = vmatprep.subr.bf16.mxu0 0
      %695 = vmatpush1.bf16.xpose.msra.mxu0 0
      %696 = vmatprep.subr.bf16.mxu0 0
      %697 = vmatpush1.bf16.xpose.msra.mxu0 0
      %698 = vmatprep.subr.bf16.mxu0 0
      %699 = vmatpush1.bf16.xpose.msra.mxu0 0
      %700 = vmatprep.subr.bf16.mxu0 0
      %701 = vmatpush1.bf16.xpose.msra.mxu0 0
      %702 = vmatprep.mubr.bf16.mxu0 0
      %703 = vmatmul.mubr.bf16.gmra.mrb[0].mxu0 %v665
      %v704 = vpop.f32.mrb[0].mxu0
      %v705 = vadd.f32 %v569, %v704
      %v706 = vpop.f32.mrb[0].mxu0
      %v707 = vpop.f32.mrb[0].mxu0
      %v708 = vpop.f32.mrb[0].mxu0
      %709 = vdwg.mxu0
      %v711 = vsel %vm571, %v558, 0
      %v714 = vsel %vm571, %v562, 0
      %716 = vmatprep.subr.bf16.mxu0 0
      %717 = vmatpush1.bf16.xpose.msra.mxu0 %v714
      %718 = vmatprep.subr.bf16.mxu0 0
      %719 = vmatpush1.bf16.xpose.msra.mxu0 0
      %720 = vmatprep.subr.bf16.mxu0 0
      %721 = vmatpush1.bf16.xpose.msra.mxu0 0
      %722 = vmatprep.subr.bf16.mxu0 0
      %723 = vmatpush1.bf16.xpose.msra.mxu0 0
      %724 = vmatprep.subr.bf16.mxu0 0
      %725 = vmatpush1.bf16.xpose.msra.mxu0 0
      %726 = vmatprep.subr.bf16.mxu0 0
      %727 = vmatpush1.bf16.xpose.msra.mxu0 0
      %728 = vmatprep.subr.bf16.mxu0 0
      %729 = vmatpush1.bf16.xpose.msra.mxu0 0
      %730 = vmatprep.subr.bf16.mxu0 0
      %731 = vmatpush1.bf16.xpose.msra.mxu0 0
      %732 = vmatprep.subr.bf16.mxu0 0
      %733 = vmatpush1.bf16.xpose.msra.mxu0 0
      %734 = vmatprep.subr.bf16.mxu0 0
      %735 = vmatpush1.bf16.xpose.msra.mxu0 0
      %736 = vmatprep.subr.bf16.mxu0 0
      %737 = vmatpush1.bf16.xpose.msra.mxu0 0
      %738 = vmatprep.subr.bf16.mxu0 0
      %739 = vmatpush1.bf16.xpose.msra.mxu0 0
      %740 = vmatprep.subr.bf16.mxu0 0
      %741 = vmatpush1.bf16.xpose.msra.mxu0 0
      %742 = vmatprep.subr.bf16.mxu0 0
      %743 = vmatpush1.bf16.xpose.msra.mxu0 0
      %744 = vmatprep.subr.bf16.mxu0 0
      %745 = vmatpush1.bf16.xpose.msra.mxu0 0
      %746 = vmatprep.subr.bf16.mxu0 0
      %747 = vmatpush1.bf16.xpose.msra.mxu0 0
      %748 = vmatprep.mubr.bf16.mxu0 0
      %749 = vmatmul.mubr.bf16.gmra.mrb[0].mxu0 %v711
      %v750 = vpop.f32.mrb[0].mxu0
      %v751 = vadd.f32 %v570, %v750
      %v752 = vpop.f32.mrb[0].mxu0
      %v753 = vpop.f32.mrb[0].mxu0
      %v754 = vpop.f32.mrb[0].mxu0
      %755 = vdwg.mxu0
      %v756 = vld [vmem:[%s507] sm:$0x1]
      %v757 = vld [vmem:[%s507 + $0x1] sm:$0x1]
      %v758 = vld [vmem:[%s507 + $0x2] sm:$0x1]
      %v759 = vld [vmem:[%s507 + $0x3] sm:$0x1]
      %v764 = vlaneseq
      %v765 = vshrl.u32 %v764, 7
      %v766 = vsub.s32 0, %v765
      %v767 = vrot.slane %v756, %v766
      %v768 = vlaneseq
      %v769 = vshrl.u32 %v768, 7
      %v770 = vsub.s32 0, %v769
      %v771 = vrot.slane %v757, %v770
      %v772 = vlaneseq
      %v773 = vshrl.u32 %v772, 7
      %v774 = vsub.s32 0, %v773
      %v775 = vrot.slane %v758, %v774
      %v776 = vlaneseq
      %v777 = vshrl.u32 %v776, 7
      %v778 = vsub.s32 0, %v777
      %v779 = vrot.slane %v759, %v778
      %v784 = vsub.f32 %v613, %v767
      %v785 = vsub.f32 %v659, %v771
      %v786 = vsub.f32 %v705, %v775
      %v787 = vsub.f32 %v751, %v779
      %v788 = vld [vmem:[%s532] sm:$0xff]
      %v789 = vld [vmem:[%s535] sm:$0x1]
      %791 = vset.pattern.permute.xlu0 0
      %792 = vperm.xlu0 %791, %v788
      %v793 = vpop.permute.xlu0 %792
      %v796 = vlaneseq
      %v797 = vshrl.u32 %v796, 7
      %v798 = vsub.s32 0, %v797
      %v799 = vrot.slane %v789, %v798
      %v801 = vmul.f32 %v793, %v799
      %v802 = vsub.f32 %v801, 1.0
      %v803 = vmul.f32 %v802, 100000.0
      %v804 = vadd.f32 %v784, %v803
      %v805 = vadd.f32 %v785, %v803
      %v806 = vadd.f32 %v786, %v803
      %v807 = vadd.f32 %v787, %v803
      %vm808 = vcmask 64512
      %v809 = vsel %vm808, %v804, -inf
      %810 = vmax.xlane.f32.xlu0 %v809
      %v811 = vpop.xlane.xlu0 %810
      %v812 = vsel %vm808, %v805, -inf
      %813 = vmax.xlane.f32.xlu0 %v812
      %v814 = vpop.xlane.xlu0 %813
      %v815 = vsel %vm808, %v806, -inf
      %816 = vmax.xlane.f32.xlu0 %v815
      %v817 = vpop.xlane.xlu0 %816
      %v818 = vsel %vm808, %v807, -inf
      %819 = vmax.xlane.f32.xlu0 %v818
      %v820 = vpop.xlane.xlu0 %819
      %v821 = vsub.f32 %v804, %v811
      %v822 = vsub.f32 %v805, %v814
      %v823 = vsub.f32 %v806, %v817
      %v824 = vsub.f32 %v807, %v820
      %v825 = vmul.f32 %v821, 1.442695
      %v826 = vpow.pop %v825
      %v827 = vmul.f32 %v822, 1.442695
      %v828 = vpow.pop %v827
      %v829 = vmul.f32 %v823, 1.442695
      %v830 = vpow.pop %v829
      %v831 = vmul.f32 %v824, 1.442695
      %v832 = vpow.pop %v831
      %v833 = vsel %vm808, %v826, 0.0
      %834 = vadd.xlane.f32.xlu0 %v833
      %v835 = vpop.xlane.xlu0 %834
      %v836 = vsel %vm808, %v828, 0.0
      %837 = vadd.xlane.f32.xlu0 %v836
      %v838 = vpop.xlane.xlu0 %837
      %v839 = vsel %vm808, %v830, 0.0
      %840 = vadd.xlane.f32.xlu0 %v839
      %v841 = vpop.xlane.xlu0 %840
      %v842 = vsel %vm808, %v832, 0.0
      %843 = vadd.xlane.f32.xlu0 %v842
      %v844 = vpop.xlane.xlu0 %843
      %v845 = vrcp.pop %v835
      %v846 = vrcp.pop %v838
      %v847 = vrcp.pop %v841
      %v848 = vrcp.pop %v844
      %v849 = vmul.f32 %v826, %v845
      %v850 = vmul.f32 %v828, %v846
      %v851 = vmul.f32 %v830, %v847
      %v852 = vmul.f32 %v832, %v848
      %v853 = vpack.c.bf16 %v849, %v849
      %v854 = vpack.c.bf16 %v850, %v850
      %v855 = vpack.c.bf16 %v851, %v851
      %v856 = vpack.c.bf16 %v852, %v852
      %v857 = vld [vmem:[%s503] sm:$0xf]
      %v858 = vld [vmem:[%s503 + $0x4] sm:$0xf]
      %v859 = vld [vmem:[%s503 + $0x8] sm:$0xf]
      %v860 = vld [vmem:[%s503 + $0xc] sm:$0xf]
      %v862 = vsel %vm808, %v853, 0
      %vm864 = vcmask 1043456
      %v866 = vsel %vm864, %v857, 0
      %868 = vmatprep.subr.bf16.mxu0 0
      %869 = vmatpush1.bf16.msra.mxu0 %v866
      %870 = vmatprep.subr.bf16.mxu0 0
      %871 = vmatpush1.bf16.msra.mxu0 0
      %872 = vmatprep.subr.bf16.mxu0 0
      %873 = vmatpush1.bf16.msra.mxu0 0
      %874 = vmatprep.subr.bf16.mxu0 0
      %875 = vmatpush1.bf16.msra.mxu0 0
      %876 = vmatprep.subr.bf16.mxu0 0
      %877 = vmatpush1.bf16.msra.mxu0 0
      %878 = vmatprep.subr.bf16.mxu0 0
      %879 = vmatpush1.bf16.msra.mxu0 0
      %880 = vmatprep.subr.bf16.mxu0 0
      %881 = vmatpush1.bf16.msra.mxu0 0
      %882 = vmatprep.subr.bf16.mxu0 0
      %883 = vmatpush1.bf16.msra.mxu0 0
      %884 = vmatprep.subr.bf16.mxu0 0
      %885 = vmatpush1.bf16.msra.mxu0 0
      %886 = vmatprep.subr.bf16.mxu0 0
      %887 = vmatpush1.bf16.msra.mxu0 0
      %888 = vmatprep.subr.bf16.mxu0 0
      %889 = vmatpush1.bf16.msra.mxu0 0
      %890 = vmatprep.subr.bf16.mxu0 0
      %891 = vmatpush1.bf16.msra.mxu0 0
      %892 = vmatprep.subr.bf16.mxu0 0
      %893 = vmatpush1.bf16.msra.mxu0 0
      %894 = vmatprep.subr.bf16.mxu0 0
      %895 = vmatpush1.bf16.msra.mxu0 0
      %896 = vmatprep.subr.bf16.mxu0 0
      %897 = vmatpush1.bf16.msra.mxu0 0
      %898 = vmatprep.subr.bf16.mxu0 0
      %899 = vmatpush1.bf16.msra.mxu0 0
      %900 = vmatprep.mubr.bf16.mxu0 0
      %901 = vmatmul.mubr.bf16.gmra.mrb[0].mxu0 %v862
      %v902 = vpop.f32.mrb[0].mxu0
      %v903 = vadd.f32 0.0, %v902
      %v904 = vpop.f32.mrb[0].mxu0
      %v905 = vpop.f32.mrb[0].mxu0
      %v906 = vpop.f32.mrb[0].mxu0
      %907 = vdwg.mxu0
      %v909 = vsel %vm808, %v854, 0
      %v912 = vsel %vm864, %v858, 0
      %914 = vmatprep.subr.bf16.mxu0 0
      %915 = vmatpush1.bf16.msra.mxu0 %v912
      %916 = vmatprep.subr.bf16.mxu0 0
      %917 = vmatpush1.bf16.msra.mxu0 0
      %918 = vmatprep.subr.bf16.mxu0 0
      %919 = vmatpush1.bf16.msra.mxu0 0
      %920 = vmatprep.subr.bf16.mxu0 0
      %921 = vmatpush1.bf16.msra.mxu0 0
      %922 = vmatprep.subr.bf16.mxu0 0
      %923 = vmatpush1.bf16.msra.mxu0 0
      %924 = vmatprep.subr.bf16.mxu0 0
      %925 = vmatpush1.bf16.msra.mxu0 0
      %926 = vmatprep.subr.bf16.mxu0 0
      %927 = vmatpush1.bf16.msra.mxu0 0
      %928 = vmatprep.subr.bf16.mxu0 0
      %929 = vmatpush1.bf16.msra.mxu0 0
      %930 = vmatprep.subr.bf16.mxu0 0
      %931 = vmatpush1.bf16.msra.mxu0 0
      %932 = vmatprep.subr.bf16.mxu0 0
      %933 = vmatpush1.bf16.msra.mxu0 0
      %934 = vmatprep.subr.bf16.mxu0 0
      %935 = vmatpush1.bf16.msra.mxu0 0
      %936 = vmatprep.subr.bf16.mxu0 0
      %937 = vmatpush1.bf16.msra.mxu0 0
      %938 = vmatprep.subr.bf16.mxu0 0
      %939 = vmatpush1.bf16.msra.mxu0 0
      %940 = vmatprep.subr.bf16.mxu0 0
      %941 = vmatpush1.bf16.msra.mxu0 0
      %942 = vmatprep.subr.bf16.mxu0 0
      %943 = vmatpush1.bf16.msra.mxu0 0
      %944 = vmatprep.subr.bf16.mxu0 0
      %945 = vmatpush1.bf16.msra.mxu0 0
      %946 = vmatprep.mubr.bf16.mxu0 0
      %947 = vmatmul.mubr.bf16.gmra.mrb[0].mxu0 %v909
      %v948 = vpop.f32.mrb[0].mxu0
      %v949 = vadd.f32 0.0, %v948
      %v950 = vpop.f32.mrb[0].mxu0
      %v951 = vpop.f32.mrb[0].mxu0
      %v952 = vpop.f32.mrb[0].mxu0
      %953 = vdwg.mxu0
      %v955 = vsel %vm808, %v855, 0
      %v958 = vsel %vm864, %v859, 0
      %960 = vmatprep.subr.bf16.mxu0 0
      %961 = vmatpush1.bf16.msra.mxu0 %v958
      %962 = vmatprep.subr.bf16.mxu0 0
      %963 = vmatpush1.bf16.msra.mxu0 0
      %964 = vmatprep.subr.bf16.mxu0 0
      %965 = vmatpush1.bf16.msra.mxu0 0
      %966 = vmatprep.subr.bf16.mxu0 0
      %967 = vmatpush1.bf16.msra.mxu0 0
      %968 = vmatprep.subr.bf16.mxu0 0
      %969 = vmatpush1.bf16.msra.mxu0 0
      %970 = vmatprep.subr.bf16.mxu0 0
      %971 = vmatpush1.bf16.msra.mxu0 0
      %972 = vmatprep.subr.bf16.mxu0 0
      %973 = vmatpush1.bf16.msra.mxu0 0
      %974 = vmatprep.subr.bf16.mxu0 0
      %975 = vmatpush1.bf16.msra.mxu0 0
      %976 = vmatprep.subr.bf16.mxu0 0
      %977 = vmatpush1.bf16.msra.mxu0 0
      %978 = vmatprep.subr.bf16.mxu0 0
      %979 = vmatpush1.bf16.msra.mxu0 0
      %980 = vmatprep.subr.bf16.mxu0 0
      %981 = vmatpush1.bf16.msra.mxu0 0
      %982 = vmatprep.subr.bf16.mxu0 0
      %983 = vmatpush1.bf16.msra.mxu0 0
      %984 = vmatprep.subr.bf16.mxu0 0
      %985 = vmatpush1.bf16.msra.mxu0 0
      %986 = vmatprep.subr.bf16.mxu0 0
      %987 = vmatpush1.bf16.msra.mxu0 0
      %988 = vmatprep.subr.bf16.mxu0 0
      %989 = vmatpush1.bf16.msra.mxu0 0
      %990 = vmatprep.subr.bf16.mxu0 0
      %991 = vmatpush1.bf16.msra.mxu0 0
      %992 = vmatprep.mubr.bf16.mxu0 0
      %993 = vmatmul.mubr.bf16.gmra.mrb[0].mxu0 %v955
      %v994 = vpop.f32.mrb[0].mxu0
      %v995 = vadd.f32 0.0, %v994
      %v996 = vpop.f32.mrb[0].mxu0
      %v997 = vpop.f32.mrb[0].mxu0
      %v998 = vpop.f32.mrb[0].mxu0
      %999 = vdwg.mxu0
      %v1001 = vsel %vm808, %v856, 0
      %v1004 = vsel %vm864, %v860, 0
      %1006 = vmatprep.subr.bf16.mxu0 0
      %1007 = vmatpush1.bf16.msra.mxu0 %v1004
      %1008 = vmatprep.subr.bf16.mxu0 0
      %1009 = vmatpush1.bf16.msra.mxu0 0
      %1010 = vmatprep.subr.bf16.mxu0 0
      %1011 = vmatpush1.bf16.msra.mxu0 0
      %1012 = vmatprep.subr.bf16.mxu0 0
      %1013 = vmatpush1.bf16.msra.mxu0 0
      %1014 = vmatprep.subr.bf16.mxu0 0
      %1015 = vmatpush1.bf16.msra.mxu0 0
      %1016 = vmatprep.subr.bf16.mxu0 0
      %1017 = vmatpush1.bf16.msra.mxu0 0
      %1018 = vmatprep.subr.bf16.mxu0 0
      %1019 = vmatpush1.bf16.msra.mxu0 0
      %1020 = vmatprep.subr.bf16.mxu0 0
      %1021 = vmatpush1.bf16.msra.mxu0 0
      %1022 = vmatprep.subr.bf16.mxu0 0
      %1023 = vmatpush1.bf16.msra.mxu0 0
      %1024 = vmatprep.subr.bf16.mxu0 0
      %1025 = vmatpush1.bf16.msra.mxu0 0
      %1026 = vmatprep.subr.bf16.mxu0 0
      %1027 = vmatpush1.bf16.msra.mxu0 0
      %1028 = vmatprep.subr.bf16.mxu0 0
      %1029 = vmatpush1.bf16.msra.mxu0 0
      %1030 = vmatprep.subr.bf16.mxu0 0
      %1031 = vmatpush1.bf16.msra.mxu0 0
      %1032 = vmatprep.subr.bf16.mxu0 0
      %1033 = vmatpush1.bf16.msra.mxu0 0
      %1034 = vmatprep.subr.bf16.mxu0 0
      %1035 = vmatpush1.bf16.msra.mxu0 0
      %1036 = vmatprep.subr.bf16.mxu0 0
      %1037 = vmatpush1.bf16.msra.mxu0 0
      %1038 = vmatprep.mubr.bf16.mxu0 0
      %1039 = vmatmul.mubr.bf16.gmra.mrb[0].mxu0 %v1001
      %v1040 = vpop.f32.mrb[0].mxu0
      %v1041 = vadd.f32 0.0, %v1040
      %v1042 = vpop.f32.mrb[0].mxu0
      %v1043 = vpop.f32.mrb[0].mxu0
      %v1044 = vpop.f32.mrb[0].mxu0
      %1045 = vdwg.mxu0
      %vm1046 = vcmask 326656
      %1047 = vst.msk [vmem:[%s543] sm:$0xff] %vm1046, %v903
      %1048 = vst.msk [vmem:[%s543 + $0x8] sm:$0xff] %vm1046, %v949
      %1049 = vst.msk [vmem:[%s543 + $0x10] sm:$0xff] %vm1046, %v995
      %1050 = vst.msk [vmem:[%s543 + $0x18] sm:$0xff] %vm1046, %v1041
      %v1053 = vunpack.c.l.s4 1966171168
      %v1054 = vunpack.c.0.s8 %v1053
      %v1055 = vlaneseq
      %v1056 = vshrl.u32 %v1055, 7
      %v1057 = vsub.s32 %v1054, %v1056
      %v1058 = vrot.slane %v853, %v1057
      %v1059 = vcombine.high %v1058, %v1058
      %v1061 = vunpack.c.l.s4 1966171168
      %v1062 = vunpack.c.0.s8 %v1061
      %v1063 = vlaneseq
      %v1064 = vshrl.u32 %v1063, 7
      %v1065 = vsub.s32 %v1062, %v1064
      %v1066 = vrot.slane %v1058, %v1065
      %v1068 = vunpack.c.l.s4 1966171168
      %v1069 = vunpack.c.0.s8 %v1068
      %v1070 = vlaneseq
      %v1071 = vshrl.u32 %v1070, 7
      %v1072 = vsub.s32 %v1069, %v1071
      %v1073 = vrot.slane %v1059, %v1072
      %v1074 = vcombine.high %v1066, %v1066
      %v1075 = vcombine.high %v1073, %v1073
      %v1076 = vunpack.i.l.s16 %v1066
      %v1077 = vunpack.i.h.s16 %v1066
      %v1078 = vunpack.i.l.s16 %v1073
      %v1079 = vunpack.i.h.s16 %v1073
      %v1080 = vunpack.i.l.s16 %v1074
      %v1081 = vunpack.i.h.s16 %v1074
      %v1082 = vunpack.i.l.s16 %v1075
      %v1083 = vunpack.i.h.s16 %v1075
      %v1084 = vpack.i.b16 %v1076, %v1076
      %v1085 = vpack.i.b16 %v1077, %v1077
      %v1086 = vpack.i.b16 %v1078, %v1078
      %v1087 = vpack.i.b16 %v1079, %v1079
      %v1088 = vpack.i.b16 %v1080, %v1080
      %v1089 = vpack.i.b16 %v1081, %v1081
      %v1090 = vpack.i.b16 %v1082, %v1082
      %v1091 = vpack.i.b16 %v1083, %v1083
      %v1093 = vunpack.c.l.s4 857870592
      %v1094 = vunpack.c.0.s8 %v1093
      %v1095 = vlaneseq
      %v1096 = vshrl.u32 %v1095, 7
      %v1097 = vsub.s32 %v1094, %v1096
      %v1098 = vrot.slane %v1084, %v1097
      %v1100 = vunpack.c.l.s4 857870592
      %v1101 = vunpack.c.0.s8 %v1100
      %v1102 = vlaneseq
      %v1103 = vshrl.u32 %v1102, 7
      %v1104 = vsub.s32 %v1101, %v1103
      %v1105 = vrot.slane %v1085, %v1104
      %v1107 = vunpack.c.l.s4 857870592
      %v1108 = vunpack.c.0.s8 %v1107
      %v1109 = vlaneseq
      %v1110 = vshrl.u32 %v1109, 7
      %v1111 = vsub.s32 %v1108, %v1110
      %v1112 = vrot.slane %v1086, %v1111
      %v1114 = vunpack.c.l.s4 857870592
      %v1115 = vunpack.c.0.s8 %v1114
      %v1116 = vlaneseq
      %v1117 = vshrl.u32 %v1116, 7
      %v1118 = vsub.s32 %v1115, %v1117
      %v1119 = vrot.slane %v1087, %v1118
      %v1121 = vunpack.c.l.s4 857870592
      %v1122 = vunpack.c.0.s8 %v1121
      %v1123 = vlaneseq
      %v1124 = vshrl.u32 %v1123, 7
      %v1125 = vsub.s32 %v1122, %v1124
      %v1126 = vrot.slane %v1088, %v1125
      %v1128 = vunpack.c.l.s4 857870592
      %v1129 = vunpack.c.0.s8 %v1128
      %v1130 = vlaneseq
      %v1131 = vshrl.u32 %v1130, 7
      %v1132 = vsub.s32 %v1129, %v1131
      %v1133 = vrot.slane %v1089, %v1132
      %v1135 = vunpack.c.l.s4 857870592
      %v1136 = vunpack.c.0.s8 %v1135
      %v1137 = vlaneseq
      %v1138 = vshrl.u32 %v1137, 7
      %v1139 = vsub.s32 %v1136, %v1138
      %v1140 = vrot.slane %v1090, %v1139
      %v1142 = vunpack.c.l.s4 857870592
      %v1143 = vunpack.c.0.s8 %v1142
      %v1144 = vlaneseq
      %v1145 = vshrl.u32 %v1144, 7
      %v1146 = vsub.s32 %v1143, %v1145
      %v1147 = vrot.slane %v1091, %v1146
      %vm1156 = vcmask 57344
      %vm1157 = vsmask.f32 256
      %vm1158 = vmand %vm1156, %vm1157
      %v1159 = vld [vmem:[#allocation2] sm:$0x1]
      %v1160 = vsel %vm1158, %v1098, %v1159
      %1161 = vst [vmem:[#allocation2] sm:$0x1] %v1160
      %v1162 = vld [vmem:[#allocation2 + $0x2] sm:$0x1]
      %v1163 = vsel %vm1158, %v1105, %v1162
      %1164 = vst [vmem:[#allocation2 + $0x2] sm:$0x1] %v1163
      %v1165 = vld [vmem:[#allocation2 + $0x4] sm:$0x1]
      %v1166 = vsel %vm1158, %v1112, %v1165
      %1167 = vst [vmem:[#allocation2 + $0x4] sm:$0x1] %v1166
      %v1168 = vld [vmem:[#allocation2 + $0x6] sm:$0x1]
      %v1169 = vsel %vm1158, %v1119, %v1168
      %1170 = vst [vmem:[#allocation2 + $0x6] sm:$0x1] %v1169
      %v1171 = vld [vmem:[#allocation2 + $0x8] sm:$0x1]
      %v1172 = vsel %vm1158, %v1126, %v1171
      %1173 = vst [vmem:[#allocation2 + $0x8] sm:$0x1] %v1172
      %v1174 = vld [vmem:[#allocation2 + $0xa] sm:$0x1]
      %v1175 = vsel %vm1158, %v1133, %v1174
      %1176 = vst [vmem:[#allocation2 + $0xa] sm:$0x1] %v1175
      %v1177 = vld [vmem:[#allocation2 + $0xc] sm:$0x1]
      %v1178 = vsel %vm1158, %v1140, %v1177
      %1179 = vst [vmem:[#allocation2 + $0xc] sm:$0x1] %v1178
      %v1180 = vld [vmem:[#allocation2 + $0xe] sm:$0x1]
      %v1181 = vsel %vm1158, %v1147, %v1180
      %1182 = vst [vmem:[#allocation2 + $0xe] sm:$0x1] %v1181
      %v1185 = vunpack.c.l.s4 1966171168
      %v1186 = vunpack.c.0.s8 %v1185
      %v1187 = vlaneseq
      %v1188 = vshrl.u32 %v1187, 7
      %v1189 = vsub.s32 %v1186, %v1188
      %v1190 = vrot.slane %v854, %v1189
      %v1191 = vcombine.high %v1190, %v1190
      %v1193 = vunpack.c.l.s4 1966171168
      %v1194 = vunpack.c.0.s8 %v1193
      %v1195 = vlaneseq
      %v1196 = vshrl.u32 %v1195, 7
      %v1197 = vsub.s32 %v1194, %v1196
      %v1198 = vrot.slane %v1190, %v1197
      %v1200 = vunpack.c.l.s4 1966171168
      %v1201 = vunpack.c.0.s8 %v1200
      %v1202 = vlaneseq
      %v1203 = vshrl.u32 %v1202, 7
      %v1204 = vsub.s32 %v1201, %v1203
      %v1205 = vrot.slane %v1191, %v1204
      %v1206 = vcombine.high %v1198, %v1198
      %v1207 = vcombine.high %v1205, %v1205
      %v1208 = vunpack.i.l.s16 %v1198
      %v1209 = vunpack.i.h.s16 %v1198
      %v1210 = vunpack.i.l.s16 %v1205
      %v1211 = vunpack.i.h.s16 %v1205
      %v1212 = vunpack.i.l.s16 %v1206
      %v1213 = vunpack.i.h.s16 %v1206
      %v1214 = vunpack.i.l.s16 %v1207
      %v1215 = vunpack.i.h.s16 %v1207
      %v1216 = vpack.i.b16 %v1208, %v1208
      %v1217 = vpack.i.b16 %v1209, %v1209
      %v1218 = vpack.i.b16 %v1210, %v1210
      %v1219 = vpack.i.b16 %v1211, %v1211
      %v1220 = vpack.i.b16 %v1212, %v1212
      %v1221 = vpack.i.b16 %v1213, %v1213
      %v1222 = vpack.i.b16 %v1214, %v1214
      %v1223 = vpack.i.b16 %v1215, %v1215
      %v1225 = vunpack.c.l.s4 857870592
      %v1226 = vunpack.c.0.s8 %v1225
      %v1227 = vlaneseq
      %v1228 = vshrl.u32 %v1227, 7
      %v1229 = vsub.s32 %v1226, %v1228
      %v1230 = vrot.slane %v1216, %v1229
      %v1232 = vunpack.c.l.s4 857870592
      %v1233 = vunpack.c.0.s8 %v1232
      %v1234 = vlaneseq
      %v1235 = vshrl.u32 %v1234, 7
      %v1236 = vsub.s32 %v1233, %v1235
      %v1237 = vrot.slane %v1217, %v1236
      %v1239 = vunpack.c.l.s4 857870592
      %v1240 = vunpack.c.0.s8 %v1239
      %v1241 = vlaneseq
      %v1242 = vshrl.u32 %v1241, 7
      %v1243 = vsub.s32 %v1240, %v1242
      %v1244 = vrot.slane %v1218, %v1243
      %v1246 = vunpack.c.l.s4 857870592
      %v1247 = vunpack.c.0.s8 %v1246
      %v1248 = vlaneseq
      %v1249 = vshrl.u32 %v1248, 7
      %v1250 = vsub.s32 %v1247, %v1249
      %v1251 = vrot.slane %v1219, %v1250
      %v1253 = vunpack.c.l.s4 857870592
      %v1254 = vunpack.c.0.s8 %v1253
      %v1255 = vlaneseq
      %v1256 = vshrl.u32 %v1255, 7
      %v1257 = vsub.s32 %v1254, %v1256
      %v1258 = vrot.slane %v1220, %v1257
      %v1260 = vunpack.c.l.s4 857870592
      %v1261 = vunpack.c.0.s8 %v1260
      %v1262 = vlaneseq
      %v1263 = vshrl.u32 %v1262, 7
      %v1264 = vsub.s32 %v1261, %v1263
      %v1265 = vrot.slane %v1221, %v1264
      %v1267 = vunpack.c.l.s4 857870592
      %v1268 = vunpack.c.0.s8 %v1267
      %v1269 = vlaneseq
      %v1270 = vshrl.u32 %v1269, 7
      %v1271 = vsub.s32 %v1268, %v1270
      %v1272 = vrot.slane %v1222, %v1271
      %v1274 = vunpack.c.l.s4 857870592
      %v1275 = vunpack.c.0.s8 %v1274
      %v1276 = vlaneseq
      %v1277 = vshrl.u32 %v1276, 7
      %v1278 = vsub.s32 %v1275, %v1277
      %v1279 = vrot.slane %v1223, %v1278
      %vm1288 = vsmask.f32 7938
      %vm1289 = vmand %vm1156, %vm1288
      %v1290 = vld [vmem:[#allocation2] sm:$0x1]
      %v1291 = vsel %vm1289, %v1230, %v1290
      %1292 = vst [vmem:[#allocation2] sm:$0x1] %v1291
      %v1293 = vld [vmem:[#allocation2 + $0x2] sm:$0x1]
      %v1294 = vsel %vm1289, %v1237, %v1293
      %1295 = vst [vmem:[#allocation2 + $0x2] sm:$0x1] %v1294
      %v1296 = vld [vmem:[#allocation2 + $0x4] sm:$0x1]
      %v1297 = vsel %vm1289, %v1244, %v1296
      %1298 = vst [vmem:[#allocation2 + $0x4] sm:$0x1] %v1297
      %v1299 = vld [vmem:[#allocation2 + $0x6] sm:$0x1]
      %v1300 = vsel %vm1289, %v1251, %v1299
      %1301 = vst [vmem:[#allocation2 + $0x6] sm:$0x1] %v1300
      %v1302 = vld [vmem:[#allocation2 + $0x8] sm:$0x1]
      %v1303 = vsel %vm1289, %v1258, %v1302
      %1304 = vst [vmem:[#allocation2 + $0x8] sm:$0x1] %v1303
      %v1305 = vld [vmem:[#allocation2 + $0xa] sm:$0x1]
      %v1306 = vsel %vm1289, %v1265, %v1305
      %1307 = vst [vmem:[#allocation2 + $0xa] sm:$0x1] %v1306
      %v1308 = vld [vmem:[#allocation2 + $0xc] sm:$0x1]
      %v1309 = vsel %vm1289, %v1272, %v1308
      %1310 = vst [vmem:[#allocation2 + $0xc] sm:$0x1] %v1309
      %v1311 = vld [vmem:[#allocation2 + $0xe] sm:$0x1]
      %v1312 = vsel %vm1289, %v1279, %v1311
      %1313 = vst [vmem:[#allocation2 + $0xe] sm:$0x1] %v1312
      %v1316 = vunpack.c.l.s4 1966171168
      %v1317 = vunpack.c.0.s8 %v1316
      %v1318 = vlaneseq
      %v1319 = vshrl.u32 %v1318, 7
      %v1320 = vsub.s32 %v1317, %v1319
      %v1321 = vrot.slane %v855, %v1320
      %v1322 = vcombine.high %v1321, %v1321
      %v1324 = vunpack.c.l.s4 1966171168
      %v1325 = vunpack.c.0.s8 %v1324
      %v1326 = vlaneseq
      %v1327 = vshrl.u32 %v1326, 7
      %v1328 = vsub.s32 %v1325, %v1327
      %v1329 = vrot.slane %v1321, %v1328
      %v1331 = vunpack.c.l.s4 1966171168
      %v1332 = vunpack.c.0.s8 %v1331
      %v1333 = vlaneseq
      %v1334 = vshrl.u32 %v1333, 7
      %v1335 = vsub.s32 %v1332, %v1334
      %v1336 = vrot.slane %v1322, %v1335
      %v1337 = vcombine.high %v1329, %v1329
      %v1338 = vcombine.high %v1336, %v1336
      %v1339 = vunpack.i.l.s16 %v1329
      %v1340 = vunpack.i.h.s16 %v1329
      %v1341 = vunpack.i.l.s16 %v1336
      %v1342 = vunpack.i.h.s16 %v1336
      %v1343 = vunpack.i.l.s16 %v1337
      %v1344 = vunpack.i.h.s16 %v1337
      %v1345 = vunpack.i.l.s16 %v1338
      %v1346 = vunpack.i.h.s16 %v1338
      %v1347 = vpack.i.b16 %v1339, %v1339
      %v1348 = vpack.i.b16 %v1340, %v1340
      %v1349 = vpack.i.b16 %v1341, %v1341
      %v1350 = vpack.i.b16 %v1342, %v1342
      %v1351 = vpack.i.b16 %v1343, %v1343
      %v1352 = vpack.i.b16 %v1344, %v1344
      %v1353 = vpack.i.b16 %v1345, %v1345
      %v1354 = vpack.i.b16 %v1346, %v1346
      %v1356 = vunpack.c.l.s4 857870592
      %v1357 = vunpack.c.0.s8 %v1356
      %v1358 = vlaneseq
      %v1359 = vshrl.u32 %v1358, 7
      %v1360 = vsub.s32 %v1357, %v1359
      %v1361 = vrot.slane %v1347, %v1360
      %v1363 = vunpack.c.l.s4 857870592
      %v1364 = vunpack.c.0.s8 %v1363
      %v1365 = vlaneseq
      %v1366 = vshrl.u32 %v1365, 7
      %v1367 = vsub.s32 %v1364, %v1366
      %v1368 = vrot.slane %v1348, %v1367
      %v1370 = vunpack.c.l.s4 857870592
      %v1371 = vunpack.c.0.s8 %v1370
      %v1372 = vlaneseq
      %v1373 = vshrl.u32 %v1372, 7
      %v1374 = vsub.s32 %v1371, %v1373
      %v1375 = vrot.slane %v1349, %v1374
      %v1377 = vunpack.c.l.s4 857870592
      %v1378 = vunpack.c.0.s8 %v1377
      %v1379 = vlaneseq
      %v1380 = vshrl.u32 %v1379, 7
      %v1381 = vsub.s32 %v1378, %v1380
      %v1382 = vrot.slane %v1350, %v1381
      %v1384 = vunpack.c.l.s4 857870592
      %v1385 = vunpack.c.0.s8 %v1384
      %v1386 = vlaneseq
      %v1387 = vshrl.u32 %v1386, 7
      %v1388 = vsub.s32 %v1385, %v1387
      %v1389 = vrot.slane %v1351, %v1388
      %v1391 = vunpack.c.l.s4 857870592
      %v1392 = vunpack.c.0.s8 %v1391
      %v1393 = vlaneseq
      %v1394 = vshrl.u32 %v1393, 7
      %v1395 = vsub.s32 %v1392, %v1394
      %v1396 = vrot.slane %v1352, %v1395
      %v1398 = vunpack.c.l.s4 857870592
      %v1399 = vunpack.c.0.s8 %v1398
      %v1400 = vlaneseq
      %v1401 = vshrl.u32 %v1400, 7
      %v1402 = vsub.s32 %v1399, %v1401
      %v1403 = vrot.slane %v1353, %v1402
      %v1405 = vunpack.c.l.s4 857870592
      %v1406 = vunpack.c.0.s8 %v1405
      %v1407 = vlaneseq
      %v1408 = vshrl.u32 %v1407, 7
      %v1409 = vsub.s32 %v1406, %v1408
      %v1410 = vrot.slane %v1354, %v1409
      %vm1419 = vcmask 58369
      %vm1420 = vsmask.f32 1280
      %vm1421 = vmand %vm1419, %vm1420
      %v1422 = vld [vmem:[#allocation2] sm:$0x2]
      %v1423 = vsel %vm1421, %v1361, %v1422
      %1424 = vst [vmem:[#allocation2] sm:$0x2] %v1423
      %v1425 = vld [vmem:[#allocation2 + $0x2] sm:$0x2]
      %v1426 = vsel %vm1421, %v1368, %v1425
      %1427 = vst [vmem:[#allocation2 + $0x2] sm:$0x2] %v1426
      %v1428 = vld [vmem:[#allocation2 + $0x4] sm:$0x2]
      %v1429 = vsel %vm1421, %v1375, %v1428
      %1430 = vst [vmem:[#allocation2 + $0x4] sm:$0x2] %v1429
      %v1431 = vld [vmem:[#allocation2 + $0x6] sm:$0x2]
      %v1432 = vsel %vm1421, %v1382, %v1431
      %1433 = vst [vmem:[#allocation2 + $0x6] sm:$0x2] %v1432
      %v1434 = vld [vmem:[#allocation2 + $0x8] sm:$0x2]
      %v1435 = vsel %vm1421, %v1389, %v1434
      %1436 = vst [vmem:[#allocation2 + $0x8] sm:$0x2] %v1435
      %v1437 = vld [vmem:[#allocation2 + $0xa] sm:$0x2]
      %v1438 = vsel %vm1421, %v1396, %v1437
      %1439 = vst [vmem:[#allocation2 + $0xa] sm:$0x2] %v1438
      %v1440 = vld [vmem:[#allocation2 + $0xc] sm:$0x2]
      %v1441 = vsel %vm1421, %v1403, %v1440
      %1442 = vst [vmem:[#allocation2 + $0xc] sm:$0x2] %v1441
      %v1443 = vld [vmem:[#allocation2 + $0xe] sm:$0x2]
      %v1444 = vsel %vm1421, %v1410, %v1443
      %1445 = vst [vmem:[#allocation2 + $0xe] sm:$0x2] %v1444
      %v1448 = vunpack.c.l.s4 1966171168
      %v1449 = vunpack.c.0.s8 %v1448
      %v1450 = vlaneseq
      %v1451 = vshrl.u32 %v1450, 7
      %v1452 = vsub.s32 %v1449, %v1451
      %v1453 = vrot.slane %v856, %v1452
      %v1454 = vcombine.high %v1453, %v1453
      %v1456 = vunpack.c.l.s4 1966171168
      %v1457 = vunpack.c.0.s8 %v1456
      %v1458 = vlaneseq
      %v1459 = vshrl.u32 %v1458, 7
      %v1460 = vsub.s32 %v1457, %v1459
      %v1461 = vrot.slane %v1453, %v1460
      %v1463 = vunpack.c.l.s4 1966171168
      %v1464 = vunpack.c.0.s8 %v1463
      %v1465 = vlaneseq
      %v1466 = vshrl.u32 %v1465, 7
      %v1467 = vsub.s32 %v1464, %v1466
      %v1468 = vrot.slane %v1454, %v1467
      %v1469 = vcombine.high %v1461, %v1461
      %v1470 = vcombine.high %v1468, %v1468
      %v1471 = vunpack.i.l.s16 %v1461
      %v1472 = vunpack.i.h.s16 %v1461
      %v1473 = vunpack.i.l.s16 %v1468
      %v1474 = vunpack.i.h.s16 %v1468
      %v1475 = vunpack.i.l.s16 %v1469
      %v1476 = vunpack.i.h.s16 %v1469
      %v1477 = vunpack.i.l.s16 %v1470
      %v1478 = vunpack.i.h.s16 %v1470
      %v1479 = vpack.i.b16 %v1471, %v1471
      %v1480 = vpack.i.b16 %v1472, %v1472
      %v1481 = vpack.i.b16 %v1473, %v1473
      %v1482 = vpack.i.b16 %v1474, %v1474
      %v1483 = vpack.i.b16 %v1475, %v1475
      %v1484 = vpack.i.b16 %v1476, %v1476
      %v1485 = vpack.i.b16 %v1477, %v1477
      %v1486 = vpack.i.b16 %v1478, %v1478
      %v1488 = vunpack.c.l.s4 857870592
      %v1489 = vunpack.c.0.s8 %v1488
      %v1490 = vlaneseq
      %v1491 = vshrl.u32 %v1490, 7
      %v1492 = vsub.s32 %v1489, %v1491
      %v1493 = vrot.slane %v1479, %v1492
      %v1495 = vunpack.c.l.s4 857870592
      %v1496 = vunpack.c.0.s8 %v1495
      %v1497 = vlaneseq
      %v1498 = vshrl.u32 %v1497, 7
      %v1499 = vsub.s32 %v1496, %v1498
      %v1500 = vrot.slane %v1480, %v1499
      %v1502 = vunpack.c.l.s4 857870592
      %v1503 = vunpack.c.0.s8 %v1502
      %v1504 = vlaneseq
      %v1505 = vshrl.u32 %v1504, 7
      %v1506 = vsub.s32 %v1503, %v1505
      %v1507 = vrot.slane %v1481, %v1506
      %v1509 = vunpack.c.l.s4 857870592
      %v1510 = vunpack.c.0.s8 %v1509
      %v1511 = vlaneseq
      %v1512 = vshrl.u32 %v1511, 7
      %v1513 = vsub.s32 %v1510, %v1512
      %v1514 = vrot.slane %v1482, %v1513
      %v1516 = vunpack.c.l.s4 857870592
      %v1517 = vunpack.c.0.s8 %v1516
      %v1518 = vlaneseq
      %v1519 = vshrl.u32 %v1518, 7
      %v1520 = vsub.s32 %v1517, %v1519
      %v1521 = vrot.slane %v1483, %v1520
      %v1523 = vunpack.c.l.s4 857870592
      %v1524 = vunpack.c.0.s8 %v1523
      %v1525 = vlaneseq
      %v1526 = vshrl.u32 %v1525, 7
      %v1527 = vsub.s32 %v1524, %v1526
      %v1528 = vrot.slane %v1484, %v1527
      %v1530 = vunpack.c.l.s4 857870592
      %v1531 = vunpack.c.0.s8 %v1530
      %v1532 = vlaneseq
      %v1533 = vshrl.u32 %v1532, 7
      %v1534 = vsub.s32 %v1531, %v1533
      %v1535 = vrot.slane %v1485, %v1534
      %v1537 = vunpack.c.l.s4 857870592
      %v1538 = vunpack.c.0.s8 %v1537
      %v1539 = vlaneseq
      %v1540 = vshrl.u32 %v1539, 7
      %v1541 = vsub.s32 %v1538, %v1540
      %v1542 = vrot.slane %v1486, %v1541
      %vm1551 = vsmask.f32 7942
      %vm1552 = vmand %vm1419, %vm1551
      %v1553 = vld [vmem:[#allocation2] sm:$0x2]
      %v1554 = vsel %vm1552, %v1493, %v1553
      %1555 = vst [vmem:[#allocation2] sm:$0x2] %v1554
      %v1556 = vld [vmem:[#allocation2 + $0x2] sm:$0x2]
      %v1557 = vsel %vm1552, %v1500, %v1556
      %1558 = vst [vmem:[#allocation2 + $0x2] sm:$0x2] %v1557
      %v1559 = vld [vmem:[#allocation2 + $0x4] sm:$0x2]
      %v1560 = vsel %vm1552, %v1507, %v1559
      %1561 = vst [vmem:[#allocation2 + $0x4] sm:$0x2] %v1560
      %v1562 = vld [vmem:[#allocation2 + $0x6] sm:$0x2]
      %v1563 = vsel %vm1552, %v1514, %v1562
      %1564 = vst [vmem:[#allocation2 + $0x6] sm:$0x2] %v1563
      %v1565 = vld [vmem:[#allocation2 + $0x8] sm:$0x2]
      %v1566 = vsel %vm1552, %v1521, %v1565
      %1567 = vst [vmem:[#allocation2 + $0x8] sm:$0x2] %v1566
      %v1568 = vld [vmem:[#allocation2 + $0xa] sm:$0x2]
      %v1569 = vsel %vm1552, %v1528, %v1568
      %1570 = vst [vmem:[#allocation2 + $0xa] sm:$0x2] %v1569
      %v1571 = vld [vmem:[#allocation2 + $0xc] sm:$0x2]
      %v1572 = vsel %vm1552, %v1535, %v1571
      %1573 = vst [vmem:[#allocation2 + $0xc] sm:$0x2] %v1572
      %v1574 = vld [vmem:[#allocation2 + $0xe] sm:$0x2]
      %v1575 = vsel %vm1552, %v1542, %v1574
      %1576 = vst [vmem:[#allocation2 + $0xe] sm:$0x2] %v1575
      %v1577 = vld [vmem:[#allocation2] sm:$0x3]
      %v1578 = vld [vmem:[#allocation2 + $0x2] sm:$0x3]
      %v1579 = vld [vmem:[#allocation2 + $0x4] sm:$0x3]
      %v1580 = vld [vmem:[#allocation2 + $0x6] sm:$0x3]
      %v1581 = vld [vmem:[#allocation2 + $0x8] sm:$0x3]
      %v1582 = vld [vmem:[#allocation2 + $0xa] sm:$0x3]
      %v1583 = vld [vmem:[#allocation2 + $0xc] sm:$0x3]
      %v1584 = vld [vmem:[#allocation2 + $0xe] sm:$0x3]
      %v1585 = vld [vmem:[%s524] sm:$0xf]
      %v1586 = vld [vmem:[%s524 + $0x4] sm:$0xf]
      %v1587 = vld [vmem:[%s524 + $0x8] sm:$0xf]
      %v1588 = vld [vmem:[%s524 + $0xc] sm:$0xf]
      %v1589 = vld [vmem:[%s524 + $0x10] sm:$0xf]
      %v1590 = vld [vmem:[%s524 + $0x14] sm:$0xf]
      %v1591 = vld [vmem:[%s524 + $0x18] sm:$0xf]
      %v1592 = vld [vmem:[%s524 + $0x1c] sm:$0xf]
      %v1594 = vsel %vm808, %v1577, 0
      %v1597 = vsel %vm864, %v1585, 0
      %1599 = vmatprep.subr.bf16.mxu0 0
      %1600 = vmatpush1.bf16.msra.mxu0 %v1597
      %1601 = vmatprep.subr.bf16.mxu0 0
      %1602 = vmatpush1.bf16.msra.mxu0 0
      %1603 = vmatprep.subr.bf16.mxu0 0
      %1604 = vmatpush1.bf16.msra.mxu0 0
      %1605 = vmatprep.subr.bf16.mxu0 0
      %1606 = vmatpush1.bf16.msra.mxu0 0
      %1607 = vmatprep.subr.bf16.mxu0 0
      %1608 = vmatpush1.bf16.msra.mxu0 0
      %1609 = vmatprep.subr.bf16.mxu0 0
      %1610 = vmatpush1.bf16.msra.mxu0 0
      %1611 = vmatprep.subr.bf16.mxu0 0
      %1612 = vmatpush1.bf16.msra.mxu0 0
      %1613 = vmatprep.subr.bf16.mxu0 0
      %1614 = vmatpush1.bf16.msra.mxu0 0
      %1615 = vmatprep.subr.bf16.mxu0 0
      %1616 = vmatpush1.bf16.msra.mxu0 0
      %1617 = vmatprep.subr.bf16.mxu0 0
      %1618 = vmatpush1.bf16.msra.mxu0 0
      %1619 = vmatprep.subr.bf16.mxu0 0
      %1620 = vmatpush1.bf16.msra.mxu0 0
      %1621 = vmatprep.subr.bf16.mxu0 0
      %1622 = vmatpush1.bf16.msra.mxu0 0
      %1623 = vmatprep.subr.bf16.mxu0 0
      %1624 = vmatpush1.bf16.msra.mxu0 0
      %1625 = vmatprep.subr.bf16.mxu0 0
      %1626 = vmatpush1.bf16.msra.mxu0 0
      %1627 = vmatprep.subr.bf16.mxu0 0
      %1628 = vmatpush1.bf16.msra.mxu0 0
      %1629 = vmatprep.subr.bf16.mxu0 0
      %1630 = vmatpush1.bf16.msra.mxu0 0
      %1631 = vmatprep.mubr.bf16.mxu0 0
      %1632 = vmatmul.mubr.bf16.gmra.mrb[0].mxu0 %v1594
      %v1633 = vpop.f32.mrb[0].mxu0
      %v1634 = vadd.f32 0.0, %v1633
      %v1635 = vpop.f32.mrb[0].mxu0
      %v1636 = vpop.f32.mrb[0].mxu0
      %v1637 = vpop.f32.mrb[0].mxu0
      %1638 = vdwg.mxu0
      %v1640 = vsel %vm808, %v1578, 0
      %v1643 = vsel %vm864, %v1586, 0
      %1645 = vmatprep.subr.bf16.mxu0 0
      %1646 = vmatpush1.bf16.msra.mxu0 %v1643
      %1647 = vmatprep.subr.bf16.mxu0 0
      %1648 = vmatpush1.bf16.msra.mxu0 0
      %1649 = vmatprep.subr.bf16.mxu0 0
      %1650 = vmatpush1.bf16.msra.mxu0 0
      %1651 = vmatprep.subr.bf16.mxu0 0
      %1652 = vmatpush1.bf16.msra.mxu0 0
      %1653 = vmatprep.subr.bf16.mxu0 0
      %1654 = vmatpush1.bf16.msra.mxu0 0
      %1655 = vmatprep.subr.bf16.mxu0 0
      %1656 = vmatpush1.bf16.msra.mxu0 0
      %1657 = vmatprep.subr.bf16.mxu0 0
      %1658 = vmatpush1.bf16.msra.mxu0 0
      %1659 = vmatprep.subr.bf16.mxu0 0
      %1660 = vmatpush1.bf16.msra.mxu0 0
      %1661 = vmatprep.subr.bf16.mxu0 0
      %1662 = vmatpush1.bf16.msra.mxu0 0
      %1663 = vmatprep.subr.bf16.mxu0 0
      %1664 = vmatpush1.bf16.msra.mxu0 0
      %1665 = vmatprep.subr.bf16.mxu0 0
      %1666 = vmatpush1.bf16.msra.mxu0 0
      %1667 = vmatprep.subr.bf16.mxu0 0
      %1668 = vmatpush1.bf16.msra.mxu0 0
      %1669 = vmatprep.subr.bf16.mxu0 0
      %1670 = vmatpush1.bf16.msra.mxu0 0
      %1671 = vmatprep.subr.bf16.mxu0 0
      %1672 = vmatpush1.bf16.msra.mxu0 0
      %1673 = vmatprep.subr.bf16.mxu0 0
      %1674 = vmatpush1.bf16.msra.mxu0 0
      %1675 = vmatprep.subr.bf16.mxu0 0
      %1676 = vmatpush1.bf16.msra.mxu0 0
      %1677 = vmatprep.mubr.bf16.mxu0 0
      %1678 = vmatmul.mubr.bf16.gmra.mrb[0].mxu0 %v1640
      %v1679 = vpop.f32.mrb[0].mxu0
      %v1680 = vadd.f32 0.0, %v1679
      %v1681 = vpop.f32.mrb[0].mxu0
      %v1682 = vpop.f32.mrb[0].mxu0
      %v1683 = vpop.f32.mrb[0].mxu0
      %1684 = vdwg.mxu0
      %v1686 = vsel %vm808, %v1579, 0
      %v1689 = vsel %vm864, %v1587, 0
      %1691 = vmatprep.subr.bf16.mxu0 0
      %1692 = vmatpush1.bf16.msra.mxu0 %v1689
      %1693 = vmatprep.subr.bf16.mxu0 0
      %1694 = vmatpush1.bf16.msra.mxu0 0
      %1695 = vmatprep.subr.bf16.mxu0 0
      %1696 = vmatpush1.bf16.msra.mxu0 0
      %1697 = vmatprep.subr.bf16.mxu0 0
      %1698 = vmatpush1.bf16.msra.mxu0 0
      %1699 = vmatprep.subr.bf16.mxu0 0
      %1700 = vmatpush1.bf16.msra.mxu0 0
      %1701 = vmatprep.subr.bf16.mxu0 0
      %1702 = vmatpush1.bf16.msra.mxu0 0
      %1703 = vmatprep.subr.bf16.mxu0 0
      %1704 = vmatpush1.bf16.msra.mxu0 0
      %1705 = vmatprep.subr.bf16.mxu0 0
      %1706 = vmatpush1.bf16.msra.mxu0 0
      %1707 = vmatprep.subr.bf16.mxu0 0
      %1708 = vmatpush1.bf16.msra.mxu0 0
      %1709 = vmatprep.subr.bf16.mxu0 0
      %1710 = vmatpush1.bf16.msra.mxu0 0
      %1711 = vmatprep.subr.bf16.mxu0 0
      %1712 = vmatpush1.bf16.msra.mxu0 0
      %1713 = vmatprep.subr.bf16.mxu0 0
      %1714 = vmatpush1.bf16.msra.mxu0 0
      %1715 = vmatprep.subr.bf16.mxu0 0
      %1716 = vmatpush1.bf16.msra.mxu0 0
      %1717 = vmatprep.subr.bf16.mxu0 0
      %1718 = vmatpush1.bf16.msra.mxu0 0
      %1719 = vmatprep.subr.bf16.mxu0 0
      %1720 = vmatpush1.bf16.msra.mxu0 0
      %1721 = vmatprep.subr.bf16.mxu0 0
      %1722 = vmatpush1.bf16.msra.mxu0 0
      %1723 = vmatprep.mubr.bf16.mxu0 0
      %1724 = vmatmul.mubr.bf16.gmra.mrb[0].mxu0 %v1686
      %v1725 = vpop.f32.mrb[0].mxu0
      %v1726 = vadd.f32 0.0, %v1725
      %v1727 = vpop.f32.mrb[0].mxu0
      %v1728 = vpop.f32.mrb[0].mxu0
      %v1729 = vpop.f32.mrb[0].mxu0
      %1730 = vdwg.mxu0
      %v1732 = vsel %vm808, %v1580, 0
      %v1735 = vsel %vm864, %v1588, 0
      %1737 = vmatprep.subr.bf16.mxu0 0
      %1738 = vmatpush1.bf16.msra.mxu0 %v1735
      %1739 = vmatprep.subr.bf16.mxu0 0
      %1740 = vmatpush1.bf16.msra.mxu0 0
      %1741 = vmatprep.subr.bf16.mxu0 0
      %1742 = vmatpush1.bf16.msra.mxu0 0
      %1743 = vmatprep.subr.bf16.mxu0 0
      %1744 = vmatpush1.bf16.msra.mxu0 0
      %1745 = vmatprep.subr.bf16.mxu0 0
      %1746 = vmatpush1.bf16.msra.mxu0 0
      %1747 = vmatprep.subr.bf16.mxu0 0
      %1748 = vmatpush1.bf16.msra.mxu0 0
      %1749 = vmatprep.subr.bf16.mxu0 0
      %1750 = vmatpush1.bf16.msra.mxu0 0
      %1751 = vmatprep.subr.bf16.mxu0 0
      %1752 = vmatpush1.bf16.msra.mxu0 0
      %1753 = vmatprep.subr.bf16.mxu0 0
      %1754 = vmatpush1.bf16.msra.mxu0 0
      %1755 = vmatprep.subr.bf16.mxu0 0
      %1756 = vmatpush1.bf16.msra.mxu0 0
      %1757 = vmatprep.subr.bf16.mxu0 0
      %1758 = vmatpush1.bf16.msra.mxu0 0
      %1759 = vmatprep.subr.bf16.mxu0 0
      %1760 = vmatpush1.bf16.msra.mxu0 0
      %1761 = vmatprep.subr.bf16.mxu0 0
      %1762 = vmatpush1.bf16.msra.mxu0 0
      %1763 = vmatprep.subr.bf16.mxu0 0
      %1764 = vmatpush1.bf16.msra.mxu0 0
      %1765 = vmatprep.subr.bf16.mxu0 0
      %1766 = vmatpush1.bf16.msra.mxu0 0
      %1767 = vmatprep.subr.bf16.mxu0 0
      %1768 = vmatpush1.bf16.msra.mxu0 0
      %1769 = vmatprep.mubr.bf16.mxu0 0
      %1770 = vmatmul.mubr.bf16.gmra.mrb[0].mxu0 %v1732
      %v1771 = vpop.f32.mrb[0].mxu0
      %v1772 = vadd.f32 0.0, %v1771
      %v1773 = vpop.f32.mrb[0].mxu0
      %v1774 = vpop.f32.mrb[0].mxu0
      %v1775 = vpop.f32.mrb[0].mxu0
      %1776 = vdwg.mxu0
      %v1778 = vsel %vm808, %v1581, 0
      %v1781 = vsel %vm864, %v1589, 0
      %1783 = vmatprep.subr.bf16.mxu0 0
      %1784 = vmatpush1.bf16.msra.mxu0 %v1781
      %1785 = vmatprep.subr.bf16.mxu0 0
      %1786 = vmatpush1.bf16.msra.mxu0 0
      %1787 = vmatprep.subr.bf16.mxu0 0
      %1788 = vmatpush1.bf16.msra.mxu0 0
      %1789 = vmatprep.subr.bf16.mxu0 0
      %1790 = vmatpush1.bf16.msra.mxu0 0
      %1791 = vmatprep.subr.bf16.mxu0 0
      %1792 = vmatpush1.bf16.msra.mxu0 0
      %1793 = vmatprep.subr.bf16.mxu0 0
      %1794 = vmatpush1.bf16.msra.mxu0 0
      %1795 = vmatprep.subr.bf16.mxu0 0
      %1796 = vmatpush1.bf16.msra.mxu0 0
      %1797 = vmatprep.subr.bf16.mxu0 0
      %1798 = vmatpush1.bf16.msra.mxu0 0
      %1799 = vmatprep.subr.bf16.mxu0 0
      %1800 = vmatpush1.bf16.msra.mxu0 0
      %1801 = vmatprep.subr.bf16.mxu0 0
      %1802 = vmatpush1.bf16.msra.mxu0 0
      %1803 = vmatprep.subr.bf16.mxu0 0
      %1804 = vmatpush1.bf16.msra.mxu0 0
      %1805 = vmatprep.subr.bf16.mxu0 0
      %1806 = vmatpush1.bf16.msra.mxu0 0
      %1807 = vmatprep.subr.bf16.mxu0 0
      %1808 = vmatpush1.bf16.msra.mxu0 0
      %1809 = vmatprep.subr.bf16.mxu0 0
      %1810 = vmatpush1.bf16.msra.mxu0 0
      %1811 = vmatprep.subr.bf16.mxu0 0
      %1812 = vmatpush1.bf16.msra.mxu0 0
      %1813 = vmatprep.subr.bf16.mxu0 0
      %1814 = vmatpush1.bf16.msra.mxu0 0
      %1815 = vmatprep.mubr.bf16.mxu0 0
      %1816 = vmatmul.mubr.bf16.gmra.mrb[0].mxu0 %v1778
      %v1817 = vpop.f32.mrb[0].mxu0
      %v1818 = vadd.f32 0.0, %v1817
      %v1819 = vpop.f32.mrb[0].mxu0
      %v1820 = vpop.f32.mrb[0].mxu0
      %v1821 = vpop.f32.mrb[0].mxu0
      %1822 = vdwg.mxu0
      %v1824 = vsel %vm808, %v1582, 0
      %v1827 = vsel %vm864, %v1590, 0
      %1829 = vmatprep.subr.bf16.mxu0 0
      %1830 = vmatpush1.bf16.msra.mxu0 %v1827
      %1831 = vmatprep.subr.bf16.mxu0 0
      %1832 = vmatpush1.bf16.msra.mxu0 0
      %1833 = vmatprep.subr.bf16.mxu0 0
      %1834 = vmatpush1.bf16.msra.mxu0 0
      %1835 = vmatprep.subr.bf16.mxu0 0
      %1836 = vmatpush1.bf16.msra.mxu0 0
      %1837 = vmatprep.subr.bf16.mxu0 0
      %1838 = vmatpush1.bf16.msra.mxu0 0
      %1839 = vmatprep.subr.bf16.mxu0 0
      %1840 = vmatpush1.bf16.msra.mxu0 0
      %1841 = vmatprep.subr.bf16.mxu0 0
      %1842 = vmatpush1.bf16.msra.mxu0 0
      %1843 = vmatprep.subr.bf16.mxu0 0
      %1844 = vmatpush1.bf16.msra.mxu0 0
      %1845 = vmatprep.subr.bf16.mxu0 0
      %1846 = vmatpush1.bf16.msra.mxu0 0
      %1847 = vmatprep.subr.bf16.mxu0 0
      %1848 = vmatpush1.bf16.msra.mxu0 0
      %1849 = vmatprep.subr.bf16.mxu0 0
      %1850 = vmatpush1.bf16.msra.mxu0 0
      %1851 = vmatprep.subr.bf16.mxu0 0
      %1852 = vmatpush1.bf16.msra.mxu0 0
      %1853 = vmatprep.subr.bf16.mxu0 0
      %1854 = vmatpush1.bf16.msra.mxu0 0
      %1855 = vmatprep.subr.bf16.mxu0 0
      %1856 = vmatpush1.bf16.msra.mxu0 0
      %1857 = vmatprep.subr.bf16.mxu0 0
      %1858 = vmatpush1.bf16.msra.mxu0 0
      %1859 = vmatprep.subr.bf16.mxu0 0
      %1860 = vmatpush1.bf16.msra.mxu0 0
      %1861 = vmatprep.mubr.bf16.mxu0 0
      %1862 = vmatmul.mubr.bf16.gmra.mrb[0].mxu0 %v1824
      %v1863 = vpop.f32.mrb[0].mxu0
      %v1864 = vadd.f32 0.0, %v1863
      %v1865 = vpop.f32.mrb[0].mxu0
      %v1866 = vpop.f32.mrb[0].mxu0
      %v1867 = vpop.f32.mrb[0].mxu0
      %1868 = vdwg.mxu0
      %v1870 = vsel %vm808, %v1583, 0
      %v1873 = vsel %vm864, %v1591, 0
      %1875 = vmatprep.subr.bf16.mxu0 0
      %1876 = vmatpush1.bf16.msra.mxu0 %v1873
      %1877 = vmatprep.subr.bf16.mxu0 0
      %1878 = vmatpush1.bf16.msra.mxu0 0
      %1879 = vmatprep.subr.bf16.mxu0 0
      %1880 = vmatpush1.bf16.msra.mxu0 0
      %1881 = vmatprep.subr.bf16.mxu0 0
      %1882 = vmatpush1.bf16.msra.mxu0 0
      %1883 = vmatprep.subr.bf16.mxu0 0
      %1884 = vmatpush1.bf16.msra.mxu0 0
      %1885 = vmatprep.subr.bf16.mxu0 0
      %1886 = vmatpush1.bf16.msra.mxu0 0
      %1887 = vmatprep.subr.bf16.mxu0 0
      %1888 = vmatpush1.bf16.msra.mxu0 0
      %1889 = vmatprep.subr.bf16.mxu0 0
      %1890 = vmatpush1.bf16.msra.mxu0 0
      %1891 = vmatprep.subr.bf16.mxu0 0
      %1892 = vmatpush1.bf16.msra.mxu0 0
      %1893 = vmatprep.subr.bf16.mxu0 0
      %1894 = vmatpush1.bf16.msra.mxu0 0
      %1895 = vmatprep.subr.bf16.mxu0 0
      %1896 = vmatpush1.bf16.msra.mxu0 0
      %1897 = vmatprep.subr.bf16.mxu0 0
      %1898 = vmatpush1.bf16.msra.mxu0 0
      %1899 = vmatprep.subr.bf16.mxu0 0
      %1900 = vmatpush1.bf16.msra.mxu0 0
      %1901 = vmatprep.subr.bf16.mxu0 0
      %1902 = vmatpush1.bf16.msra.mxu0 0
      %1903 = vmatprep.subr.bf16.mxu0 0
      %1904 = vmatpush1.bf16.msra.mxu0 0
      %1905 = vmatprep.subr.bf16.mxu0 0
      %1906 = vmatpush1.bf16.msra.mxu0 0
      %1907 = vmatprep.mubr.bf16.mxu0 0
      %1908 = vmatmul.mubr.bf16.gmra.mrb[0].mxu0 %v1870
      %v1909 = vpop.f32.mrb[0].mxu0
      %v1910 = vadd.f32 0.0, %v1909
      %v1911 = vpop.f32.mrb[0].mxu0
      %v1912 = vpop.f32.mrb[0].mxu0
      %v1913 = vpop.f32.mrb[0].mxu0
      %1914 = vdwg.mxu0
      %v1916 = vsel %vm808, %v1584, 0
      %v1919 = vsel %vm864, %v1592, 0
      %1921 = vmatprep.subr.bf16.mxu0 0
      %1922 = vmatpush1.bf16.msra.mxu0 %v1919
      %1923 = vmatprep.subr.bf16.mxu0 0
      %1924 = vmatpush1.bf16.msra.mxu0 0
      %1925 = vmatprep.subr.bf16.mxu0 0
      %1926 = vmatpush1.bf16.msra.mxu0 0
      %1927 = vmatprep.subr.bf16.mxu0 0
      %1928 = vmatpush1.bf16.msra.mxu0 0
      %1929 = vmatprep.subr.bf16.mxu0 0
      %1930 = vmatpush1.bf16.msra.mxu0 0
      %1931 = vmatprep.subr.bf16.mxu0 0
      %1932 = vmatpush1.bf16.msra.mxu0 0
      %1933 = vmatprep.subr.bf16.mxu0 0
      %1934 = vmatpush1.bf16.msra.mxu0 0
      %1935 = vmatprep.subr.bf16.mxu0 0
      %1936 = vmatpush1.bf16.msra.mxu0 0
      %1937 = vmatprep.subr.bf16.mxu0 0
      %1938 = vmatpush1.bf16.msra.mxu0 0
      %1939 = vmatprep.subr.bf16.mxu0 0
      %1940 = vmatpush1.bf16.msra.mxu0 0
      %1941 = vmatprep.subr.bf16.mxu0 0
      %1942 = vmatpush1.bf16.msra.mxu0 0
      %1943 = vmatprep.subr.bf16.mxu0 0
      %1944 = vmatpush1.bf16.msra.mxu0 0
      %1945 = vmatprep.subr.bf16.mxu0 0
      %1946 = vmatpush1.bf16.msra.mxu0 0
      %1947 = vmatprep.subr.bf16.mxu0 0
      %1948 = vmatpush1.bf16.msra.mxu0 0
      %1949 = vmatprep.subr.bf16.mxu0 0
      %1950 = vmatpush1.bf16.msra.mxu0 0
      %1951 = vmatprep.subr.bf16.mxu0 0
      %1952 = vmatpush1.bf16.msra.mxu0 0
      %1953 = vmatprep.mubr.bf16.mxu0 0
      %1954 = vmatmul.mubr.bf16.gmra.mrb[0].mxu0 %v1916
      %v1955 = vpop.f32.mrb[0].mxu0
      %v1956 = vadd.f32 0.0, %v1955
      %v1957 = vpop.f32.mrb[0].mxu0
      %v1958 = vpop.f32.mrb[0].mxu0
      %v1959 = vpop.f32.mrb[0].mxu0
      %1960 = vdwg.mxu0
      %vm1961 = vcmask 27648
      %1962 = vst.msk [vmem:[%s552] sm:$0xf] %vm1961, %v1634
      %1963 = vst.msk [vmem:[%s552 + $0x4] sm:$0xf] %vm1961, %v1680
      %1964 = vst.msk [vmem:[%s552 + $0x8] sm:$0xf] %vm1961, %v1726
      %1965 = vst.msk [vmem:[%s552 + $0xc] sm:$0xf] %vm1961, %v1772
      %1966 = vst.msk [vmem:[%s552 + $0x10] sm:$0xf] %vm1961, %v1818
      %1967 = vst.msk [vmem:[%s552 + $0x14] sm:$0xf] %vm1961, %v1864
      %1968 = vst.msk [vmem:[%s552 + $0x18] sm:$0xf] %vm1961, %v1910
      %1969 = vst.msk [vmem:[%s552 + $0x1c] sm:$0xf] %vm1961, %v1956
      %p1970 = scmp.lt.s32.totalorder %s25, 1
      %s1971 = scalar_select %p1970, %s25, 1
      %p1972 = scmp.lt.s32.totalorder %s26, 0
      %s1973 = scalar_select %p1972, %s26, 0
      %s1974 = smul.addr %s1971, 4
      %s1975 = sadd.s32 %s1973, %s1974
      %s1976 = smul.addr %s1975, 8
      %s1977 = scalar_lea.vmem %s8, %s1976
      %s1978 = smul.u32 8, %s26
      %p1979 = scmp.lt.s32.totalorder %s25, 1
      %s1980 = scalar_select %p1979, %s25, 1
      %p1981 = scmp.lt.s32.totalorder %s1978, 7
      %s1982 = scalar_select %p1981, %s1978, 7
      %s1983 = smul.addr %s1980, 8
      %s1984 = sadd.s32 %s1982, %s1983
      %s1985 = smul.addr %s1984, 4
      %s1986 = scalar_lea.vmem %s9, %s1985
      // Predicated region
      $region53: #{structure_module_forward.32} parent=51 // pred_check
        %p1987 = pneg %p269
      $region54: #{structure_module_forward.32} parent=51 // pred_check_branch
        %1989 = sbr.rel (%p1987) target = $region56
      $region55: #{structure_module_forward.32} parent=51 // pred_region
        _
      $region56: #{structure_module_forward.32} parent=51 // pred_fallthru
        _
      // Predicated region
      $region57: #{structure_module_forward.32} parent=51 // pred_check
        %p1990 = pneg %p297
      $region58: #{structure_module_forward.32} parent=51 // pred_check_branch
        %1992 = sbr.rel (%p1990) target = $region60
      $region59: #{structure_module_forward.32} parent=51 // pred_region
        %s1993 = smul.u32 8, %s26
      $region60: #{structure_module_forward.32} parent=51 // pred_fallthru
        _
    $region52: #{structure_module_forward.32} parent=5 // pred_fallthru
      _
    %p1994 = scmp.le.s32.totalorder 2, %s16
    // Predicated region
    $region61: #{structure_module_forward.32} parent=5 // pred_check
      %p1995 = pneg %p1994
    $region62: #{structure_module_forward.32} parent=5 // pred_check_branch
      %1997 = sbr.rel (%p1995) target = $region64
    $region63: #{structure_module_forward.32} parent=5 // pred_region
      %s1998 = ssub.s32 %s16, 2
      // Predicated region
      $region65: #{structure_module_forward.32} parent=63 // pred_check
        %p1999 = pneg %p275
      $region66: #{structure_module_forward.32} parent=63 // pred_check_branch
        %2001 = sbr.rel (%p1999) target = $region68
      $region67: #{structure_module_forward.32} parent=63 // pred_region
        %p2002 = scmp.lt.s32.totalorder %s27, 1
        %s2003 = scalar_select %p2002, %s27, 1
        %p2004 = scmp.lt.s32.totalorder %s28, 0
        %s2005 = scalar_select %p2004, %s28, 0
        %s2006 = smul.addr %s2003, 4
        %s2007 = sadd.s32 %s2005, %s2006
        %s2008 = smul.addr %s2007, 8
        %s2009 = scalar_lea.vmem %s8, %s2008
      $region68: #{structure_module_forward.32} parent=63 // pred_fallthru
        _
      // Predicated region
      $region69: #{structure_module_forward.32} parent=63 // pred_check
        %p2010 = pneg %p303
      $region70: #{structure_module_forward.32} parent=63 // pred_check_branch
        %2012 = sbr.rel (%p2010) target = $region72
      $region71: #{structure_module_forward.32} parent=63 // pred_region
        %s2013 = smul.u32 8, %s28
        %p2014 = scmp.lt.s32.totalorder %s27, 1
        %s2015 = scalar_select %p2014, %s27, 1
        %p2016 = scmp.lt.s32.totalorder %s2013, 7
        %s2017 = scalar_select %p2016, %s2013, 7
        %s2018 = smul.addr %s2015, 8
        %s2019 = sadd.s32 %s2017, %s2018
        %s2020 = smul.addr %s2019, 4
        %s2021 = scalar_lea.vmem %s9, %s2020
      $region72: #{structure_module_forward.32} parent=63 // pred_fallthru
        _
    $region64: #{structure_module_forward.32} parent=5 // pred_fallthru
      _
  $region6: #{structure_module_forward.32} parent=0 // loop_footer
    %s20 = sadd.s32 1, %s16
  $region7: #{structure_module_forward.32} parent=0 // loop_footer_branch
    %15 = sbr.rel target = $region3
  $region8: #{structure_module_forward.32} parent=0 // loop_exit
    _

// kernel: structure_module_forward.33
$region0: #{structure_module_forward.33}
  #allocation0 [shape = 'u32[]', space=smem, size = 0x4, offset = 0x4, fixed_abs, tag = 'smem constant byte address 0x4 - core index']
  #allocation1 [shape = 'u32[144,128]{1,0:T(1,128)}', space=vmem, size = 0x12000, scoped, tag = 'internal scratch']
  %s0 = inlined_call_operand.vmem [shape: f32[16,208], index: 0, kind: input, shape index: {}]
  %s1 = inlined_call_operand.vmem [shape: bf16[208,32], index: 1, kind: input, shape index: {}]
  %s2 = inlined_call_operand.vmem [shape: f32[1,32], index: 2, kind: input, shape index: {}]
  %s3 = inlined_call_operand.vmem [shape: f32[16,1], index: 3, kind: input, shape index: {}]
  %s4 = inlined_call_operand.vmem [shape: f32[16,32], index: 4, kind: input, shape index: {}]
  %s5 = inlined_call_operand.vmem [shape: f32[1,32], index: 5, kind: input, shape index: {}]
  %s6 = inlined_call_operand.vmem [shape: f32[1,32], index: 6, kind: input, shape index: {}]
  %s7 = inlined_call_operand.vmem [shape: f32[16,32], index: 7, kind: output, shape index: {}]
  %s8 = sld [smem:[#allocation0]]
  $region38: #{structure_module_forward.33} parent=0
    _
  %s10 = ssub.s32 1, %s8
  %s11 = scalar_select 0, %s10, %s8
  // Predicated region
  $region2: #{structure_module_forward.33} parent=0 // pred_check
    _
  $region3: #{structure_module_forward.33} parent=0 // pred_check_branch
    %13 = sbr.rel (0) target = $region5
  $region4: #{structure_module_forward.33} parent=0 // pred_region
    _
  $region5: #{structure_module_forward.33} parent=0 // pred_fallthru
    _
  // Predicated region
  $region6: #{structure_module_forward.33} parent=0 // pred_check
    _
  $region7: #{structure_module_forward.33} parent=0 // pred_check_branch
    %15 = sbr.rel (0) target = $region9
  $region8: #{structure_module_forward.33} parent=0 // pred_region
    _
  $region9: #{structure_module_forward.33} parent=0 // pred_fallthru
    _
  // Predicated region
  $region10: #{structure_module_forward.33} parent=0 // pred_check
    _
  $region11: #{structure_module_forward.33} parent=0 // pred_check_branch
    %17 = sbr.rel (0) target = $region13
  $region12: #{structure_module_forward.33} parent=0 // pred_region
    _
  $region13: #{structure_module_forward.33} parent=0 // pred_fallthru
    _
  // Predicated region
  $region14: #{structure_module_forward.33} parent=0 // pred_check
    _
  $region15: #{structure_module_forward.33} parent=0 // pred_check_branch
    %19 = sbr.rel (0) target = $region17
  $region16: #{structure_module_forward.33} parent=0 // pred_region
    _
  $region17: #{structure_module_forward.33} parent=0 // pred_fallthru
    _
  // Predicated region
  $region18: #{structure_module_forward.33} parent=0 // pred_check
    _
  $region19: #{structure_module_forward.33} parent=0 // pred_check_branch
    %21 = sbr.rel (0) target = $region21
  $region20: #{structure_module_forward.33} parent=0 // pred_region
    _
  $region21: #{structure_module_forward.33} parent=0 // pred_fallthru
    _
  // Predicated region
  $region22: #{structure_module_forward.33} parent=0 // pred_check
    _
  $region23: #{structure_module_forward.33} parent=0 // pred_check_branch
    %23 = sbr.rel (0) target = $region25
  $region24: #{structure_module_forward.33} parent=0 // pred_region
    _
  $region25: #{structure_module_forward.33} parent=0 // pred_fallthru
    _
  // Predicated region
  $region26: #{structure_module_forward.33} parent=0 // pred_check
    _
  $region27: #{structure_module_forward.33} parent=0 // pred_check_branch
    %25 = sbr.rel (0) target = $region29
  $region28: #{structure_module_forward.33} parent=0 // pred_region
    _
  $region29: #{structure_module_forward.33} parent=0 // pred_fallthru
    _
  %v27 = vld [vmem:[%s0] sm:$0xff]
  %v28 = vld [vmem:[%s0 + $0x8] sm:$0xff]
  %v29 = vld [vmem:[%s0 + $0x10] sm:$0xff]
  %v30 = vld [vmem:[%s0 + $0x18] sm:$0xff]
  %v31 = vld [vmem:[%s1] sm:$0xf]
  %v32 = vld [vmem:[%s1 + $0x4] sm:$0xf]
  %v33 = vld [vmem:[%s1 + $0x8] sm:$0xf]
  %v34 = vld [vmem:[%s1 + $0xc] sm:$0xf]
  %v35 = vld [vmem:[%s1 + $0x10] sm:$0xf]
  %v36 = vld [vmem:[%s1 + $0x14] sm:$0xf]
  %v37 = vld [vmem:[%s1 + $0x18] sm:$0xf]
  %v38 = vld [vmem:[%s1 + $0x1c] sm:$0xf]
  %v39 = vld [vmem:[%s1 + $0x20] sm:$0xf]
  %v40 = vld [vmem:[%s1 + $0x24] sm:$0xf]
  %v41 = vld [vmem:[%s1 + $0x28] sm:$0xf]
  %v42 = vld [vmem:[%s1 + $0x2c] sm:$0xf]
  %v43 = vld [vmem:[%s1 + $0x30] sm:$0xf]
  %v44 = vld [vmem:[%s1 + $0x34] sm:$0xf]
  %v45 = vld [vmem:[%s1 + $0x38] sm:$0xf]
  %v46 = vld [vmem:[%s1 + $0x3c] sm:$0xf]
  %v47 = vld [vmem:[%s1 + $0x40] sm:$0xf]
  %v48 = vld [vmem:[%s1 + $0x44] sm:$0xf]
  %v49 = vld [vmem:[%s1 + $0x48] sm:$0xf]
  %v50 = vld [vmem:[%s1 + $0x4c] sm:$0xf]
  %v51 = vld [vmem:[%s1 + $0x50] sm:$0xf]
  %v52 = vld [vmem:[%s1 + $0x54] sm:$0xf]
  %v53 = vld [vmem:[%s1 + $0x58] sm:$0xf]
  %v54 = vld [vmem:[%s1 + $0x5c] sm:$0xf]
  %v55 = vld [vmem:[%s1 + $0x60] sm:$0xf]
  %v56 = vld [vmem:[%s1 + $0x64] sm:$0xf]
  %v57 = vld [vmem:[%s2] sm:$0x1]
  %v58 = vpack.c.bf16 %v29, %v27
  %v59 = vpack.c.bf16 %v30, %v28
  %v61 = vlaneseq
  %v62 = vshrl.u32 %v61, 7
  %v63 = vsub.s32 0, %v62
  %v64 = vrot.slane %v57, %v63
  %v92 = vunpack.c.l.b16 %v31
  %v93 = vunpack.c.l.b16 %v32
  %v94 = vunpack.c.l.b16 %v33
  %v95 = vunpack.c.l.b16 %v34
  %v96 = vunpack.c.l.b16 %v35
  %v97 = vunpack.c.l.b16 %v36
  %v98 = vunpack.c.l.b16 %v37
  %v99 = vunpack.c.l.b16 %v38
  %v100 = vunpack.c.l.b16 %v39
  %v101 = vunpack.c.l.b16 %v40
  %v102 = vunpack.c.l.b16 %v41
  %v103 = vunpack.c.l.b16 %v42
  %v104 = vunpack.c.l.b16 %v43
  %v105 = vunpack.c.l.b16 %v44
  %v106 = vunpack.c.l.b16 %v45
  %v107 = vunpack.c.l.b16 %v46
  %v108 = vunpack.c.l.b16 %v47
  %v109 = vunpack.c.l.b16 %v48
  %v110 = vunpack.c.l.b16 %v49
  %v111 = vunpack.c.l.b16 %v50
  %v112 = vunpack.c.l.b16 %v51
  %v113 = vunpack.c.l.b16 %v52
  %v114 = vunpack.c.l.b16 %v53
  %v115 = vunpack.c.l.b16 %v54
  %v116 = vunpack.c.l.b16 %v55
  %v117 = vunpack.c.l.b16 %v56
  %v118 = vpack.c.b16 %v93, %v92
  %v119 = vpack.c.b16 %v95, %v94
  %v120 = vpack.c.b16 %v97, %v96
  %v121 = vpack.c.b16 %v99, %v98
  %v122 = vpack.c.b16 %v101, %v100
  %v123 = vpack.c.b16 %v103, %v102
  %v124 = vpack.c.b16 %v105, %v104
  %v125 = vpack.c.b16 %v107, %v106
  %v126 = vpack.c.b16 %v109, %v108
  %v127 = vpack.c.b16 %v111, %v110
  %v128 = vpack.c.b16 %v113, %v112
  %v129 = vpack.c.b16 %v115, %v114
  %v130 = vpack.c.b16 %v117, %v116
  %vm144 = vcmask 654336
  %v146 = vsel %vm144, %v59, 0
  %148 = vmatprep.subr.bf16.mxu0 0
  %149 = vmatpush1.bf16.msra.mxu0 %v118
  %150 = vmatprep.subr.bf16.mxu0 0
  %151 = vmatpush1.bf16.msra.mxu0 %v119
  %152 = vmatprep.subr.bf16.mxu0 0
  %153 = vmatpush1.bf16.msra.mxu0 %v120
  %154 = vmatprep.subr.bf16.mxu0 0
  %155 = vmatpush1.bf16.msra.mxu0 %v121
  %156 = vmatprep.subr.bf16.mxu0 0
  %157 = vmatpush1.bf16.msra.mxu0 %v122
  %158 = vmatprep.subr.bf16.mxu0 0
  %159 = vmatpush1.bf16.msra.mxu0 %v123
  %160 = vmatprep.subr.bf16.mxu0 0
  %161 = vmatpush1.bf16.msra.mxu0 %v124
  %162 = vmatprep.subr.bf16.mxu0 0
  %163 = vmatpush1.bf16.msra.mxu0 %v125
  %164 = vmatprep.subr.bf16.mxu0 0
  %165 = vmatpush1.bf16.msra.mxu0 %v126
  %166 = vmatprep.subr.bf16.mxu0 0
  %167 = vmatpush1.bf16.msra.mxu0 %v127
  %168 = vmatprep.subr.bf16.mxu0 0
  %169 = vmatpush1.bf16.msra.mxu0 %v128
  %170 = vmatprep.subr.bf16.mxu0 0
  %171 = vmatpush1.bf16.msra.mxu0 %v129
  %172 = vmatprep.subr.bf16.mxu0 0
  %173 = vmatpush1.bf16.msra.mxu0 %v130
  %174 = vmatprep.subr.bf16.mxu0 0
  %175 = vmatpush1.bf16.msra.mxu0 0
  %176 = vmatprep.subr.bf16.mxu0 0
  %177 = vmatpush1.bf16.msra.mxu0 0
  %178 = vmatprep.subr.bf16.mxu0 0
  %179 = vmatpush1.bf16.msra.mxu0 0
  %180 = vmatprep.mubr.bf16.mxu0 %v146
  %181 = vmatmul.mubr.bf16.gmra.mrb[0].mxu0 %v58
  %v182 = vpop.f32.mrb[0].mxu0
  %v183 = vadd.f32 %v64, %v182
  %v184 = vpop.f32.mrb[0].mxu0
  %v185 = vpop.f32.mrb[0].mxu0
  %v186 = vadd.f32 %v64, %v185
  %v187 = vpop.f32.mrb[0].mxu0
  %188 = vdwg.mxu0
  %v189 = vld [vmem:[%s3] sm:$0xff]
  %v190 = vld [vmem:[%s3 + $0x8] sm:$0xff]
  %192 = vset.pattern.permute.xlu0 0
  %193 = vperm.xlu0 %192, %v189
  %v194 = vpop.permute.xlu0 %193
  %197 = vset.pattern.permute.xlu0 0
  %198 = vperm.xlu0 %197, %v190
  %v199 = vpop.permute.xlu0 %198
  %v201 = vmul.f32 %v183, %v194
  %v202 = vmul.f32 %v186, %v199
  %v203 = vld [vmem:[%s4] sm:$0xff]
  %v204 = vld [vmem:[%s4 + $0x8] sm:$0xff]
  %v205 = vadd.f32 %v201, %v203
  %v206 = vadd.f32 %v202, %v204
  %v207 = vld [vmem:[%s5] sm:$0x1]
  %v208 = vld [vmem:[%s6] sm:$0x1]
  %vm209 = vcmask 261120
  %v210 = vsel %vm209, %v205, 0.0
  %211 = vadd.xlane.f32.xlu0 %v210
  %v212 = vpop.xlane.xlu0 %211
  %v213 = vsel %vm209, %v206, 0.0
  %214 = vadd.xlane.f32.xlu0 %v213
  %v215 = vpop.xlane.xlu0 %214
  %v216 = vrcp.pop 32.0
  %v217 = vmul.f32 %v212, %v216
  %v218 = vmul.f32 %v215, %v216
  %v219 = vsub.f32 %v205, %v217
  %v220 = vsub.f32 %v206, %v218
  %v221 = vmul.f32 %v219, %v219
  %v222 = vmul.f32 %v220, %v220
  %v223 = vsel %vm209, %v221, 0.0
  %224 = vadd.xlane.f32.xlu0 %v223
  %v225 = vpop.xlane.xlu0 %224
  %v226 = vsel %vm209, %v222, 0.0
  %227 = vadd.xlane.f32.xlu0 %v226
  %v228 = vpop.xlane.xlu0 %227
  %v229 = vmul.f32 %v225, %v216
  %v230 = vmul.f32 %v228, %v216
  %v231 = vadd.f32 %v229, 1e-05
  %v232 = vadd.f32 %v230, 1e-05
  %v233 = vrsqrt.pop %v231
  %v234 = vrsqrt.pop %v232
  %v235 = vmul.f32 %v219, %v233
  %v236 = vmul.f32 %v220, %v234
  %v238 = vlaneseq
  %v239 = vshrl.u32 %v238, 7
  %v240 = vsub.s32 0, %v239
  %v241 = vrot.slane %v207, %v240
  %v243 = vmul.f32 %v235, %v241
  %v244 = vmul.f32 %v236, %v241
  %v246 = vlaneseq
  %v247 = vshrl.u32 %v246, 7
  %v248 = vsub.s32 0, %v247
  %v249 = vrot.slane %v208, %v248
  %v251 = vadd.f32 %v243, %v249
  %v252 = vadd.f32 %v244, %v249
  %253 = vst.msk [vmem:[%s7] sm:$0xff] %vm209, %v251
  %254 = vst.msk [vmem:[%s7 + $0x8] sm:$0xff] %vm209, %v252
  // Predicated region
  $region30: #{structure_module_forward.33} parent=0 // pred_check
    _
  $region31: #{structure_module_forward.33} parent=0 // pred_check_branch
    %256 = sbr.rel (0) target = $region33
  $region32: #{structure_module_forward.33} parent=0 // pred_region
    _
  $region33: #{structure_module_forward.33} parent=0 // pred_fallthru
    _
  // Predicated region
  $region34: #{structure_module_forward.33} parent=0 // pred_check
    _
  $region35: #{structure_module_forward.33} parent=0 // pred_check_branch
    %258 = sbr.rel (0) target = $region37
  $region36: #{structure_module_forward.33} parent=0 // pred_region
    _
  $region37: #{structure_module_forward.33} parent=0 // pred_fallthru
    _

// kernel: structure_module_forward.35
$region0: #{structure_module_forward.35}
  #allocation0 [shape = 'u32[]', space=smem, size = 0x4, offset = 0x4, fixed_abs, tag = 'smem constant byte address 0x4 - core index']
  #allocation1 [shape = 'u32[144,128]{1,0:T(1,128)}', space=vmem, size = 0x12000, scoped, tag = 'internal scratch']
  %s0 = inlined_call_operand.vmem [shape: f32[16,40], index: 0, kind: input, shape index: {}]
  %s1 = inlined_call_operand.vmem [shape: bf16[40,120], index: 1, kind: input, shape index: {}]
  %s2 = inlined_call_operand.vmem [shape: f32[1,120], index: 2, kind: input, shape index: {}]
  %s3 = inlined_call_operand.vmem [shape: f32[16,120], index: 3, kind: output, shape index: {}]
  %s4 = sld [smem:[#allocation0]]
  $region22: #{structure_module_forward.35} parent=0
    _
  %s6 = ssub.s32 1, %s4
  %s7 = scalar_select 0, %s6, %s4
  // Predicated region
  $region2: #{structure_module_forward.35} parent=0 // pred_check
    _
  $region3: #{structure_module_forward.35} parent=0 // pred_check_branch
    %9 = sbr.rel (0) target = $region5
  $region4: #{structure_module_forward.35} parent=0 // pred_region
    _
  $region5: #{structure_module_forward.35} parent=0 // pred_fallthru
    _
  // Predicated region
  $region6: #{structure_module_forward.35} parent=0 // pred_check
    _
  $region7: #{structure_module_forward.35} parent=0 // pred_check_branch
    %11 = sbr.rel (0) target = $region9
  $region8: #{structure_module_forward.35} parent=0 // pred_region
    _
  $region9: #{structure_module_forward.35} parent=0 // pred_fallthru
    _
  // Predicated region
  $region10: #{structure_module_forward.35} parent=0 // pred_check
    _
  $region11: #{structure_module_forward.35} parent=0 // pred_check_branch
    %13 = sbr.rel (0) target = $region13
  $region12: #{structure_module_forward.35} parent=0 // pred_region
    _
  $region13: #{structure_module_forward.35} parent=0 // pred_fallthru
    _
  %v15 = vld [vmem:[%s0] sm:$0xff]
  %v16 = vld [vmem:[%s0 + $0x8] sm:$0xff]
  %v17 = vld [vmem:[%s1] sm:$0xf]
  %v18 = vld [vmem:[%s1 + $0x4] sm:$0xf]
  %v19 = vld [vmem:[%s1 + $0x8] sm:$0xf]
  %v20 = vld [vmem:[%s1 + $0xc] sm:$0xf]
  %v21 = vld [vmem:[%s1 + $0x10] sm:$0xf]
  %v22 = vld [vmem:[%s2] sm:$0x1]
  %v23 = vpack.c.bf16 %v16, %v15
  %v25 = vlaneseq
  %v26 = vshrl.u32 %v25, 7
  %v27 = vsub.s32 0, %v26
  %v28 = vrot.slane %v22, %v27
  %v35 = vunpack.c.l.b16 %v17
  %v36 = vunpack.c.l.b16 %v18
  %v37 = vunpack.c.l.b16 %v19
  %v38 = vunpack.c.l.b16 %v20
  %v39 = vunpack.c.l.b16 %v21
  %v40 = vpack.c.b16 %v36, %v35
  %v41 = vpack.c.b16 %v38, %v37
  %v42 = vpack.c.b16 %v39, %v39
  %vm45 = vcmask 326656
  %v47 = vsel %vm45, %v23, 0
  %vm49 = vcmask 1043456
  %v51 = vsel %vm49, %v42, 0
  %53 = vmatprep.subr.bf16.mxu0 0
  %54 = vmatpush1.bf16.msra.mxu0 %v40
  %55 = vmatprep.subr.bf16.mxu0 0
  %56 = vmatpush1.bf16.msra.mxu0 %v41
  %57 = vmatprep.subr.bf16.mxu0 0
  %58 = vmatpush1.bf16.msra.mxu0 %v51
  %59 = vmatprep.subr.bf16.mxu0 0
  %60 = vmatpush1.bf16.msra.mxu0 0
  %61 = vmatprep.subr.bf16.mxu0 0
  %62 = vmatpush1.bf16.msra.mxu0 0
  %63 = vmatprep.subr.bf16.mxu0 0
  %64 = vmatpush1.bf16.msra.mxu0 0
  %65 = vmatprep.subr.bf16.mxu0 0
  %66 = vmatpush1.bf16.msra.mxu0 0
  %67 = vmatprep.subr.bf16.mxu0 0
  %68 = vmatpush1.bf16.msra.mxu0 0
  %69 = vmatprep.subr.bf16.mxu0 0
  %70 = vmatpush1.bf16.msra.mxu0 0
  %71 = vmatprep.subr.bf16.mxu0 0
  %72 = vmatpush1.bf16.msra.mxu0 0
  %73 = vmatprep.subr.bf16.mxu0 0
  %74 = vmatpush1.bf16.msra.mxu0 0
  %75 = vmatprep.subr.bf16.mxu0 0
  %76 = vmatpush1.bf16.msra.mxu0 0
  %77 = vmatprep.subr.bf16.mxu0 0
  %78 = vmatpush1.bf16.msra.mxu0 0
  %79 = vmatprep.subr.bf16.mxu0 0
  %80 = vmatpush1.bf16.msra.mxu0 0
  %81 = vmatprep.subr.bf16.mxu0 0
  %82 = vmatpush1.bf16.msra.mxu0 0
  %83 = vmatprep.subr.bf16.mxu0 0
  %84 = vmatpush1.bf16.msra.mxu0 0
  %85 = vmatprep.mubr.bf16.mxu0 0
  %86 = vmatmul.mubr.bf16.gmra.mrb[0].mxu0 %v47
  %v87 = vpop.f32.mrb[0].mxu0
  %v88 = vadd.f32 %v28, %v87
  %v89 = vpop.f32.mrb[0].mxu0
  %v90 = vpop.f32.mrb[0].mxu0
  %v91 = vadd.f32 %v28, %v90
  %v92 = vpop.f32.mrb[0].mxu0
  %93 = vdwg.mxu0
  %vm94 = vcmask 982016
  %95 = vst.msk [vmem:[%s3] sm:$0xff] %vm94, %v88
  %96 = vst.msk [vmem:[%s3 + $0x8] sm:$0xff] %vm94, %v91
  // Predicated region
  $region14: #{structure_module_forward.35} parent=0 // pred_check
    _
  $region15: #{structure_module_forward.35} parent=0 // pred_check_branch
    %98 = sbr.rel (0) target = $region17
  $region16: #{structure_module_forward.35} parent=0 // pred_region
    _
  $region17: #{structure_module_forward.35} parent=0 // pred_fallthru
    _
  // Predicated region
  $region18: #{structure_module_forward.35} parent=0 // pred_check
    _
  $region19: #{structure_module_forward.35} parent=0 // pred_check_branch
    %100 = sbr.rel (0) target = $region21
  $region20: #{structure_module_forward.35} parent=0 // pred_region
    _
  $region21: #{structure_module_forward.35} parent=0 // pred_fallthru
    _

// kernel: structure_module_forward.36
$region0: #{structure_module_forward.36}
  #allocation0 [shape = 'u32[]', space=smem, size = 0x4, offset = 0x4, fixed_abs, tag = 'smem constant byte address 0x4 - core index']
  #allocation1 [shape = 'u32[144,128]{1,0:T(1,128)}', space=vmem, size = 0x12000, scoped, tag = 'internal scratch']
  %s0 = inlined_call_operand.vmem [shape: f32[2,4,8,10], index: 0, kind: input, shape index: {}]
  %s1 = inlined_call_operand.vmem [shape: f32[2,4,8,10], index: 1, kind: input, shape index: {}]
  %s2 = inlined_call_operand.vmem [shape: f32[2,4,8,10], index: 2, kind: input, shape index: {}]
  %s3 = inlined_call_operand.vmem [shape: f32[2,1,8], index: 3, kind: input, shape index: {}]
  %s4 = inlined_call_operand.vmem [shape: f32[2,4,8,10], index: 4, kind: output, shape index: {}]
  %s5 = sld [smem:[#allocation0]]
  $region49: #{structure_module_forward.36} parent=0
    _
  %s7 = ssub.s32 1, %s5
  %s8 = scalar_select 0, %s7, %s5
  loop: start=0, step=1, limit=10
  $region2: #{structure_module_forward.36} parent=0 // loop_pre_header
    _
  $region3: #{structure_module_forward.36} parent=0 // loop_header
    %s10 = sphi 0, %s14
    %p11 = scmp.ge.s32.totalorder %s10, 10
    %s17 = sphi 0, %s29
    %s18 = sphi 0, %s25
    %s19 = sphi 0, %s17
    %s20 = sphi 0, %s18
    %s21 = sphi 0, %s19
    %s22 = sphi 0, %s20
    %s34 = sphi 0, %s36
    %s37 = sphi 0, %s34
    %s38 = sphi 0, %s37
    %s54 = sphi 0, %s38
    %s62 = sphi 0, %s64
    %s65 = sphi 0, %s62
    %s66 = sphi 0, %s65
    %s82 = sphi 0, %s66
    %s90 = sphi 0, %s92
    %s93 = sphi 0, %s90
    %s94 = sphi 0, %s93
    %s110 = sphi 0, %s94
    %s116 = sphi 0, %s118
    %s119 = sphi 0, %s116
    %s120 = sphi 0, %s119
    %s136 = sphi 0, %s120
    %s144 = sphi 0, %s146
    %s147 = sphi 0, %s144
    %s148 = sphi 0, %s147
    %s164 = sphi 0, %s148
  $region4: #{structure_module_forward.36} parent=0 // loop_header_branch
    %13 = sbr.rel (%p11) target = $region8
  $region5: #{structure_module_forward.36} parent=0 // loop_body
    %s15 = ssub.s32 %s10, 1
    %s16 = ssub.s32 %s10, 2
    %s23 = sadd.s32 1, %s18
    %p24 = scmp.ge.s32.totalorder %s23, 4
    %s25 = scalar_select %p24, 0, %s23
    %s26 = sadd.s32 1, %s17
    %s27 = scalar_select %p24, %s26, %s17
    %p28 = scmp.ge.s32.totalorder %s27, 2
    %s29 = scalar_select %p28, 0, %s27
    %s30 = ssub.s32 %s17, %s29
    %s31 = ssub.s32 %s18, %s25
    %s32 = sor.u32 %s30, %s31
    %p33 = scmp.eq.s32.totalorder %s32, 0
    %s35 = sadd.s32 %s34, 1
    %s36 = scalar_select %p33, %s34, %s35
    %p39 = pneg %p33
    %p40 = scmp.eq.s32.totalorder %s10, 7
    %p41 = por %p39, %p40
    %p42 = scmp.ne.s32.totalorder %s34, %s37
    %p43 = scmp.eq.s32.totalorder %s10, 0
    %p44 = por %p42, %p43
    %p45 = scmp.ne.s32.totalorder %s34, %s37
    %p46 = scmp.eq.s32.totalorder %s15, 7
    %p47 = por %p45, %p46
    %p48 = scmp.ne.s32.totalorder %s37, %s38
    %p49 = scmp.eq.s32.totalorder %s15, 0
    %p50 = por %p48, %p49
    %p51 = scmp.ne.s32.totalorder %s37, %s38
    %p52 = scmp.eq.s32.totalorder %s16, 7
    %p53 = por %p51, %p52
    %p55 = scmp.ne.s32.totalorder %s38, %s54
    %p56 = scmp.eq.s32.totalorder %s16, 0
    %p57 = por %p55, %p56
    %s58 = ssub.s32 %s17, %s29
    %s59 = ssub.s32 %s18, %s25
    %s60 = sor.u32 %s58, %s59
    %p61 = scmp.eq.s32.totalorder %s60, 0
    %s63 = sadd.s32 %s62, 1
    %s64 = scalar_select %p61, %s62, %s63
    %p67 = pneg %p61
    %p68 = scmp.eq.s32.totalorder %s10, 7
    %p69 = por %p67, %p68
    %p70 = scmp.ne.s32.totalorder %s62, %s65
    %p71 = scmp.eq.s32.totalorder %s10, 0
    %p72 = por %p70, %p71
    %p73 = scmp.ne.s32.totalorder %s62, %s65
    %p74 = scmp.eq.s32.totalorder %s15, 7
    %p75 = por %p73, %p74
    %p76 = scmp.ne.s32.totalorder %s65, %s66
    %p77 = scmp.eq.s32.totalorder %s15, 0
    %p78 = por %p76, %p77
    %p79 = scmp.ne.s32.totalorder %s65, %s66
    %p80 = scmp.eq.s32.totalorder %s16, 7
    %p81 = por %p79, %p80
    %p83 = scmp.ne.s32.totalorder %s66, %s82
    %p84 = scmp.eq.s32.totalorder %s16, 0
    %p85 = por %p83, %p84
    %s86 = ssub.s32 %s17, %s29
    %s87 = ssub.s32 %s18, %s25
    %s88 = sor.u32 %s86, %s87
    %p89 = scmp.eq.s32.totalorder %s88, 0
    %s91 = sadd.s32 %s90, 1
    %s92 = scalar_select %p89, %s90, %s91
    %p95 = pneg %p89
    %p96 = scmp.eq.s32.totalorder %s10, 7
    %p97 = por %p95, %p96
    %p98 = scmp.ne.s32.totalorder %s90, %s93
    %p99 = scmp.eq.s32.totalorder %s10, 0
    %p100 = por %p98, %p99
    %p101 = scmp.ne.s32.totalorder %s90, %s93
    %p102 = scmp.eq.s32.totalorder %s15, 7
    %p103 = por %p101, %p102
    %p104 = scmp.ne.s32.totalorder %s93, %s94
    %p105 = scmp.eq.s32.totalorder %s15, 0
    %p106 = por %p104, %p105
    %p107 = scmp.ne.s32.totalorder %s93, %s94
    %p108 = scmp.eq.s32.totalorder %s16, 7
    %p109 = por %p107, %p108
    %p111 = scmp.ne.s32.totalorder %s94, %s110
    %p112 = scmp.eq.s32.totalorder %s16, 0
    %p113 = por %p111, %p112
    %s114 = ssub.s32 %s17, %s29
    %p115 = scmp.eq.s32.totalorder %s114, 0
    %s117 = sadd.s32 %s116, 1
    %s118 = scalar_select %p115, %s116, %s117
    %p121 = pneg %p115
    %p122 = scmp.eq.s32.totalorder %s10, 7
    %p123 = por %p121, %p122
    %p124 = scmp.ne.s32.totalorder %s116, %s119
    %p125 = scmp.eq.s32.totalorder %s10, 0
    %p126 = por %p124, %p125
    %p127 = scmp.ne.s32.totalorder %s116, %s119
    %p128 = scmp.eq.s32.totalorder %s15, 7
    %p129 = por %p127, %p128
    %p130 = scmp.ne.s32.totalorder %s119, %s120
    %p131 = scmp.eq.s32.totalorder %s15, 0
    %p132 = por %p130, %p131
    %p133 = scmp.ne.s32.totalorder %s119, %s120
    %p134 = scmp.eq.s32.totalorder %s16, 7
    %p135 = por %p133, %p134
    %p137 = scmp.ne.s32.totalorder %s120, %s136
    %p138 = scmp.eq.s32.totalorder %s16, 0
    %p139 = por %p137, %p138
    %s140 = ssub.s32 %s17, %s29
    %s141 = ssub.s32 %s18, %s25
    %s142 = sor.u32 %s140, %s141
    %p143 = scmp.eq.s32.totalorder %s142, 0
    %s145 = sadd.s32 %s144, 1
    %s146 = scalar_select %p143, %s144, %s145
    %p149 = pneg %p143
    %p150 = scmp.eq.s32.totalorder %s10, 7
    %p151 = por %p149, %p150
    %p152 = scmp.ne.s32.totalorder %s144, %s147
    %p153 = scmp.eq.s32.totalorder %s10, 0
    %p154 = por %p152, %p153
    %p155 = scmp.ne.s32.totalorder %s144, %s147
    %p156 = scmp.eq.s32.totalorder %s15, 7
    %p157 = por %p155, %p156
    %p158 = scmp.ne.s32.totalorder %s147, %s148
    %p159 = scmp.eq.s32.totalorder %s15, 0
    %p160 = por %p158, %p159
    %p161 = scmp.ne.s32.totalorder %s147, %s148
    %p162 = scmp.eq.s32.totalorder %s16, 7
    %p163 = por %p161, %p162
    %p165 = scmp.ne.s32.totalorder %s148, %s164
    %p166 = scmp.eq.s32.totalorder %s16, 0
    %p167 = por %p165, %p166
    %p168 = scmp.le.s32.totalorder 1, %s10
    %p169 = scmp.lt.s32.totalorder %s10, 9
    %p170 = pnand %p168, %p169
    %p171 = pneg %p170
    // Predicated region
    $region9: #{structure_module_forward.36} parent=5 // pred_check
      _
    $region10: #{structure_module_forward.36} parent=5 // pred_check_branch
      %173 = sbr.rel (%p170) target = $region12
    $region11: #{structure_module_forward.36} parent=5 // pred_region
      %s174 = ssub.s32 %s10, 1
    $region12: #{structure_module_forward.36} parent=5 // pred_fallthru
      _
    %p175 = scmp.lt.s32.totalorder %s10, 8
    // Predicated region
    $region13: #{structure_module_forward.36} parent=5 // pred_check
      %p176 = pneg %p175
    $region14: #{structure_module_forward.36} parent=5 // pred_check_branch
      %178 = sbr.rel (%p176) target = $region16
    $region15: #{structure_module_forward.36} parent=5 // pred_region
      // Predicated region
      $region17: #{structure_module_forward.36} parent=15 // pred_check
        %p179 = pneg %p44
      $region18: #{structure_module_forward.36} parent=15 // pred_check_branch
        %181 = sbr.rel (%p179) target = $region20
      $region19: #{structure_module_forward.36} parent=15 // pred_region
        %p182 = scmp.lt.s32.totalorder %s17, 1
        %s183 = scalar_select %p182, %s17, 1
        %p184 = scmp.lt.s32.totalorder %s18, 3
        %s185 = scalar_select %p184, %s18, 3
        %s186 = smul.addr %s183, 4
        %s187 = sadd.s32 %s185, %s186
        %s188 = smul.addr %s187, 8
        %s189 = scalar_lea.vmem %s0, %s188
      $region20: #{structure_module_forward.36} parent=15 // pred_fallthru
        _
      // Predicated region
      $region21: #{structure_module_forward.36} parent=15 // pred_check
        %p190 = pneg %p72
      $region22: #{structure_module_forward.36} parent=15 // pred_check_branch
        %192 = sbr.rel (%p190) target = $region24
      $region23: #{structure_module_forward.36} parent=15 // pred_region
        %p193 = scmp.lt.s32.totalorder %s17, 1
        %s194 = scalar_select %p193, %s17, 1
        %p195 = scmp.lt.s32.totalorder %s18, 3
        %s196 = scalar_select %p195, %s18, 3
        %s197 = smul.addr %s194, 4
        %s198 = sadd.s32 %s196, %s197
        %s199 = smul.addr %s198, 8
        %s200 = scalar_lea.vmem %s1, %s199
      $region24: #{structure_module_forward.36} parent=15 // pred_fallthru
        _
      // Predicated region
      $region25: #{structure_module_forward.36} parent=15 // pred_check
        %p201 = pneg %p100
      $region26: #{structure_module_forward.36} parent=15 // pred_check_branch
        %203 = sbr.rel (%p201) target = $region28
      $region27: #{structure_module_forward.36} parent=15 // pred_region
        %p204 = scmp.lt.s32.totalorder %s17, 1
        %s205 = scalar_select %p204, %s17, 1
        %p206 = scmp.lt.s32.totalorder %s18, 3
        %s207 = scalar_select %p206, %s18, 3
        %s208 = smul.addr %s205, 4
        %s209 = sadd.s32 %s207, %s208
        %s210 = smul.addr %s209, 8
        %s211 = scalar_lea.vmem %s2, %s210
      $region28: #{structure_module_forward.36} parent=15 // pred_fallthru
        _
      // Predicated region
      $region29: #{structure_module_forward.36} parent=15 // pred_check
        %p212 = pneg %p126
      $region30: #{structure_module_forward.36} parent=15 // pred_check_branch
        %214 = sbr.rel (%p212) target = $region32
      $region31: #{structure_module_forward.36} parent=15 // pred_region
        %p215 = scmp.lt.s32.totalorder %s17, 1
        %s216 = scalar_select %p215, %s17, 1
        %s217 = scalar_lea.vmem %s3, %s216
      $region32: #{structure_module_forward.36} parent=15 // pred_fallthru
        _
    $region16: #{structure_module_forward.36} parent=5 // pred_fallthru
      _
    %p218 = scmp.le.s32.totalorder 1, %s10
    %p219 = scmp.lt.s32.totalorder %s10, 9
    %p220 = pnand %p218, %p219
    %p221 = pneg %p220
    // Predicated region
    $region33: #{structure_module_forward.36} parent=5 // pred_check
      _
    $region34: #{structure_module_forward.36} parent=5 // pred_check_branch
      %223 = sbr.rel (%p220) target = $region36
    $region35: #{structure_module_forward.36} parent=5 // pred_region
      %s224 = ssub.s32 %s10, 1
      %p225 = scmp.lt.s32.totalorder %s19, 1
      %s226 = scalar_select %p225, %s19, 1
      %p227 = scmp.lt.s32.totalorder %s20, 3
      %s228 = scalar_select %p227, %s20, 3
      %s229 = smul.addr %s226, 4
      %s230 = sadd.s32 %s228, %s229
      %s231 = smul.addr %s230, 8
      %s232 = scalar_lea.vmem %s0, %s231
      %p233 = pneg %p50
      %p234 = pneg %p47
      %p235 = scmp.lt.s32.totalorder %s19, 1
      %s236 = scalar_select %p235, %s19, 1
      %p237 = scmp.lt.s32.totalorder %s20, 3
      %s238 = scalar_select %p237, %s20, 3
      %s239 = smul.addr %s236, 4
      %s240 = sadd.s32 %s238, %s239
      %s241 = smul.addr %s240, 8
      %s242 = scalar_lea.vmem %s1, %s241
      %p243 = pneg %p78
      %p244 = pneg %p75
      %p245 = scmp.lt.s32.totalorder %s19, 1
      %s246 = scalar_select %p245, %s19, 1
      %p247 = scmp.lt.s32.totalorder %s20, 3
      %s248 = scalar_select %p247, %s20, 3
      %s249 = smul.addr %s246, 4
      %s250 = sadd.s32 %s248, %s249
      %s251 = smul.addr %s250, 8
      %s252 = scalar_lea.vmem %s2, %s251
      %p253 = pneg %p106
      %p254 = pneg %p103
      %p255 = scmp.lt.s32.totalorder %s19, 1
      %s256 = scalar_select %p255, %s19, 1
      %s257 = scalar_lea.vmem %s3, %s256
      %p258 = pneg %p132
      %p259 = pneg %p129
      %p260 = pneg %p160
      %p261 = pneg %p157
      %p262 = scmp.lt.s32.totalorder %s19, 1
      %s263 = scalar_select %p262, %s19, 1
      %p264 = scmp.lt.s32.totalorder %s20, 3
      %s265 = scalar_select %p264, %s20, 3
      %s266 = smul.addr %s263, 4
      %s267 = sadd.s32 %s265, %s266
      %s268 = smul.addr %s267, 8
      %s269 = scalar_lea.vmem %s4, %s268
      %p270 = scmp.lt.s32.totalorder %s19, 1
      %s271 = scalar_select %p270, %s19, 1
      %p272 = scmp.lt.s32.totalorder %s20, 3
      %s273 = scalar_select %p272, %s20, 3
      %s274 = smul.addr %s271, 4
      %s275 = sadd.s32 %s273, %s274
      %s276 = smul.addr %s275, 8
      %s277 = scalar_lea.vmem %s0, %s276
      %p278 = scmp.lt.s32.totalorder %s19, 1
      %s279 = scalar_select %p278, %s19, 1
      %p280 = scmp.lt.s32.totalorder %s20, 3
      %s281 = scalar_select %p280, %s20, 3
      %s282 = smul.addr %s279, 4
      %s283 = sadd.s32 %s281, %s282
      %s284 = smul.addr %s283, 8
      %s285 = scalar_lea.vmem %s1, %s284
      %p286 = scmp.lt.s32.totalorder %s19, 1
      %s287 = scalar_select %p286, %s19, 1
      %p288 = scmp.lt.s32.totalorder %s20, 3
      %s289 = scalar_select %p288, %s20, 3
      %s290 = smul.addr %s287, 4
      %s291 = sadd.s32 %s289, %s290
      %s292 = smul.addr %s291, 8
      %s293 = scalar_lea.vmem %s2, %s292
      %p294 = scmp.lt.s32.totalorder %s19, 1
      %s295 = scalar_select %p294, %s19, 1
      %s296 = scalar_lea.vmem %s3, %s295
      %p297 = scmp.lt.s32.totalorder %s19, 1
      %s298 = scalar_select %p297, %s19, 1
      %p299 = scmp.lt.s32.totalorder %s20, 3
      %s300 = scalar_select %p299, %s20, 3
      %s301 = smul.addr %s298, 4
      %s302 = sadd.s32 %s300, %s301
      %s303 = smul.addr %s302, 8
      %s304 = scalar_lea.vmem %s4, %s303
      %v306 = vld [vmem:[%s277] sm:$0xff]
      %v307 = vld [vmem:[%s285] sm:$0xff]
      %v308 = vld [vmem:[%s293] sm:$0xff]
      %v309 = vpack.c.bf16 %v306, %v306
      %v310 = vpack.c.bf16 %v307, %v307
      %vm311 = vcmask 80896
      %v313 = vsel %vm311, %v309, 0
      %v316 = vsel %vm311, %v310, 0
      %318 = vmatprep.subr.bf16.mxu0 0
      %319 = vmatpush1.bf16.xpose.msra.mxu0 %v316
      %320 = vmatprep.subr.bf16.mxu0 0
      %321 = vmatpush1.bf16.xpose.msra.mxu0 0
      %322 = vmatprep.subr.bf16.mxu0 0
      %323 = vmatpush1.bf16.xpose.msra.mxu0 0
      %324 = vmatprep.subr.bf16.mxu0 0
      %325 = vmatpush1.bf16.xpose.msra.mxu0 0
      %326 = vmatprep.subr.bf16.mxu0 0
      %327 = vmatpush1.bf16.xpose.msra.mxu0 0
      %328 = vmatprep.subr.bf16.mxu0 0
      %329 = vmatpush1.bf16.xpose.msra.mxu0 0
      %330 = vmatprep.subr.bf16.mxu0 0
      %331 = vmatpush1.bf16.xpose.msra.mxu0 0
      %332 = vmatprep.subr.bf16.mxu0 0
      %333 = vmatpush1.bf16.xpose.msra.mxu0 0
      %334 = vmatprep.subr.bf16.mxu0 0
      %335 = vmatpush1.bf16.xpose.msra.mxu0 0
      %336 = vmatprep.subr.bf16.mxu0 0
      %337 = vmatpush1.bf16.xpose.msra.mxu0 0
      %338 = vmatprep.subr.bf16.mxu0 0
      %339 = vmatpush1.bf16.xpose.msra.mxu0 0
      %340 = vmatprep.subr.bf16.mxu0 0
      %341 = vmatpush1.bf16.xpose.msra.mxu0 0
      %342 = vmatprep.subr.bf16.mxu0 0
      %343 = vmatpush1.bf16.xpose.msra.mxu0 0
      %344 = vmatprep.subr.bf16.mxu0 0
      %345 = vmatpush1.bf16.xpose.msra.mxu0 0
      %346 = vmatprep.subr.bf16.mxu0 0
      %347 = vmatpush1.bf16.xpose.msra.mxu0 0
      %348 = vmatprep.subr.bf16.mxu0 0
      %349 = vmatpush1.bf16.xpose.msra.mxu0 0
      %350 = vmatprep.mubr.bf16.mxu0 0
      %351 = vmatmul.mubr.bf16.gmra.mrb[0].mxu0 %v313
      %v352 = vpop.f32.mrb[0].mxu0
      %v353 = vadd.f32 0.0, %v352
      %v354 = vpop.f32.mrb[0].mxu0
      %v355 = vpop.f32.mrb[0].mxu0
      %v356 = vpop.f32.mrb[0].mxu0
      %357 = vdwg.mxu0
      %v358 = vmul.f32 %v353, 0.31622776
      %v359 = vld [vmem:[%s296] sm:$0x1]
      %v361 = vlaneseq
      %v362 = vshrl.u32 %v361, 7
      %v363 = vsub.s32 0, %v362
      %v364 = vrot.slane %v359, %v363
      %v366 = vadd.f32 %v358, %v364
      %vm367 = vcmask 64512
      %v368 = vsel %vm367, %v366, -inf
      %369 = vmax.xlane.f32.xlu0 %v368
      %v370 = vpop.xlane.xlu0 %369
      %v371 = vsub.f32 %v366, %v370
      %v372 = vmul.f32 %v371, 1.442695
      %v373 = vpow.pop %v372
      %v374 = vsel %vm367, %v373, 0.0
      %375 = vadd.xlane.f32.xlu0 %v374
      %v376 = vpop.xlane.xlu0 %375
      %v377 = vrcp.pop %v376
      %v378 = vmul.f32 %v373, %v377
      %v379 = vpack.c.bf16 %v378, %v378
      %v380 = vpack.c.bf16 %v308, %v308
      %v382 = vsel %vm367, %v379, 0
      %vm384 = vcmask 1043456
      %v386 = vsel %vm384, %v380, 0
      %388 = vmatprep.subr.bf16.mxu0 0
      %389 = vmatpush1.bf16.msra.mxu0 %v386
      %390 = vmatprep.subr.bf16.mxu0 0
      %391 = vmatpush1.bf16.msra.mxu0 0
      %392 = vmatprep.subr.bf16.mxu0 0
      %393 = vmatpush1.bf16.msra.mxu0 0
      %394 = vmatprep.subr.bf16.mxu0 0
      %395 = vmatpush1.bf16.msra.mxu0 0
      %396 = vmatprep.subr.bf16.mxu0 0
      %397 = vmatpush1.bf16.msra.mxu0 0
      %398 = vmatprep.subr.bf16.mxu0 0
      %399 = vmatpush1.bf16.msra.mxu0 0
      %400 = vmatprep.subr.bf16.mxu0 0
      %401 = vmatpush1.bf16.msra.mxu0 0
      %402 = vmatprep.subr.bf16.mxu0 0
      %403 = vmatpush1.bf16.msra.mxu0 0
      %404 = vmatprep.subr.bf16.mxu0 0
      %405 = vmatpush1.bf16.msra.mxu0 0
      %406 = vmatprep.subr.bf16.mxu0 0
      %407 = vmatpush1.bf16.msra.mxu0 0
      %408 = vmatprep.subr.bf16.mxu0 0
      %409 = vmatpush1.bf16.msra.mxu0 0
      %410 = vmatprep.subr.bf16.mxu0 0
      %411 = vmatpush1.bf16.msra.mxu0 0
      %412 = vmatprep.subr.bf16.mxu0 0
      %413 = vmatpush1.bf16.msra.mxu0 0
      %414 = vmatprep.subr.bf16.mxu0 0
      %415 = vmatpush1.bf16.msra.mxu0 0
      %416 = vmatprep.subr.bf16.mxu0 0
      %417 = vmatpush1.bf16.msra.mxu0 0
      %418 = vmatprep.subr.bf16.mxu0 0
      %419 = vmatpush1.bf16.msra.mxu0 0
      %420 = vmatprep.mubr.bf16.mxu0 0
      %421 = vmatmul.mubr.bf16.gmra.mrb[0].mxu0 %v382
      %v422 = vpop.f32.mrb[0].mxu0
      %v423 = vadd.f32 0.0, %v422
      %v424 = vpop.f32.mrb[0].mxu0
      %v425 = vpop.f32.mrb[0].mxu0
      %v426 = vpop.f32.mrb[0].mxu0
      %427 = vdwg.mxu0
      %428 = vst.msk [vmem:[%s304] sm:$0xff] %vm311, %v423
      %p429 = scmp.lt.s32.totalorder %s19, 1
      %s430 = scalar_select %p429, %s19, 1
      %p431 = scmp.lt.s32.totalorder %s20, 3
      %s432 = scalar_select %p431, %s20, 3
      %s433 = smul.addr %s430, 4
      %s434 = sadd.s32 %s432, %s433
      %s435 = smul.addr %s434, 8
      %s436 = scalar_lea.vmem %s4, %s435
      // Predicated region
      $region37: #{structure_module_forward.36} parent=35 // pred_check
        %p437 = pneg %p157
      $region38: #{structure_module_forward.36} parent=35 // pred_check_branch
        %439 = sbr.rel (%p437) target = $region40
      $region39: #{structure_module_forward.36} parent=35 // pred_region
        _
      $region40: #{structure_module_forward.36} parent=35 // pred_fallthru
        _
    $region36: #{structure_module_forward.36} parent=5 // pred_fallthru
      _
    %p440 = scmp.le.s32.totalorder 2, %s10
    // Predicated region
    $region41: #{structure_module_forward.36} parent=5 // pred_check
      %p441 = pneg %p440
    $region42: #{structure_module_forward.36} parent=5 // pred_check_branch
      %443 = sbr.rel (%p441) target = $region44
    $region43: #{structure_module_forward.36} parent=5 // pred_region
      %s444 = ssub.s32 %s10, 2
      // Predicated region
      $region45: #{structure_module_forward.36} parent=43 // pred_check
        %p445 = pneg %p163
      $region46: #{structure_module_forward.36} parent=43 // pred_check_branch
        %447 = sbr.rel (%p445) target = $region48
      $region47: #{structure_module_forward.36} parent=43 // pred_region
        %p448 = scmp.lt.s32.totalorder %s21, 1
        %s449 = scalar_select %p448, %s21, 1
        %p450 = scmp.lt.s32.totalorder %s22, 3
        %s451 = scalar_select %p450, %s22, 3
        %s452 = smul.addr %s449, 4
        %s453 = sadd.s32 %s451, %s452
        %s454 = smul.addr %s453, 8
        %s455 = scalar_lea.vmem %s4, %s454
      $region48: #{structure_module_forward.36} parent=43 // pred_fallthru
        _
    $region44: #{structure_module_forward.36} parent=5 // pred_fallthru
      _
  $region6: #{structure_module_forward.36} parent=0 // loop_footer
    %s14 = sadd.s32 1, %s10
  $region7: #{structure_module_forward.36} parent=0 // loop_footer_branch
    %9 = sbr.rel target = $region3
  $region8: #{structure_module_forward.36} parent=0 // loop_exit
    _

// kernel: structure_module_forward.38
$region0: #{structure_module_forward.38}
  #allocation0 [shape = 'u32[]', space=smem, size = 0x4, offset = 0x4, fixed_abs, tag = 'smem constant byte address 0x4 - core index']
  #allocation1 [shape = 'u32[144,128]{1,0:T(1,128)}', space=vmem, size = 0x12000, scoped, tag = 'internal scratch']
  %s0 = inlined_call_operand.vmem [shape: f32[16,40], index: 0, kind: input, shape index: {}]
  %s1 = inlined_call_operand.vmem [shape: bf16[40,40], index: 1, kind: input, shape index: {}]
  %s2 = inlined_call_operand.vmem [shape: f32[1,40], index: 2, kind: input, shape index: {}]
  %s3 = inlined_call_operand.vmem [shape: f32[16,40], index: 3, kind: output, shape index: {}]
  %s4 = sld [smem:[#allocation0]]
  $region22: #{structure_module_forward.38} parent=0
    _
  %s6 = ssub.s32 1, %s4
  %s7 = scalar_select 0, %s6, %s4
  // Predicated region
  $region2: #{structure_module_forward.38} parent=0 // pred_check
    _
  $region3: #{structure_module_forward.38} parent=0 // pred_check_branch
    %9 = sbr.rel (0) target = $region5
  $region4: #{structure_module_forward.38} parent=0 // pred_region
    _
  $region5: #{structure_module_forward.38} parent=0 // pred_fallthru
    _
  // Predicated region
  $region6: #{structure_module_forward.38} parent=0 // pred_check
    _
  $region7: #{structure_module_forward.38} parent=0 // pred_check_branch
    %11 = sbr.rel (0) target = $region9
  $region8: #{structure_module_forward.38} parent=0 // pred_region
    _
  $region9: #{structure_module_forward.38} parent=0 // pred_fallthru
    _
  // Predicated region
  $region10: #{structure_module_forward.38} parent=0 // pred_check
    _
  $region11: #{structure_module_forward.38} parent=0 // pred_check_branch
    %13 = sbr.rel (0) target = $region13
  $region12: #{structure_module_forward.38} parent=0 // pred_region
    _
  $region13: #{structure_module_forward.38} parent=0 // pred_fallthru
    _
  %v15 = vld [vmem:[%s0] sm:$0xff]
  %v16 = vld [vmem:[%s0 + $0x8] sm:$0xff]
  %v17 = vld [vmem:[%s1] sm:$0xf]
  %v18 = vld [vmem:[%s1 + $0x4] sm:$0xf]
  %v19 = vld [vmem:[%s1 + $0x8] sm:$0xf]
  %v20 = vld [vmem:[%s1 + $0xc] sm:$0xf]
  %v21 = vld [vmem:[%s1 + $0x10] sm:$0xf]
  %v22 = vld [vmem:[%s2] sm:$0x1]
  %v23 = vpack.c.bf16 %v16, %v15
  %v25 = vlaneseq
  %v26 = vshrl.u32 %v25, 7
  %v27 = vsub.s32 0, %v26
  %v28 = vrot.slane %v22, %v27
  %v35 = vunpack.c.l.b16 %v17
  %v36 = vunpack.c.l.b16 %v18
  %v37 = vunpack.c.l.b16 %v19
  %v38 = vunpack.c.l.b16 %v20
  %v39 = vunpack.c.l.b16 %v21
  %v40 = vpack.c.b16 %v36, %v35
  %v41 = vpack.c.b16 %v38, %v37
  %v42 = vpack.c.b16 %v39, %v39
  %vm45 = vcmask 326656
  %v47 = vsel %vm45, %v23, 0
  %vm49 = vcmask 1043456
  %v51 = vsel %vm49, %v42, 0
  %53 = vmatprep.subr.bf16.mxu0 0
  %54 = vmatpush1.bf16.msra.mxu0 %v40
  %55 = vmatprep.subr.bf16.mxu0 0
  %56 = vmatpush1.bf16.msra.mxu0 %v41
  %57 = vmatprep.subr.bf16.mxu0 0
  %58 = vmatpush1.bf16.msra.mxu0 %v51
  %59 = vmatprep.subr.bf16.mxu0 0
  %60 = vmatpush1.bf16.msra.mxu0 0
  %61 = vmatprep.subr.bf16.mxu0 0
  %62 = vmatpush1.bf16.msra.mxu0 0
  %63 = vmatprep.subr.bf16.mxu0 0
  %64 = vmatpush1.bf16.msra.mxu0 0
  %65 = vmatprep.subr.bf16.mxu0 0
  %66 = vmatpush1.bf16.msra.mxu0 0
  %67 = vmatprep.subr.bf16.mxu0 0
  %68 = vmatpush1.bf16.msra.mxu0 0
  %69 = vmatprep.subr.bf16.mxu0 0
  %70 = vmatpush1.bf16.msra.mxu0 0
  %71 = vmatprep.subr.bf16.mxu0 0
  %72 = vmatpush1.bf16.msra.mxu0 0
  %73 = vmatprep.subr.bf16.mxu0 0
  %74 = vmatpush1.bf16.msra.mxu0 0
  %75 = vmatprep.subr.bf16.mxu0 0
  %76 = vmatpush1.bf16.msra.mxu0 0
  %77 = vmatprep.subr.bf16.mxu0 0
  %78 = vmatpush1.bf16.msra.mxu0 0
  %79 = vmatprep.subr.bf16.mxu0 0
  %80 = vmatpush1.bf16.msra.mxu0 0
  %81 = vmatprep.subr.bf16.mxu0 0
  %82 = vmatpush1.bf16.msra.mxu0 0
  %83 = vmatprep.subr.bf16.mxu0 0
  %84 = vmatpush1.bf16.msra.mxu0 0
  %85 = vmatprep.mubr.bf16.mxu0 0
  %86 = vmatmul.mubr.bf16.gmra.mrb[0].mxu0 %v47
  %v87 = vpop.f32.mrb[0].mxu0
  %v88 = vadd.f32 %v28, %v87
  %v89 = vpop.f32.mrb[0].mxu0
  %v90 = vpop.f32.mrb[0].mxu0
  %v91 = vadd.f32 %v28, %v90
  %v92 = vpop.f32.mrb[0].mxu0
  %93 = vdwg.mxu0
  %v94 = vmax.f32 %v88, 0.0
  %v95 = vmax.f32 %v91, 0.0
  %96 = vst.msk [vmem:[%s3] sm:$0xff] %vm45, %v94
  %97 = vst.msk [vmem:[%s3 + $0x8] sm:$0xff] %vm45, %v95
  // Predicated region
  $region14: #{structure_module_forward.38} parent=0 // pred_check
    _
  $region15: #{structure_module_forward.38} parent=0 // pred_check_branch
    %99 = sbr.rel (0) target = $region17
  $region16: #{structure_module_forward.38} parent=0 // pred_region
    _
  $region17: #{structure_module_forward.38} parent=0 // pred_fallthru
    _
  // Predicated region
  $region18: #{structure_module_forward.38} parent=0 // pred_check
    _
  $region19: #{structure_module_forward.38} parent=0 // pred_check_branch
    %101 = sbr.rel (0) target = $region21
  $region20: #{structure_module_forward.38} parent=0 // pred_region
    _
  $region21: #{structure_module_forward.38} parent=0 // pred_fallthru
    _

// kernel: structure_module_forward.40
$region0: #{structure_module_forward.40}
  #allocation0 [shape = 'u32[]', space=smem, size = 0x4, offset = 0x4, fixed_abs, tag = 'smem constant byte address 0x4 - core index']
  #allocation1 [shape = 'u32[144,128]{1,0:T(1,128)}', space=vmem, size = 0x12000, scoped, tag = 'internal scratch']
  %s0 = inlined_call_operand.vmem [shape: f32[16,40], index: 0, kind: input, shape index: {}]
  %s1 = inlined_call_operand.vmem [shape: bf16[40,32], index: 1, kind: input, shape index: {}]
  %s2 = inlined_call_operand.vmem [shape: f32[1,32], index: 2, kind: input, shape index: {}]
  %s3 = inlined_call_operand.vmem [shape: f32[16,32], index: 3, kind: input, shape index: {}]
  %s4 = inlined_call_operand.vmem [shape: f32[16,32], index: 4, kind: output, shape index: {}]
  %s5 = sld [smem:[#allocation0]]
  $region26: #{structure_module_forward.40} parent=0
    _
  %s7 = ssub.s32 1, %s5
  %s8 = scalar_select 0, %s7, %s5
  // Predicated region
  $region2: #{structure_module_forward.40} parent=0 // pred_check
    _
  $region3: #{structure_module_forward.40} parent=0 // pred_check_branch
    %10 = sbr.rel (0) target = $region5
  $region4: #{structure_module_forward.40} parent=0 // pred_region
    _
  $region5: #{structure_module_forward.40} parent=0 // pred_fallthru
    _
  // Predicated region
  $region6: #{structure_module_forward.40} parent=0 // pred_check
    _
  $region7: #{structure_module_forward.40} parent=0 // pred_check_branch
    %12 = sbr.rel (0) target = $region9
  $region8: #{structure_module_forward.40} parent=0 // pred_region
    _
  $region9: #{structure_module_forward.40} parent=0 // pred_fallthru
    _
  // Predicated region
  $region10: #{structure_module_forward.40} parent=0 // pred_check
    _
  $region11: #{structure_module_forward.40} parent=0 // pred_check_branch
    %14 = sbr.rel (0) target = $region13
  $region12: #{structure_module_forward.40} parent=0 // pred_region
    _
  $region13: #{structure_module_forward.40} parent=0 // pred_fallthru
    _
  // Predicated region
  $region14: #{structure_module_forward.40} parent=0 // pred_check
    _
  $region15: #{structure_module_forward.40} parent=0 // pred_check_branch
    %16 = sbr.rel (0) target = $region17
  $region16: #{structure_module_forward.40} parent=0 // pred_region
    _
  $region17: #{structure_module_forward.40} parent=0 // pred_fallthru
    _
  %v18 = vld [vmem:[%s0] sm:$0xff]
  %v19 = vld [vmem:[%s0 + $0x8] sm:$0xff]
  %v20 = vld [vmem:[%s1] sm:$0xf]
  %v21 = vld [vmem:[%s1 + $0x4] sm:$0xf]
  %v22 = vld [vmem:[%s1 + $0x8] sm:$0xf]
  %v23 = vld [vmem:[%s1 + $0xc] sm:$0xf]
  %v24 = vld [vmem:[%s1 + $0x10] sm:$0xf]
  %v25 = vld [vmem:[%s2] sm:$0x1]
  %v26 = vpack.c.bf16 %v19, %v18
  %v28 = vlaneseq
  %v29 = vshrl.u32 %v28, 7
  %v30 = vsub.s32 0, %v29
  %v31 = vrot.slane %v25, %v30
  %v38 = vunpack.c.l.b16 %v20
  %v39 = vunpack.c.l.b16 %v21
  %v40 = vunpack.c.l.b16 %v22
  %v41 = vunpack.c.l.b16 %v23
  %v42 = vunpack.c.l.b16 %v24
  %v43 = vpack.c.b16 %v39, %v38
  %v44 = vpack.c.b16 %v41, %v40
  %v45 = vpack.c.b16 %v42, %v42
  %vm48 = vcmask 326656
  %v50 = vsel %vm48, %v26, 0
  %vm52 = vcmask 1043456
  %v54 = vsel %vm52, %v45, 0
  %56 = vmatprep.subr.bf16.mxu0 0
  %57 = vmatpush1.bf16.msra.mxu0 %v43
  %58 = vmatprep.subr.bf16.mxu0 0
  %59 = vmatpush1.bf16.msra.mxu0 %v44
  %60 = vmatprep.subr.bf16.mxu0 0
  %61 = vmatpush1.bf16.msra.mxu0 %v54
  %62 = vmatprep.subr.bf16.mxu0 0
  %63 = vmatpush1.bf16.msra.mxu0 0
  %64 = vmatprep.subr.bf16.mxu0 0
  %65 = vmatpush1.bf16.msra.mxu0 0
  %66 = vmatprep.subr.bf16.mxu0 0
  %67 = vmatpush1.bf16.msra.mxu0 0
  %68 = vmatprep.subr.bf16.mxu0 0
  %69 = vmatpush1.bf16.msra.mxu0 0
  %70 = vmatprep.subr.bf16.mxu0 0
  %71 = vmatpush1.bf16.msra.mxu0 0
  %72 = vmatprep.subr.bf16.mxu0 0
  %73 = vmatpush1.bf16.msra.mxu0 0
  %74 = vmatprep.subr.bf16.mxu0 0
  %75 = vmatpush1.bf16.msra.mxu0 0
  %76 = vmatprep.subr.bf16.mxu0 0
  %77 = vmatpush1.bf16.msra.mxu0 0
  %78 = vmatprep.subr.bf16.mxu0 0
  %79 = vmatpush1.bf16.msra.mxu0 0
  %80 = vmatprep.subr.bf16.mxu0 0
  %81 = vmatpush1.bf16.msra.mxu0 0
  %82 = vmatprep.subr.bf16.mxu0 0
  %83 = vmatpush1.bf16.msra.mxu0 0
  %84 = vmatprep.subr.bf16.mxu0 0
  %85 = vmatpush1.bf16.msra.mxu0 0
  %86 = vmatprep.subr.bf16.mxu0 0
  %87 = vmatpush1.bf16.msra.mxu0 0
  %88 = vmatprep.mubr.bf16.mxu0 0
  %89 = vmatmul.mubr.bf16.gmra.mrb[0].mxu0 %v50
  %v90 = vpop.f32.mrb[0].mxu0
  %v91 = vadd.f32 %v31, %v90
  %v92 = vpop.f32.mrb[0].mxu0
  %v93 = vpop.f32.mrb[0].mxu0
  %v94 = vadd.f32 %v31, %v93
  %v95 = vpop.f32.mrb[0].mxu0
  %96 = vdwg.mxu0
  %v97 = vld [vmem:[%s3] sm:$0xff]
  %v98 = vld [vmem:[%s3 + $0x8] sm:$0xff]
  %v99 = vadd.f32 %v91, %v97
  %v100 = vadd.f32 %v94, %v98
  %vm101 = vcmask 261120
  %102 = vst.msk [vmem:[%s4] sm:$0xff] %vm101, %v99
  %103 = vst.msk [vmem:[%s4 + $0x8] sm:$0xff] %vm101, %v100
  // Predicated region
  $region18: #{structure_module_forward.40} parent=0 // pred_check
    _
  $region19: #{structure_module_forward.40} parent=0 // pred_check_branch
    %105 = sbr.rel (0) target = $region21
  $region20: #{structure_module_forward.40} parent=0 // pred_region
    _
  $region21: #{structure_module_forward.40} parent=0 // pred_fallthru
    _
  // Predicated region
  $region22: #{structure_module_forward.40} parent=0 // pred_check
    _
  $region23: #{structure_module_forward.40} parent=0 // pred_check_branch
    %107 = sbr.rel (0) target = $region25
  $region24: #{structure_module_forward.40} parent=0 // pred_region
    _
  $region25: #{structure_module_forward.40} parent=0 // pred_fallthru
    _

// kernel: structure_module_forward.37
$region0: #{structure_module_forward.37}
  #allocation0 [shape = 'u32[]', space=smem, size = 0x4, offset = 0x4, fixed_abs, tag = 'smem constant byte address 0x4 - core index']
  #allocation1 [shape = 'u32[144,128]{1,0:T(1,128)}', space=vmem, size = 0x12000, scoped, tag = 'internal scratch']
  %s0 = inlined_call_operand.vmem [shape: f32[16,40], index: 0, kind: input, shape index: {}]
  %s1 = inlined_call_operand.vmem [shape: bf16[40,40], index: 1, kind: input, shape index: {}]
  %s2 = inlined_call_operand.vmem [shape: f32[1,40], index: 2, kind: input, shape index: {}]
  %s3 = inlined_call_operand.vmem [shape: f32[16,40], index: 3, kind: input, shape index: {}]
  %s4 = inlined_call_operand.vmem [shape: f32[1,40], index: 4, kind: input, shape index: {}]
  %s5 = inlined_call_operand.vmem [shape: f32[1,40], index: 5, kind: input, shape index: {}]
  %s6 = inlined_call_operand.vmem [shape: f32[16,40], index: 6, kind: output, shape index: {}]
  %s7 = sld [smem:[#allocation0]]
  $region34: #{structure_module_forward.37} parent=0
    _
  %s9 = ssub.s32 1, %s7
  %s10 = scalar_select 0, %s9, %s7
  // Predicated region
  $region2: #{structure_module_forward.37} parent=0 // pred_check
    _
  $region3: #{structure_module_forward.37} parent=0 // pred_check_branch
    %12 = sbr.rel (0) target = $region5
  $region4: #{structure_module_forward.37} parent=0 // pred_region
    _
  $region5: #{structure_module_forward.37} parent=0 // pred_fallthru
    _
  // Predicated region
  $region6: #{structure_module_forward.37} parent=0 // pred_check
    _
  $region7: #{structure_module_forward.37} parent=0 // pred_check_branch
    %14 = sbr.rel (0) target = $region9
  $region8: #{structure_module_forward.37} parent=0 // pred_region
    _
  $region9: #{structure_module_forward.37} parent=0 // pred_fallthru
    _
  // Predicated region
  $region10: #{structure_module_forward.37} parent=0 // pred_check
    _
  $region11: #{structure_module_forward.37} parent=0 // pred_check_branch
    %16 = sbr.rel (0) target = $region13
  $region12: #{structure_module_forward.37} parent=0 // pred_region
    _
  $region13: #{structure_module_forward.37} parent=0 // pred_fallthru
    _
  // Predicated region
  $region14: #{structure_module_forward.37} parent=0 // pred_check
    _
  $region15: #{structure_module_forward.37} parent=0 // pred_check_branch
    %18 = sbr.rel (0) target = $region17
  $region16: #{structure_module_forward.37} parent=0 // pred_region
    _
  $region17: #{structure_module_forward.37} parent=0 // pred_fallthru
    _
  // Predicated region
  $region18: #{structure_module_forward.37} parent=0 // pred_check
    _
  $region19: #{structure_module_forward.37} parent=0 // pred_check_branch
    %20 = sbr.rel (0) target = $region21
  $region20: #{structure_module_forward.37} parent=0 // pred_region
    _
  $region21: #{structure_module_forward.37} parent=0 // pred_fallthru
    _
  // Predicated region
  $region22: #{structure_module_forward.37} parent=0 // pred_check
    _
  $region23: #{structure_module_forward.37} parent=0 // pred_check_branch
    %22 = sbr.rel (0) target = $region25
  $region24: #{structure_module_forward.37} parent=0 // pred_region
    _
  $region25: #{structure_module_forward.37} parent=0 // pred_fallthru
    _
  %v24 = vld [vmem:[%s0] sm:$0xff]
  %v25 = vld [vmem:[%s0 + $0x8] sm:$0xff]
  %v26 = vld [vmem:[%s1] sm:$0xf]
  %v27 = vld [vmem:[%s1 + $0x4] sm:$0xf]
  %v28 = vld [vmem:[%s1 + $0x8] sm:$0xf]
  %v29 = vld [vmem:[%s1 + $0xc] sm:$0xf]
  %v30 = vld [vmem:[%s1 + $0x10] sm:$0xf]
  %v31 = vld [vmem:[%s2] sm:$0x1]
  %v32 = vpack.c.bf16 %v25, %v24
  %v34 = vlaneseq
  %v35 = vshrl.u32 %v34, 7
  %v36 = vsub.s32 0, %v35
  %v37 = vrot.slane %v31, %v36
  %v44 = vunpack.c.l.b16 %v26
  %v45 = vunpack.c.l.b16 %v27
  %v46 = vunpack.c.l.b16 %v28
  %v47 = vunpack.c.l.b16 %v29
  %v48 = vunpack.c.l.b16 %v30
  %v49 = vpack.c.b16 %v45, %v44
  %v50 = vpack.c.b16 %v47, %v46
  %v51 = vpack.c.b16 %v48, %v48
  %vm54 = vcmask 326656
  %v56 = vsel %vm54, %v32, 0
  %vm58 = vcmask 1043456
  %v60 = vsel %vm58, %v51, 0
  %62 = vmatprep.subr.bf16.mxu0 0
  %63 = vmatpush1.bf16.msra.mxu0 %v49
  %64 = vmatprep.subr.bf16.mxu0 0
  %65 = vmatpush1.bf16.msra.mxu0 %v50
  %66 = vmatprep.subr.bf16.mxu0 0
  %67 = vmatpush1.bf16.msra.mxu0 %v60
  %68 = vmatprep.subr.bf16.mxu0 0
  %69 = vmatpush1.bf16.msra.mxu0 0
  %70 = vmatprep.subr.bf16.mxu0 0
  %71 = vmatpush1.bf16.msra.mxu0 0
  %72 = vmatprep.subr.bf16.mxu0 0
  %73 = vmatpush1.bf16.msra.mxu0 0
  %74 = vmatprep.subr.bf16.mxu0 0
  %75 = vmatpush1.bf16.msra.mxu0 0
  %76 = vmatprep.subr.bf16.mxu0 0
  %77 = vmatpush1.bf16.msra.mxu0 0
  %78 = vmatprep.subr.bf16.mxu0 0
  %79 = vmatpush1.bf16.msra.mxu0 0
  %80 = vmatprep.subr.bf16.mxu0 0
  %81 = vmatpush1.bf16.msra.mxu0 0
  %82 = vmatprep.subr.bf16.mxu0 0
  %83 = vmatpush1.bf16.msra.mxu0 0
  %84 = vmatprep.subr.bf16.mxu0 0
  %85 = vmatpush1.bf16.msra.mxu0 0
  %86 = vmatprep.subr.bf16.mxu0 0
  %87 = vmatpush1.bf16.msra.mxu0 0
  %88 = vmatprep.subr.bf16.mxu0 0
  %89 = vmatpush1.bf16.msra.mxu0 0
  %90 = vmatprep.subr.bf16.mxu0 0
  %91 = vmatpush1.bf16.msra.mxu0 0
  %92 = vmatprep.subr.bf16.mxu0 0
  %93 = vmatpush1.bf16.msra.mxu0 0
  %94 = vmatprep.mubr.bf16.mxu0 0
  %95 = vmatmul.mubr.bf16.gmra.mrb[0].mxu0 %v56
  %v96 = vpop.f32.mrb[0].mxu0
  %v97 = vadd.f32 %v37, %v96
  %v98 = vpop.f32.mrb[0].mxu0
  %v99 = vpop.f32.mrb[0].mxu0
  %v100 = vadd.f32 %v37, %v99
  %v101 = vpop.f32.mrb[0].mxu0
  %102 = vdwg.mxu0
  %v103 = vld [vmem:[%s3] sm:$0xff]
  %v104 = vld [vmem:[%s3 + $0x8] sm:$0xff]
  %v105 = vadd.f32 %v97, %v103
  %v106 = vadd.f32 %v100, %v104
  %v107 = vld [vmem:[%s4] sm:$0x1]
  %v108 = vld [vmem:[%s5] sm:$0x1]
  %v109 = vsel %vm54, %v105, 0.0
  %110 = vadd.xlane.f32.xlu0 %v109
  %v111 = vpop.xlane.xlu0 %110
  %v112 = vsel %vm54, %v106, 0.0
  %113 = vadd.xlane.f32.xlu0 %v112
  %v114 = vpop.xlane.xlu0 %113
  %v115 = vrcp.pop 40.0
  %v116 = vmul.f32 %v111, %v115
  %v117 = vmul.f32 %v114, %v115
  %v118 = vsub.f32 %v105, %v116
  %v119 = vsub.f32 %v106, %v117
  %v120 = vmul.f32 %v118, %v118
  %v121 = vmul.f32 %v119, %v119
  %v122 = vsel %vm54, %v120, 0.0
  %123 = vadd.xlane.f32.xlu0 %v122
  %v124 = vpop.xlane.xlu0 %123
  %v125 = vsel %vm54, %v121, 0.0
  %126 = vadd.xlane.f32.xlu0 %v125
  %v127 = vpop.xlane.xlu0 %126
  %v128 = vmul.f32 %v124, %v115
  %v129 = vmul.f32 %v127, %v115
  %v130 = vadd.f32 %v128, 1e-05
  %v131 = vadd.f32 %v129, 1e-05
  %v132 = vrsqrt.pop %v130
  %v133 = vrsqrt.pop %v131
  %v134 = vmul.f32 %v118, %v132
  %v135 = vmul.f32 %v119, %v133
  %v137 = vlaneseq
  %v138 = vshrl.u32 %v137, 7
  %v139 = vsub.s32 0, %v138
  %v140 = vrot.slane %v107, %v139
  %v142 = vmul.f32 %v134, %v140
  %v143 = vmul.f32 %v135, %v140
  %v145 = vlaneseq
  %v146 = vshrl.u32 %v145, 7
  %v147 = vsub.s32 0, %v146
  %v148 = vrot.slane %v108, %v147
  %v150 = vadd.f32 %v142, %v148
  %v151 = vadd.f32 %v143, %v148
  %152 = vst.msk [vmem:[%s6] sm:$0xff] %vm54, %v150
  %153 = vst.msk [vmem:[%s6 + $0x8] sm:$0xff] %vm54, %v151
  // Predicated region
  $region26: #{structure_module_forward.37} parent=0 // pred_check
    _
  $region27: #{structure_module_forward.37} parent=0 // pred_check_branch
    %155 = sbr.rel (0) target = $region29
  $region28: #{structure_module_forward.37} parent=0 // pred_region
    _
  $region29: #{structure_module_forward.37} parent=0 // pred_fallthru
    _
  // Predicated region
  $region30: #{structure_module_forward.37} parent=0 // pred_check
    _
  $region31: #{structure_module_forward.37} parent=0 // pred_check_branch
    %157 = sbr.rel (0) target = $region33
  $region32: #{structure_module_forward.37} parent=0 // pred_region
    _
  $region33: #{structure_module_forward.37} parent=0 // pred_fallthru
    _

// kernel: structure_module_forward.42
$region0: #{structure_module_forward.42}
  #allocation0 [shape = 'u32[]', space=smem, size = 0x4, offset = 0x4, fixed_abs, tag = 'smem constant byte address 0x4 - core index']
  #allocation1 [shape = 'u32[144,128]{1,0:T(1,128)}', space=vmem, size = 0x12000, scoped, tag = 'internal scratch']
  %s0 = inlined_call_operand.vmem [shape: f32[16,32], index: 0, kind: input, shape index: {}]
  %s1 = inlined_call_operand.vmem [shape: bf16[32,6], index: 1, kind: input, shape index: {}]
  %s2 = inlined_call_operand.vmem [shape: f32[1,6], index: 2, kind: input, shape index: {}]
  %s3 = inlined_call_operand.vmem [shape: f32[16,6], index: 3, kind: output, shape index: {}]
  %s4 = sld [smem:[#allocation0]]
  $region22: #{structure_module_forward.42} parent=0
    _
  %s6 = ssub.s32 1, %s4
  %s7 = scalar_select 0, %s6, %s4
  // Predicated region
  $region2: #{structure_module_forward.42} parent=0 // pred_check
    _
  $region3: #{structure_module_forward.42} parent=0 // pred_check_branch
    %9 = sbr.rel (0) target = $region5
  $region4: #{structure_module_forward.42} parent=0 // pred_region
    _
  $region5: #{structure_module_forward.42} parent=0 // pred_fallthru
    _
  // Predicated region
  $region6: #{structure_module_forward.42} parent=0 // pred_check
    _
  $region7: #{structure_module_forward.42} parent=0 // pred_check_branch
    %11 = sbr.rel (0) target = $region9
  $region8: #{structure_module_forward.42} parent=0 // pred_region
    _
  $region9: #{structure_module_forward.42} parent=0 // pred_fallthru
    _
  // Predicated region
  $region10: #{structure_module_forward.42} parent=0 // pred_check
    _
  $region11: #{structure_module_forward.42} parent=0 // pred_check_branch
    %13 = sbr.rel (0) target = $region13
  $region12: #{structure_module_forward.42} parent=0 // pred_region
    _
  $region13: #{structure_module_forward.42} parent=0 // pred_fallthru
    _
  %v15 = vld [vmem:[%s0] sm:$0xff]
  %v16 = vld [vmem:[%s0 + $0x8] sm:$0xff]
  %v17 = vld [vmem:[%s1] sm:$0xf]
  %v18 = vld [vmem:[%s1 + $0x4] sm:$0xf]
  %v19 = vld [vmem:[%s1 + $0x8] sm:$0xf]
  %v20 = vld [vmem:[%s1 + $0xc] sm:$0xf]
  %v21 = vld [vmem:[%s2] sm:$0x1]
  %v22 = vpack.c.bf16 %v16, %v15
  %v24 = vlaneseq
  %v25 = vshrl.u32 %v24, 7
  %v26 = vsub.s32 0, %v25
  %v27 = vrot.slane %v21, %v26
  %v33 = vunpack.c.l.b16 %v17
  %v34 = vunpack.c.l.b16 %v18
  %v35 = vunpack.c.l.b16 %v19
  %v36 = vunpack.c.l.b16 %v20
  %v37 = vpack.c.b16 %v34, %v33
  %v38 = vpack.c.b16 %v36, %v35
  %vm41 = vcmask 261120
  %v43 = vsel %vm41, %v22, 0
  %45 = vmatprep.subr.bf16.mxu0 0
  %46 = vmatpush1.bf16.msra.mxu0 %v37
  %47 = vmatprep.subr.bf16.mxu0 0
  %48 = vmatpush1.bf16.msra.mxu0 %v38
  %49 = vmatprep.subr.bf16.mxu0 0
  %50 = vmatpush1.bf16.msra.mxu0 0
  %51 = vmatprep.subr.bf16.mxu0 0
  %52 = vmatpush1.bf16.msra.mxu0 0
  %53 = vmatprep.subr.bf16.mxu0 0
  %54 = vmatpush1.bf16.msra.mxu0 0
  %55 = vmatprep.subr.bf16.mxu0 0
  %56 = vmatpush1.bf16.msra.mxu0 0
  %57 = vmatprep.subr.bf16.mxu0 0
  %58 = vmatpush1.bf16.msra.mxu0 0
  %59 = vmatprep.subr.bf16.mxu0 0
  %60 = vmatpush1.bf16.msra.mxu0 0
  %61 = vmatprep.subr.bf16.mxu0 0
  %62 = vmatpush1.bf16.msra.mxu0 0
  %63 = vmatprep.subr.bf16.mxu0 0
  %64 = vmatpush1.bf16.msra.mxu0 0
  %65 = vmatprep.subr.bf16.mxu0 0
  %66 = vmatpush1.bf16.msra.mxu0 0
  %67 = vmatprep.subr.bf16.mxu0 0
  %68 = vmatpush1.bf16.msra.mxu0 0
  %69 = vmatprep.subr.bf16.mxu0 0
  %70 = vmatpush1.bf16.msra.mxu0 0
  %71 = vmatprep.subr.bf16.mxu0 0
  %72 = vmatpush1.bf16.msra.mxu0 0
  %73 = vmatprep.subr.bf16.mxu0 0
  %74 = vmatpush1.bf16.msra.mxu0 0
  %75 = vmatprep.subr.bf16.mxu0 0
  %76 = vmatpush1.bf16.msra.mxu0 0
  %77 = vmatprep.mubr.bf16.mxu0 0
  %78 = vmatmul.mubr.bf16.gmra.mrb[0].mxu0 %v43
  %v79 = vpop.f32.mrb[0].mxu0
  %v80 = vadd.f32 %v27, %v79
  %v81 = vpop.f32.mrb[0].mxu0
  %v82 = vpop.f32.mrb[0].mxu0
  %v83 = vadd.f32 %v27, %v82
  %v84 = vpop.f32.mrb[0].mxu0
  %85 = vdwg.mxu0
  %vm86 = vcmask 48128
  %87 = vst.msk [vmem:[%s3] sm:$0xff] %vm86, %v80
  %88 = vst.msk [vmem:[%s3 + $0x8] sm:$0xff] %vm86, %v83
  // Predicated region
  $region14: #{structure_module_forward.42} parent=0 // pred_check
    _
  $region15: #{structure_module_forward.42} parent=0 // pred_check_branch
    %90 = sbr.rel (0) target = $region17
  $region16: #{structure_module_forward.42} parent=0 // pred_region
    _
  $region17: #{structure_module_forward.42} parent=0 // pred_fallthru
    _
  // Predicated region
  $region18: #{structure_module_forward.42} parent=0 // pred_check
    _
  $region19: #{structure_module_forward.42} parent=0 // pred_check_branch
    %92 = sbr.rel (0) target = $region21
  $region20: #{structure_module_forward.42} parent=0 // pred_region
    _
  $region21: #{structure_module_forward.42} parent=0 // pred_fallthru
    _

// kernel: structure_module_forward.41
$region0: #{structure_module_forward.41}
  #allocation0 [shape = 'u32[]', space=smem, size = 0x4, offset = 0x4, fixed_abs, tag = 'smem constant byte address 0x4 - core index']
  #allocation1 [shape = 'u32[144,128]{1,0:T(1,128)}', space=vmem, size = 0x12000, scoped, tag = 'internal scratch']
  %s0 = inlined_call_operand.vmem [shape: f32[16,32], index: 0, kind: input, shape index: {}]
  %s1 = inlined_call_operand.vmem [shape: bf16[32,32], index: 1, kind: input, shape index: {}]
  %s2 = inlined_call_operand.vmem [shape: f32[1,32], index: 2, kind: input, shape index: {}]
  %s3 = inlined_call_operand.vmem [shape: bf16[32,32], index: 3, kind: input, shape index: {}]
  %s4 = inlined_call_operand.vmem [shape: f32[1,32], index: 4, kind: input, shape index: {}]
  %s5 = inlined_call_operand.vmem [shape: bf16[32,32], index: 5, kind: input, shape index: {}]
  %s6 = inlined_call_operand.vmem [shape: f32[1,32], index: 6, kind: input, shape index: {}]
  %s7 = inlined_call_operand.vmem [shape: f32[1,32], index: 7, kind: input, shape index: {}]
  %s8 = inlined_call_operand.vmem [shape: f32[1,32], index: 8, kind: input, shape index: {}]
  %s9 = inlined_call_operand.vmem [shape: f32[16,1], index: 9, kind: input, shape index: {}]
  %s10 = inlined_call_operand.vmem [shape: f32[16,32], index: 10, kind: output, shape index: {}]
  %s11 = sld [smem:[#allocation0]]
  $region50: #{structure_module_forward.41} parent=0
    _
  %s13 = ssub.s32 1, %s11
  %s14 = scalar_select 0, %s13, %s11
  // Predicated region
  $region2: #{structure_module_forward.41} parent=0 // pred_check
    _
  $region3: #{structure_module_forward.41} parent=0 // pred_check_branch
    %16 = sbr.rel (0) target = $region5
  $region4: #{structure_module_forward.41} parent=0 // pred_region
    _
  $region5: #{structure_module_forward.41} parent=0 // pred_fallthru
    _
  // Predicated region
  $region6: #{structure_module_forward.41} parent=0 // pred_check
    _
  $region7: #{structure_module_forward.41} parent=0 // pred_check_branch
    %18 = sbr.rel (0) target = $region9
  $region8: #{structure_module_forward.41} parent=0 // pred_region
    _
  $region9: #{structure_module_forward.41} parent=0 // pred_fallthru
    _
  // Predicated region
  $region10: #{structure_module_forward.41} parent=0 // pred_check
    _
  $region11: #{structure_module_forward.41} parent=0 // pred_check_branch
    %20 = sbr.rel (0) target = $region13
  $region12: #{structure_module_forward.41} parent=0 // pred_region
    _
  $region13: #{structure_module_forward.41} parent=0 // pred_fallthru
    _
  // Predicated region
  $region14: #{structure_module_forward.41} parent=0 // pred_check
    _
  $region15: #{structure_module_forward.41} parent=0 // pred_check_branch
    %22 = sbr.rel (0) target = $region17
  $region16: #{structure_module_forward.41} parent=0 // pred_region
    _
  $region17: #{structure_module_forward.41} parent=0 // pred_fallthru
    _
  // Predicated region
  $region18: #{structure_module_forward.41} parent=0 // pred_check
    _
  $region19: #{structure_module_forward.41} parent=0 // pred_check_branch
    %24 = sbr.rel (0) target = $region21
  $region20: #{structure_module_forward.41} parent=0 // pred_region
    _
  $region21: #{structure_module_forward.41} parent=0 // pred_fallthru
    _
  // Predicated region
  $region22: #{structure_module_forward.41} parent=0 // pred_check
    _
  $region23: #{structure_module_forward.41} parent=0 // pred_check_branch
    %26 = sbr.rel (0) target = $region25
  $region24: #{structure_module_forward.41} parent=0 // pred_region
    _
  $region25: #{structure_module_forward.41} parent=0 // pred_fallthru
    _
  // Predicated region
  $region26: #{structure_module_forward.41} parent=0 // pred_check
    _
  $region27: #{structure_module_forward.41} parent=0 // pred_check_branch
    %28 = sbr.rel (0) target = $region29
  $region28: #{structure_module_forward.41} parent=0 // pred_region
    _
  $region29: #{structure_module_forward.41} parent=0 // pred_fallthru
    _
  // Predicated region
  $region30: #{structure_module_forward.41} parent=0 // pred_check
    _
  $region31: #{structure_module_forward.41} parent=0 // pred_check_branch
    %30 = sbr.rel (0) target = $region33
  $region32: #{structure_module_forward.41} parent=0 // pred_region
    _
  $region33: #{structure_module_forward.41} parent=0 // pred_fallthru
    _
  // Predicated region
  $region34: #{structure_module_forward.41} parent=0 // pred_check
    _
  $region35: #{structure_module_forward.41} parent=0 // pred_check_branch
    %32 = sbr.rel (0) target = $region37
  $region36: #{structure_module_forward.41} parent=0 // pred_region
    _
  $region37: #{structure_module_forward.41} parent=0 // pred_fallthru
    _
  // Predicated region
  $region38: #{structure_module_forward.41} parent=0 // pred_check
    _
  $region39: #{structure_module_forward.41} parent=0 // pred_check_branch
    %34 = sbr.rel (0) target = $region41
  $region40: #{structure_module_forward.41} parent=0 // pred_region
    _
  $region41: #{structure_module_forward.41} parent=0 // pred_fallthru
    _
  %v36 = vld [vmem:[%s0] sm:$0xff]
  %v37 = vld [vmem:[%s0 + $0x8] sm:$0xff]
  %v38 = vld [vmem:[%s1] sm:$0xf]
  %v39 = vld [vmem:[%s1 + $0x4] sm:$0xf]
  %v40 = vld [vmem:[%s1 + $0x8] sm:$0xf]
  %v41 = vld [vmem:[%s1 + $0xc] sm:$0xf]
  %v42 = vpack.c.bf16 %v37, %v36
  %v43 = vld [vmem:[%s2] sm:$0x1]
  %v45 = vlaneseq
  %v46 = vshrl.u32 %v45, 7
  %v47 = vsub.s32 0, %v46
  %v48 = vrot.slane %v43, %v47
  %v54 = vunpack.c.l.b16 %v38
  %v55 = vunpack.c.l.b16 %v39
  %v56 = vunpack.c.l.b16 %v40
  %v57 = vunpack.c.l.b16 %v41
  %v58 = vpack.c.b16 %v55, %v54
  %v59 = vpack.c.b16 %v57, %v56
  %vm62 = vcmask 261120
  %v64 = vsel %vm62, %v42, 0
  %66 = vmatprep.subr.bf16.mxu0 0
  %67 = vmatpush1.bf16.msra.mxu0 %v58
  %68 = vmatprep.subr.bf16.mxu0 0
  %69 = vmatpush1.bf16.msra.mxu0 %v59
  %70 = vmatprep.subr.bf16.mxu0 0
  %71 = vmatpush1.bf16.msra.mxu0 0
  %72 = vmatprep.subr.bf16.mxu0 0
  %73 = vmatpush1.bf16.msra.mxu0 0
  %74 = vmatprep.subr.bf16.mxu0 0
  %75 = vmatpush1.bf16.msra.mxu0 0
  %76 = vmatprep.subr.bf16.mxu0 0
  %77 = vmatpush1.bf16.msra.mxu0 0
  %78 = vmatprep.subr.bf16.mxu0 0
  %79 = vmatpush1.bf16.msra.mxu0 0
  %80 = vmatprep.subr.bf16.mxu0 0
  %81 = vmatpush1.bf16.msra.mxu0 0
  %82 = vmatprep.subr.bf16.mxu0 0
  %83 = vmatpush1.bf16.msra.mxu0 0
  %84 = vmatprep.subr.bf16.mxu0 0
  %85 = vmatpush1.bf16.msra.mxu0 0
  %86 = vmatprep.subr.bf16.mxu0 0
  %87 = vmatpush1.bf16.msra.mxu0 0
  %88 = vmatprep.subr.bf16.mxu0 0
  %89 = vmatpush1.bf16.msra.mxu0 0
  %90 = vmatprep.subr.bf16.mxu0 0
  %91 = vmatpush1.bf16.msra.mxu0 0
  %92 = vmatprep.subr.bf16.mxu0 0
  %93 = vmatpush1.bf16.msra.mxu0 0
  %94 = vmatprep.subr.bf16.mxu0 0
  %95 = vmatpush1.bf16.msra.mxu0 0
  %96 = vmatprep.subr.bf16.mxu0 0
  %97 = vmatpush1.bf16.msra.mxu0 0
  %98 = vmatprep.mubr.bf16.mxu0 0
  %99 = vmatmul.mubr.bf16.gmra.mrb[0].mxu0 %v64
  %v100 = vpop.f32.mrb[0].mxu0
  %v101 = vadd.f32 %v48, %v100
  %v102 = vpop.f32.mrb[0].mxu0
  %v103 = vpop.f32.mrb[0].mxu0
  %v104 = vadd.f32 %v48, %v103
  %v105 = vpop.f32.mrb[0].mxu0
  %106 = vdwg.mxu0
  %v107 = vmax.f32 %v101, 0.0
  %v108 = vmax.f32 %v104, 0.0
  %v109 = vld [vmem:[%s3] sm:$0xf]
  %v110 = vld [vmem:[%s3 + $0x4] sm:$0xf]
  %v111 = vld [vmem:[%s3 + $0x8] sm:$0xf]
  %v112 = vld [vmem:[%s3 + $0xc] sm:$0xf]
  %v113 = vpack.c.bf16 %v108, %v107
  %v114 = vld [vmem:[%s4] sm:$0x1]
  %v116 = vlaneseq
  %v117 = vshrl.u32 %v116, 7
  %v118 = vsub.s32 0, %v117
  %v119 = vrot.slane %v114, %v118
  %v125 = vunpack.c.l.b16 %v109
  %v126 = vunpack.c.l.b16 %v110
  %v127 = vunpack.c.l.b16 %v111
  %v128 = vunpack.c.l.b16 %v112
  %v129 = vpack.c.b16 %v126, %v125
  %v130 = vpack.c.b16 %v128, %v127
  %v134 = vsel %vm62, %v113, 0
  %136 = vmatprep.subr.bf16.mxu0 0
  %137 = vmatpush1.bf16.msra.mxu0 %v129
  %138 = vmatprep.subr.bf16.mxu0 0
  %139 = vmatpush1.bf16.msra.mxu0 %v130
  %140 = vmatprep.subr.bf16.mxu0 0
  %141 = vmatpush1.bf16.msra.mxu0 0
  %142 = vmatprep.subr.bf16.mxu0 0
  %143 = vmatpush1.bf16.msra.mxu0 0
  %144 = vmatprep.subr.bf16.mxu0 0
  %145 = vmatpush1.bf16.msra.mxu0 0
  %146 = vmatprep.subr.bf16.mxu0 0
  %147 = vmatpush1.bf16.msra.mxu0 0
  %148 = vmatprep.subr.bf16.mxu0 0
  %149 = vmatpush1.bf16.msra.mxu0 0
  %150 = vmatprep.subr.bf16.mxu0 0
  %151 = vmatpush1.bf16.msra.mxu0 0
  %152 = vmatprep.subr.bf16.mxu0 0
  %153 = vmatpush1.bf16.msra.mxu0 0
  %154 = vmatprep.subr.bf16.mxu0 0
  %155 = vmatpush1.bf16.msra.mxu0 0
  %156 = vmatprep.subr.bf16.mxu0 0
  %157 = vmatpush1.bf16.msra.mxu0 0
  %158 = vmatprep.subr.bf16.mxu0 0
  %159 = vmatpush1.bf16.msra.mxu0 0
  %160 = vmatprep.subr.bf16.mxu0 0
  %161 = vmatpush1.bf16.msra.mxu0 0
  %162 = vmatprep.subr.bf16.mxu0 0
  %163 = vmatpush1.bf16.msra.mxu0 0
  %164 = vmatprep.subr.bf16.mxu0 0
  %165 = vmatpush1.bf16.msra.mxu0 0
  %166 = vmatprep.subr.bf16.mxu0 0
  %167 = vmatpush1.bf16.msra.mxu0 0
  %168 = vmatprep.mubr.bf16.mxu0 0
  %169 = vmatmul.mubr.bf16.gmra.mrb[0].mxu0 %v134
  %v170 = vpop.f32.mrb[0].mxu0
  %v171 = vadd.f32 %v119, %v170
  %v172 = vpop.f32.mrb[0].mxu0
  %v173 = vpop.f32.mrb[0].mxu0
  %v174 = vadd.f32 %v119, %v173
  %v175 = vpop.f32.mrb[0].mxu0
  %176 = vdwg.mxu0
  %v177 = vmax.f32 %v171, 0.0
  %v178 = vmax.f32 %v174, 0.0
  %v179 = vld [vmem:[%s5] sm:$0xf]
  %v180 = vld [vmem:[%s5 + $0x4] sm:$0xf]
  %v181 = vld [vmem:[%s5 + $0x8] sm:$0xf]
  %v182 = vld [vmem:[%s5 + $0xc] sm:$0xf]
  %v183 = vpack.c.bf16 %v178, %v177
  %v184 = vld [vmem:[%s6] sm:$0x1]
  %v186 = vlaneseq
  %v187 = vshrl.u32 %v186, 7
  %v188 = vsub.s32 0, %v187
  %v189 = vrot.slane %v184, %v188
  %v195 = vunpack.c.l.b16 %v179
  %v196 = vunpack.c.l.b16 %v180
  %v197 = vunpack.c.l.b16 %v181
  %v198 = vunpack.c.l.b16 %v182
  %v199 = vpack.c.b16 %v196, %v195
  %v200 = vpack.c.b16 %v198, %v197
  %v204 = vsel %vm62, %v183, 0
  %206 = vmatprep.subr.bf16.mxu0 0
  %207 = vmatpush1.bf16.msra.mxu0 %v199
  %208 = vmatprep.subr.bf16.mxu0 0
  %209 = vmatpush1.bf16.msra.mxu0 %v200
  %210 = vmatprep.subr.bf16.mxu0 0
  %211 = vmatpush1.bf16.msra.mxu0 0
  %212 = vmatprep.subr.bf16.mxu0 0
  %213 = vmatpush1.bf16.msra.mxu0 0
  %214 = vmatprep.subr.bf16.mxu0 0
  %215 = vmatpush1.bf16.msra.mxu0 0
  %216 = vmatprep.subr.bf16.mxu0 0
  %217 = vmatpush1.bf16.msra.mxu0 0
  %218 = vmatprep.subr.bf16.mxu0 0
  %219 = vmatpush1.bf16.msra.mxu0 0
  %220 = vmatprep.subr.bf16.mxu0 0
  %221 = vmatpush1.bf16.msra.mxu0 0
  %222 = vmatprep.subr.bf16.mxu0 0
  %223 = vmatpush1.bf16.msra.mxu0 0
  %224 = vmatprep.subr.bf16.mxu0 0
  %225 = vmatpush1.bf16.msra.mxu0 0
  %226 = vmatprep.subr.bf16.mxu0 0
  %227 = vmatpush1.bf16.msra.mxu0 0
  %228 = vmatprep.subr.bf16.mxu0 0
  %229 = vmatpush1.bf16.msra.mxu0 0
  %230 = vmatprep.subr.bf16.mxu0 0
  %231 = vmatpush1.bf16.msra.mxu0 0
  %232 = vmatprep.subr.bf16.mxu0 0
  %233 = vmatpush1.bf16.msra.mxu0 0
  %234 = vmatprep.subr.bf16.mxu0 0
  %235 = vmatpush1.bf16.msra.mxu0 0
  %236 = vmatprep.subr.bf16.mxu0 0
  %237 = vmatpush1.bf16.msra.mxu0 0
  %238 = vmatprep.mubr.bf16.mxu0 0
  %239 = vmatmul.mubr.bf16.gmra.mrb[0].mxu0 %v204
  %v240 = vpop.f32.mrb[0].mxu0
  %v241 = vadd.f32 %v189, %v240
  %v242 = vpop.f32.mrb[0].mxu0
  %v243 = vpop.f32.mrb[0].mxu0
  %v244 = vadd.f32 %v189, %v243
  %v245 = vpop.f32.mrb[0].mxu0
  %246 = vdwg.mxu0
  %v247 = vadd.f32 %v241, %v36
  %v248 = vadd.f32 %v244, %v37
  %v249 = vsel %vm62, %v247, 0.0
  %250 = vadd.xlane.f32.xlu0 %v249
  %v251 = vpop.xlane.xlu0 %250
  %v252 = vsel %vm62, %v248, 0.0
  %253 = vadd.xlane.f32.xlu0 %v252
  %v254 = vpop.xlane.xlu0 %253
  %v255 = vrcp.pop 32.0
  %v256 = vmul.f32 %v251, %v255
  %v257 = vmul.f32 %v254, %v255
  %v258 = vsub.f32 %v247, %v256
  %v259 = vsub.f32 %v248, %v257
  %v260 = vmul.f32 %v258, %v258
  %v261 = vmul.f32 %v259, %v259
  %v262 = vsel %vm62, %v260, 0.0
  %263 = vadd.xlane.f32.xlu0 %v262
  %v264 = vpop.xlane.xlu0 %263
  %v265 = vsel %vm62, %v261, 0.0
  %266 = vadd.xlane.f32.xlu0 %v265
  %v267 = vpop.xlane.xlu0 %266
  %v268 = vmul.f32 %v264, %v255
  %v269 = vmul.f32 %v267, %v255
  %v270 = vadd.f32 %v268, 1e-05
  %v271 = vadd.f32 %v269, 1e-05
  %v272 = vrsqrt.pop %v270
  %v273 = vrsqrt.pop %v271
  %v274 = vmul.f32 %v258, %v272
  %v275 = vmul.f32 %v259, %v273
  %v276 = vld [vmem:[%s7] sm:$0x1]
  %v278 = vlaneseq
  %v279 = vshrl.u32 %v278, 7
  %v280 = vsub.s32 0, %v279
  %v281 = vrot.slane %v276, %v280
  %v283 = vmul.f32 %v274, %v281
  %v284 = vmul.f32 %v275, %v281
  %v285 = vld [vmem:[%s8] sm:$0x1]
  %v287 = vlaneseq
  %v288 = vshrl.u32 %v287, 7
  %v289 = vsub.s32 0, %v288
  %v290 = vrot.slane %v285, %v289
  %v292 = vadd.f32 %v283, %v290
  %v293 = vadd.f32 %v284, %v290
  %v294 = vld [vmem:[%s9] sm:$0xff]
  %v295 = vld [vmem:[%s9 + $0x8] sm:$0xff]
  %297 = vset.pattern.permute.xlu0 0
  %298 = vperm.xlu0 %297, %v294
  %v299 = vpop.permute.xlu0 %298
  %302 = vset.pattern.permute.xlu0 0
  %303 = vperm.xlu0 %302, %v295
  %v304 = vpop.permute.xlu0 %303
  %v306 = vmul.f32 %v292, %v299
  %v307 = vmul.f32 %v293, %v304
  %308 = vst.msk [vmem:[%s10] sm:$0xff] %vm62, %v306
  %309 = vst.msk [vmem:[%s10 + $0x8] sm:$0xff] %vm62, %v307
  // Predicated region
  $region42: #{structure_module_forward.41} parent=0 // pred_check
    _
  $region43: #{structure_module_forward.41} parent=0 // pred_check_branch
    %311 = sbr.rel (0) target = $region45
  $region44: #{structure_module_forward.41} parent=0 // pred_region
    _
  $region45: #{structure_module_forward.41} parent=0 // pred_fallthru
    _
  // Predicated region
  $region46: #{structure_module_forward.41} parent=0 // pred_check
    _
  $region47: #{structure_module_forward.41} parent=0 // pred_check_branch
    %313 = sbr.rel (0) target = $region49
  $region48: #{structure_module_forward.41} parent=0 // pred_region
    _
  $region49: #{structure_module_forward.41} parent=0 // pred_fallthru
    _

// kernel: structure_module_forward.43
$region0: #{structure_module_forward.43}
  #allocation0 [shape = 'u32[]', space=smem, size = 0x4, offset = 0x4, fixed_abs, tag = 'smem constant byte address 0x4 - core index']
  #allocation1 [shape = 'u32[144,128]{1,0:T(1,128)}', space=vmem, size = 0x12000, scoped, tag = 'internal scratch']
  %s0 = inlined_call_operand.vmem [shape: f32[16,32], index: 0, kind: input, shape index: {}]
  %s1 = inlined_call_operand.vmem [shape: bf16[32,16], index: 1, kind: input, shape index: {}]
  %s2 = inlined_call_operand.vmem [shape: f32[1,16], index: 2, kind: input, shape index: {}]
  %s3 = inlined_call_operand.vmem [shape: f32[16,16], index: 3, kind: output, shape index: {}]
  %s4 = sld [smem:[#allocation0]]
  $region22: #{structure_module_forward.43} parent=0
    _
  %s6 = ssub.s32 1, %s4
  %s7 = scalar_select 0, %s6, %s4
  // Predicated region
  $region2: #{structure_module_forward.43} parent=0 // pred_check
    _
  $region3: #{structure_module_forward.43} parent=0 // pred_check_branch
    %9 = sbr.rel (0) target = $region5
  $region4: #{structure_module_forward.43} parent=0 // pred_region
    _
  $region5: #{structure_module_forward.43} parent=0 // pred_fallthru
    _
  // Predicated region
  $region6: #{structure_module_forward.43} parent=0 // pred_check
    _
  $region7: #{structure_module_forward.43} parent=0 // pred_check_branch
    %11 = sbr.rel (0) target = $region9
  $region8: #{structure_module_forward.43} parent=0 // pred_region
    _
  $region9: #{structure_module_forward.43} parent=0 // pred_fallthru
    _
  // Predicated region
  $region10: #{structure_module_forward.43} parent=0 // pred_check
    _
  $region11: #{structure_module_forward.43} parent=0 // pred_check_branch
    %13 = sbr.rel (0) target = $region13
  $region12: #{structure_module_forward.43} parent=0 // pred_region
    _
  $region13: #{structure_module_forward.43} parent=0 // pred_fallthru
    _
  %v15 = vld [vmem:[%s0] sm:$0xff]
  %v16 = vld [vmem:[%s0 + $0x8] sm:$0xff]
  %v17 = vld [vmem:[%s1] sm:$0xf]
  %v18 = vld [vmem:[%s1 + $0x4] sm:$0xf]
  %v19 = vld [vmem:[%s1 + $0x8] sm:$0xf]
  %v20 = vld [vmem:[%s1 + $0xc] sm:$0xf]
  %v21 = vld [vmem:[%s2] sm:$0x1]
  %v22 = vpack.c.bf16 %v16, %v15
  %v24 = vlaneseq
  %v25 = vshrl.u32 %v24, 7
  %v26 = vsub.s32 0, %v25
  %v27 = vrot.slane %v21, %v26
  %v33 = vunpack.c.l.b16 %v17
  %v34 = vunpack.c.l.b16 %v18
  %v35 = vunpack.c.l.b16 %v19
  %v36 = vunpack.c.l.b16 %v20
  %v37 = vpack.c.b16 %v34, %v33
  %v38 = vpack.c.b16 %v36, %v35
  %vm41 = vcmask 261120
  %v43 = vsel %vm41, %v22, 0
  %45 = vmatprep.subr.bf16.mxu0 0
  %46 = vmatpush1.bf16.msra.mxu0 %v37
  %47 = vmatprep.subr.bf16.mxu0 0
  %48 = vmatpush1.bf16.msra.mxu0 %v38
  %49 = vmatprep.subr.bf16.mxu0 0
  %50 = vmatpush1.bf16.msra.mxu0 0
  %51 = vmatprep.subr.bf16.mxu0 0
  %52 = vmatpush1.bf16.msra.mxu0 0
  %53 = vmatprep.subr.bf16.mxu0 0
  %54 = vmatpush1.bf16.msra.mxu0 0
  %55 = vmatprep.subr.bf16.mxu0 0
  %56 = vmatpush1.bf16.msra.mxu0 0
  %57 = vmatprep.subr.bf16.mxu0 0
  %58 = vmatpush1.bf16.msra.mxu0 0
  %59 = vmatprep.subr.bf16.mxu0 0
  %60 = vmatpush1.bf16.msra.mxu0 0
  %61 = vmatprep.subr.bf16.mxu0 0
  %62 = vmatpush1.bf16.msra.mxu0 0
  %63 = vmatprep.subr.bf16.mxu0 0
  %64 = vmatpush1.bf16.msra.mxu0 0
  %65 = vmatprep.subr.bf16.mxu0 0
  %66 = vmatpush1.bf16.msra.mxu0 0
  %67 = vmatprep.subr.bf16.mxu0 0
  %68 = vmatpush1.bf16.msra.mxu0 0
  %69 = vmatprep.subr.bf16.mxu0 0
  %70 = vmatpush1.bf16.msra.mxu0 0
  %71 = vmatprep.subr.bf16.mxu0 0
  %72 = vmatpush1.bf16.msra.mxu0 0
  %73 = vmatprep.subr.bf16.mxu0 0
  %74 = vmatpush1.bf16.msra.mxu0 0
  %75 = vmatprep.subr.bf16.mxu0 0
  %76 = vmatpush1.bf16.msra.mxu0 0
  %77 = vmatprep.mubr.bf16.mxu0 0
  %78 = vmatmul.mubr.bf16.gmra.mrb[0].mxu0 %v43
  %v79 = vpop.f32.mrb[0].mxu0
  %v80 = vadd.f32 %v27, %v79
  %v81 = vpop.f32.mrb[0].mxu0
  %v82 = vpop.f32.mrb[0].mxu0
  %v83 = vadd.f32 %v27, %v82
  %v84 = vpop.f32.mrb[0].mxu0
  %85 = vdwg.mxu0
  %vm86 = vcmask 130048
  %87 = vst.msk [vmem:[%s3] sm:$0xff] %vm86, %v80
  %88 = vst.msk [vmem:[%s3 + $0x8] sm:$0xff] %vm86, %v83
  // Predicated region
  $region14: #{structure_module_forward.43} parent=0 // pred_check
    _
  $region15: #{structure_module_forward.43} parent=0 // pred_check_branch
    %90 = sbr.rel (0) target = $region17
  $region16: #{structure_module_forward.43} parent=0 // pred_region
    _
  $region17: #{structure_module_forward.43} parent=0 // pred_fallthru
    _
  // Predicated region
  $region18: #{structure_module_forward.43} parent=0 // pred_check
    _
  $region19: #{structure_module_forward.43} parent=0 // pred_check_branch
    %92 = sbr.rel (0) target = $region21
  $region20: #{structure_module_forward.43} parent=0 // pred_region
    _
  $region21: #{structure_module_forward.43} parent=0 // pred_fallthru
    _

// kernel: structure_module_forward.44
$region0: #{structure_module_forward.44}
  #allocation0 [shape = 'u32[]', space=smem, size = 0x4, offset = 0x4, fixed_abs, tag = 'smem constant byte address 0x4 - core index']
  #allocation1 [shape = 'u32[144,128]{1,0:T(1,128)}', space=vmem, size = 0x12000, scoped, tag = 'internal scratch']
  %s0 = inlined_call_operand.vmem [shape: f32[16,16], index: 0, kind: input, shape index: {}]
  %s1 = inlined_call_operand.vmem [shape: bf16[16,128], index: 1, kind: input, shape index: {}]
  %s2 = inlined_call_operand.vmem [shape: f32[1,128], index: 2, kind: input, shape index: {}]
  %s3 = inlined_call_operand.vmem [shape: f32[16,128], index: 3, kind: output, shape index: {}]
  %s4 = sld [smem:[#allocation0]]
  $region22: #{structure_module_forward.44} parent=0
    _
  %s6 = ssub.s32 1, %s4
  %s7 = scalar_select 0, %s6, %s4
  // Predicated region
  $region2: #{structure_module_forward.44} parent=0 // pred_check
    _
  $region3: #{structure_module_forward.44} parent=0 // pred_check_branch
    %9 = sbr.rel (0) target = $region5
  $region4: #{structure_module_forward.44} parent=0 // pred_region
    _
  $region5: #{structure_module_forward.44} parent=0 // pred_fallthru
    _
  // Predicated region
  $region6: #{structure_module_forward.44} parent=0 // pred_check
    _
  $region7: #{structure_module_forward.44} parent=0 // pred_check_branch
    %11 = sbr.rel (0) target = $region9
  $region8: #{structure_module_forward.44} parent=0 // pred_region
    _
  $region9: #{structure_module_forward.44} parent=0 // pred_fallthru
    _
  // Predicated region
  $region10: #{structure_module_forward.44} parent=0 // pred_check
    _
  $region11: #{structure_module_forward.44} parent=0 // pred_check_branch
    %13 = sbr.rel (0) target = $region13
  $region12: #{structure_module_forward.44} parent=0 // pred_region
    _
  $region13: #{structure_module_forward.44} parent=0 // pred_fallthru
    _
  %v15 = vld [vmem:[%s0] sm:$0xff]
  %v16 = vld [vmem:[%s0 + $0x8] sm:$0xff]
  %v17 = vld [vmem:[%s1] sm:$0xf]
  %v18 = vld [vmem:[%s1 + $0x4] sm:$0xf]
  %v19 = vld [vmem:[%s2] sm:$0x1]
  %v20 = vpack.c.bf16 %v16, %v15
  %v22 = vlaneseq
  %v23 = vshrl.u32 %v22, 7
  %v24 = vsub.s32 0, %v23
  %v25 = vrot.slane %v19, %v24
  %v29 = vunpack.c.l.b16 %v17
  %v30 = vunpack.c.l.b16 %v18
  %v31 = vpack.c.b16 %v30, %v29
  %vm33 = vcmask 130048
  %v35 = vsel %vm33, %v20, 0
  %37 = vmatprep.subr.bf16.mxu0 0
  %38 = vmatpush1.bf16.msra.mxu0 %v31
  %39 = vmatprep.subr.bf16.mxu0 0
  %40 = vmatpush1.bf16.msra.mxu0 0
  %41 = vmatprep.subr.bf16.mxu0 0
  %42 = vmatpush1.bf16.msra.mxu0 0
  %43 = vmatprep.subr.bf16.mxu0 0
  %44 = vmatpush1.bf16.msra.mxu0 0
  %45 = vmatprep.subr.bf16.mxu0 0
  %46 = vmatpush1.bf16.msra.mxu0 0
  %47 = vmatprep.subr.bf16.mxu0 0
  %48 = vmatpush1.bf16.msra.mxu0 0
  %49 = vmatprep.subr.bf16.mxu0 0
  %50 = vmatpush1.bf16.msra.mxu0 0
  %51 = vmatprep.subr.bf16.mxu0 0
  %52 = vmatpush1.bf16.msra.mxu0 0
  %53 = vmatprep.subr.bf16.mxu0 0
  %54 = vmatpush1.bf16.msra.mxu0 0
  %55 = vmatprep.subr.bf16.mxu0 0
  %56 = vmatpush1.bf16.msra.mxu0 0
  %57 = vmatprep.subr.bf16.mxu0 0
  %58 = vmatpush1.bf16.msra.mxu0 0
  %59 = vmatprep.subr.bf16.mxu0 0
  %60 = vmatpush1.bf16.msra.mxu0 0
  %61 = vmatprep.subr.bf16.mxu0 0
  %62 = vmatpush1.bf16.msra.mxu0 0
  %63 = vmatprep.subr.bf16.mxu0 0
  %64 = vmatpush1.bf16.msra.mxu0 0
  %65 = vmatprep.subr.bf16.mxu0 0
  %66 = vmatpush1.bf16.msra.mxu0 0
  %67 = vmatprep.subr.bf16.mxu0 0
  %68 = vmatpush1.bf16.msra.mxu0 0
  %69 = vmatprep.mubr.bf16.mxu0 0
  %70 = vmatmul.mubr.bf16.gmra.mrb[0].mxu0 %v35
  %v71 = vpop.f32.mrb[0].mxu0
  %v72 = vadd.f32 %v25, %v71
  %v73 = vpop.f32.mrb[0].mxu0
  %v74 = vpop.f32.mrb[0].mxu0
  %v75 = vadd.f32 %v25, %v74
  %v76 = vpop.f32.mrb[0].mxu0
  %77 = vdwg.mxu0
  %78 = vst [vmem:[%s3] sm:$0xff] %v72
  %79 = vst [vmem:[%s3 + $0x8] sm:$0xff] %v75
  // Predicated region
  $region14: #{structure_module_forward.44} parent=0 // pred_check
    _
  $region15: #{structure_module_forward.44} parent=0 // pred_check_branch
    %81 = sbr.rel (0) target = $region17
  $region16: #{structure_module_forward.44} parent=0 // pred_region
    _
  $region17: #{structure_module_forward.44} parent=0 // pred_fallthru
    _
  // Predicated region
  $region18: #{structure_module_forward.44} parent=0 // pred_check
    _
  $region19: #{structure_module_forward.44} parent=0 // pred_check_branch
    %83 = sbr.rel (0) target = $region21
  $region20: #{structure_module_forward.44} parent=0 // pred_region
    _
  $region21: #{structure_module_forward.44} parent=0 // pred_fallthru
    _

// kernel: structure_module_forward.47
$region0: #{structure_module_forward.47}
  #allocation0 [shape = 'u32[]', space=smem, size = 0x4, offset = 0x4, fixed_abs, tag = 'smem constant byte address 0x4 - core index']
  #allocation1 [shape = 'u32[144,128]{1,0:T(1,128)}', space=vmem, size = 0x12000, scoped, tag = 'internal scratch']
  %s0 = inlined_call_operand.vmem [shape: bf16[128,16], index: 0, kind: input, shape index: {}]
  %s1 = inlined_call_operand.vmem [shape: bf16[16,8], index: 1, kind: input, shape index: {}]
  %s2 = inlined_call_operand.vmem [shape: f32[1,8], index: 2, kind: input, shape index: {}]
  %s3 = inlined_call_operand.vmem [shape: bf16[128,8], index: 3, kind: output, shape index: {}]
  %s4 = sld [smem:[#allocation0]]
  $region22: #{structure_module_forward.47} parent=0
    _
  %s6 = ssub.s32 1, %s4
  %s7 = scalar_select 0, %s6, %s4
  // Predicated region
  $region2: #{structure_module_forward.47} parent=0 // pred_check
    _
  $region3: #{structure_module_forward.47} parent=0 // pred_check_branch
    %9 = sbr.rel (0) target = $region5
  $region4: #{structure_module_forward.47} parent=0 // pred_region
    _
  $region5: #{structure_module_forward.47} parent=0 // pred_fallthru
    _
  // Predicated region
  $region6: #{structure_module_forward.47} parent=0 // pred_check
    _
  $region7: #{structure_module_forward.47} parent=0 // pred_check_branch
    %11 = sbr.rel (0) target = $region9
  $region8: #{structure_module_forward.47} parent=0 // pred_region
    _
  $region9: #{structure_module_forward.47} parent=0 // pred_fallthru
    _
  // Predicated region
  $region10: #{structure_module_forward.47} parent=0 // pred_check
    _
  $region11: #{structure_module_forward.47} parent=0 // pred_check_branch
    %13 = sbr.rel (0) target = $region13
  $region12: #{structure_module_forward.47} parent=0 // pred_region
    _
  $region13: #{structure_module_forward.47} parent=0 // pred_fallthru
    _
  %v15 = vld [vmem:[%s0] sm:$0xf]
  %v16 = vld [vmem:[%s0 + $0x4] sm:$0xf]
  %v17 = vld [vmem:[%s0 + $0x8] sm:$0xf]
  %v18 = vld [vmem:[%s0 + $0xc] sm:$0xf]
  %v19 = vld [vmem:[%s0 + $0x10] sm:$0xf]
  %v20 = vld [vmem:[%s0 + $0x14] sm:$0xf]
  %v21 = vld [vmem:[%s0 + $0x18] sm:$0xf]
  %v22 = vld [vmem:[%s0 + $0x1c] sm:$0xf]
  %v23 = vld [vmem:[%s0 + $0x20] sm:$0xf]
  %v24 = vld [vmem:[%s0 + $0x24] sm:$0xf]
  %v25 = vld [vmem:[%s0 + $0x28] sm:$0xf]
  %v26 = vld [vmem:[%s0 + $0x2c] sm:$0xf]
  %v27 = vld [vmem:[%s0 + $0x30] sm:$0xf]
  %v28 = vld [vmem:[%s0 + $0x34] sm:$0xf]
  %v29 = vld [vmem:[%s0 + $0x38] sm:$0xf]
  %v30 = vld [vmem:[%s0 + $0x3c] sm:$0xf]
  %v31 = vld [vmem:[%s1] sm:$0xf]
  %v32 = vld [vmem:[%s1 + $0x4] sm:$0xf]
  %v33 = vld [vmem:[%s2] sm:$0x1]
  %v35 = vlaneseq
  %v36 = vshrl.u32 %v35, 7
  %v37 = vsub.s32 0, %v36
  %v38 = vrot.slane %v33, %v37
  %v56 = vunpack.c.l.b16 %v15
  %v57 = vunpack.c.l.b16 %v16
  %v58 = vunpack.c.l.b16 %v17
  %v59 = vunpack.c.l.b16 %v18
  %v60 = vunpack.c.l.b16 %v19
  %v61 = vunpack.c.l.b16 %v20
  %v62 = vunpack.c.l.b16 %v21
  %v63 = vunpack.c.l.b16 %v22
  %v64 = vunpack.c.l.b16 %v23
  %v65 = vunpack.c.l.b16 %v24
  %v66 = vunpack.c.l.b16 %v25
  %v67 = vunpack.c.l.b16 %v26
  %v68 = vunpack.c.l.b16 %v27
  %v69 = vunpack.c.l.b16 %v28
  %v70 = vunpack.c.l.b16 %v29
  %v71 = vunpack.c.l.b16 %v30
  %v72 = vpack.c.b16 %v57, %v56
  %v73 = vpack.c.b16 %v59, %v58
  %v74 = vpack.c.b16 %v61, %v60
  %v75 = vpack.c.b16 %v63, %v62
  %v76 = vpack.c.b16 %v65, %v64
  %v77 = vpack.c.b16 %v67, %v66
  %v78 = vpack.c.b16 %v69, %v68
  %v79 = vpack.c.b16 %v71, %v70
  %v82 = vunpack.c.l.b16 %v31
  %v83 = vunpack.c.l.b16 %v32
  %v84 = vpack.c.b16 %v83, %v82
  %vm86 = vcmask 130048
  %v88 = vsel %vm86, %v72, 0
  %v91 = vsel %vm86, %v73, 0
  %v94 = vsel %vm86, %v74, 0
  %v97 = vsel %vm86, %v75, 0
  %v100 = vsel %vm86, %v76, 0
  %v103 = vsel %vm86, %v77, 0
  %v106 = vsel %vm86, %v78, 0
  %v109 = vsel %vm86, %v79, 0
  %111 = vmatprep.subr.bf16.mxu0 0
  %112 = vmatpush1.bf16.msra.mxu0 %v84
  %113 = vmatprep.subr.bf16.mxu0 0
  %114 = vmatpush1.bf16.msra.mxu0 0
  %115 = vmatprep.subr.bf16.mxu0 0
  %116 = vmatpush1.bf16.msra.mxu0 0
  %117 = vmatprep.subr.bf16.mxu0 0
  %118 = vmatpush1.bf16.msra.mxu0 0
  %119 = vmatprep.subr.bf16.mxu0 0
  %120 = vmatpush1.bf16.msra.mxu0 0
  %121 = vmatprep.subr.bf16.mxu0 0
  %122 = vmatpush1.bf16.msra.mxu0 0
  %123 = vmatprep.subr.bf16.mxu0 0
  %124 = vmatpush1.bf16.msra.mxu0 0
  %125 = vmatprep.subr.bf16.mxu0 0
  %126 = vmatpush1.bf16.msra.mxu0 0
  %127 = vmatprep.subr.bf16.mxu0 0
  %128 = vmatpush1.bf16.msra.mxu0 0
  %129 = vmatprep.subr.bf16.mxu0 0
  %130 = vmatpush1.bf16.msra.mxu0 0
  %131 = vmatprep.subr.bf16.mxu0 0
  %132 = vmatpush1.bf16.msra.mxu0 0
  %133 = vmatprep.subr.bf16.mxu0 0
  %134 = vmatpush1.bf16.msra.mxu0 0
  %135 = vmatprep.subr.bf16.mxu0 0
  %136 = vmatpush1.bf16.msra.mxu0 0
  %137 = vmatprep.subr.bf16.mxu0 0
  %138 = vmatpush1.bf16.msra.mxu0 0
  %139 = vmatprep.subr.bf16.mxu0 0
  %140 = vmatpush1.bf16.msra.mxu0 0
  %141 = vmatprep.subr.bf16.mxu0 0
  %142 = vmatpush1.bf16.msra.mxu0 0
  %143 = vmatprep.mubr.bf16.mxu0 0
  %144 = vmatmul.mubr.bf16.gmra.mrb[0].mxu0 %v88
  %v145 = vpop.f32.mrb[0].mxu0
  %v146 = vadd.f32 %v38, %v145
  %v147 = vpop.f32.mrb[0].mxu0
  %v148 = vpop.f32.mrb[0].mxu0
  %v149 = vadd.f32 %v38, %v148
  %v150 = vpop.f32.mrb[0].mxu0
  %151 = vmatprep.mubr.bf16.mxu0 0
  %152 = vmatmul.mubr.bf16.gmra.mrb[0].mxu0 %v91
  %v153 = vpop.f32.mrb[0].mxu0
  %v154 = vadd.f32 %v38, %v153
  %v155 = vpop.f32.mrb[0].mxu0
  %v156 = vpop.f32.mrb[0].mxu0
  %v157 = vadd.f32 %v38, %v156
  %v158 = vpop.f32.mrb[0].mxu0
  %159 = vmatprep.mubr.bf16.mxu0 0
  %160 = vmatmul.mubr.bf16.gmra.mrb[0].mxu0 %v94
  %v161 = vpop.f32.mrb[0].mxu0
  %v162 = vadd.f32 %v38, %v161
  %v163 = vpop.f32.mrb[0].mxu0
  %v164 = vpop.f32.mrb[0].mxu0
  %v165 = vadd.f32 %v38, %v164
  %v166 = vpop.f32.mrb[0].mxu0
  %167 = vmatprep.mubr.bf16.mxu0 0
  %168 = vmatmul.mubr.bf16.gmra.mrb[0].mxu0 %v97
  %v169 = vpop.f32.mrb[0].mxu0
  %v170 = vadd.f32 %v38, %v169
  %v171 = vpop.f32.mrb[0].mxu0
  %v172 = vpop.f32.mrb[0].mxu0
  %v173 = vadd.f32 %v38, %v172
  %v174 = vpop.f32.mrb[0].mxu0
  %175 = vmatprep.mubr.bf16.mxu0 0
  %176 = vmatmul.mubr.bf16.gmra.mrb[0].mxu0 %v100
  %v177 = vpop.f32.mrb[0].mxu0
  %v178 = vadd.f32 %v38, %v177
  %v179 = vpop.f32.mrb[0].mxu0
  %v180 = vpop.f32.mrb[0].mxu0
  %v181 = vadd.f32 %v38, %v180
  %v182 = vpop.f32.mrb[0].mxu0
  %183 = vmatprep.mubr.bf16.mxu0 0
  %184 = vmatmul.mubr.bf16.gmra.mrb[0].mxu0 %v103
  %v185 = vpop.f32.mrb[0].mxu0
  %v186 = vadd.f32 %v38, %v185
  %v187 = vpop.f32.mrb[0].mxu0
  %v188 = vpop.f32.mrb[0].mxu0
  %v189 = vadd.f32 %v38, %v188
  %v190 = vpop.f32.mrb[0].mxu0
  %191 = vmatprep.mubr.bf16.mxu0 0
  %192 = vmatmul.mubr.bf16.gmra.mrb[0].mxu0 %v106
  %v193 = vpop.f32.mrb[0].mxu0
  %v194 = vadd.f32 %v38, %v193
  %v195 = vpop.f32.mrb[0].mxu0
  %v196 = vpop.f32.mrb[0].mxu0
  %v197 = vadd.f32 %v38, %v196
  %v198 = vpop.f32.mrb[0].mxu0
  %199 = vmatprep.mubr.bf16.mxu0 0
  %200 = vmatmul.mubr.bf16.gmra.mrb[0].mxu0 %v109
  %v201 = vpop.f32.mrb[0].mxu0
  %v202 = vadd.f32 %v38, %v201
  %v203 = vpop.f32.mrb[0].mxu0
  %v204 = vpop.f32.mrb[0].mxu0
  %v205 = vadd.f32 %v38, %v204
  %v206 = vpop.f32.mrb[0].mxu0
  %207 = vdwg.mxu0
  %v208 = vpack.c.bf16 %v149, %v146
  %v209 = vpack.c.bf16 %v157, %v154
  %v210 = vpack.c.bf16 %v165, %v162
  %v211 = vpack.c.bf16 %v173, %v170
  %v212 = vpack.c.bf16 %v181, %v178
  %v213 = vpack.c.bf16 %v189, %v186
  %v214 = vpack.c.bf16 %v197, %v194
  %v215 = vpack.c.bf16 %v205, %v202
  %v224 = vunpack.c.l.b16 %v208
  %v225 = vunpack.c.h.b16 %v208
  %v226 = vunpack.c.l.b16 %v209
  %v227 = vunpack.c.h.b16 %v209
  %v228 = vunpack.c.l.b16 %v210
  %v229 = vunpack.c.h.b16 %v210
  %v230 = vunpack.c.l.b16 %v211
  %v231 = vunpack.c.h.b16 %v211
  %v232 = vunpack.c.l.b16 %v212
  %v233 = vunpack.c.h.b16 %v212
  %v234 = vunpack.c.l.b16 %v213
  %v235 = vunpack.c.h.b16 %v213
  %v236 = vunpack.c.l.b16 %v214
  %v237 = vunpack.c.h.b16 %v214
  %v238 = vunpack.c.l.b16 %v215
  %v239 = vunpack.c.h.b16 %v215
  %v240 = vpack.c.b16 %v224, %v224
  %v241 = vpack.c.b16 %v225, %v225
  %v242 = vpack.c.b16 %v226, %v226
  %v243 = vpack.c.b16 %v227, %v227
  %v244 = vpack.c.b16 %v228, %v228
  %v245 = vpack.c.b16 %v229, %v229
  %v246 = vpack.c.b16 %v230, %v230
  %v247 = vpack.c.b16 %v231, %v231
  %v248 = vpack.c.b16 %v232, %v232
  %v249 = vpack.c.b16 %v233, %v233
  %v250 = vpack.c.b16 %v234, %v234
  %v251 = vpack.c.b16 %v235, %v235
  %v252 = vpack.c.b16 %v236, %v236
  %v253 = vpack.c.b16 %v237, %v237
  %v254 = vpack.c.b16 %v238, %v238
  %v255 = vpack.c.b16 %v239, %v239
  %vm272 = vcmask 60416
  %273 = vst.msk [vmem:[%s3] sm:$0xf] %vm272, %v240
  %274 = vst.msk [vmem:[%s3 + $0x4] sm:$0xf] %vm272, %v241
  %275 = vst.msk [vmem:[%s3 + $0x8] sm:$0xf] %vm272, %v242
  %276 = vst.msk [vmem:[%s3 + $0xc] sm:$0xf] %vm272, %v243
  %277 = vst.msk [vmem:[%s3 + $0x10] sm:$0xf] %vm272, %v244
  %278 = vst.msk [vmem:[%s3 + $0x14] sm:$0xf] %vm272, %v245
  %279 = vst.msk [vmem:[%s3 + $0x18] sm:$0xf] %vm272, %v246
  %280 = vst.msk [vmem:[%s3 + $0x1c] sm:$0xf] %vm272, %v247
  %281 = vst.msk [vmem:[%s3 + $0x20] sm:$0xf] %vm272, %v248
  %282 = vst.msk [vmem:[%s3 + $0x24] sm:$0xf] %vm272, %v249
  %283 = vst.msk [vmem:[%s3 + $0x28] sm:$0xf] %vm272, %v250
  %284 = vst.msk [vmem:[%s3 + $0x2c] sm:$0xf] %vm272, %v251
  %285 = vst.msk [vmem:[%s3 + $0x30] sm:$0xf] %vm272, %v252
  %286 = vst.msk [vmem:[%s3 + $0x34] sm:$0xf] %vm272, %v253
  %287 = vst.msk [vmem:[%s3 + $0x38] sm:$0xf] %vm272, %v254
  %288 = vst.msk [vmem:[%s3 + $0x3c] sm:$0xf] %vm272, %v255
  // Predicated region
  $region14: #{structure_module_forward.47} parent=0 // pred_check
    _
  $region15: #{structure_module_forward.47} parent=0 // pred_check_branch
    %290 = sbr.rel (0) target = $region17
  $region16: #{structure_module_forward.47} parent=0 // pred_region
    _
  $region17: #{structure_module_forward.47} parent=0 // pred_fallthru
    _
  // Predicated region
  $region18: #{structure_module_forward.47} parent=0 // pred_check
    _
  $region19: #{structure_module_forward.47} parent=0 // pred_check_branch
    %292 = sbr.rel (0) target = $region21
  $region20: #{structure_module_forward.47} parent=0 // pred_region
    _
  $region21: #{structure_module_forward.47} parent=0 // pred_fallthru
    _

// kernel: structure_module_forward.45
$region0: #{structure_module_forward.45}
  #allocation0 [shape = 'u32[]', space=smem, size = 0x4, offset = 0x4, fixed_abs, tag = 'smem constant byte address 0x4 - core index']
  #allocation1 [shape = 'u32[144,128]{1,0:T(1,128)}', space=vmem, size = 0x12000, scoped, tag = 'internal scratch']
  %s0 = inlined_call_operand.vmem [shape: f32[2,8,8,16], index: 0, kind: input, shape index: {}]
  %s1 = inlined_call_operand.vmem [shape: f32[2,8,48], index: 1, kind: input, shape index: {}]
  %s2 = inlined_call_operand.vmem [shape: f32[2,8,48], index: 2, kind: input, shape index: {}]
  %s3 = inlined_call_operand.vmem [shape: f32[2,8,16], index: 3, kind: input, shape index: {}]
  %s4 = inlined_call_operand.vmem [shape: f32[2,8,16], index: 4, kind: input, shape index: {}]
  %s5 = inlined_call_operand.vmem [shape: f32[2,8,1], index: 5, kind: input, shape index: {}]
  %s6 = inlined_call_operand.vmem [shape: f32[2,1,8], index: 6, kind: input, shape index: {}]
  %s7 = inlined_call_operand.vmem [shape: bf16[16,48], index: 7, kind: input, shape index: {}]
  %s8 = inlined_call_operand.vmem [shape: f32[1,48], index: 8, kind: input, shape index: {}]
  %s9 = inlined_call_operand.vmem [shape: bf16[48,48], index: 9, kind: input, shape index: {}]
  %s10 = inlined_call_operand.vmem [shape: f32[1,48], index: 10, kind: input, shape index: {}]
  %s11 = inlined_call_operand.vmem [shape: bf16[48,16], index: 11, kind: input, shape index: {}]
  %s12 = inlined_call_operand.vmem [shape: bf16[16,16], index: 12, kind: input, shape index: {}]
  %s13 = inlined_call_operand.vmem [shape: f32[1,16], index: 13, kind: input, shape index: {}]
  %s14 = inlined_call_operand.vmem [shape: f32[1,16], index: 14, kind: input, shape index: {}]
  %s15 = inlined_call_operand.vmem [shape: f32[1,16], index: 15, kind: input, shape index: {}]
  %s16 = inlined_call_operand.vmem [shape: bf16[2,8,8,16], index: 16, kind: output, shape index: {}]
  %s17 = sld [smem:[#allocation0]]
  $region97: #{structure_module_forward.45} parent=0
    _
  %s19 = ssub.s32 1, %s17
  %s20 = scalar_select 0, %s19, %s17
  loop: start=0, step=1, limit=4
  $region2: #{structure_module_forward.45} parent=0 // loop_pre_header
    _
  $region3: #{structure_module_forward.45} parent=0 // loop_header
    %s22 = sphi 0, %s26
    %p23 = scmp.ge.s32.totalorder %s22, 4
    %s29 = sphi 0, %s41
    %s30 = sphi 0, %s37
    %s31 = sphi 0, %s29
    %s32 = sphi 0, %s30
    %s33 = sphi 0, %s31
    %s34 = sphi 0, %s32
    %s46 = sphi 0, %s48
    %s49 = sphi 0, %s46
    %s50 = sphi 0, %s49
    %s66 = sphi 0, %s50
    %s74 = sphi 0, %s76
    %s77 = sphi 0, %s74
    %s78 = sphi 0, %s77
    %s94 = sphi 0, %s78
    %s100 = sphi 0, %s102
    %s103 = sphi 0, %s100
    %s104 = sphi 0, %s103
    %s120 = sphi 0, %s104
    %s128 = sphi 0, %s130
    %s131 = sphi 0, %s128
    %s132 = sphi 0, %s131
    %s148 = sphi 0, %s132
    %s154 = sphi 0, %s156
    %s157 = sphi 0, %s154
    %s158 = sphi 0, %s157
    %s174 = sphi 0, %s158
    %s182 = sphi 0, %s184
    %s185 = sphi 0, %s182
    %s186 = sphi 0, %s185
    %s202 = sphi 0, %s186
    %s208 = sphi 0, %s210
    %s211 = sphi 0, %s208
    %s212 = sphi 0, %s211
    %s228 = sphi 0, %s212
    %s232 = sphi 0, %s232
    %s234 = sphi 0, %s232
    %s235 = sphi 0, %s234
    %s249 = sphi 0, %s235
    %s253 = sphi 0, %s253
    %s255 = sphi 0, %s253
    %s256 = sphi 0, %s255
    %s270 = sphi 0, %s256
    %s274 = sphi 0, %s274
    %s276 = sphi 0, %s274
    %s277 = sphi 0, %s276
    %s291 = sphi 0, %s277
    %s295 = sphi 0, %s295
    %s297 = sphi 0, %s295
    %s298 = sphi 0, %s297
    %s312 = sphi 0, %s298
    %s316 = sphi 0, %s316
    %s318 = sphi 0, %s316
    %s319 = sphi 0, %s318
    %s333 = sphi 0, %s319
    %s337 = sphi 0, %s337
    %s339 = sphi 0, %s337
    %s340 = sphi 0, %s339
    %s354 = sphi 0, %s340
    %s358 = sphi 0, %s358
    %s360 = sphi 0, %s358
    %s361 = sphi 0, %s360
    %s375 = sphi 0, %s361
    %s379 = sphi 0, %s379
    %s381 = sphi 0, %s379
    %s382 = sphi 0, %s381
    %s396 = sphi 0, %s382
    %s400 = sphi 0, %s400
    %s402 = sphi 0, %s400
    %s403 = sphi 0, %s402
    %s417 = sphi 0, %s403
    %s425 = sphi 0, %s427
    %s428 = sphi 0, %s425
    %s429 = sphi 0, %s428
    %s445 = sphi 0, %s429
  $region4: #{structure_module_forward.45} parent=0 // loop_header_branch
    %25 = sbr.rel (%p23) target = $region8
  $region5: #{structure_module_forward.45} parent=0 // loop_body
    %s27 = ssub.s32 %s22, 1
    %s28 = ssub.s32 %s22, 2
    %s35 = sadd.s32 1, %s30
    %p36 = scmp.ge.s32.totalorder %s35, 1
    %s37 = scalar_select %p36, 0, %s35
    %s38 = sadd.s32 1, %s29
    %s39 = scalar_select %p36, %s38, %s29
    %p40 = scmp.ge.s32.totalorder %s39, 2
    %s41 = scalar_select %p40, 0, %s39
    %s42 = ssub.s32 %s29, %s41
    %s43 = ssub.s32 %s30, %s37
    %s44 = sor.u32 %s42, %s43
    %p45 = scmp.eq.s32.totalorder %s44, 0
    %s47 = sadd.s32 %s46, 1
    %s48 = scalar_select %p45, %s46, %s47
    %p51 = pneg %p45
    %p52 = scmp.eq.s32.totalorder %s22, 1
    %p53 = por %p51, %p52
    %p54 = scmp.ne.s32.totalorder %s46, %s49
    %p55 = scmp.eq.s32.totalorder %s22, 0
    %p56 = por %p54, %p55
    %p57 = scmp.ne.s32.totalorder %s46, %s49
    %p58 = scmp.eq.s32.totalorder %s27, 1
    %p59 = por %p57, %p58
    %p60 = scmp.ne.s32.totalorder %s49, %s50
    %p61 = scmp.eq.s32.totalorder %s27, 0
    %p62 = por %p60, %p61
    %p63 = scmp.ne.s32.totalorder %s49, %s50
    %p64 = scmp.eq.s32.totalorder %s28, 1
    %p65 = por %p63, %p64
    %p67 = scmp.ne.s32.totalorder %s50, %s66
    %p68 = scmp.eq.s32.totalorder %s28, 0
    %p69 = por %p67, %p68
    %s70 = ssub.s32 %s29, %s41
    %s71 = ssub.s32 %s30, %s37
    %s72 = sor.u32 %s70, %s71
    %p73 = scmp.eq.s32.totalorder %s72, 0
    %s75 = sadd.s32 %s74, 1
    %s76 = scalar_select %p73, %s74, %s75
    %p79 = pneg %p73
    %p80 = scmp.eq.s32.totalorder %s22, 1
    %p81 = por %p79, %p80
    %p82 = scmp.ne.s32.totalorder %s74, %s77
    %p83 = scmp.eq.s32.totalorder %s22, 0
    %p84 = por %p82, %p83
    %p85 = scmp.ne.s32.totalorder %s74, %s77
    %p86 = scmp.eq.s32.totalorder %s27, 1
    %p87 = por %p85, %p86
    %p88 = scmp.ne.s32.totalorder %s77, %s78
    %p89 = scmp.eq.s32.totalorder %s27, 0
    %p90 = por %p88, %p89
    %p91 = scmp.ne.s32.totalorder %s77, %s78
    %p92 = scmp.eq.s32.totalorder %s28, 1
    %p93 = por %p91, %p92
    %p95 = scmp.ne.s32.totalorder %s78, %s94
    %p96 = scmp.eq.s32.totalorder %s28, 0
    %p97 = por %p95, %p96
    %s98 = ssub.s32 %s29, %s41
    %p99 = scmp.eq.s32.totalorder %s98, 0
    %s101 = sadd.s32 %s100, 1
    %s102 = scalar_select %p99, %s100, %s101
    %p105 = pneg %p99
    %p106 = scmp.eq.s32.totalorder %s22, 1
    %p107 = por %p105, %p106
    %p108 = scmp.ne.s32.totalorder %s100, %s103
    %p109 = scmp.eq.s32.totalorder %s22, 0
    %p110 = por %p108, %p109
    %p111 = scmp.ne.s32.totalorder %s100, %s103
    %p112 = scmp.eq.s32.totalorder %s27, 1
    %p113 = por %p111, %p112
    %p114 = scmp.ne.s32.totalorder %s103, %s104
    %p115 = scmp.eq.s32.totalorder %s27, 0
    %p116 = por %p114, %p115
    %p117 = scmp.ne.s32.totalorder %s103, %s104
    %p118 = scmp.eq.s32.totalorder %s28, 1
    %p119 = por %p117, %p118
    %p121 = scmp.ne.s32.totalorder %s104, %s120
    %p122 = scmp.eq.s32.totalorder %s28, 0
    %p123 = por %p121, %p122
    %s124 = ssub.s32 %s29, %s41
    %s125 = ssub.s32 %s30, %s37
    %s126 = sor.u32 %s124, %s125
    %p127 = scmp.eq.s32.totalorder %s126, 0
    %s129 = sadd.s32 %s128, 1
    %s130 = scalar_select %p127, %s128, %s129
    %p133 = pneg %p127
    %p134 = scmp.eq.s32.totalorder %s22, 1
    %p135 = por %p133, %p134
    %p136 = scmp.ne.s32.totalorder %s128, %s131
    %p137 = scmp.eq.s32.totalorder %s22, 0
    %p138 = por %p136, %p137
    %p139 = scmp.ne.s32.totalorder %s128, %s131
    %p140 = scmp.eq.s32.totalorder %s27, 1
    %p141 = por %p139, %p140
    %p142 = scmp.ne.s32.totalorder %s131, %s132
    %p143 = scmp.eq.s32.totalorder %s27, 0
    %p144 = por %p142, %p143
    %p145 = scmp.ne.s32.totalorder %s131, %s132
    %p146 = scmp.eq.s32.totalorder %s28, 1
    %p147 = por %p145, %p146
    %p149 = scmp.ne.s32.totalorder %s132, %s148
    %p150 = scmp.eq.s32.totalorder %s28, 0
    %p151 = por %p149, %p150
    %s152 = ssub.s32 %s29, %s41
    %p153 = scmp.eq.s32.totalorder %s152, 0
    %s155 = sadd.s32 %s154, 1
    %s156 = scalar_select %p153, %s154, %s155
    %p159 = pneg %p153
    %p160 = scmp.eq.s32.totalorder %s22, 1
    %p161 = por %p159, %p160
    %p162 = scmp.ne.s32.totalorder %s154, %s157
    %p163 = scmp.eq.s32.totalorder %s22, 0
    %p164 = por %p162, %p163
    %p165 = scmp.ne.s32.totalorder %s154, %s157
    %p166 = scmp.eq.s32.totalorder %s27, 1
    %p167 = por %p165, %p166
    %p168 = scmp.ne.s32.totalorder %s157, %s158
    %p169 = scmp.eq.s32.totalorder %s27, 0
    %p170 = por %p168, %p169
    %p171 = scmp.ne.s32.totalorder %s157, %s158
    %p172 = scmp.eq.s32.totalorder %s28, 1
    %p173 = por %p171, %p172
    %p175 = scmp.ne.s32.totalorder %s158, %s174
    %p176 = scmp.eq.s32.totalorder %s28, 0
    %p177 = por %p175, %p176
    %s178 = ssub.s32 %s29, %s41
    %s179 = ssub.s32 %s30, %s37
    %s180 = sor.u32 %s178, %s179
    %p181 = scmp.eq.s32.totalorder %s180, 0
    %s183 = sadd.s32 %s182, 1
    %s184 = scalar_select %p181, %s182, %s183
    %p187 = pneg %p181
    %p188 = scmp.eq.s32.totalorder %s22, 1
    %p189 = por %p187, %p188
    %p190 = scmp.ne.s32.totalorder %s182, %s185
    %p191 = scmp.eq.s32.totalorder %s22, 0
    %p192 = por %p190, %p191
    %p193 = scmp.ne.s32.totalorder %s182, %s185
    %p194 = scmp.eq.s32.totalorder %s27, 1
    %p195 = por %p193, %p194
    %p196 = scmp.ne.s32.totalorder %s185, %s186
    %p197 = scmp.eq.s32.totalorder %s27, 0
    %p198 = por %p196, %p197
    %p199 = scmp.ne.s32.totalorder %s185, %s186
    %p200 = scmp.eq.s32.totalorder %s28, 1
    %p201 = por %p199, %p200
    %p203 = scmp.ne.s32.totalorder %s186, %s202
    %p204 = scmp.eq.s32.totalorder %s28, 0
    %p205 = por %p203, %p204
    %s206 = ssub.s32 %s29, %s41
    %p207 = scmp.eq.s32.totalorder %s206, 0
    %s209 = sadd.s32 %s208, 1
    %s210 = scalar_select %p207, %s208, %s209
    %p213 = pneg %p207
    %p214 = scmp.eq.s32.totalorder %s22, 1
    %p215 = por %p213, %p214
    %p216 = scmp.ne.s32.totalorder %s208, %s211
    %p217 = scmp.eq.s32.totalorder %s22, 0
    %p218 = por %p216, %p217
    %p219 = scmp.ne.s32.totalorder %s208, %s211
    %p220 = scmp.eq.s32.totalorder %s27, 1
    %p221 = por %p219, %p220
    %p222 = scmp.ne.s32.totalorder %s211, %s212
    %p223 = scmp.eq.s32.totalorder %s27, 0
    %p224 = por %p222, %p223
    %p225 = scmp.ne.s32.totalorder %s211, %s212
    %p226 = scmp.eq.s32.totalorder %s28, 1
    %p227 = por %p225, %p226
    %p229 = scmp.ne.s32.totalorder %s212, %s228
    %p230 = scmp.eq.s32.totalorder %s28, 0
    %p231 = por %p229, %p230
    %s233 = sadd.s32 %s232, 1
    %p236 = scmp.eq.s32.totalorder %s22, 1
    %p237 = scmp.ne.s32.totalorder %s232, %s234
    %p238 = scmp.eq.s32.totalorder %s22, 0
    %p239 = por %p237, %p238
    %p240 = scmp.ne.s32.totalorder %s232, %s234
    %p241 = scmp.eq.s32.totalorder %s27, 1
    %p242 = por %p240, %p241
    %p243 = scmp.ne.s32.totalorder %s234, %s235
    %p244 = scmp.eq.s32.totalorder %s27, 0
    %p245 = por %p243, %p244
    %p246 = scmp.ne.s32.totalorder %s234, %s235
    %p247 = scmp.eq.s32.totalorder %s28, 1
    %p248 = por %p246, %p247
    %p250 = scmp.ne.s32.totalorder %s235, %s249
    %p251 = scmp.eq.s32.totalorder %s28, 0
    %p252 = por %p250, %p251
    %s254 = sadd.s32 %s253, 1
    %p257 = scmp.eq.s32.totalorder %s22, 1
    %p258 = scmp.ne.s32.totalorder %s253, %s255
    %p259 = scmp.eq.s32.totalorder %s22, 0
    %p260 = por %p258, %p259
    %p261 = scmp.ne.s32.totalorder %s253, %s255
    %p262 = scmp.eq.s32.totalorder %s27, 1
    %p263 = por %p261, %p262
    %p264 = scmp.ne.s32.totalorder %s255, %s256
    %p265 = scmp.eq.s32.totalorder %s27, 0
    %p266 = por %p264, %p265
    %p267 = scmp.ne.s32.totalorder %s255, %s256
    %p268 = scmp.eq.s32.totalorder %s28, 1
    %p269 = por %p267, %p268
    %p271 = scmp.ne.s32.totalorder %s256, %s270
    %p272 = scmp.eq.s32.totalorder %s28, 0
    %p273 = por %p271, %p272
    %s275 = sadd.s32 %s274, 1
    %p278 = scmp.eq.s32.totalorder %s22, 1
    %p279 = scmp.ne.s32.totalorder %s274, %s276
    %p280 = scmp.eq.s32.totalorder %s22, 0
    %p281 = por %p279, %p280
    %p282 = scmp.ne.s32.totalorder %s274, %s276
    %p283 = scmp.eq.s32.totalorder %s27, 1
    %p284 = por %p282, %p283
    %p285 = scmp.ne.s32.totalorder %s276, %s277
    %p286 = scmp.eq.s32.totalorder %s27, 0
    %p287 = por %p285, %p286
    %p288 = scmp.ne.s32.totalorder %s276, %s277
    %p289 = scmp.eq.s32.totalorder %s28, 1
    %p290 = por %p288, %p289
    %p292 = scmp.ne.s32.totalorder %s277, %s291
    %p293 = scmp.eq.s32.totalorder %s28, 0
    %p294 = por %p292, %p293
    %s296 = sadd.s32 %s295, 1
    %p299 = scmp.eq.s32.totalorder %s22, 1
    %p300 = scmp.ne.s32.totalorder %s295, %s297
    %p301 = scmp.eq.s32.totalorder %s22, 0
    %p302 = por %p300, %p301
    %p303 = scmp.ne.s32.totalorder %s295, %s297
    %p304 = scmp.eq.s32.totalorder %s27, 1
    %p305 = por %p303, %p304
    %p306 = scmp.ne.s32.totalorder %s297, %s298
    %p307 = scmp.eq.s32.totalorder %s27, 0
    %p308 = por %p306, %p307
    %p309 = scmp.ne.s32.totalorder %s297, %s298
    %p310 = scmp.eq.s32.totalorder %s28, 1
    %p311 = por %p309, %p310
    %p313 = scmp.ne.s32.totalorder %s298, %s312
    %p314 = scmp.eq.s32.totalorder %s28, 0
    %p315 = por %p313, %p314
    %s317 = sadd.s32 %s316, 1
    %p320 = scmp.eq.s32.totalorder %s22, 1
    %p321 = scmp.ne.s32.totalorder %s316, %s318
    %p322 = scmp.eq.s32.totalorder %s22, 0
    %p323 = por %p321, %p322
    %p324 = scmp.ne.s32.totalorder %s316, %s318
    %p325 = scmp.eq.s32.totalorder %s27, 1
    %p326 = por %p324, %p325
    %p327 = scmp.ne.s32.totalorder %s318, %s319
    %p328 = scmp.eq.s32.totalorder %s27, 0
    %p329 = por %p327, %p328
    %p330 = scmp.ne.s32.totalorder %s318, %s319
    %p331 = scmp.eq.s32.totalorder %s28, 1
    %p332 = por %p330, %p331
    %p334 = scmp.ne.s32.totalorder %s319, %s333
    %p335 = scmp.eq.s32.totalorder %s28, 0
    %p336 = por %p334, %p335
    %s338 = sadd.s32 %s337, 1
    %p341 = scmp.eq.s32.totalorder %s22, 1
    %p342 = scmp.ne.s32.totalorder %s337, %s339
    %p343 = scmp.eq.s32.totalorder %s22, 0
    %p344 = por %p342, %p343
    %p345 = scmp.ne.s32.totalorder %s337, %s339
    %p346 = scmp.eq.s32.totalorder %s27, 1
    %p347 = por %p345, %p346
    %p348 = scmp.ne.s32.totalorder %s339, %s340
    %p349 = scmp.eq.s32.totalorder %s27, 0
    %p350 = por %p348, %p349
    %p351 = scmp.ne.s32.totalorder %s339, %s340
    %p352 = scmp.eq.s32.totalorder %s28, 1
    %p353 = por %p351, %p352
    %p355 = scmp.ne.s32.totalorder %s340, %s354
    %p356 = scmp.eq.s32.totalorder %s28, 0
    %p357 = por %p355, %p356
    %s359 = sadd.s32 %s358, 1
    %p362 = scmp.eq.s32.totalorder %s22, 1
    %p363 = scmp.ne.s32.totalorder %s358, %s360
    %p364 = scmp.eq.s32.totalorder %s22, 0
    %p365 = por %p363, %p364
    %p366 = scmp.ne.s32.totalorder %s358, %s360
    %p367 = scmp.eq.s32.totalorder %s27, 1
    %p368 = por %p366, %p367
    %p369 = scmp.ne.s32.totalorder %s360, %s361
    %p370 = scmp.eq.s32.totalorder %s27, 0
    %p371 = por %p369, %p370
    %p372 = scmp.ne.s32.totalorder %s360, %s361
    %p373 = scmp.eq.s32.totalorder %s28, 1
    %p374 = por %p372, %p373
    %p376 = scmp.ne.s32.totalorder %s361, %s375
    %p377 = scmp.eq.s32.totalorder %s28, 0
    %p378 = por %p376, %p377
    %s380 = sadd.s32 %s379, 1
    %p383 = scmp.eq.s32.totalorder %s22, 1
    %p384 = scmp.ne.s32.totalorder %s379, %s381
    %p385 = scmp.eq.s32.totalorder %s22, 0
    %p386 = por %p384, %p385
    %p387 = scmp.ne.s32.totalorder %s379, %s381
    %p388 = scmp.eq.s32.totalorder %s27, 1
    %p389 = por %p387, %p388
    %p390 = scmp.ne.s32.totalorder %s381, %s382
    %p391 = scmp.eq.s32.totalorder %s27, 0
    %p392 = por %p390, %p391
    %p393 = scmp.ne.s32.totalorder %s381, %s382
    %p394 = scmp.eq.s32.totalorder %s28, 1
    %p395 = por %p393, %p394
    %p397 = scmp.ne.s32.totalorder %s382, %s396
    %p398 = scmp.eq.s32.totalorder %s28, 0
    %p399 = por %p397, %p398
    %s401 = sadd.s32 %s400, 1
    %p404 = scmp.eq.s32.totalorder %s22, 1
    %p405 = scmp.ne.s32.totalorder %s400, %s402
    %p406 = scmp.eq.s32.totalorder %s22, 0
    %p407 = por %p405, %p406
    %p408 = scmp.ne.s32.totalorder %s400, %s402
    %p409 = scmp.eq.s32.totalorder %s27, 1
    %p410 = por %p408, %p409
    %p411 = scmp.ne.s32.totalorder %s402, %s403
    %p412 = scmp.eq.s32.totalorder %s27, 0
    %p413 = por %p411, %p412
    %p414 = scmp.ne.s32.totalorder %s402, %s403
    %p415 = scmp.eq.s32.totalorder %s28, 1
    %p416 = por %p414, %p415
    %p418 = scmp.ne.s32.totalorder %s403, %s417
    %p419 = scmp.eq.s32.totalorder %s28, 0
    %p420 = por %p418, %p419
    %s421 = ssub.s32 %s29, %s41
    %s422 = ssub.s32 %s30, %s37
    %s423 = sor.u32 %s421, %s422
    %p424 = scmp.eq.s32.totalorder %s423, 0
    %s426 = sadd.s32 %s425, 1
    %s427 = scalar_select %p424, %s425, %s426
    %p430 = pneg %p424
    %p431 = scmp.eq.s32.totalorder %s22, 1
    %p432 = por %p430, %p431
    %p433 = scmp.ne.s32.totalorder %s425, %s428
    %p434 = scmp.eq.s32.totalorder %s22, 0
    %p435 = por %p433, %p434
    %p436 = scmp.ne.s32.totalorder %s425, %s428
    %p437 = scmp.eq.s32.totalorder %s27, 1
    %p438 = por %p436, %p437
    %p439 = scmp.ne.s32.totalorder %s428, %s429
    %p440 = scmp.eq.s32.totalorder %s27, 0
    %p441 = por %p439, %p440
    %p442 = scmp.ne.s32.totalorder %s428, %s429
    %p443 = scmp.eq.s32.totalorder %s28, 1
    %p444 = por %p442, %p443
    %p446 = scmp.ne.s32.totalorder %s429, %s445
    %p447 = scmp.eq.s32.totalorder %s28, 0
    %p448 = por %p446, %p447
    %p449 = scmp.le.s32.totalorder 1, %s22
    %p450 = scmp.lt.s32.totalorder %s22, 3
    %p451 = pnand %p449, %p450
    %p452 = pneg %p451
    // Predicated region
    $region9: #{structure_module_forward.45} parent=5 // pred_check
      _
    $region10: #{structure_module_forward.45} parent=5 // pred_check_branch
      %454 = sbr.rel (%p451) target = $region12
    $region11: #{structure_module_forward.45} parent=5 // pred_region
      %s455 = ssub.s32 %s22, 1
      // Predicated region
      $region13: #{structure_module_forward.45} parent=11 // pred_check
        %p456 = pneg %p245
      $region14: #{structure_module_forward.45} parent=11 // pred_check_branch
        %458 = sbr.rel (%p456) target = $region16
      $region15: #{structure_module_forward.45} parent=11 // pred_region
        _
      $region16: #{structure_module_forward.45} parent=11 // pred_fallthru
        _
      // Predicated region
      $region17: #{structure_module_forward.45} parent=11 // pred_check
        %p459 = pneg %p266
      $region18: #{structure_module_forward.45} parent=11 // pred_check_branch
        %461 = sbr.rel (%p459) target = $region20
      $region19: #{structure_module_forward.45} parent=11 // pred_region
        _
      $region20: #{structure_module_forward.45} parent=11 // pred_fallthru
        _
      // Predicated region
      $region21: #{structure_module_forward.45} parent=11 // pred_check
        %p462 = pneg %p287
      $region22: #{structure_module_forward.45} parent=11 // pred_check_branch
        %464 = sbr.rel (%p462) target = $region24
      $region23: #{structure_module_forward.45} parent=11 // pred_region
        _
      $region24: #{structure_module_forward.45} parent=11 // pred_fallthru
        _
      // Predicated region
      $region25: #{structure_module_forward.45} parent=11 // pred_check
        %p465 = pneg %p308
      $region26: #{structure_module_forward.45} parent=11 // pred_check_branch
        %467 = sbr.rel (%p465) target = $region28
      $region27: #{structure_module_forward.45} parent=11 // pred_region
        _
      $region28: #{structure_module_forward.45} parent=11 // pred_fallthru
        _
      // Predicated region
      $region29: #{structure_module_forward.45} parent=11 // pred_check
        %p468 = pneg %p329
      $region30: #{structure_module_forward.45} parent=11 // pred_check_branch
        %470 = sbr.rel (%p468) target = $region32
      $region31: #{structure_module_forward.45} parent=11 // pred_region
        _
      $region32: #{structure_module_forward.45} parent=11 // pred_fallthru
        _
      // Predicated region
      $region33: #{structure_module_forward.45} parent=11 // pred_check
        %p471 = pneg %p350
      $region34: #{structure_module_forward.45} parent=11 // pred_check_branch
        %473 = sbr.rel (%p471) target = $region36
      $region35: #{structure_module_forward.45} parent=11 // pred_region
        _
      $region36: #{structure_module_forward.45} parent=11 // pred_fallthru
        _
      // Predicated region
      $region37: #{structure_module_forward.45} parent=11 // pred_check
        %p474 = pneg %p371
      $region38: #{structure_module_forward.45} parent=11 // pred_check_branch
        %476 = sbr.rel (%p474) target = $region40
      $region39: #{structure_module_forward.45} parent=11 // pred_region
        _
      $region40: #{structure_module_forward.45} parent=11 // pred_fallthru
        _
      // Predicated region
      $region41: #{structure_module_forward.45} parent=11 // pred_check
        %p477 = pneg %p392
      $region42: #{structure_module_forward.45} parent=11 // pred_check_branch
        %479 = sbr.rel (%p477) target = $region44
      $region43: #{structure_module_forward.45} parent=11 // pred_region
        _
      $region44: #{structure_module_forward.45} parent=11 // pred_fallthru
        _
      // Predicated region
      $region45: #{structure_module_forward.45} parent=11 // pred_check
        %p480 = pneg %p413
      $region46: #{structure_module_forward.45} parent=11 // pred_check_branch
        %482 = sbr.rel (%p480) target = $region48
      $region47: #{structure_module_forward.45} parent=11 // pred_region
        _
      $region48: #{structure_module_forward.45} parent=11 // pred_fallthru
        _
    $region12: #{structure_module_forward.45} parent=5 // pred_fallthru
      _
    %p483 = scmp.lt.s32.totalorder %s22, 2
    // Predicated region
    $region49: #{structure_module_forward.45} parent=5 // pred_check
      %p484 = pneg %p483
    $region50: #{structure_module_forward.45} parent=5 // pred_check_branch
      %486 = sbr.rel (%p484) target = $region52
    $region51: #{structure_module_forward.45} parent=5 // pred_region
      // Predicated region
      $region53: #{structure_module_forward.45} parent=51 // pred_check
        %p487 = pneg %p56
      $region54: #{structure_module_forward.45} parent=51 // pred_check_branch
        %489 = sbr.rel (%p487) target = $region56
      $region55: #{structure_module_forward.45} parent=51 // pred_region
        %s490 = smul.u32 8, %s30
        %p491 = scmp.lt.s32.totalorder %s29, 1
        %s492 = scalar_select %p491, %s29, 1
        %p493 = scmp.lt.s32.totalorder %s490, 7
        %s494 = scalar_select %p493, %s490, 7
        %s495 = smul.addr %s492, 8
        %s496 = sadd.s32 %s494, %s495
        %s497 = smul.addr %s496, 8
        %s498 = scalar_lea.vmem %s0, %s497
        %s499 = smul.u32 8, %s30
      $region56: #{structure_module_forward.45} parent=51 // pred_fallthru
        _
      // Predicated region
      $region57: #{structure_module_forward.45} parent=51 // pred_check
        %p500 = pneg %p84
      $region58: #{structure_module_forward.45} parent=51 // pred_check_branch
        %502 = sbr.rel (%p500) target = $region60
      $region59: #{structure_module_forward.45} parent=51 // pred_region
        %p503 = scmp.lt.s32.totalorder %s29, 1
        %s504 = scalar_select %p503, %s29, 1
        %p505 = scmp.lt.s32.totalorder %s30, 0
        %s506 = scalar_select %p505, %s30, 0
        %s507 = sadd.s32 %s506, %s504
        %s508 = smul.addr %s507, 8
        %s509 = scalar_lea.vmem %s1, %s508
      $region60: #{structure_module_forward.45} parent=51 // pred_fallthru
        _
      // Predicated region
      $region61: #{structure_module_forward.45} parent=51 // pred_check
        %p510 = pneg %p110
      $region62: #{structure_module_forward.45} parent=51 // pred_check_branch
        %512 = sbr.rel (%p510) target = $region64
      $region63: #{structure_module_forward.45} parent=51 // pred_region
        %p513 = scmp.lt.s32.totalorder %s29, 1
        %s514 = scalar_select %p513, %s29, 1
        %s515 = smul.addr %s514, 8
        %s516 = scalar_lea.vmem %s2, %s515
      $region64: #{structure_module_forward.45} parent=51 // pred_fallthru
        _
      // Predicated region
      $region65: #{structure_module_forward.45} parent=51 // pred_check
        %p517 = pneg %p138
      $region66: #{structure_module_forward.45} parent=51 // pred_check_branch
        %519 = sbr.rel (%p517) target = $region68
      $region67: #{structure_module_forward.45} parent=51 // pred_region
        %p520 = scmp.lt.s32.totalorder %s29, 1
        %s521 = scalar_select %p520, %s29, 1
        %p522 = scmp.lt.s32.totalorder %s30, 0
        %s523 = scalar_select %p522, %s30, 0
        %s524 = sadd.s32 %s523, %s521
        %s525 = smul.addr %s524, 8
        %s526 = scalar_lea.vmem %s3, %s525
      $region68: #{structure_module_forward.45} parent=51 // pred_fallthru
        _
      // Predicated region
      $region69: #{structure_module_forward.45} parent=51 // pred_check
        %p527 = pneg %p164
      $region70: #{structure_module_forward.45} parent=51 // pred_check_branch
        %529 = sbr.rel (%p527) target = $region72
      $region71: #{structure_module_forward.45} parent=51 // pred_region
        %p530 = scmp.lt.s32.totalorder %s29, 1
        %s531 = scalar_select %p530, %s29, 1
        %s532 = smul.addr %s531, 8
        %s533 = scalar_lea.vmem %s4, %s532
      $region72: #{structure_module_forward.45} parent=51 // pred_fallthru
        _
      // Predicated region
      $region73: #{structure_module_forward.45} parent=51 // pred_check
        %p534 = pneg %p192
      $region74: #{structure_module_forward.45} parent=51 // pred_check_branch
        %536 = sbr.rel (%p534) target = $region76
      $region75: #{structure_module_forward.45} parent=51 // pred_region
        %p537 = scmp.lt.s32.totalorder %s29, 1
        %s538 = scalar_select %p537, %s29, 1
        %p539 = scmp.lt.s32.totalorder %s30, 0
        %s540 = scalar_select %p539, %s30, 0
        %s541 = sadd.s32 %s540, %s538
        %s542 = smul.addr %s541, 8
        %s543 = scalar_lea.vmem %s5, %s542
      $region76: #{structure_module_forward.45} parent=51 // pred_fallthru
        _
      // Predicated region
      $region77: #{structure_module_forward.45} parent=51 // pred_check
        %p544 = pneg %p218
      $region78: #{structure_module_forward.45} parent=51 // pred_check_branch
        %546 = sbr.rel (%p544) target = $region80
      $region79: #{structure_module_forward.45} parent=51 // pred_region
        %p547 = scmp.lt.s32.totalorder %s29, 1
        %s548 = scalar_select %p547, %s29, 1
        %s549 = scalar_lea.vmem %s6, %s548
      $region80: #{structure_module_forward.45} parent=51 // pred_fallthru
        _
    $region52: #{structure_module_forward.45} parent=5 // pred_fallthru
      _
    %p550 = scmp.le.s32.totalorder 1, %s22
    %p551 = scmp.lt.s32.totalorder %s22, 3
    %p552 = pnand %p550, %p551
    %p553 = pneg %p552
    // Predicated region
    $region81: #{structure_module_forward.45} parent=5 // pred_check
      _
    $region82: #{structure_module_forward.45} parent=5 // pred_check_branch
      %555 = sbr.rel (%p552) target = $region84
    $region83: #{structure_module_forward.45} parent=5 // pred_region
      %s556 = ssub.s32 %s22, 1
      %s557 = smul.u32 8, %s32
      %p558 = scmp.lt.s32.totalorder %s31, 1
      %s559 = scalar_select %p558, %s31, 1
      %p560 = scmp.lt.s32.totalorder %s557, 7
      %s561 = scalar_select %p560, %s557, 7
      %s562 = smul.addr %s559, 8
      %s563 = sadd.s32 %s561, %s562
      %s564 = smul.addr %s563, 8
      %s565 = scalar_lea.vmem %s0, %s564
      %p566 = pneg %p62
      %p567 = pneg %p59
      %p568 = scmp.lt.s32.totalorder %s31, 1
      %s569 = scalar_select %p568, %s31, 1
      %p570 = scmp.lt.s32.totalorder %s32, 0
      %s571 = scalar_select %p570, %s32, 0
      %s572 = sadd.s32 %s571, %s569
      %s573 = smul.addr %s572, 8
      %s574 = scalar_lea.vmem %s1, %s573
      %p575 = pneg %p90
      %p576 = pneg %p87
      %p577 = scmp.lt.s32.totalorder %s31, 1
      %s578 = scalar_select %p577, %s31, 1
      %s579 = smul.addr %s578, 8
      %s580 = scalar_lea.vmem %s2, %s579
      %p581 = pneg %p116
      %p582 = pneg %p113
      %p583 = scmp.lt.s32.totalorder %s31, 1
      %s584 = scalar_select %p583, %s31, 1
      %p585 = scmp.lt.s32.totalorder %s32, 0
      %s586 = scalar_select %p585, %s32, 0
      %s587 = sadd.s32 %s586, %s584
      %s588 = smul.addr %s587, 8
      %s589 = scalar_lea.vmem %s3, %s588
      %p590 = pneg %p144
      %p591 = pneg %p141
      %p592 = scmp.lt.s32.totalorder %s31, 1
      %s593 = scalar_select %p592, %s31, 1
      %s594 = smul.addr %s593, 8
      %s595 = scalar_lea.vmem %s4, %s594
      %p596 = pneg %p170
      %p597 = pneg %p167
      %p598 = scmp.lt.s32.totalorder %s31, 1
      %s599 = scalar_select %p598, %s31, 1
      %p600 = scmp.lt.s32.totalorder %s32, 0
      %s601 = scalar_select %p600, %s32, 0
      %s602 = sadd.s32 %s601, %s599
      %s603 = smul.addr %s602, 8
      %s604 = scalar_lea.vmem %s5, %s603
      %p605 = pneg %p198
      %p606 = pneg %p195
      %p607 = scmp.lt.s32.totalorder %s31, 1
      %s608 = scalar_select %p607, %s31, 1
      %s609 = scalar_lea.vmem %s6, %s608
      %p610 = pneg %p224
      %p611 = pneg %p221
      %p612 = pneg %p245
      %p613 = pneg %p242
      %p614 = pneg %p266
      %p615 = pneg %p263
      %p616 = pneg %p287
      %p617 = pneg %p284
      %p618 = pneg %p308
      %p619 = pneg %p305
      %p620 = pneg %p329
      %p621 = pneg %p326
      %p622 = pneg %p350
      %p623 = pneg %p347
      %p624 = pneg %p371
      %p625 = pneg %p368
      %p626 = pneg %p392
      %p627 = pneg %p389
      %p628 = pneg %p413
      %p629 = pneg %p410
      %p630 = pneg %p441
      %p631 = pneg %p438
      %s632 = smul.u32 8, %s32
      %p633 = scmp.lt.s32.totalorder %s31, 1
      %s634 = scalar_select %p633, %s31, 1
      %p635 = scmp.lt.s32.totalorder %s632, 7
      %s636 = scalar_select %p635, %s632, 7
      %s637 = smul.addr %s634, 8
      %s638 = sadd.s32 %s636, %s637
      %s639 = smul.addr %s638, 4
      %s640 = scalar_lea.vmem %s16, %s639
      %s641 = smul.u32 8, %s32
      %p642 = scmp.lt.s32.totalorder %s31, 1
      %s643 = scalar_select %p642, %s31, 1
      %p644 = scmp.lt.s32.totalorder %s641, 7
      %s645 = scalar_select %p644, %s641, 7
      %s646 = smul.addr %s643, 8
      %s647 = sadd.s32 %s645, %s646
      %s648 = smul.addr %s647, 8
      %s649 = scalar_lea.vmem %s0, %s648
      %s650 = smul.u32 8, %s32
      %p651 = scmp.lt.s32.totalorder %s31, 1
      %s652 = scalar_select %p651, %s31, 1
      %p653 = scmp.lt.s32.totalorder %s32, 0
      %s654 = scalar_select %p653, %s32, 0
      %s655 = sadd.s32 %s654, %s652
      %s656 = smul.addr %s655, 8
      %s657 = scalar_lea.vmem %s1, %s656
      %p658 = scmp.lt.s32.totalorder %s31, 1
      %s659 = scalar_select %p658, %s31, 1
      %s660 = smul.addr %s659, 8
      %s661 = scalar_lea.vmem %s2, %s660
      %p662 = scmp.lt.s32.totalorder %s31, 1
      %s663 = scalar_select %p662, %s31, 1
      %p664 = scmp.lt.s32.totalorder %s32, 0
      %s665 = scalar_select %p664, %s32, 0
      %s666 = sadd.s32 %s665, %s663
      %s667 = smul.addr %s666, 8
      %s668 = scalar_lea.vmem %s3, %s667
      %p669 = scmp.lt.s32.totalorder %s31, 1
      %s670 = scalar_select %p669, %s31, 1
      %s671 = smul.addr %s670, 8
      %s672 = scalar_lea.vmem %s4, %s671
      %p673 = scmp.lt.s32.totalorder %s31, 1
      %s674 = scalar_select %p673, %s31, 1
      %p675 = scmp.lt.s32.totalorder %s32, 0
      %s676 = scalar_select %p675, %s32, 0
      %s677 = sadd.s32 %s676, %s674
      %s678 = smul.addr %s677, 8
      %s679 = scalar_lea.vmem %s5, %s678
      %p680 = scmp.lt.s32.totalorder %s31, 1
      %s681 = scalar_select %p680, %s31, 1
      %s682 = scalar_lea.vmem %s6, %s681
      %s683 = smul.u32 8, %s32
      %p684 = scmp.lt.s32.totalorder %s31, 1
      %s685 = scalar_select %p684, %s31, 1
      %p686 = scmp.lt.s32.totalorder %s683, 7
      %s687 = scalar_select %p686, %s683, 7
      %s688 = smul.addr %s685, 8
      %s689 = sadd.s32 %s687, %s688
      %s690 = smul.addr %s689, 4
      %s691 = scalar_lea.vmem %s16, %s690
      %s692 = smul.u32 8, %s32
      %v694 = vld [vmem:[%s649] sm:$0xff]
      %v695 = vld [vmem:[%s649 + $0x8] sm:$0xff]
      %v696 = vld [vmem:[%s649 + $0x10] sm:$0xff]
      %v697 = vld [vmem:[%s649 + $0x18] sm:$0xff]
      %v698 = vld [vmem:[%s649 + $0x20] sm:$0xff]
      %v699 = vld [vmem:[%s649 + $0x28] sm:$0xff]
      %v700 = vld [vmem:[%s649 + $0x30] sm:$0xff]
      %v701 = vld [vmem:[%s649 + $0x38] sm:$0xff]
      %v702 = vld [vmem:[%s7] sm:$0xf]
      %v703 = vld [vmem:[%s7 + $0x4] sm:$0xf]
      %v704 = vpack.c.bf16 %v695, %v694
      %v705 = vpack.c.bf16 %v697, %v696
      %v706 = vpack.c.bf16 %v699, %v698
      %v707 = vpack.c.bf16 %v701, %v700
      %v710 = vunpack.c.l.b16 %v702
      %v711 = vunpack.c.l.b16 %v703
      %v712 = vpack.c.b16 %v711, %v710
      %vm714 = vcmask 130048
      %v716 = vsel %vm714, %v704, 0
      %v719 = vsel %vm714, %v705, 0
      %v722 = vsel %vm714, %v706, 0
      %v725 = vsel %vm714, %v707, 0
      %727 = vmatprep.subr.bf16.mxu0 0
      %728 = vmatpush1.bf16.msra.mxu0 %v712
      %729 = vmatprep.subr.bf16.mxu0 0
      %730 = vmatpush1.bf16.msra.mxu0 0
      %731 = vmatprep.subr.bf16.mxu0 0
      %732 = vmatpush1.bf16.msra.mxu0 0
      %733 = vmatprep.subr.bf16.mxu0 0
      %734 = vmatpush1.bf16.msra.mxu0 0
      %735 = vmatprep.subr.bf16.mxu0 0
      %736 = vmatpush1.bf16.msra.mxu0 0
      %737 = vmatprep.subr.bf16.mxu0 0
      %738 = vmatpush1.bf16.msra.mxu0 0
      %739 = vmatprep.subr.bf16.mxu0 0
      %740 = vmatpush1.bf16.msra.mxu0 0
      %741 = vmatprep.subr.bf16.mxu0 0
      %742 = vmatpush1.bf16.msra.mxu0 0
      %743 = vmatprep.subr.bf16.mxu0 0
      %744 = vmatpush1.bf16.msra.mxu0 0
      %745 = vmatprep.subr.bf16.mxu0 0
      %746 = vmatpush1.bf16.msra.mxu0 0
      %747 = vmatprep.subr.bf16.mxu0 0
      %748 = vmatpush1.bf16.msra.mxu0 0
      %749 = vmatprep.subr.bf16.mxu0 0
      %750 = vmatpush1.bf16.msra.mxu0 0
      %751 = vmatprep.subr.bf16.mxu0 0
      %752 = vmatpush1.bf16.msra.mxu0 0
      %753 = vmatprep.subr.bf16.mxu0 0
      %754 = vmatpush1.bf16.msra.mxu0 0
      %755 = vmatprep.subr.bf16.mxu0 0
      %756 = vmatpush1.bf16.msra.mxu0 0
      %757 = vmatprep.subr.bf16.mxu0 0
      %758 = vmatpush1.bf16.msra.mxu0 0
      %759 = vmatprep.mubr.bf16.mxu0 0
      %760 = vmatmul.mubr.bf16.gmra.mrb[0].mxu0 %v716
      %v761 = vpop.f32.mrb[0].mxu0
      %v762 = vadd.f32 0.0, %v761
      %v763 = vpop.f32.mrb[0].mxu0
      %v764 = vpop.f32.mrb[0].mxu0
      %v765 = vadd.f32 0.0, %v764
      %v766 = vpop.f32.mrb[0].mxu0
      %767 = vmatprep.mubr.bf16.mxu0 0
      %768 = vmatmul.mubr.bf16.gmra.mrb[0].mxu0 %v719
      %v769 = vpop.f32.mrb[0].mxu0
      %v770 = vadd.f32 0.0, %v769
      %v771 = vpop.f32.mrb[0].mxu0
      %v772 = vpop.f32.mrb[0].mxu0
      %v773 = vadd.f32 0.0, %v772
      %v774 = vpop.f32.mrb[0].mxu0
      %775 = vmatprep.mubr.bf16.mxu0 0
      %776 = vmatmul.mubr.bf16.gmra.mrb[0].mxu0 %v722
      %v777 = vpop.f32.mrb[0].mxu0
      %v778 = vadd.f32 0.0, %v777
      %v779 = vpop.f32.mrb[0].mxu0
      %v780 = vpop.f32.mrb[0].mxu0
      %v781 = vadd.f32 0.0, %v780
      %v782 = vpop.f32.mrb[0].mxu0
      %783 = vmatprep.mubr.bf16.mxu0 0
      %784 = vmatmul.mubr.bf16.gmra.mrb[0].mxu0 %v725
      %v785 = vpop.f32.mrb[0].mxu0
      %v786 = vadd.f32 0.0, %v785
      %v787 = vpop.f32.mrb[0].mxu0
      %v788 = vpop.f32.mrb[0].mxu0
      %v789 = vadd.f32 0.0, %v788
      %v790 = vpop.f32.mrb[0].mxu0
      %791 = vdwg.mxu0
      %v792 = vld [vmem:[%s657] sm:$0xff]
      %v794 = vcombine.high %v792, %v792
      %v796 = vunpack.c.l.s4 1966171168
      %v797 = vunpack.c.0.s8 %v796
      %v798 = vlaneseq
      %v799 = vshrl.u32 %v798, 7
      %v800 = vsub.s32 %v797, %v799
      %v801 = vrot.slane %v792, %v800
      %v803 = vunpack.c.l.s4 1966171168
      %v804 = vunpack.c.0.s8 %v803
      %v805 = vlaneseq
      %v806 = vshrl.u32 %v805, 7
      %v807 = vsub.s32 %v804, %v806
      %v808 = vrot.slane %v794, %v807
      %v809 = vcombine.high %v801, %v801
      %v810 = vcombine.high %v808, %v808
      %v812 = vunpack.c.l.s4 1966171168
      %v813 = vunpack.c.0.s8 %v812
      %v814 = vlaneseq
      %v815 = vshrl.u32 %v814, 7
      %v816 = vsub.s32 %v813, %v815
      %v817 = vrot.slane %v801, %v816
      %v819 = vunpack.c.l.s4 1966171168
      %v820 = vunpack.c.0.s8 %v819
      %v821 = vlaneseq
      %v822 = vshrl.u32 %v821, 7
      %v823 = vsub.s32 %v820, %v822
      %v824 = vrot.slane %v808, %v823
      %v826 = vunpack.c.l.s4 1966171168
      %v827 = vunpack.c.0.s8 %v826
      %v828 = vlaneseq
      %v829 = vshrl.u32 %v828, 7
      %v830 = vsub.s32 %v827, %v829
      %v831 = vrot.slane %v809, %v830
      %v833 = vunpack.c.l.s4 1966171168
      %v834 = vunpack.c.0.s8 %v833
      %v835 = vlaneseq
      %v836 = vshrl.u32 %v835, 7
      %v837 = vsub.s32 %v834, %v836
      %v838 = vrot.slane %v810, %v837
      %v839 = vcombine.high %v817, %v817
      %v840 = vcombine.high %v824, %v824
      %v841 = vcombine.high %v831, %v831
      %v842 = vcombine.high %v838, %v838
      %v843 = vlaneseq
      %v844 = vshrl.u32 %v843, 7
      %v845 = vsub.s32 0, %v844
      %v846 = vrot.slane %v817, %v845
      %v847 = vlaneseq
      %v848 = vshrl.u32 %v847, 7
      %v849 = vsub.s32 0, %v848
      %v850 = vrot.slane %v831, %v849
      %v851 = vlaneseq
      %v852 = vshrl.u32 %v851, 7
      %v853 = vsub.s32 0, %v852
      %v854 = vrot.slane %v839, %v853
      %v855 = vlaneseq
      %v856 = vshrl.u32 %v855, 7
      %v857 = vsub.s32 0, %v856
      %v858 = vrot.slane %v841, %v857
      %v859 = vlaneseq
      %v860 = vshrl.u32 %v859, 7
      %v861 = vsub.s32 0, %v860
      %v862 = vrot.slane %v824, %v861
      %v863 = vlaneseq
      %v864 = vshrl.u32 %v863, 7
      %v865 = vsub.s32 0, %v864
      %v866 = vrot.slane %v838, %v865
      %v867 = vlaneseq
      %v868 = vshrl.u32 %v867, 7
      %v869 = vsub.s32 0, %v868
      %v870 = vrot.slane %v840, %v869
      %v871 = vlaneseq
      %v872 = vshrl.u32 %v871, 7
      %v873 = vsub.s32 0, %v872
      %v874 = vrot.slane %v842, %v873
      %v883 = vadd.f32 %v762, %v846
      %v884 = vadd.f32 %v765, %v850
      %v885 = vadd.f32 %v770, %v854
      %v886 = vadd.f32 %v773, %v858
      %v887 = vadd.f32 %v778, %v862
      %v888 = vadd.f32 %v781, %v866
      %v889 = vadd.f32 %v786, %v870
      %v890 = vadd.f32 %v789, %v874
      %v891 = vld [vmem:[%s661] sm:$0xff]
      %v892 = vadd.f32 %v883, %v891
      %v893 = vadd.f32 %v884, %v891
      %v894 = vadd.f32 %v885, %v891
      %v895 = vadd.f32 %v886, %v891
      %v896 = vadd.f32 %v887, %v891
      %v897 = vadd.f32 %v888, %v891
      %v898 = vadd.f32 %v889, %v891
      %v899 = vadd.f32 %v890, %v891
      %v900 = vld [vmem:[%s8] sm:$0x1]
      %v902 = vlaneseq
      %v903 = vshrl.u32 %v902, 7
      %v904 = vsub.s32 0, %v903
      %v905 = vrot.slane %v900, %v904
      %v907 = vadd.f32 %v892, %v905
      %v908 = vadd.f32 %v893, %v905
      %v909 = vadd.f32 %v894, %v905
      %v910 = vadd.f32 %v895, %v905
      %v911 = vadd.f32 %v896, %v905
      %v912 = vadd.f32 %v897, %v905
      %v913 = vadd.f32 %v898, %v905
      %v914 = vadd.f32 %v899, %v905
      %v915 = vmax.f32 %v907, 0.0
      %v916 = vmax.f32 %v908, 0.0
      %v917 = vmax.f32 %v909, 0.0
      %v918 = vmax.f32 %v910, 0.0
      %v919 = vmax.f32 %v911, 0.0
      %v920 = vmax.f32 %v912, 0.0
      %v921 = vmax.f32 %v913, 0.0
      %v922 = vmax.f32 %v914, 0.0
      %v923 = vld [vmem:[%s9] sm:$0xf]
      %v924 = vld [vmem:[%s9 + $0x4] sm:$0xf]
      %v925 = vld [vmem:[%s9 + $0x8] sm:$0xf]
      %v926 = vld [vmem:[%s9 + $0xc] sm:$0xf]
      %v927 = vld [vmem:[%s9 + $0x10] sm:$0xf]
      %v928 = vld [vmem:[%s9 + $0x14] sm:$0xf]
      %v929 = vpack.c.bf16 %v916, %v915
      %v930 = vpack.c.bf16 %v918, %v917
      %v931 = vpack.c.bf16 %v920, %v919
      %v932 = vpack.c.bf16 %v922, %v921
      %v933 = vld [vmem:[%s10] sm:$0x1]
      %v935 = vlaneseq
      %v936 = vshrl.u32 %v935, 7
      %v937 = vsub.s32 0, %v936
      %v938 = vrot.slane %v933, %v937
      %v946 = vunpack.c.l.b16 %v923
      %v947 = vunpack.c.l.b16 %v924
      %v948 = vunpack.c.l.b16 %v925
      %v949 = vunpack.c.l.b16 %v926
      %v950 = vunpack.c.l.b16 %v927
      %v951 = vunpack.c.l.b16 %v928
      %v952 = vpack.c.b16 %v947, %v946
      %v953 = vpack.c.b16 %v949, %v948
      %v954 = vpack.c.b16 %v951, %v950
      %vm958 = vcmask 392192
      %v960 = vsel %vm958, %v929, 0
      %v963 = vsel %vm958, %v930, 0
      %v966 = vsel %vm958, %v931, 0
      %v969 = vsel %vm958, %v932, 0
      %971 = vmatprep.subr.bf16.mxu0 0
      %972 = vmatpush1.bf16.msra.mxu0 %v952
      %973 = vmatprep.subr.bf16.mxu0 0
      %974 = vmatpush1.bf16.msra.mxu0 %v953
      %975 = vmatprep.subr.bf16.mxu0 0
      %976 = vmatpush1.bf16.msra.mxu0 %v954
      %977 = vmatprep.subr.bf16.mxu0 0
      %978 = vmatpush1.bf16.msra.mxu0 0
      %979 = vmatprep.subr.bf16.mxu0 0
      %980 = vmatpush1.bf16.msra.mxu0 0
      %981 = vmatprep.subr.bf16.mxu0 0
      %982 = vmatpush1.bf16.msra.mxu0 0
      %983 = vmatprep.subr.bf16.mxu0 0
      %984 = vmatpush1.bf16.msra.mxu0 0
      %985 = vmatprep.subr.bf16.mxu0 0
      %986 = vmatpush1.bf16.msra.mxu0 0
      %987 = vmatprep.subr.bf16.mxu0 0
      %988 = vmatpush1.bf16.msra.mxu0 0
      %989 = vmatprep.subr.bf16.mxu0 0
      %990 = vmatpush1.bf16.msra.mxu0 0
      %991 = vmatprep.subr.bf16.mxu0 0
      %992 = vmatpush1.bf16.msra.mxu0 0
      %993 = vmatprep.subr.bf16.mxu0 0
      %994 = vmatpush1.bf16.msra.mxu0 0
      %995 = vmatprep.subr.bf16.mxu0 0
      %996 = vmatpush1.bf16.msra.mxu0 0
      %997 = vmatprep.subr.bf16.mxu0 0
      %998 = vmatpush1.bf16.msra.mxu0 0
      %999 = vmatprep.subr.bf16.mxu0 0
      %1000 = vmatpush1.bf16.msra.mxu0 0
      %1001 = vmatprep.subr.bf16.mxu0 0
      %1002 = vmatpush1.bf16.msra.mxu0 0
      %1003 = vmatprep.mubr.bf16.mxu0 0
      %1004 = vmatmul.mubr.bf16.gmra.mrb[0].mxu0 %v960
      %v1005 = vpop.f32.mrb[0].mxu0
      %v1006 = vadd.f32 %v938, %v1005
      %v1007 = vpop.f32.mrb[0].mxu0
      %v1008 = vpop.f32.mrb[0].mxu0
      %v1009 = vadd.f32 %v938, %v1008
      %v1010 = vpop.f32.mrb[0].mxu0
      %1011 = vmatprep.mubr.bf16.mxu0 0
      %1012 = vmatmul.mubr.bf16.gmra.mrb[0].mxu0 %v963
      %v1013 = vpop.f32.mrb[0].mxu0
      %v1014 = vadd.f32 %v938, %v1013
      %v1015 = vpop.f32.mrb[0].mxu0
      %v1016 = vpop.f32.mrb[0].mxu0
      %v1017 = vadd.f32 %v938, %v1016
      %v1018 = vpop.f32.mrb[0].mxu0
      %1019 = vmatprep.mubr.bf16.mxu0 0
      %1020 = vmatmul.mubr.bf16.gmra.mrb[0].mxu0 %v966
      %v1021 = vpop.f32.mrb[0].mxu0
      %v1022 = vadd.f32 %v938, %v1021
      %v1023 = vpop.f32.mrb[0].mxu0
      %v1024 = vpop.f32.mrb[0].mxu0
      %v1025 = vadd.f32 %v938, %v1024
      %v1026 = vpop.f32.mrb[0].mxu0
      %1027 = vmatprep.mubr.bf16.mxu0 0
      %1028 = vmatmul.mubr.bf16.gmra.mrb[0].mxu0 %v969
      %v1029 = vpop.f32.mrb[0].mxu0
      %v1030 = vadd.f32 %v938, %v1029
      %v1031 = vpop.f32.mrb[0].mxu0
      %v1032 = vpop.f32.mrb[0].mxu0
      %v1033 = vadd.f32 %v938, %v1032
      %v1034 = vpop.f32.mrb[0].mxu0
      %1035 = vdwg.mxu0
      %v1036 = vmax.f32 %v1006, 0.0
      %v1037 = vmax.f32 %v1009, 0.0
      %v1038 = vmax.f32 %v1014, 0.0
      %v1039 = vmax.f32 %v1017, 0.0
      %v1040 = vmax.f32 %v1022, 0.0
      %v1041 = vmax.f32 %v1025, 0.0
      %v1042 = vmax.f32 %v1030, 0.0
      %v1043 = vmax.f32 %v1033, 0.0
      %v1044 = vld [vmem:[%s11] sm:$0xf]
      %v1045 = vld [vmem:[%s11 + $0x4] sm:$0xf]
      %v1046 = vld [vmem:[%s11 + $0x8] sm:$0xf]
      %v1047 = vld [vmem:[%s11 + $0xc] sm:$0xf]
      %v1048 = vld [vmem:[%s11 + $0x10] sm:$0xf]
      %v1049 = vld [vmem:[%s11 + $0x14] sm:$0xf]
      %v1050 = vpack.c.bf16 %v1037, %v1036
      %v1051 = vpack.c.bf16 %v1039, %v1038
      %v1052 = vpack.c.bf16 %v1041, %v1040
      %v1053 = vpack.c.bf16 %v1043, %v1042
      %v1054 = vld [vmem:[%s12] sm:$0xf]
      %v1055 = vld [vmem:[%s12 + $0x4] sm:$0xf]
      %v1058 = vunpack.c.l.b16 %v1054
      %v1059 = vunpack.c.l.b16 %v1055
      %v1060 = vpack.c.b16 %v1059, %v1058
      %1062 = vmatprep.subr.bf16.mxu0 0
      %1063 = vmatpush1.bf16.msra.mxu0 %v1060
      %1064 = vmatprep.subr.bf16.mxu0 0
      %1065 = vmatpush1.bf16.msra.mxu0 0
      %1066 = vmatprep.subr.bf16.mxu0 0
      %1067 = vmatpush1.bf16.msra.mxu0 0
      %1068 = vmatprep.subr.bf16.mxu0 0
      %1069 = vmatpush1.bf16.msra.mxu0 0
      %1070 = vmatprep.subr.bf16.mxu0 0
      %1071 = vmatpush1.bf16.msra.mxu0 0
      %1072 = vmatprep.subr.bf16.mxu0 0
      %1073 = vmatpush1.bf16.msra.mxu0 0
      %1074 = vmatprep.subr.bf16.mxu0 0
      %1075 = vmatpush1.bf16.msra.mxu0 0
      %1076 = vmatprep.subr.bf16.mxu0 0
      %1077 = vmatpush1.bf16.msra.mxu0 0
      %1078 = vmatprep.subr.bf16.mxu0 0
      %1079 = vmatpush1.bf16.msra.mxu0 0
      %1080 = vmatprep.subr.bf16.mxu0 0
      %1081 = vmatpush1.bf16.msra.mxu0 0
      %1082 = vmatprep.subr.bf16.mxu0 0
      %1083 = vmatpush1.bf16.msra.mxu0 0
      %1084 = vmatprep.subr.bf16.mxu0 0
      %1085 = vmatpush1.bf16.msra.mxu0 0
      %1086 = vmatprep.subr.bf16.mxu0 0
      %1087 = vmatpush1.bf16.msra.mxu0 0
      %1088 = vmatprep.subr.bf16.mxu0 0
      %1089 = vmatpush1.bf16.msra.mxu0 0
      %1090 = vmatprep.subr.bf16.mxu0 0
      %1091 = vmatpush1.bf16.msra.mxu0 0
      %1092 = vmatprep.subr.bf16.mxu0 0
      %1093 = vmatpush1.bf16.msra.mxu0 0
      %1094 = vmatprep.mubr.bf16.mxu0 0
      %1095 = vmatmul.mubr.bf16.gmra.mrb[0].mxu0 %v716
      %v1096 = vpop.f32.mrb[0].mxu0
      %v1097 = vadd.f32 0.0, %v1096
      %v1098 = vpop.f32.mrb[0].mxu0
      %v1099 = vpop.f32.mrb[0].mxu0
      %v1100 = vadd.f32 0.0, %v1099
      %v1101 = vpop.f32.mrb[0].mxu0
      %1102 = vmatprep.mubr.bf16.mxu0 0
      %1103 = vmatmul.mubr.bf16.gmra.mrb[0].mxu0 %v719
      %v1104 = vpop.f32.mrb[0].mxu0
      %v1105 = vadd.f32 0.0, %v1104
      %v1106 = vpop.f32.mrb[0].mxu0
      %v1107 = vpop.f32.mrb[0].mxu0
      %v1108 = vadd.f32 0.0, %v1107
      %v1109 = vpop.f32.mrb[0].mxu0
      %1110 = vmatprep.mubr.bf16.mxu0 0
      %1111 = vmatmul.mubr.bf16.gmra.mrb[0].mxu0 %v722
      %v1112 = vpop.f32.mrb[0].mxu0
      %v1113 = vadd.f32 0.0, %v1112
      %v1114 = vpop.f32.mrb[0].mxu0
      %v1115 = vpop.f32.mrb[0].mxu0
      %v1116 = vadd.f32 0.0, %v1115
      %v1117 = vpop.f32.mrb[0].mxu0
      %1118 = vmatprep.mubr.bf16.mxu0 0
      %1119 = vmatmul.mubr.bf16.gmra.mrb[0].mxu0 %v725
      %v1120 = vpop.f32.mrb[0].mxu0
      %v1121 = vadd.f32 0.0, %v1120
      %v1122 = vpop.f32.mrb[0].mxu0
      %v1123 = vpop.f32.mrb[0].mxu0
      %v1124 = vadd.f32 0.0, %v1123
      %v1125 = vpop.f32.mrb[0].mxu0
      %1126 = vdwg.mxu0
      %v1133 = vunpack.c.l.b16 %v1044
      %v1134 = vunpack.c.l.b16 %v1045
      %v1135 = vunpack.c.l.b16 %v1046
      %v1136 = vunpack.c.l.b16 %v1047
      %v1137 = vunpack.c.l.b16 %v1048
      %v1138 = vunpack.c.l.b16 %v1049
      %v1139 = vpack.c.b16 %v1134, %v1133
      %v1140 = vpack.c.b16 %v1136, %v1135
      %v1141 = vpack.c.b16 %v1138, %v1137
      %v1146 = vsel %vm958, %v1050, 0
      %v1149 = vsel %vm958, %v1051, 0
      %v1152 = vsel %vm958, %v1052, 0
      %v1155 = vsel %vm958, %v1053, 0
      %1157 = vmatprep.subr.bf16.mxu0 0
      %1158 = vmatpush1.bf16.msra.mxu0 %v1139
      %1159 = vmatprep.subr.bf16.mxu0 0
      %1160 = vmatpush1.bf16.msra.mxu0 %v1140
      %1161 = vmatprep.subr.bf16.mxu0 0
      %1162 = vmatpush1.bf16.msra.mxu0 %v1141
      %1163 = vmatprep.subr.bf16.mxu0 0
      %1164 = vmatpush1.bf16.msra.mxu0 0
      %1165 = vmatprep.subr.bf16.mxu0 0
      %1166 = vmatpush1.bf16.msra.mxu0 0
      %1167 = vmatprep.subr.bf16.mxu0 0
      %1168 = vmatpush1.bf16.msra.mxu0 0
      %1169 = vmatprep.subr.bf16.mxu0 0
      %1170 = vmatpush1.bf16.msra.mxu0 0
      %1171 = vmatprep.subr.bf16.mxu0 0
      %1172 = vmatpush1.bf16.msra.mxu0 0
      %1173 = vmatprep.subr.bf16.mxu0 0
      %1174 = vmatpush1.bf16.msra.mxu0 0
      %1175 = vmatprep.subr.bf16.mxu0 0
      %1176 = vmatpush1.bf16.msra.mxu0 0
      %1177 = vmatprep.subr.bf16.mxu0 0
      %1178 = vmatpush1.bf16.msra.mxu0 0
      %1179 = vmatprep.subr.bf16.mxu0 0
      %1180 = vmatpush1.bf16.msra.mxu0 0
      %1181 = vmatprep.subr.bf16.mxu0 0
      %1182 = vmatpush1.bf16.msra.mxu0 0
      %1183 = vmatprep.subr.bf16.mxu0 0
      %1184 = vmatpush1.bf16.msra.mxu0 0
      %1185 = vmatprep.subr.bf16.mxu0 0
      %1186 = vmatpush1.bf16.msra.mxu0 0
      %1187 = vmatprep.subr.bf16.mxu0 0
      %1188 = vmatpush1.bf16.msra.mxu0 0
      %1189 = vmatprep.mubr.bf16.mxu0 0
      %1190 = vmatmul.mubr.bf16.gmra.mrb[0].mxu0 %v1146
      %v1191 = vpop.f32.mrb[0].mxu0
      %v1192 = vadd.f32 %v1097, %v1191
      %v1193 = vpop.f32.mrb[0].mxu0
      %v1194 = vpop.f32.mrb[0].mxu0
      %v1195 = vadd.f32 %v1100, %v1194
      %v1196 = vpop.f32.mrb[0].mxu0
      %1197 = vmatprep.mubr.bf16.mxu0 0
      %1198 = vmatmul.mubr.bf16.gmra.mrb[0].mxu0 %v1149
      %v1199 = vpop.f32.mrb[0].mxu0
      %v1200 = vadd.f32 %v1105, %v1199
      %v1201 = vpop.f32.mrb[0].mxu0
      %v1202 = vpop.f32.mrb[0].mxu0
      %v1203 = vadd.f32 %v1108, %v1202
      %v1204 = vpop.f32.mrb[0].mxu0
      %1205 = vmatprep.mubr.bf16.mxu0 0
      %1206 = vmatmul.mubr.bf16.gmra.mrb[0].mxu0 %v1152
      %v1207 = vpop.f32.mrb[0].mxu0
      %v1208 = vadd.f32 %v1113, %v1207
      %v1209 = vpop.f32.mrb[0].mxu0
      %v1210 = vpop.f32.mrb[0].mxu0
      %v1211 = vadd.f32 %v1116, %v1210
      %v1212 = vpop.f32.mrb[0].mxu0
      %1213 = vmatprep.mubr.bf16.mxu0 0
      %1214 = vmatmul.mubr.bf16.gmra.mrb[0].mxu0 %v1155
      %v1215 = vpop.f32.mrb[0].mxu0
      %v1216 = vadd.f32 %v1121, %v1215
      %v1217 = vpop.f32.mrb[0].mxu0
      %v1218 = vpop.f32.mrb[0].mxu0
      %v1219 = vadd.f32 %v1124, %v1218
      %v1220 = vpop.f32.mrb[0].mxu0
      %1221 = vdwg.mxu0
      %v1222 = vld [vmem:[%s668] sm:$0xff]
      %v1224 = vcombine.high %v1222, %v1222
      %v1226 = vunpack.c.l.s4 1966171168
      %v1227 = vunpack.c.0.s8 %v1226
      %v1228 = vlaneseq
      %v1229 = vshrl.u32 %v1228, 7
      %v1230 = vsub.s32 %v1227, %v1229
      %v1231 = vrot.slane %v1222, %v1230
      %v1233 = vunpack.c.l.s4 1966171168
      %v1234 = vunpack.c.0.s8 %v1233
      %v1235 = vlaneseq
      %v1236 = vshrl.u32 %v1235, 7
      %v1237 = vsub.s32 %v1234, %v1236
      %v1238 = vrot.slane %v1224, %v1237
      %v1239 = vcombine.high %v1231, %v1231
      %v1240 = vcombine.high %v1238, %v1238
      %v1242 = vunpack.c.l.s4 1966171168
      %v1243 = vunpack.c.0.s8 %v1242
      %v1244 = vlaneseq
      %v1245 = vshrl.u32 %v1244, 7
      %v1246 = vsub.s32 %v1243, %v1245
      %v1247 = vrot.slane %v1231, %v1246
      %v1249 = vunpack.c.l.s4 1966171168
      %v1250 = vunpack.c.0.s8 %v1249
      %v1251 = vlaneseq
      %v1252 = vshrl.u32 %v1251, 7
      %v1253 = vsub.s32 %v1250, %v1252
      %v1254 = vrot.slane %v1238, %v1253
      %v1256 = vunpack.c.l.s4 1966171168
      %v1257 = vunpack.c.0.s8 %v1256
      %v1258 = vlaneseq
      %v1259 = vshrl.u32 %v1258, 7
      %v1260 = vsub.s32 %v1257, %v1259
      %v1261 = vrot.slane %v1239, %v1260
      %v1263 = vunpack.c.l.s4 1966171168
      %v1264 = vunpack.c.0.s8 %v1263
      %v1265 = vlaneseq
      %v1266 = vshrl.u32 %v1265, 7
      %v1267 = vsub.s32 %v1264, %v1266
      %v1268 = vrot.slane %v1240, %v1267
      %v1269 = vcombine.high %v1247, %v1247
      %v1270 = vcombine.high %v1254, %v1254
      %v1271 = vcombine.high %v1261, %v1261
      %v1272 = vcombine.high %v1268, %v1268
      %v1273 = vlaneseq
      %v1274 = vshrl.u32 %v1273, 7
      %v1275 = vsub.s32 0, %v1274
      %v1276 = vrot.slane %v1247, %v1275
      %v1277 = vlaneseq
      %v1278 = vshrl.u32 %v1277, 7
      %v1279 = vsub.s32 0, %v1278
      %v1280 = vrot.slane %v1261, %v1279
      %v1281 = vlaneseq
      %v1282 = vshrl.u32 %v1281, 7
      %v1283 = vsub.s32 0, %v1282
      %v1284 = vrot.slane %v1269, %v1283
      %v1285 = vlaneseq
      %v1286 = vshrl.u32 %v1285, 7
      %v1287 = vsub.s32 0, %v1286
      %v1288 = vrot.slane %v1271, %v1287
      %v1289 = vlaneseq
      %v1290 = vshrl.u32 %v1289, 7
      %v1291 = vsub.s32 0, %v1290
      %v1292 = vrot.slane %v1254, %v1291
      %v1293 = vlaneseq
      %v1294 = vshrl.u32 %v1293, 7
      %v1295 = vsub.s32 0, %v1294
      %v1296 = vrot.slane %v1268, %v1295
      %v1297 = vlaneseq
      %v1298 = vshrl.u32 %v1297, 7
      %v1299 = vsub.s32 0, %v1298
      %v1300 = vrot.slane %v1270, %v1299
      %v1301 = vlaneseq
      %v1302 = vshrl.u32 %v1301, 7
      %v1303 = vsub.s32 0, %v1302
      %v1304 = vrot.slane %v1272, %v1303
      %v1313 = vadd.f32 %v1192, %v1276
      %v1314 = vadd.f32 %v1195, %v1280
      %v1315 = vadd.f32 %v1200, %v1284
      %v1316 = vadd.f32 %v1203, %v1288
      %v1317 = vadd.f32 %v1208, %v1292
      %v1318 = vadd.f32 %v1211, %v1296
      %v1319 = vadd.f32 %v1216, %v1300
      %v1320 = vadd.f32 %v1219, %v1304
      %v1321 = vld [vmem:[%s672] sm:$0xff]
      %v1322 = vadd.f32 %v1313, %v1321
      %v1323 = vadd.f32 %v1314, %v1321
      %v1324 = vadd.f32 %v1315, %v1321
      %v1325 = vadd.f32 %v1316, %v1321
      %v1326 = vadd.f32 %v1317, %v1321
      %v1327 = vadd.f32 %v1318, %v1321
      %v1328 = vadd.f32 %v1319, %v1321
      %v1329 = vadd.f32 %v1320, %v1321
      %v1330 = vld [vmem:[%s13] sm:$0x1]
      %v1332 = vlaneseq
      %v1333 = vshrl.u32 %v1332, 7
      %v1334 = vsub.s32 0, %v1333
      %v1335 = vrot.slane %v1330, %v1334
      %v1337 = vadd.f32 %v1322, %v1335
      %v1338 = vadd.f32 %v1323, %v1335
      %v1339 = vadd.f32 %v1324, %v1335
      %v1340 = vadd.f32 %v1325, %v1335
      %v1341 = vadd.f32 %v1326, %v1335
      %v1342 = vadd.f32 %v1327, %v1335
      %v1343 = vadd.f32 %v1328, %v1335
      %v1344 = vadd.f32 %v1329, %v1335
      %v1345 = vsel %vm714, %v1337, 0.0
      %1346 = vadd.xlane.f32.xlu0 %v1345
      %v1347 = vpop.xlane.xlu0 %1346
      %v1348 = vsel %vm714, %v1338, 0.0
      %1349 = vadd.xlane.f32.xlu0 %v1348
      %v1350 = vpop.xlane.xlu0 %1349
      %v1351 = vsel %vm714, %v1339, 0.0
      %1352 = vadd.xlane.f32.xlu0 %v1351
      %v1353 = vpop.xlane.xlu0 %1352
      %v1354 = vsel %vm714, %v1340, 0.0
      %1355 = vadd.xlane.f32.xlu0 %v1354
      %v1356 = vpop.xlane.xlu0 %1355
      %v1357 = vsel %vm714, %v1341, 0.0
      %1358 = vadd.xlane.f32.xlu0 %v1357
      %v1359 = vpop.xlane.xlu0 %1358
      %v1360 = vsel %vm714, %v1342, 0.0
      %1361 = vadd.xlane.f32.xlu0 %v1360
      %v1362 = vpop.xlane.xlu0 %1361
      %v1363 = vsel %vm714, %v1343, 0.0
      %1364 = vadd.xlane.f32.xlu0 %v1363
      %v1365 = vpop.xlane.xlu0 %1364
      %v1366 = vsel %vm714, %v1344, 0.0
      %1367 = vadd.xlane.f32.xlu0 %v1366
      %v1368 = vpop.xlane.xlu0 %1367
      %v1369 = vrcp.pop 16.0
      %v1370 = vmul.f32 %v1347, %v1369
      %v1371 = vmul.f32 %v1350, %v1369
      %v1372 = vmul.f32 %v1353, %v1369
      %v1373 = vmul.f32 %v1356, %v1369
      %v1374 = vmul.f32 %v1359, %v1369
      %v1375 = vmul.f32 %v1362, %v1369
      %v1376 = vmul.f32 %v1365, %v1369
      %v1377 = vmul.f32 %v1368, %v1369
      %v1378 = vsub.f32 %v1337, %v1370
      %v1379 = vsub.f32 %v1338, %v1371
      %v1380 = vsub.f32 %v1339, %v1372
      %v1381 = vsub.f32 %v1340, %v1373
      %v1382 = vsub.f32 %v1341, %v1374
      %v1383 = vsub.f32 %v1342, %v1375
      %v1384 = vsub.f32 %v1343, %v1376
      %v1385 = vsub.f32 %v1344, %v1377
      %v1386 = vmul.f32 %v1378, %v1378
      %v1387 = vmul.f32 %v1379, %v1379
      %v1388 = vmul.f32 %v1380, %v1380
      %v1389 = vmul.f32 %v1381, %v1381
      %v1390 = vmul.f32 %v1382, %v1382
      %v1391 = vmul.f32 %v1383, %v1383
      %v1392 = vmul.f32 %v1384, %v1384
      %v1393 = vmul.f32 %v1385, %v1385
      %v1394 = vsel %vm714, %v1386, 0.0
      %1395 = vadd.xlane.f32.xlu0 %v1394
      %v1396 = vpop.xlane.xlu0 %1395
      %v1397 = vsel %vm714, %v1387, 0.0
      %1398 = vadd.xlane.f32.xlu0 %v1397
      %v1399 = vpop.xlane.xlu0 %1398
      %v1400 = vsel %vm714, %v1388, 0.0
      %1401 = vadd.xlane.f32.xlu0 %v1400
      %v1402 = vpop.xlane.xlu0 %1401
      %v1403 = vsel %vm714, %v1389, 0.0
      %1404 = vadd.xlane.f32.xlu0 %v1403
      %v1405 = vpop.xlane.xlu0 %1404
      %v1406 = vsel %vm714, %v1390, 0.0
      %1407 = vadd.xlane.f32.xlu0 %v1406
      %v1408 = vpop.xlane.xlu0 %1407
      %v1409 = vsel %vm714, %v1391, 0.0
      %1410 = vadd.xlane.f32.xlu0 %v1409
      %v1411 = vpop.xlane.xlu0 %1410
      %v1412 = vsel %vm714, %v1392, 0.0
      %1413 = vadd.xlane.f32.xlu0 %v1412
      %v1414 = vpop.xlane.xlu0 %1413
      %v1415 = vsel %vm714, %v1393, 0.0
      %1416 = vadd.xlane.f32.xlu0 %v1415
      %v1417 = vpop.xlane.xlu0 %1416
      %v1418 = vmul.f32 %v1396, %v1369
      %v1419 = vmul.f32 %v1399, %v1369
      %v1420 = vmul.f32 %v1402, %v1369
      %v1421 = vmul.f32 %v1405, %v1369
      %v1422 = vmul.f32 %v1408, %v1369
      %v1423 = vmul.f32 %v1411, %v1369
      %v1424 = vmul.f32 %v1414, %v1369
      %v1425 = vmul.f32 %v1417, %v1369
      %v1426 = vadd.f32 %v1418, 1e-05
      %v1427 = vadd.f32 %v1419, 1e-05
      %v1428 = vadd.f32 %v1420, 1e-05
      %v1429 = vadd.f32 %v1421, 1e-05
      %v1430 = vadd.f32 %v1422, 1e-05
      %v1431 = vadd.f32 %v1423, 1e-05
      %v1432 = vadd.f32 %v1424, 1e-05
      %v1433 = vadd.f32 %v1425, 1e-05
      %v1434 = vrsqrt.pop %v1426
      %v1435 = vrsqrt.pop %v1427
      %v1436 = vrsqrt.pop %v1428
      %v1437 = vrsqrt.pop %v1429
      %v1438 = vrsqrt.pop %v1430
      %v1439 = vrsqrt.pop %v1431
      %v1440 = vrsqrt.pop %v1432
      %v1441 = vrsqrt.pop %v1433
      %v1442 = vmul.f32 %v1378, %v1434
      %v1443 = vmul.f32 %v1379, %v1435
      %v1444 = vmul.f32 %v1380, %v1436
      %v1445 = vmul.f32 %v1381, %v1437
      %v1446 = vmul.f32 %v1382, %v1438
      %v1447 = vmul.f32 %v1383, %v1439
      %v1448 = vmul.f32 %v1384, %v1440
      %v1449 = vmul.f32 %v1385, %v1441
      %v1450 = vld [vmem:[%s14] sm:$0x1]
      %v1452 = vlaneseq
      %v1453 = vshrl.u32 %v1452, 7
      %v1454 = vsub.s32 0, %v1453
      %v1455 = vrot.slane %v1450, %v1454
      %v1457 = vmul.f32 %v1442, %v1455
      %v1458 = vmul.f32 %v1443, %v1455
      %v1459 = vmul.f32 %v1444, %v1455
      %v1460 = vmul.f32 %v1445, %v1455
      %v1461 = vmul.f32 %v1446, %v1455
      %v1462 = vmul.f32 %v1447, %v1455
      %v1463 = vmul.f32 %v1448, %v1455
      %v1464 = vmul.f32 %v1449, %v1455
      %v1465 = vld [vmem:[%s15] sm:$0x1]
      %v1467 = vlaneseq
      %v1468 = vshrl.u32 %v1467, 7
      %v1469 = vsub.s32 0, %v1468
      %v1470 = vrot.slane %v1465, %v1469
      %v1472 = vadd.f32 %v1457, %v1470
      %v1473 = vadd.f32 %v1458, %v1470
      %v1474 = vadd.f32 %v1459, %v1470
      %v1475 = vadd.f32 %v1460, %v1470
      %v1476 = vadd.f32 %v1461, %v1470
      %v1477 = vadd.f32 %v1462, %v1470
      %v1478 = vadd.f32 %v1463, %v1470
      %v1479 = vadd.f32 %v1464, %v1470
      %v1480 = vld [vmem:[%s679] sm:$0xff]
      %v1482 = vcombine.high %v1480, %v1480
      %v1484 = vunpack.c.l.s4 1966171168
      %v1485 = vunpack.c.0.s8 %v1484
      %v1486 = vlaneseq
      %v1487 = vshrl.u32 %v1486, 7
      %v1488 = vsub.s32 %v1485, %v1487
      %v1489 = vrot.slane %v1480, %v1488
      %v1491 = vunpack.c.l.s4 1966171168
      %v1492 = vunpack.c.0.s8 %v1491
      %v1493 = vlaneseq
      %v1494 = vshrl.u32 %v1493, 7
      %v1495 = vsub.s32 %v1492, %v1494
      %v1496 = vrot.slane %v1482, %v1495
      %v1497 = vcombine.high %v1489, %v1489
      %v1498 = vcombine.high %v1496, %v1496
      %v1500 = vunpack.c.l.s4 1966171168
      %v1501 = vunpack.c.0.s8 %v1500
      %v1502 = vlaneseq
      %v1503 = vshrl.u32 %v1502, 7
      %v1504 = vsub.s32 %v1501, %v1503
      %v1505 = vrot.slane %v1489, %v1504
      %v1507 = vunpack.c.l.s4 1966171168
      %v1508 = vunpack.c.0.s8 %v1507
      %v1509 = vlaneseq
      %v1510 = vshrl.u32 %v1509, 7
      %v1511 = vsub.s32 %v1508, %v1510
      %v1512 = vrot.slane %v1496, %v1511
      %v1514 = vunpack.c.l.s4 1966171168
      %v1515 = vunpack.c.0.s8 %v1514
      %v1516 = vlaneseq
      %v1517 = vshrl.u32 %v1516, 7
      %v1518 = vsub.s32 %v1515, %v1517
      %v1519 = vrot.slane %v1497, %v1518
      %v1521 = vunpack.c.l.s4 1966171168
      %v1522 = vunpack.c.0.s8 %v1521
      %v1523 = vlaneseq
      %v1524 = vshrl.u32 %v1523, 7
      %v1525 = vsub.s32 %v1522, %v1524
      %v1526 = vrot.slane %v1498, %v1525
      %v1527 = vcombine.high %v1505, %v1505
      %v1528 = vcombine.high %v1512, %v1512
      %v1529 = vcombine.high %v1519, %v1519
      %v1530 = vcombine.high %v1526, %v1526
      %v1531 = vld [vmem:[%s682] sm:$0x1]
      %v1532 = vlaneseq
      %v1533 = vshrl.u32 %v1532, 7
      %v1534 = vsub.s32 0, %v1533
      %v1535 = vrot.slane %v1531, %v1534
      %1537 = vbcast.lane.b32.xlu0 %v1535, 256
      %v1538 = vpop.permute.xlu0 %1537
      %v1539 = vlaneseq
      %v1540 = vshrl.u32 %v1539, 7
      %v1541 = vsub.s32 0, %v1540
      %v1542 = vrot.slane %v1505, %v1541
      %v1543 = vlaneseq
      %v1544 = vshrl.u32 %v1543, 7
      %v1545 = vsub.s32 0, %v1544
      %v1546 = vrot.slane %v1519, %v1545
      %v1547 = vlaneseq
      %v1548 = vshrl.u32 %v1547, 7
      %v1549 = vsub.s32 0, %v1548
      %v1550 = vrot.slane %v1527, %v1549
      %v1551 = vlaneseq
      %v1552 = vshrl.u32 %v1551, 7
      %v1553 = vsub.s32 0, %v1552
      %v1554 = vrot.slane %v1529, %v1553
      %v1555 = vlaneseq
      %v1556 = vshrl.u32 %v1555, 7
      %v1557 = vsub.s32 0, %v1556
      %v1558 = vrot.slane %v1512, %v1557
      %v1559 = vlaneseq
      %v1560 = vshrl.u32 %v1559, 7
      %v1561 = vsub.s32 0, %v1560
      %v1562 = vrot.slane %v1526, %v1561
      %v1563 = vlaneseq
      %v1564 = vshrl.u32 %v1563, 7
      %v1565 = vsub.s32 0, %v1564
      %v1566 = vrot.slane %v1528, %v1565
      %v1567 = vlaneseq
      %v1568 = vshrl.u32 %v1567, 7
      %v1569 = vsub.s32 0, %v1568
      %v1570 = vrot.slane %v1530, %v1569
      %v1579 = vmul.f32 %v1542, %v1538
      %v1580 = vmul.f32 %v1546, %v1538
      %v1581 = vmul.f32 %v1550, %v1538
      %v1582 = vmul.f32 %v1554, %v1538
      %v1583 = vmul.f32 %v1558, %v1538
      %v1584 = vmul.f32 %v1562, %v1538
      %v1585 = vmul.f32 %v1566, %v1538
      %v1586 = vmul.f32 %v1570, %v1538
      %1588 = vset.pattern.permute.xlu0 0
      %1589 = vperm.xlu0 %1588, %v1579
      %v1590 = vpop.permute.xlu0 %1589
      %1593 = vset.pattern.permute.xlu0 0
      %1594 = vperm.xlu0 %1593, %v1580
      %v1595 = vpop.permute.xlu0 %1594
      %1598 = vset.pattern.permute.xlu0 0
      %1599 = vperm.xlu0 %1598, %v1581
      %v1600 = vpop.permute.xlu0 %1599
      %1603 = vset.pattern.permute.xlu0 0
      %1604 = vperm.xlu0 %1603, %v1582
      %v1605 = vpop.permute.xlu0 %1604
      %1608 = vset.pattern.permute.xlu0 0
      %1609 = vperm.xlu0 %1608, %v1583
      %v1610 = vpop.permute.xlu0 %1609
      %1613 = vset.pattern.permute.xlu0 0
      %1614 = vperm.xlu0 %1613, %v1584
      %v1615 = vpop.permute.xlu0 %1614
      %1618 = vset.pattern.permute.xlu0 0
      %1619 = vperm.xlu0 %1618, %v1585
      %v1620 = vpop.permute.xlu0 %1619
      %1623 = vset.pattern.permute.xlu0 0
      %1624 = vperm.xlu0 %1623, %v1586
      %v1625 = vpop.permute.xlu0 %1624
      %v1627 = vmul.f32 %v1472, %v1590
      %v1628 = vmul.f32 %v1473, %v1595
      %v1629 = vmul.f32 %v1474, %v1600
      %v1630 = vmul.f32 %v1475, %v1605
      %v1631 = vmul.f32 %v1476, %v1610
      %v1632 = vmul.f32 %v1477, %v1615
      %v1633 = vmul.f32 %v1478, %v1620
      %v1634 = vmul.f32 %v1479, %v1625
      %v1635 = vpack.c.bf16 %v1627, %v1627
      %v1636 = vpack.c.bf16 %v1628, %v1628
      %v1637 = vpack.c.bf16 %v1629, %v1629
      %v1638 = vpack.c.bf16 %v1630, %v1630
      %v1639 = vpack.c.bf16 %v1631, %v1631
      %v1640 = vpack.c.bf16 %v1632, %v1632
      %v1641 = vpack.c.bf16 %v1633, %v1633
      %v1642 = vpack.c.bf16 %v1634, %v1634
      %vm1643 = vcmask 125952
      %1644 = vst.msk [vmem:[%s691] sm:$0xf] %vm1643, %v1635
      %1645 = vst.msk [vmem:[%s691 + $0x4] sm:$0xf] %vm1643, %v1636
      %1646 = vst.msk [vmem:[%s691 + $0x8] sm:$0xf] %vm1643, %v1637
      %1647 = vst.msk [vmem:[%s691 + $0xc] sm:$0xf] %vm1643, %v1638
      %1648 = vst.msk [vmem:[%s691 + $0x10] sm:$0xf] %vm1643, %v1639
      %1649 = vst.msk [vmem:[%s691 + $0x14] sm:$0xf] %vm1643, %v1640
      %1650 = vst.msk [vmem:[%s691 + $0x18] sm:$0xf] %vm1643, %v1641
      %1651 = vst.msk [vmem:[%s691 + $0x1c] sm:$0xf] %vm1643, %v1642
      %s1652 = smul.u32 8, %s32
      %p1653 = scmp.lt.s32.totalorder %s31, 1
      %s1654 = scalar_select %p1653, %s31, 1
      %p1655 = scmp.lt.s32.totalorder %s1652, 7
      %s1656 = scalar_select %p1655, %s1652, 7
      %s1657 = smul.addr %s1654, 8
      %s1658 = sadd.s32 %s1656, %s1657
      %s1659 = smul.addr %s1658, 4
      %s1660 = scalar_lea.vmem %s16, %s1659
      // Predicated region
      $region85: #{structure_module_forward.45} parent=83 // pred_check
        %p1661 = pneg %p438
      $region86: #{structure_module_forward.45} parent=83 // pred_check_branch
        %1663 = sbr.rel (%p1661) target = $region88
      $region87: #{structure_module_forward.45} parent=83 // pred_region
        %s1664 = smul.u32 8, %s32
      $region88: #{structure_module_forward.45} parent=83 // pred_fallthru
        _
    $region84: #{structure_module_forward.45} parent=5 // pred_fallthru
      _
    %p1665 = scmp.le.s32.totalorder 2, %s22
    // Predicated region
    $region89: #{structure_module_forward.45} parent=5 // pred_check
      %p1666 = pneg %p1665
    $region90: #{structure_module_forward.45} parent=5 // pred_check_branch
      %1668 = sbr.rel (%p1666) target = $region92
    $region91: #{structure_module_forward.45} parent=5 // pred_region
      %s1669 = ssub.s32 %s22, 2
      // Predicated region
      $region93: #{structure_module_forward.45} parent=91 // pred_check
        %p1670 = pneg %p444
      $region94: #{structure_module_forward.45} parent=91 // pred_check_branch
        %1672 = sbr.rel (%p1670) target = $region96
      $region95: #{structure_module_forward.45} parent=91 // pred_region
        %s1673 = smul.u32 8, %s34
        %p1674 = scmp.lt.s32.totalorder %s33, 1
        %s1675 = scalar_select %p1674, %s33, 1
        %p1676 = scmp.lt.s32.totalorder %s1673, 7
        %s1677 = scalar_select %p1676, %s1673, 7
        %s1678 = smul.addr %s1675, 8
        %s1679 = sadd.s32 %s1677, %s1678
        %s1680 = smul.addr %s1679, 4
        %s1681 = scalar_lea.vmem %s16, %s1680
      $region96: #{structure_module_forward.45} parent=91 // pred_fallthru
        _
    $region92: #{structure_module_forward.45} parent=5 // pred_fallthru
      _
  $region6: #{structure_module_forward.45} parent=0 // loop_footer
    %s26 = sadd.s32 1, %s22
  $region7: #{structure_module_forward.45} parent=0 // loop_footer_branch
    %21 = sbr.rel target = $region3
  $region8: #{structure_module_forward.45} parent=0 // loop_exit
    _

// kernel: structure_module_forward.59
$region0: #{structure_module_forward.59}
  #allocation0 [shape = 'u32[]', space=smem, size = 0x4, offset = 0x4, fixed_abs, tag = 'smem constant byte address 0x4 - core index']
  #allocation1 [shape = 'u32[144,128]{1,0:T(1,128)}', space=vmem, size = 0x12000, scoped, tag = 'internal scratch']
  %s0 = inlined_call_operand.vmem [shape: f32[16,32], index: 0, kind: input, shape index: {}]
  %s1 = inlined_call_operand.vmem [shape: f32[16,32], index: 1, kind: input, shape index: {}]
  %s2 = inlined_call_operand.vmem [shape: bf16[32,128], index: 2, kind: input, shape index: {}]
  %s3 = inlined_call_operand.vmem [shape: f32[1,128], index: 3, kind: input, shape index: {}]
  %s4 = inlined_call_operand.vmem [shape: bf16[32,128], index: 4, kind: input, shape index: {}]
  %s5 = inlined_call_operand.vmem [shape: f32[1,128], index: 5, kind: input, shape index: {}]
  %s6 = inlined_call_operand.vmem [shape: bf16[128,128], index: 6, kind: input, shape index: {}]
  %s7 = inlined_call_operand.vmem [shape: f32[1,128], index: 7, kind: input, shape index: {}]
  %s8 = inlined_call_operand.vmem [shape: bf16[128,128], index: 8, kind: input, shape index: {}]
  %s9 = inlined_call_operand.vmem [shape: f32[1,128], index: 9, kind: input, shape index: {}]
  %s10 = inlined_call_operand.vmem [shape: bf16[128,128], index: 10, kind: input, shape index: {}]
  %s11 = inlined_call_operand.vmem [shape: f32[1,128], index: 11, kind: input, shape index: {}]
  %s12 = inlined_call_operand.vmem [shape: bf16[128,128], index: 12, kind: input, shape index: {}]
  %s13 = inlined_call_operand.vmem [shape: f32[1,128], index: 13, kind: input, shape index: {}]
  %s14 = inlined_call_operand.vmem [shape: bf16[128,14], index: 14, kind: input, shape index: {}]
  %s15 = inlined_call_operand.vmem [shape: f32[1,14], index: 15, kind: input, shape index: {}]
  %s16 = inlined_call_operand.vmem [shape: f32[16,14], index: 16, kind: output, shape index: {}]
  %s17 = sld [smem:[#allocation0]]
  $region74: #{structure_module_forward.59} parent=0
    _
  %s19 = ssub.s32 1, %s17
  %s20 = scalar_select 0, %s19, %s17
  // Predicated region
  $region2: #{structure_module_forward.59} parent=0 // pred_check
    _
  $region3: #{structure_module_forward.59} parent=0 // pred_check_branch
    %22 = sbr.rel (0) target = $region5
  $region4: #{structure_module_forward.59} parent=0 // pred_region
    _
  $region5: #{structure_module_forward.59} parent=0 // pred_fallthru
    _
  // Predicated region
  $region6: #{structure_module_forward.59} parent=0 // pred_check
    _
  $region7: #{structure_module_forward.59} parent=0 // pred_check_branch
    %24 = sbr.rel (0) target = $region9
  $region8: #{structure_module_forward.59} parent=0 // pred_region
    _
  $region9: #{structure_module_forward.59} parent=0 // pred_fallthru
    _
  // Predicated region
  $region10: #{structure_module_forward.59} parent=0 // pred_check
    _
  $region11: #{structure_module_forward.59} parent=0 // pred_check_branch
    %26 = sbr.rel (0) target = $region13
  $region12: #{structure_module_forward.59} parent=0 // pred_region
    _
  $region13: #{structure_module_forward.59} parent=0 // pred_fallthru
    _
  // Predicated region
  $region14: #{structure_module_forward.59} parent=0 // pred_check
    _
  $region15: #{structure_module_forward.59} parent=0 // pred_check_branch
    %28 = sbr.rel (0) target = $region17
  $region16: #{structure_module_forward.59} parent=0 // pred_region
    _
  $region17: #{structure_module_forward.59} parent=0 // pred_fallthru
    _
  // Predicated region
  $region18: #{structure_module_forward.59} parent=0 // pred_check
    _
  $region19: #{structure_module_forward.59} parent=0 // pred_check_branch
    %30 = sbr.rel (0) target = $region21
  $region20: #{structure_module_forward.59} parent=0 // pred_region
    _
  $region21: #{structure_module_forward.59} parent=0 // pred_fallthru
    _
  // Predicated region
  $region22: #{structure_module_forward.59} parent=0 // pred_check
    _
  $region23: #{structure_module_forward.59} parent=0 // pred_check_branch
    %32 = sbr.rel (0) target = $region25
  $region24: #{structure_module_forward.59} parent=0 // pred_region
    _
  $region25: #{structure_module_forward.59} parent=0 // pred_fallthru
    _
  // Predicated region
  $region26: #{structure_module_forward.59} parent=0 // pred_check
    _
  $region27: #{structure_module_forward.59} parent=0 // pred_check_branch
    %34 = sbr.rel (0) target = $region29
  $region28: #{structure_module_forward.59} parent=0 // pred_region
    _
  $region29: #{structure_module_forward.59} parent=0 // pred_fallthru
    _
  // Predicated region
  $region30: #{structure_module_forward.59} parent=0 // pred_check
    _
  $region31: #{structure_module_forward.59} parent=0 // pred_check_branch
    %36 = sbr.rel (0) target = $region33
  $region32: #{structure_module_forward.59} parent=0 // pred_region
    _
  $region33: #{structure_module_forward.59} parent=0 // pred_fallthru
    _
  // Predicated region
  $region34: #{structure_module_forward.59} parent=0 // pred_check
    _
  $region35: #{structure_module_forward.59} parent=0 // pred_check_branch
    %38 = sbr.rel (0) target = $region37
  $region36: #{structure_module_forward.59} parent=0 // pred_region
    _
  $region37: #{structure_module_forward.59} parent=0 // pred_fallthru
    _
  // Predicated region
  $region38: #{structure_module_forward.59} parent=0 // pred_check
    _
  $region39: #{structure_module_forward.59} parent=0 // pred_check_branch
    %40 = sbr.rel (0) target = $region41
  $region40: #{structure_module_forward.59} parent=0 // pred_region
    _
  $region41: #{structure_module_forward.59} parent=0 // pred_fallthru
    _
  // Predicated region
  $region42: #{structure_module_forward.59} parent=0 // pred_check
    _
  $region43: #{structure_module_forward.59} parent=0 // pred_check_branch
    %42 = sbr.rel (0) target = $region45
  $region44: #{structure_module_forward.59} parent=0 // pred_region
    _
  $region45: #{structure_module_forward.59} parent=0 // pred_fallthru
    _
  // Predicated region
  $region46: #{structure_module_forward.59} parent=0 // pred_check
    _
  $region47: #{structure_module_forward.59} parent=0 // pred_check_branch
    %44 = sbr.rel (0) target = $region49
  $region48: #{structure_module_forward.59} parent=0 // pred_region
    _
  $region49: #{structure_module_forward.59} parent=0 // pred_fallthru
    _
  // Predicated region
  $region50: #{structure_module_forward.59} parent=0 // pred_check
    _
  $region51: #{structure_module_forward.59} parent=0 // pred_check_branch
    %46 = sbr.rel (0) target = $region53
  $region52: #{structure_module_forward.59} parent=0 // pred_region
    _
  $region53: #{structure_module_forward.59} parent=0 // pred_fallthru
    _
  // Predicated region
  $region54: #{structure_module_forward.59} parent=0 // pred_check
    _
  $region55: #{structure_module_forward.59} parent=0 // pred_check_branch
    %48 = sbr.rel (0) target = $region57
  $region56: #{structure_module_forward.59} parent=0 // pred_region
    _
  $region57: #{structure_module_forward.59} parent=0 // pred_fallthru
    _
  // Predicated region
  $region58: #{structure_module_forward.59} parent=0 // pred_check
    _
  $region59: #{structure_module_forward.59} parent=0 // pred_check_branch
    %50 = sbr.rel (0) target = $region61
  $region60: #{structure_module_forward.59} parent=0 // pred_region
    _
  $region61: #{structure_module_forward.59} parent=0 // pred_fallthru
    _
  // Predicated region
  $region62: #{structure_module_forward.59} parent=0 // pred_check
    _
  $region63: #{structure_module_forward.59} parent=0 // pred_check_branch
    %52 = sbr.rel (0) target = $region65
  $region64: #{structure_module_forward.59} parent=0 // pred_region
    _
  $region65: #{structure_module_forward.59} parent=0 // pred_fallthru
    _
  %v54 = vld [vmem:[%s0] sm:$0xff]
  %v55 = vld [vmem:[%s0 + $0x8] sm:$0xff]
  %v56 = vld [vmem:[%s1] sm:$0xff]
  %v57 = vld [vmem:[%s1 + $0x8] sm:$0xff]
  %v58 = vld [vmem:[%s2] sm:$0xf]
  %v59 = vld [vmem:[%s2 + $0x4] sm:$0xf]
  %v60 = vld [vmem:[%s2 + $0x8] sm:$0xf]
  %v61 = vld [vmem:[%s2 + $0xc] sm:$0xf]
  %v62 = vld [vmem:[%s3] sm:$0x1]
  %v63 = vld [vmem:[%s4] sm:$0xf]
  %v64 = vld [vmem:[%s4 + $0x4] sm:$0xf]
  %v65 = vld [vmem:[%s4 + $0x8] sm:$0xf]
  %v66 = vld [vmem:[%s4 + $0xc] sm:$0xf]
  %v67 = vld [vmem:[%s5] sm:$0x1]
  %v68 = vmax.f32 %v54, 0.0
  %v69 = vmax.f32 %v55, 0.0
  %v70 = vpack.c.bf16 %v69, %v68
  %v72 = vlaneseq
  %v73 = vshrl.u32 %v72, 7
  %v74 = vsub.s32 0, %v73
  %v75 = vrot.slane %v62, %v74
  %v81 = vunpack.c.l.b16 %v58
  %v82 = vunpack.c.l.b16 %v59
  %v83 = vunpack.c.l.b16 %v60
  %v84 = vunpack.c.l.b16 %v61
  %v85 = vpack.c.b16 %v82, %v81
  %v86 = vpack.c.b16 %v84, %v83
  %vm89 = vcmask 261120
  %v91 = vsel %vm89, %v70, 0
  %93 = vmatprep.subr.bf16.mxu0 0
  %94 = vmatpush1.bf16.msra.mxu0 %v85
  %95 = vmatprep.subr.bf16.mxu0 0
  %96 = vmatpush1.bf16.msra.mxu0 %v86
  %97 = vmatprep.subr.bf16.mxu0 0
  %98 = vmatpush1.bf16.msra.mxu0 0
  %99 = vmatprep.subr.bf16.mxu0 0
  %100 = vmatpush1.bf16.msra.mxu0 0
  %101 = vmatprep.subr.bf16.mxu0 0
  %102 = vmatpush1.bf16.msra.mxu0 0
  %103 = vmatprep.subr.bf16.mxu0 0
  %104 = vmatpush1.bf16.msra.mxu0 0
  %105 = vmatprep.subr.bf16.mxu0 0
  %106 = vmatpush1.bf16.msra.mxu0 0
  %107 = vmatprep.subr.bf16.mxu0 0
  %108 = vmatpush1.bf16.msra.mxu0 0
  %109 = vmatprep.subr.bf16.mxu0 0
  %110 = vmatpush1.bf16.msra.mxu0 0
  %111 = vmatprep.subr.bf16.mxu0 0
  %112 = vmatpush1.bf16.msra.mxu0 0
  %113 = vmatprep.subr.bf16.mxu0 0
  %114 = vmatpush1.bf16.msra.mxu0 0
  %115 = vmatprep.subr.bf16.mxu0 0
  %116 = vmatpush1.bf16.msra.mxu0 0
  %117 = vmatprep.subr.bf16.mxu0 0
  %118 = vmatpush1.bf16.msra.mxu0 0
  %119 = vmatprep.subr.bf16.mxu0 0
  %120 = vmatpush1.bf16.msra.mxu0 0
  %121 = vmatprep.subr.bf16.mxu0 0
  %122 = vmatpush1.bf16.msra.mxu0 0
  %123 = vmatprep.subr.bf16.mxu0 0
  %124 = vmatpush1.bf16.msra.mxu0 0
  %125 = vmatprep.mubr.bf16.mxu0 0
  %126 = vmatmul.mubr.bf16.gmra.mrb[0].mxu0 %v91
  %v127 = vpop.f32.mrb[0].mxu0
  %v128 = vadd.f32 %v75, %v127
  %v129 = vpop.f32.mrb[0].mxu0
  %v130 = vpop.f32.mrb[0].mxu0
  %v131 = vadd.f32 %v75, %v130
  %v132 = vpop.f32.mrb[0].mxu0
  %133 = vdwg.mxu0
  %v134 = vmax.f32 %v56, 0.0
  %v135 = vmax.f32 %v57, 0.0
  %v136 = vpack.c.bf16 %v135, %v134
  %v141 = vunpack.c.l.b16 %v63
  %v142 = vunpack.c.l.b16 %v64
  %v143 = vunpack.c.l.b16 %v65
  %v144 = vunpack.c.l.b16 %v66
  %v145 = vpack.c.b16 %v142, %v141
  %v146 = vpack.c.b16 %v144, %v143
  %v150 = vsel %vm89, %v136, 0
  %152 = vmatprep.subr.bf16.mxu0 0
  %153 = vmatpush1.bf16.msra.mxu0 %v145
  %154 = vmatprep.subr.bf16.mxu0 0
  %155 = vmatpush1.bf16.msra.mxu0 %v146
  %156 = vmatprep.subr.bf16.mxu0 0
  %157 = vmatpush1.bf16.msra.mxu0 0
  %158 = vmatprep.subr.bf16.mxu0 0
  %159 = vmatpush1.bf16.msra.mxu0 0
  %160 = vmatprep.subr.bf16.mxu0 0
  %161 = vmatpush1.bf16.msra.mxu0 0
  %162 = vmatprep.subr.bf16.mxu0 0
  %163 = vmatpush1.bf16.msra.mxu0 0
  %164 = vmatprep.subr.bf16.mxu0 0
  %165 = vmatpush1.bf16.msra.mxu0 0
  %166 = vmatprep.subr.bf16.mxu0 0
  %167 = vmatpush1.bf16.msra.mxu0 0
  %168 = vmatprep.subr.bf16.mxu0 0
  %169 = vmatpush1.bf16.msra.mxu0 0
  %170 = vmatprep.subr.bf16.mxu0 0
  %171 = vmatpush1.bf16.msra.mxu0 0
  %172 = vmatprep.subr.bf16.mxu0 0
  %173 = vmatpush1.bf16.msra.mxu0 0
  %174 = vmatprep.subr.bf16.mxu0 0
  %175 = vmatpush1.bf16.msra.mxu0 0
  %176 = vmatprep.subr.bf16.mxu0 0
  %177 = vmatpush1.bf16.msra.mxu0 0
  %178 = vmatprep.subr.bf16.mxu0 0
  %179 = vmatpush1.bf16.msra.mxu0 0
  %180 = vmatprep.subr.bf16.mxu0 0
  %181 = vmatpush1.bf16.msra.mxu0 0
  %182 = vmatprep.subr.bf16.mxu0 0
  %183 = vmatpush1.bf16.msra.mxu0 0
  %184 = vmatprep.mubr.bf16.mxu0 0
  %185 = vmatmul.mubr.bf16.gmra.mrb[0].mxu0 %v150
  %v186 = vpop.f32.mrb[0].mxu0
  %v187 = vadd.f32 0.0, %v186
  %v188 = vpop.f32.mrb[0].mxu0
  %v189 = vpop.f32.mrb[0].mxu0
  %v190 = vadd.f32 0.0, %v189
  %v191 = vpop.f32.mrb[0].mxu0
  %192 = vdwg.mxu0
  %v193 = vadd.f32 %v128, %v187
  %v194 = vadd.f32 %v131, %v190
  %v196 = vlaneseq
  %v197 = vshrl.u32 %v196, 7
  %v198 = vsub.s32 0, %v197
  %v199 = vrot.slane %v67, %v198
  %v201 = vadd.f32 %v193, %v199
  %v202 = vadd.f32 %v194, %v199
  %v203 = vld [vmem:[%s6] sm:$0xf]
  %v204 = vld [vmem:[%s6 + $0x4] sm:$0xf]
  %v205 = vld [vmem:[%s6 + $0x8] sm:$0xf]
  %v206 = vld [vmem:[%s6 + $0xc] sm:$0xf]
  %v207 = vld [vmem:[%s6 + $0x10] sm:$0xf]
  %v208 = vld [vmem:[%s6 + $0x14] sm:$0xf]
  %v209 = vld [vmem:[%s6 + $0x18] sm:$0xf]
  %v210 = vld [vmem:[%s6 + $0x1c] sm:$0xf]
  %v211 = vld [vmem:[%s6 + $0x20] sm:$0xf]
  %v212 = vld [vmem:[%s6 + $0x24] sm:$0xf]
  %v213 = vld [vmem:[%s6 + $0x28] sm:$0xf]
  %v214 = vld [vmem:[%s6 + $0x2c] sm:$0xf]
  %v215 = vld [vmem:[%s6 + $0x30] sm:$0xf]
  %v216 = vld [vmem:[%s6 + $0x34] sm:$0xf]
  %v217 = vld [vmem:[%s6 + $0x38] sm:$0xf]
  %v218 = vld [vmem:[%s6 + $0x3c] sm:$0xf]
  %v219 = vld [vmem:[%s7] sm:$0x1]
  %v220 = vld [vmem:[%s8] sm:$0xf]
  %v221 = vld [vmem:[%s8 + $0x4] sm:$0xf]
  %v222 = vld [vmem:[%s8 + $0x8] sm:$0xf]
  %v223 = vld [vmem:[%s8 + $0xc] sm:$0xf]
  %v224 = vld [vmem:[%s8 + $0x10] sm:$0xf]
  %v225 = vld [vmem:[%s8 + $0x14] sm:$0xf]
  %v226 = vld [vmem:[%s8 + $0x18] sm:$0xf]
  %v227 = vld [vmem:[%s8 + $0x1c] sm:$0xf]
  %v228 = vld [vmem:[%s8 + $0x20] sm:$0xf]
  %v229 = vld [vmem:[%s8 + $0x24] sm:$0xf]
  %v230 = vld [vmem:[%s8 + $0x28] sm:$0xf]
  %v231 = vld [vmem:[%s8 + $0x2c] sm:$0xf]
  %v232 = vld [vmem:[%s8 + $0x30] sm:$0xf]
  %v233 = vld [vmem:[%s8 + $0x34] sm:$0xf]
  %v234 = vld [vmem:[%s8 + $0x38] sm:$0xf]
  %v235 = vld [vmem:[%s8 + $0x3c] sm:$0xf]
  %v236 = vld [vmem:[%s9] sm:$0x1]
  %v237 = vmax.f32 %v201, 0.0
  %v238 = vmax.f32 %v202, 0.0
  %v239 = vpack.c.bf16 %v238, %v237
  %v241 = vlaneseq
  %v242 = vshrl.u32 %v241, 7
  %v243 = vsub.s32 0, %v242
  %v244 = vrot.slane %v219, %v243
  %v262 = vunpack.c.l.b16 %v203
  %v263 = vunpack.c.l.b16 %v204
  %v264 = vunpack.c.l.b16 %v205
  %v265 = vunpack.c.l.b16 %v206
  %v266 = vunpack.c.l.b16 %v207
  %v267 = vunpack.c.l.b16 %v208
  %v268 = vunpack.c.l.b16 %v209
  %v269 = vunpack.c.l.b16 %v210
  %v270 = vunpack.c.l.b16 %v211
  %v271 = vunpack.c.l.b16 %v212
  %v272 = vunpack.c.l.b16 %v213
  %v273 = vunpack.c.l.b16 %v214
  %v274 = vunpack.c.l.b16 %v215
  %v275 = vunpack.c.l.b16 %v216
  %v276 = vunpack.c.l.b16 %v217
  %v277 = vunpack.c.l.b16 %v218
  %v278 = vpack.c.b16 %v263, %v262
  %v279 = vpack.c.b16 %v265, %v264
  %v280 = vpack.c.b16 %v267, %v266
  %v281 = vpack.c.b16 %v269, %v268
  %v282 = vpack.c.b16 %v271, %v270
  %v283 = vpack.c.b16 %v273, %v272
  %v284 = vpack.c.b16 %v275, %v274
  %v285 = vpack.c.b16 %v277, %v276
  %294 = vmatprep.subr.bf16.mxu0 0
  %295 = vmatpush1.bf16.msra.mxu0 %v278
  %296 = vmatprep.subr.bf16.mxu0 0
  %297 = vmatpush1.bf16.msra.mxu0 %v279
  %298 = vmatprep.subr.bf16.mxu0 0
  %299 = vmatpush1.bf16.msra.mxu0 %v280
  %300 = vmatprep.subr.bf16.mxu0 0
  %301 = vmatpush1.bf16.msra.mxu0 %v281
  %302 = vmatprep.subr.bf16.mxu0 0
  %303 = vmatpush1.bf16.msra.mxu0 %v282
  %304 = vmatprep.subr.bf16.mxu0 0
  %305 = vmatpush1.bf16.msra.mxu0 %v283
  %306 = vmatprep.subr.bf16.mxu0 0
  %307 = vmatpush1.bf16.msra.mxu0 %v284
  %308 = vmatprep.subr.bf16.mxu0 0
  %309 = vmatpush1.bf16.msra.mxu0 %v285
  %310 = vmatprep.subr.bf16.mxu0 0
  %311 = vmatpush1.bf16.msra.mxu0 0
  %312 = vmatprep.subr.bf16.mxu0 0
  %313 = vmatpush1.bf16.msra.mxu0 0
  %314 = vmatprep.subr.bf16.mxu0 0
  %315 = vmatpush1.bf16.msra.mxu0 0
  %316 = vmatprep.subr.bf16.mxu0 0
  %317 = vmatpush1.bf16.msra.mxu0 0
  %318 = vmatprep.subr.bf16.mxu0 0
  %319 = vmatpush1.bf16.msra.mxu0 0
  %320 = vmatprep.subr.bf16.mxu0 0
  %321 = vmatpush1.bf16.msra.mxu0 0
  %322 = vmatprep.subr.bf16.mxu0 0
  %323 = vmatpush1.bf16.msra.mxu0 0
  %324 = vmatprep.subr.bf16.mxu0 0
  %325 = vmatpush1.bf16.msra.mxu0 0
  %326 = vmatprep.mubr.bf16.mxu0 0
  %327 = vmatmul.mubr.bf16.gmra.mrb[0].mxu0 %v239
  %v328 = vpop.f32.mrb[0].mxu0
  %v329 = vadd.f32 %v244, %v328
  %v330 = vpop.f32.mrb[0].mxu0
  %v331 = vpop.f32.mrb[0].mxu0
  %v332 = vadd.f32 %v244, %v331
  %v333 = vpop.f32.mrb[0].mxu0
  %334 = vdwg.mxu0
  %v335 = vmax.f32 %v329, 0.0
  %v336 = vmax.f32 %v332, 0.0
  %v337 = vpack.c.bf16 %v336, %v335
  %v339 = vlaneseq
  %v340 = vshrl.u32 %v339, 7
  %v341 = vsub.s32 0, %v340
  %v342 = vrot.slane %v236, %v341
  %v360 = vunpack.c.l.b16 %v220
  %v361 = vunpack.c.l.b16 %v221
  %v362 = vunpack.c.l.b16 %v222
  %v363 = vunpack.c.l.b16 %v223
  %v364 = vunpack.c.l.b16 %v224
  %v365 = vunpack.c.l.b16 %v225
  %v366 = vunpack.c.l.b16 %v226
  %v367 = vunpack.c.l.b16 %v227
  %v368 = vunpack.c.l.b16 %v228
  %v369 = vunpack.c.l.b16 %v229
  %v370 = vunpack.c.l.b16 %v230
  %v371 = vunpack.c.l.b16 %v231
  %v372 = vunpack.c.l.b16 %v232
  %v373 = vunpack.c.l.b16 %v233
  %v374 = vunpack.c.l.b16 %v234
  %v375 = vunpack.c.l.b16 %v235
  %v376 = vpack.c.b16 %v361, %v360
  %v377 = vpack.c.b16 %v363, %v362
  %v378 = vpack.c.b16 %v365, %v364
  %v379 = vpack.c.b16 %v367, %v366
  %v380 = vpack.c.b16 %v369, %v368
  %v381 = vpack.c.b16 %v371, %v370
  %v382 = vpack.c.b16 %v373, %v372
  %v383 = vpack.c.b16 %v375, %v374
  %392 = vmatprep.subr.bf16.mxu0 0
  %393 = vmatpush1.bf16.msra.mxu0 %v376
  %394 = vmatprep.subr.bf16.mxu0 0
  %395 = vmatpush1.bf16.msra.mxu0 %v377
  %396 = vmatprep.subr.bf16.mxu0 0
  %397 = vmatpush1.bf16.msra.mxu0 %v378
  %398 = vmatprep.subr.bf16.mxu0 0
  %399 = vmatpush1.bf16.msra.mxu0 %v379
  %400 = vmatprep.subr.bf16.mxu0 0
  %401 = vmatpush1.bf16.msra.mxu0 %v380
  %402 = vmatprep.subr.bf16.mxu0 0
  %403 = vmatpush1.bf16.msra.mxu0 %v381
  %404 = vmatprep.subr.bf16.mxu0 0
  %405 = vmatpush1.bf16.msra.mxu0 %v382
  %406 = vmatprep.subr.bf16.mxu0 0
  %407 = vmatpush1.bf16.msra.mxu0 %v383
  %408 = vmatprep.subr.bf16.mxu0 0
  %409 = vmatpush1.bf16.msra.mxu0 0
  %410 = vmatprep.subr.bf16.mxu0 0
  %411 = vmatpush1.bf16.msra.mxu0 0
  %412 = vmatprep.subr.bf16.mxu0 0
  %413 = vmatpush1.bf16.msra.mxu0 0
  %414 = vmatprep.subr.bf16.mxu0 0
  %415 = vmatpush1.bf16.msra.mxu0 0
  %416 = vmatprep.subr.bf16.mxu0 0
  %417 = vmatpush1.bf16.msra.mxu0 0
  %418 = vmatprep.subr.bf16.mxu0 0
  %419 = vmatpush1.bf16.msra.mxu0 0
  %420 = vmatprep.subr.bf16.mxu0 0
  %421 = vmatpush1.bf16.msra.mxu0 0
  %422 = vmatprep.subr.bf16.mxu0 0
  %423 = vmatpush1.bf16.msra.mxu0 0
  %424 = vmatprep.mubr.bf16.mxu0 0
  %425 = vmatmul.mubr.bf16.gmra.mrb[0].mxu0 %v337
  %v426 = vpop.f32.mrb[0].mxu0
  %v427 = vadd.f32 %v342, %v426
  %v428 = vpop.f32.mrb[0].mxu0
  %v429 = vpop.f32.mrb[0].mxu0
  %v430 = vadd.f32 %v342, %v429
  %v431 = vpop.f32.mrb[0].mxu0
  %432 = vdwg.mxu0
  %v433 = vadd.f32 %v201, %v427
  %v434 = vadd.f32 %v202, %v430
  %v435 = vld [vmem:[%s10] sm:$0xf]
  %v436 = vld [vmem:[%s10 + $0x4] sm:$0xf]
  %v437 = vld [vmem:[%s10 + $0x8] sm:$0xf]
  %v438 = vld [vmem:[%s10 + $0xc] sm:$0xf]
  %v439 = vld [vmem:[%s10 + $0x10] sm:$0xf]
  %v440 = vld [vmem:[%s10 + $0x14] sm:$0xf]
  %v441 = vld [vmem:[%s10 + $0x18] sm:$0xf]
  %v442 = vld [vmem:[%s10 + $0x1c] sm:$0xf]
  %v443 = vld [vmem:[%s10 + $0x20] sm:$0xf]
  %v444 = vld [vmem:[%s10 + $0x24] sm:$0xf]
  %v445 = vld [vmem:[%s10 + $0x28] sm:$0xf]
  %v446 = vld [vmem:[%s10 + $0x2c] sm:$0xf]
  %v447 = vld [vmem:[%s10 + $0x30] sm:$0xf]
  %v448 = vld [vmem:[%s10 + $0x34] sm:$0xf]
  %v449 = vld [vmem:[%s10 + $0x38] sm:$0xf]
  %v450 = vld [vmem:[%s10 + $0x3c] sm:$0xf]
  %v451 = vld [vmem:[%s11] sm:$0x1]
  %v452 = vld [vmem:[%s12] sm:$0xf]
  %v453 = vld [vmem:[%s12 + $0x4] sm:$0xf]
  %v454 = vld [vmem:[%s12 + $0x8] sm:$0xf]
  %v455 = vld [vmem:[%s12 + $0xc] sm:$0xf]
  %v456 = vld [vmem:[%s12 + $0x10] sm:$0xf]
  %v457 = vld [vmem:[%s12 + $0x14] sm:$0xf]
  %v458 = vld [vmem:[%s12 + $0x18] sm:$0xf]
  %v459 = vld [vmem:[%s12 + $0x1c] sm:$0xf]
  %v460 = vld [vmem:[%s12 + $0x20] sm:$0xf]
  %v461 = vld [vmem:[%s12 + $0x24] sm:$0xf]
  %v462 = vld [vmem:[%s12 + $0x28] sm:$0xf]
  %v463 = vld [vmem:[%s12 + $0x2c] sm:$0xf]
  %v464 = vld [vmem:[%s12 + $0x30] sm:$0xf]
  %v465 = vld [vmem:[%s12 + $0x34] sm:$0xf]
  %v466 = vld [vmem:[%s12 + $0x38] sm:$0xf]
  %v467 = vld [vmem:[%s12 + $0x3c] sm:$0xf]
  %v468 = vld [vmem:[%s13] sm:$0x1]
  %v469 = vmax.f32 %v433, 0.0
  %v470 = vmax.f32 %v434, 0.0
  %v471 = vpack.c.bf16 %v470, %v469
  %v473 = vlaneseq
  %v474 = vshrl.u32 %v473, 7
  %v475 = vsub.s32 0, %v474
  %v476 = vrot.slane %v451, %v475
  %v494 = vunpack.c.l.b16 %v435
  %v495 = vunpack.c.l.b16 %v436
  %v496 = vunpack.c.l.b16 %v437
  %v497 = vunpack.c.l.b16 %v438
  %v498 = vunpack.c.l.b16 %v439
  %v499 = vunpack.c.l.b16 %v440
  %v500 = vunpack.c.l.b16 %v441
  %v501 = vunpack.c.l.b16 %v442
  %v502 = vunpack.c.l.b16 %v443
  %v503 = vunpack.c.l.b16 %v444
  %v504 = vunpack.c.l.b16 %v445
  %v505 = vunpack.c.l.b16 %v446
  %v506 = vunpack.c.l.b16 %v447
  %v507 = vunpack.c.l.b16 %v448
  %v508 = vunpack.c.l.b16 %v449
  %v509 = vunpack.c.l.b16 %v450
  %v510 = vpack.c.b16 %v495, %v494
  %v511 = vpack.c.b16 %v497, %v496
  %v512 = vpack.c.b16 %v499, %v498
  %v513 = vpack.c.b16 %v501, %v500
  %v514 = vpack.c.b16 %v503, %v502
  %v515 = vpack.c.b16 %v505, %v504
  %v516 = vpack.c.b16 %v507, %v506
  %v517 = vpack.c.b16 %v509, %v508
  %526 = vmatprep.subr.bf16.mxu0 0
  %527 = vmatpush1.bf16.msra.mxu0 %v510
  %528 = vmatprep.subr.bf16.mxu0 0
  %529 = vmatpush1.bf16.msra.mxu0 %v511
  %530 = vmatprep.subr.bf16.mxu0 0
  %531 = vmatpush1.bf16.msra.mxu0 %v512
  %532 = vmatprep.subr.bf16.mxu0 0
  %533 = vmatpush1.bf16.msra.mxu0 %v513
  %534 = vmatprep.subr.bf16.mxu0 0
  %535 = vmatpush1.bf16.msra.mxu0 %v514
  %536 = vmatprep.subr.bf16.mxu0 0
  %537 = vmatpush1.bf16.msra.mxu0 %v515
  %538 = vmatprep.subr.bf16.mxu0 0
  %539 = vmatpush1.bf16.msra.mxu0 %v516
  %540 = vmatprep.subr.bf16.mxu0 0
  %541 = vmatpush1.bf16.msra.mxu0 %v517
  %542 = vmatprep.subr.bf16.mxu0 0
  %543 = vmatpush1.bf16.msra.mxu0 0
  %544 = vmatprep.subr.bf16.mxu0 0
  %545 = vmatpush1.bf16.msra.mxu0 0
  %546 = vmatprep.subr.bf16.mxu0 0
  %547 = vmatpush1.bf16.msra.mxu0 0
  %548 = vmatprep.subr.bf16.mxu0 0
  %549 = vmatpush1.bf16.msra.mxu0 0
  %550 = vmatprep.subr.bf16.mxu0 0
  %551 = vmatpush1.bf16.msra.mxu0 0
  %552 = vmatprep.subr.bf16.mxu0 0
  %553 = vmatpush1.bf16.msra.mxu0 0
  %554 = vmatprep.subr.bf16.mxu0 0
  %555 = vmatpush1.bf16.msra.mxu0 0
  %556 = vmatprep.subr.bf16.mxu0 0
  %557 = vmatpush1.bf16.msra.mxu0 0
  %558 = vmatprep.mubr.bf16.mxu0 0
  %559 = vmatmul.mubr.bf16.gmra.mrb[0].mxu0 %v471
  %v560 = vpop.f32.mrb[0].mxu0
  %v561 = vadd.f32 %v476, %v560
  %v562 = vpop.f32.mrb[0].mxu0
  %v563 = vpop.f32.mrb[0].mxu0
  %v564 = vadd.f32 %v476, %v563
  %v565 = vpop.f32.mrb[0].mxu0
  %566 = vdwg.mxu0
  %v567 = vmax.f32 %v561, 0.0
  %v568 = vmax.f32 %v564, 0.0
  %v569 = vpack.c.bf16 %v568, %v567
  %v571 = vlaneseq
  %v572 = vshrl.u32 %v571, 7
  %v573 = vsub.s32 0, %v572
  %v574 = vrot.slane %v468, %v573
  %v592 = vunpack.c.l.b16 %v452
  %v593 = vunpack.c.l.b16 %v453
  %v594 = vunpack.c.l.b16 %v454
  %v595 = vunpack.c.l.b16 %v455
  %v596 = vunpack.c.l.b16 %v456
  %v597 = vunpack.c.l.b16 %v457
  %v598 = vunpack.c.l.b16 %v458
  %v599 = vunpack.c.l.b16 %v459
  %v600 = vunpack.c.l.b16 %v460
  %v601 = vunpack.c.l.b16 %v461
  %v602 = vunpack.c.l.b16 %v462
  %v603 = vunpack.c.l.b16 %v463
  %v604 = vunpack.c.l.b16 %v464
  %v605 = vunpack.c.l.b16 %v465
  %v606 = vunpack.c.l.b16 %v466
  %v607 = vunpack.c.l.b16 %v467
  %v608 = vpack.c.b16 %v593, %v592
  %v609 = vpack.c.b16 %v595, %v594
  %v610 = vpack.c.b16 %v597, %v596
  %v611 = vpack.c.b16 %v599, %v598
  %v612 = vpack.c.b16 %v601, %v600
  %v613 = vpack.c.b16 %v603, %v602
  %v614 = vpack.c.b16 %v605, %v604
  %v615 = vpack.c.b16 %v607, %v606
  %624 = vmatprep.subr.bf16.mxu0 0
  %625 = vmatpush1.bf16.msra.mxu0 %v608
  %626 = vmatprep.subr.bf16.mxu0 0
  %627 = vmatpush1.bf16.msra.mxu0 %v609
  %628 = vmatprep.subr.bf16.mxu0 0
  %629 = vmatpush1.bf16.msra.mxu0 %v610
  %630 = vmatprep.subr.bf16.mxu0 0
  %631 = vmatpush1.bf16.msra.mxu0 %v611
  %632 = vmatprep.subr.bf16.mxu0 0
  %633 = vmatpush1.bf16.msra.mxu0 %v612
  %634 = vmatprep.subr.bf16.mxu0 0
  %635 = vmatpush1.bf16.msra.mxu0 %v613
  %636 = vmatprep.subr.bf16.mxu0 0
  %637 = vmatpush1.bf16.msra.mxu0 %v614
  %638 = vmatprep.subr.bf16.mxu0 0
  %639 = vmatpush1.bf16.msra.mxu0 %v615
  %640 = vmatprep.subr.bf16.mxu0 0
  %641 = vmatpush1.bf16.msra.mxu0 0
  %642 = vmatprep.subr.bf16.mxu0 0
  %643 = vmatpush1.bf16.msra.mxu0 0
  %644 = vmatprep.subr.bf16.mxu0 0
  %645 = vmatpush1.bf16.msra.mxu0 0
  %646 = vmatprep.subr.bf16.mxu0 0
  %647 = vmatpush1.bf16.msra.mxu0 0
  %648 = vmatprep.subr.bf16.mxu0 0
  %649 = vmatpush1.bf16.msra.mxu0 0
  %650 = vmatprep.subr.bf16.mxu0 0
  %651 = vmatpush1.bf16.msra.mxu0 0
  %652 = vmatprep.subr.bf16.mxu0 0
  %653 = vmatpush1.bf16.msra.mxu0 0
  %654 = vmatprep.subr.bf16.mxu0 0
  %655 = vmatpush1.bf16.msra.mxu0 0
  %656 = vmatprep.mubr.bf16.mxu0 0
  %657 = vmatmul.mubr.bf16.gmra.mrb[0].mxu0 %v569
  %v658 = vpop.f32.mrb[0].mxu0
  %v659 = vadd.f32 %v574, %v658
  %v660 = vpop.f32.mrb[0].mxu0
  %v661 = vpop.f32.mrb[0].mxu0
  %v662 = vadd.f32 %v574, %v661
  %v663 = vpop.f32.mrb[0].mxu0
  %664 = vdwg.mxu0
  %v665 = vadd.f32 %v433, %v659
  %v666 = vadd.f32 %v434, %v662
  %v667 = vld [vmem:[%s14] sm:$0xf]
  %v668 = vld [vmem:[%s14 + $0x4] sm:$0xf]
  %v669 = vld [vmem:[%s14 + $0x8] sm:$0xf]
  %v670 = vld [vmem:[%s14 + $0xc] sm:$0xf]
  %v671 = vld [vmem:[%s14 + $0x10] sm:$0xf]
  %v672 = vld [vmem:[%s14 + $0x14] sm:$0xf]
  %v673 = vld [vmem:[%s14 + $0x18] sm:$0xf]
  %v674 = vld [vmem:[%s14 + $0x1c] sm:$0xf]
  %v675 = vld [vmem:[%s14 + $0x20] sm:$0xf]
  %v676 = vld [vmem:[%s14 + $0x24] sm:$0xf]
  %v677 = vld [vmem:[%s14 + $0x28] sm:$0xf]
  %v678 = vld [vmem:[%s14 + $0x2c] sm:$0xf]
  %v679 = vld [vmem:[%s14 + $0x30] sm:$0xf]
  %v680 = vld [vmem:[%s14 + $0x34] sm:$0xf]
  %v681 = vld [vmem:[%s14 + $0x38] sm:$0xf]
  %v682 = vld [vmem:[%s14 + $0x3c] sm:$0xf]
  %v683 = vld [vmem:[%s15] sm:$0x1]
  %v684 = vmax.f32 %v665, 0.0
  %v685 = vmax.f32 %v666, 0.0
  %v686 = vpack.c.bf16 %v685, %v684
  %v688 = vlaneseq
  %v689 = vshrl.u32 %v688, 7
  %v690 = vsub.s32 0, %v689
  %v691 = vrot.slane %v683, %v690
  %v709 = vunpack.c.l.b16 %v667
  %v710 = vunpack.c.l.b16 %v668
  %v711 = vunpack.c.l.b16 %v669
  %v712 = vunpack.c.l.b16 %v670
  %v713 = vunpack.c.l.b16 %v671
  %v714 = vunpack.c.l.b16 %v672
  %v715 = vunpack.c.l.b16 %v673
  %v716 = vunpack.c.l.b16 %v674
  %v717 = vunpack.c.l.b16 %v675
  %v718 = vunpack.c.l.b16 %v676
  %v719 = vunpack.c.l.b16 %v677
  %v720 = vunpack.c.l.b16 %v678
  %v721 = vunpack.c.l.b16 %v679
  %v722 = vunpack.c.l.b16 %v680
  %v723 = vunpack.c.l.b16 %v681
  %v724 = vunpack.c.l.b16 %v682
  %v725 = vpack.c.b16 %v710, %v709
  %v726 = vpack.c.b16 %v712, %v711
  %v727 = vpack.c.b16 %v714, %v713
  %v728 = vpack.c.b16 %v716, %v715
  %v729 = vpack.c.b16 %v718, %v717
  %v730 = vpack.c.b16 %v720, %v719
  %v731 = vpack.c.b16 %v722, %v721
  %v732 = vpack.c.b16 %v724, %v723
  %741 = vmatprep.subr.bf16.mxu0 0
  %742 = vmatpush1.bf16.msra.mxu0 %v725
  %743 = vmatprep.subr.bf16.mxu0 0
  %744 = vmatpush1.bf16.msra.mxu0 %v726
  %745 = vmatprep.subr.bf16.mxu0 0
  %746 = vmatpush1.bf16.msra.mxu0 %v727
  %747 = vmatprep.subr.bf16.mxu0 0
  %748 = vmatpush1.bf16.msra.mxu0 %v728
  %749 = vmatprep.subr.bf16.mxu0 0
  %750 = vmatpush1.bf16.msra.mxu0 %v729
  %751 = vmatprep.subr.bf16.mxu0 0
  %752 = vmatpush1.bf16.msra.mxu0 %v730
  %753 = vmatprep.subr.bf16.mxu0 0
  %754 = vmatpush1.bf16.msra.mxu0 %v731
  %755 = vmatprep.subr.bf16.mxu0 0
  %756 = vmatpush1.bf16.msra.mxu0 %v732
  %757 = vmatprep.subr.bf16.mxu0 0
  %758 = vmatpush1.bf16.msra.mxu0 0
  %759 = vmatprep.subr.bf16.mxu0 0
  %760 = vmatpush1.bf16.msra.mxu0 0
  %761 = vmatprep.subr.bf16.mxu0 0
  %762 = vmatpush1.bf16.msra.mxu0 0
  %763 = vmatprep.subr.bf16.mxu0 0
  %764 = vmatpush1.bf16.msra.mxu0 0
  %765 = vmatprep.subr.bf16.mxu0 0
  %766 = vmatpush1.bf16.msra.mxu0 0
  %767 = vmatprep.subr.bf16.mxu0 0
  %768 = vmatpush1.bf16.msra.mxu0 0
  %769 = vmatprep.subr.bf16.mxu0 0
  %770 = vmatpush1.bf16.msra.mxu0 0
  %771 = vmatprep.subr.bf16.mxu0 0
  %772 = vmatpush1.bf16.msra.mxu0 0
  %773 = vmatprep.mubr.bf16.mxu0 0
  %774 = vmatmul.mubr.bf16.gmra.mrb[0].mxu0 %v686
  %v775 = vpop.f32.mrb[0].mxu0
  %v776 = vadd.f32 %v691, %v775
  %v777 = vpop.f32.mrb[0].mxu0
  %v778 = vpop.f32.mrb[0].mxu0
  %v779 = vadd.f32 %v691, %v778
  %v780 = vpop.f32.mrb[0].mxu0
  %781 = vdwg.mxu0
  %vm782 = vcmask 113664
  %783 = vst.msk [vmem:[%s16] sm:$0xff] %vm782, %v776
  %784 = vst.msk [vmem:[%s16 + $0x8] sm:$0xff] %vm782, %v779
  // Predicated region
  $region66: #{structure_module_forward.59} parent=0 // pred_check
    _
  $region67: #{structure_module_forward.59} parent=0 // pred_check_branch
    %786 = sbr.rel (0) target = $region69
  $region68: #{structure_module_forward.59} parent=0 // pred_region
    _
  $region69: #{structure_module_forward.59} parent=0 // pred_fallthru
    _
  // Predicated region
  $region70: #{structure_module_forward.59} parent=0 // pred_check
    _
  $region71: #{structure_module_forward.59} parent=0 // pred_check_branch
    %788 = sbr.rel (0) target = $region73
  $region72: #{structure_module_forward.59} parent=0 // pred_region
    _
  $region73: #{structure_module_forward.59} parent=0 // pred_fallthru
    _

</llo_original>
